<compile_context>
chip_gen: v6e
topology: v6e:2x2x1
jax: 0.10.0
libtpu: 0.0.40
codegen_flags: <defaults>
</compile_context>

<pallas_src>
import functools

import jax
import jax.numpy as jnp
from jax import lax
from jax.experimental import pallas as pl
from jax.experimental.pallas import tpu as pltpu

_EPS = 1e-5  # nn.LayerNorm / nn.Transformer default


# ------------------------- in-kernel helper math ---------------------------

def _layer_norm(x, g, b, eps=_EPS):
    mu = jnp.mean(x, axis=-1, keepdims=True)
    var = jnp.mean(jnp.square(x - mu), axis=-1, keepdims=True)
    return (x - mu) * lax.rsqrt(var + eps) * g + b


def _mm(a, w):
    """MXU matmul: bf16 operands, f32 accumulation."""
    return jnp.dot(a.astype(jnp.bfloat16), w.astype(jnp.bfloat16),
                   preferred_element_type=jnp.float32)


def _mha(q, k, v, wo, n_head):
    """Multi-head attention fused with the output projection.

    q: (B, Tq, H), k/v: (B, Tk, H) in f32; wo: (H, H) bf16.
    The batch axis rides as a dot_general batch dim; heads are a small static
    loop over lane slices (unavoidable until H is a multiple of 128); the output
    projection is a single K=H matmul on the concatenated head contexts.
    Returns (B*Tq, H) in f32.
    """
    B, Tq, H = q.shape
    Dh = H // n_head
    scale = 1.0 / float(Dh) ** 0.5
    ctx = []
    for h in range(n_head):
        sl = slice(h * Dh, (h + 1) * Dh)
        qh = q[:, :, sl].astype(jnp.bfloat16)
        kh = k[:, :, sl].astype(jnp.bfloat16)
        vh = v[:, :, sl].astype(jnp.bfloat16)
        s = jnp.einsum("bqd,bkd->bqk", qh, kh,
                       preferred_element_type=jnp.float32) * scale
        m = jnp.max(s, axis=-1, keepdims=True)
        p = jnp.exp(s - m)
        # softmax denominator on the EUP slot (approx reciprocal is standard here)
        p = p * pl.reciprocal(jnp.sum(p, axis=-1, keepdims=True), approx=True)
        ctx.append(jnp.einsum("bqk,bkd->bqd", p.astype(jnp.bfloat16), vh,
                              preferred_element_type=jnp.float32))
    ctx = jnp.concatenate(ctx, axis=-1)                 # (B, Tq, H)
    return _mm(ctx.reshape(B * Tq, H), wo)              # single K=H out-proj


# ----------------------------- fused kernel --------------------------------

def _gdlt_kernel(
    x_ref, q0_ref,
    ipw1, ipb1, ipw2, ipb2,
    ewqkv, ebqkv, ewo, ebo, eln1g, eln1b, ew1, eb1, ew2, eb2, eln2g, eln2b,
    encg, encb,
    swqkv, sbqkv, swo, sbo, cwq, cbq, cwkv, cbkv, cwo, cbo,
    dln1g, dln1b, dln2g, dln2b, dln3g, dln3b, dw1, db1, dw2, db2,
    decg, decb,
    embed_ref,
    *, n_enc, n_dec, n_head):
    B, T, C = x_ref.shape
    BNQ, H = q0_ref.shape
    NQ = BNQ // B

    # ---- in_proj: conv1x1+BN (fused, eval) -> ReLU -> conv1x1+BN, batch folded
    x = x_ref[...].reshape(B * T, C)
    hdn = jnp.maximum(_mm(x, ipw1[...]) + ipb1[...], 0.0)
    xe = _mm(hdn, ipw2[...]) + ipb2[...]                          # (B*T, H) f32

    # ---- encoder stack (post-norm, ReLU FFN, dropout = identity) ----
    for l in range(n_enc):
        qkv = _mm(xe, ewqkv[l]) + ebqkv[l]                        # (B*T, 3H)
        q = qkv[:, :H].reshape(B, T, H)
        k = qkv[:, H:2 * H].reshape(B, T, H)
        v = qkv[:, 2 * H:].reshape(B, T, H)
        attn = _mha(q, k, v, ewo[l], n_head) + ebo[l]
        xe = _layer_norm(xe + attn, eln1g[l], eln1b[l])
        ffn = _mm(jnp.maximum(_mm(xe, ew1[l]) + eb1[l], 0.0), ew2[l]) + eb2[l]
        xe = _layer_norm(xe + ffn, eln2g[l], eln2b[l])

    # final encoder norm (nn.Transformer encoder.norm); stays in VMEM
    mem = _layer_norm(xe, encg[...], encb[...])                   # (B*T, H)

    # ---- decoder stack (queries = prototype broadcast over batch) ----
    tq = q0_ref[...]                                              # (B*NQ, H)
    for l in range(n_dec):
        # self-attention on the queries
        qkv = _mm(tq, swqkv[l]) + sbqkv[l]                        # (B*NQ, 3H)
        q = qkv[:, :H].reshape(B, NQ, H)
        k = qkv[:, H:2 * H].reshape(B, NQ, H)
        v = qkv[:, 2 * H:].reshape(B, NQ, H)
        attn = _mha(q, k, v, swo[l], n_head) + sbo[l]
        tq = _layer_norm(tq + attn, dln1g[l], dln1b[l])

        # cross-attention against the (VMEM-resident) encoder memory
        qc = (_mm(tq, cwq[l]) + cbq[l]).reshape(B, NQ, H)
        kv = _mm(mem, cwkv[l]) + cbkv[l]                          # (B*T, 2H)
        kc = kv[:, :H].reshape(B, T, H)
        vc = kv[:, H:].reshape(B, T, H)
        attn = _mha(qc, kc, vc, cwo[l], n_head) + cbo[l]
        tq = _layer_norm(tq + attn, dln2g[l], dln2b[l])

        # FFN
        ffn = _mm(jnp.maximum(_mm(tq, dw1[l]) + db1[l], 0.0), dw2[l]) + db2[l]
        tq = _layer_norm(tq + ffn, dln3g[l], dln3b[l])

    # final decoder norm (nn.Transformer decoder.norm)
    tq = _layer_norm(tq, decg[...], decb[...])
    embed_ref[...] = tq.reshape(B, NQ, H).astype(embed_ref.dtype)


# ----------------------------- pallas_call glue -----------------------------

def gdlt_forward(x, params, n_head):
    B, T, C = x.shape
    proto = params["prototype"]
    NQ, H = proto.shape
    Le = params["enc_wqkv"].shape[0]
    Ld = params["dec_swqkv"].shape[0]
    assert H % n_head == 0
    # Current kernel relies on sublane-aligned leading-dim collapses.
    # TODO(synk): pad T / n_query (with key masking) for non-multiple-of-8 sizes.
    assert T % 8 == 0 and NQ % 8 == 0, "T and n_query must be multiples of 8"

    bf = lambda a: a.astype(jnp.bfloat16)  # MXU weight operands (halves VMEM)
    # prototype repeated over batch, pre-flattened to (B*NQ, H) (tiny)
    q0 = jnp.broadcast_to(proto[None], (B, NQ, H)).reshape(B * NQ, H)

    args = [
        x, q0,
        bf(params["ip_w1"]), params["ip_b1"], bf(params["ip_w2"]), params["ip_b2"],
        bf(params["enc_wqkv"]), params["enc_bqkv"], bf(params["enc_wo"]), params["enc_bo"],
        params["enc_ln1g"], params["enc_ln1b"],
        bf(params["enc_w1"]), params["enc_b1"], bf(params["enc_w2"]), params["enc_b2"],
        params["enc_ln2g"], params["enc_ln2b"],
        params["enc_norm_g"], params["enc_norm_b"],
        bf(params["dec_swqkv"]), params["dec_sbqkv"], bf(params["dec_swo"]), params["dec_sbo"],
        bf(params["dec_cwq"]), params["dec_cbq"], bf(params["dec_cwkv"]), params["dec_cbkv"],
        bf(params["dec_cwo"]), params["dec_cbo"],
        params["dec_ln1g"], params["dec_ln1b"], params["dec_ln2g"], params["dec_ln2b"],
        params["dec_ln3g"], params["dec_ln3b"],
        bf(params["dec_w1"]), params["dec_b1"], bf(params["dec_w2"]), params["dec_b2"],
        params["dec_norm_g"], params["dec_norm_b"],
    ]

    embed = pl.pallas_call(
        functools.partial(_gdlt_kernel, n_enc=Le, n_dec=Ld, n_head=n_head),
        out_shape=jax.ShapeDtypeStruct((B, NQ, H), jnp.float32),
        in_specs=[pl.BlockSpec(memory_space=pltpu.MemorySpace.VMEM)] * len(args),
        out_specs=pl.BlockSpec(memory_space=pltpu.MemorySpace.VMEM),
        compiler_params=pltpu.CompilerParams(vmem_limit_bytes=32 * 1024 * 1024),
    )(*args)

    # Scalar head in the wrapper (review item): O(B*NQ) work, exact divide for the
    # final normalization, no lane-dim-1 VMEM output block.
    s = jnp.einsum("bqh,qh->bq", embed, params["reg_w"]) + params["reg_b"][None, :]
    norm_s = jax.nn.sigmoid(s)
    norm_s = norm_s / jnp.sum(norm_s, axis=1, keepdims=True)
    out = jnp.sum(params["weight"][None, :] * norm_s, axis=1)     # (B,)
    return {"output": out, "embed": embed}


# --------------------------- parameter init --------------------------------

def init_params(key, in_dim, hidden_dim, n_head, n_encoder, n_decoder, n_query):
    H = hidden_dim
    F = 3 * hidden_dim
    keys = iter(jax.random.split(key, 256))

    def nrm(shape, scale=0.05):
        return scale * jax.random.normal(next(keys), shape, dtype=jnp.float32)

    def fused_conv_bn(cin, cout):
        # conv1x1 (as (cin, cout) matmul weight) fused with eval-mode BatchNorm1d
        w = nrm((cin, cout))
        b = nrm((cout,))
        gamma = 1.0 + nrm((cout,), 0.02)
        beta = nrm((cout,), 0.02)
        mean = nrm((cout,), 0.02)
        var = 1.0 + jnp.abs(nrm((cout,), 0.02))
        s = gamma / jnp.sqrt(var + 1e-5)
        return w * s[None, :], (b * s + beta - mean * s).reshape(1, cout)

    ip_w1, ip_b1 = fused_conv_bn(in_dim, in_dim // 2)
    ip_w2, ip_b2 = fused_conv_bn(in_dim // 2, H)
    Le, Ld = n_encoder, n_decoder

    return {
        "ip_w1": ip_w1, "ip_b1": ip_b1, "ip_w2": ip_w2, "ip_b2": ip_b2,
        # encoder layers, stacked over the layer axis
        "enc_wqkv": nrm((Le, H, 3 * H)), "enc_bqkv": nrm((Le, 1, 3 * H)),
        "enc_wo": nrm((Le, H, H)), "enc_bo": nrm((Le, 1, H)),
        "enc_ln1g": 1.0 + nrm((Le, 1, H), 0.02), "enc_ln1b": nrm((Le, 1, H), 0.02),
        "enc_w1": nrm((Le, H, F)), "enc_b1": nrm((Le, 1, F)),
        "enc_w2": nrm((Le, F, H)), "enc_b2": nrm((Le, 1, H)),
        "enc_ln2g": 1.0 + nrm((Le, 1, H), 0.02), "enc_ln2b": nrm((Le, 1, H), 0.02),
        "enc_norm_g": 1.0 + nrm((1, H), 0.02), "enc_norm_b": nrm((1, H), 0.02),
        # decoder layers, stacked over the layer axis
        "dec_swqkv": nrm((Ld, H, 3 * H)), "dec_sbqkv": nrm((Ld, 1, 3 * H)),
        "dec_swo": nrm((Ld, H, H)), "dec_sbo": nrm((Ld, 1, H)),
        "dec_cwq": nrm((Ld, H, H)), "dec_cbq": nrm((Ld, 1, H)),
        "dec_cwkv": nrm((Ld, H, 2 * H)), "dec_cbkv": nrm((Ld, 1, 2 * H)),
        "dec_cwo": nrm((Ld, H, H)), "dec_cbo": nrm((Ld, 1, H)),
        "dec_ln1g": 1.0 + nrm((Ld, 1, H), 0.02), "dec_ln1b": nrm((Ld, 1, H), 0.02),
        "dec_ln2g": 1.0 + nrm((Ld, 1, H), 0.02), "dec_ln2b": nrm((Ld, 1, H), 0.02),
        "dec_ln3g": 1.0 + nrm((Ld, 1, H), 0.02), "dec_ln3b": nrm((Ld, 1, H), 0.02),
        "dec_w1": nrm((Ld, H, F)), "dec_b1": nrm((Ld, 1, F)),
        "dec_w2": nrm((Ld, F, H)), "dec_b2": nrm((Ld, 1, H)),
        "dec_norm_g": 1.0 + nrm((1, H), 0.02), "dec_norm_b": nrm((1, H), 0.02),
        # prototype queries + regressor head + linspace weights
        "prototype": nrm((n_query, H), 0.5),
        "reg_w": nrm((n_query, H)),                  # PyTorch Linear (out, in) layout
        "reg_b": nrm((n_query,)),
        "weight": jnp.linspace(0.0, 1.0, n_query, dtype=jnp.float32),
    }


# ------------------------------- main --------------------------------------

if __name__ == "__main__":
    # small config consistent with GDLT(in_dim, hidden, n_head, n_enc, n_dec, n_query, dropout)
    B, T = 2, 8
    IN_DIM, HIDDEN, N_HEAD = 64, 32, 2
    N_ENC, N_DEC, N_QUERY = 2, 2, 8

    key = jax.random.PRNGKey(0)
    kx, kp = jax.random.split(key)
    x = jax.random.normal(kx, (B, T, IN_DIM), dtype=jnp.float32)
    params = init_params(kp, IN_DIM, HIDDEN, N_HEAD, N_ENC, N_DEC, N_QUERY)

    fwd = jax.jit(functools.partial(gdlt_forward, n_head=N_HEAD))
    out = fwd(x, params)
    jax.block_until_ready(out["output"])
    jax.block_until_ready(out["embed"])
    assert out["output"].shape == (B,)
    assert out["embed"].shape == (B, N_QUERY, HIDDEN)
    print("KERNEL_OK")
</pallas_src>

<mosaic_0001>
module attributes {stable_mosaic.version = 11 : i64} {
  func.func @_gdlt_kernel(%arg0: memref<2x8x64xf32, #tpu.memory_space<vmem>>, %arg1: memref<16x32xf32, #tpu.memory_space<vmem>>, %arg2: memref<64x32xbf16, #tpu.memory_space<vmem>>, %arg3: memref<1x32xf32, #tpu.memory_space<vmem>>, %arg4: memref<32x32xbf16, #tpu.memory_space<vmem>>, %arg5: memref<1x32xf32, #tpu.memory_space<vmem>>, %arg6: memref<2x32x96xbf16, #tpu.memory_space<vmem>>, %arg7: memref<2x1x96xf32, #tpu.memory_space<vmem>>, %arg8: memref<2x32x32xbf16, #tpu.memory_space<vmem>>, %arg9: memref<2x1x32xf32, #tpu.memory_space<vmem>>, %arg10: memref<2x1x32xf32, #tpu.memory_space<vmem>>, %arg11: memref<2x1x32xf32, #tpu.memory_space<vmem>>, %arg12: memref<2x32x96xbf16, #tpu.memory_space<vmem>>, %arg13: memref<2x1x96xf32, #tpu.memory_space<vmem>>, %arg14: memref<2x96x32xbf16, #tpu.memory_space<vmem>>, %arg15: memref<2x1x32xf32, #tpu.memory_space<vmem>>, %arg16: memref<2x1x32xf32, #tpu.memory_space<vmem>>, %arg17: memref<2x1x32xf32, #tpu.memory_space<vmem>>, %arg18: memref<1x32xf32, #tpu.memory_space<vmem>>, %arg19: memref<1x32xf32, #tpu.memory_space<vmem>>, %arg20: memref<2x32x96xbf16, #tpu.memory_space<vmem>>, %arg21: memref<2x1x96xf32, #tpu.memory_space<vmem>>, %arg22: memref<2x32x32xbf16, #tpu.memory_space<vmem>>, %arg23: memref<2x1x32xf32, #tpu.memory_space<vmem>>, %arg24: memref<2x32x32xbf16, #tpu.memory_space<vmem>>, %arg25: memref<2x1x32xf32, #tpu.memory_space<vmem>>, %arg26: memref<2x32x64xbf16, #tpu.memory_space<vmem>>, %arg27: memref<2x1x64xf32, #tpu.memory_space<vmem>>, %arg28: memref<2x32x32xbf16, #tpu.memory_space<vmem>>, %arg29: memref<2x1x32xf32, #tpu.memory_space<vmem>>, %arg30: memref<2x1x32xf32, #tpu.memory_space<vmem>>, %arg31: memref<2x1x32xf32, #tpu.memory_space<vmem>>, %arg32: memref<2x1x32xf32, #tpu.memory_space<vmem>>, %arg33: memref<2x1x32xf32, #tpu.memory_space<vmem>>, %arg34: memref<2x1x32xf32, #tpu.memory_space<vmem>>, %arg35: memref<2x1x32xf32, #tpu.memory_space<vmem>>, %arg36: memref<2x32x96xbf16, #tpu.memory_space<vmem>>, %arg37: memref<2x1x96xf32, #tpu.memory_space<vmem>>, %arg38: memref<2x96x32xbf16, #tpu.memory_space<vmem>>, %arg39: memref<2x1x32xf32, #tpu.memory_space<vmem>>, %arg40: memref<1x32xf32, #tpu.memory_space<vmem>>, %arg41: memref<1x32xf32, #tpu.memory_space<vmem>>, %arg42: memref<2x8x32xf32, #tpu.memory_space<vmem>>) attributes {dimension_semantics = [], scalar_prefetch = 0 : i64, scratch_operands = 0 : i64, tpu.core_type = #tpu.core_type<tc>} {
    %c0 = arith.constant 0 : index
    %c0_0 = arith.constant 0 : index
    %c0_1 = arith.constant 0 : index
    %0 = vector.load %arg0[%c0, %c0_0, %c0_1] : memref<2x8x64xf32, #tpu.memory_space<vmem>>, vector<2x8x64xf32>
    %1 = vector.shape_cast %0 : vector<2x8x64xf32> to vector<16x64xf32>
    %c0_2 = arith.constant 0 : index
    %c0_3 = arith.constant 0 : index
    %2 = vector.load %arg2[%c0_2, %c0_3] : memref<64x32xbf16, #tpu.memory_space<vmem>>, vector<64x32xbf16>
    %3 = arith.truncf %1 : vector<16x64xf32> to vector<16x64xbf16>
    %cst = arith.constant dense<0.000000e+00> : vector<16x32xf32>
    %4 = tpu.matmul %3, %2, %cst {dimension_numbers = #tpu.dot_dimension_numbers<[1], [0], [0], [1], [0, 0, 1, 1], [], []>} : vector<16x64xbf16>, vector<64x32xbf16>, vector<16x32xf32> -> vector<16x32xf32>
    %c0_4 = arith.constant 0 : index
    %c0_5 = arith.constant 0 : index
    %5 = vector.load %arg3[%c0_4, %c0_5] : memref<1x32xf32, #tpu.memory_space<vmem>>, vector<1x32xf32>
    %6 = vector.broadcast %5 : vector<1x32xf32> to vector<16x32xf32>
    %7 = arith.addf %4, %6 : vector<16x32xf32>
    %cst_6 = arith.constant 0.000000e+00 : f32
    %8 = vector.broadcast %cst_6 : f32 to vector<16x32xf32>
    %9 = arith.maximumf %7, %8 : vector<16x32xf32>
    %c0_7 = arith.constant 0 : index
    %c0_8 = arith.constant 0 : index
    %10 = vector.load %arg4[%c0_7, %c0_8] : memref<32x32xbf16, #tpu.memory_space<vmem>>, vector<32x32xbf16>
    %11 = arith.truncf %9 : vector<16x32xf32> to vector<16x32xbf16>
    %cst_9 = arith.constant dense<0.000000e+00> : vector<16x32xf32>
    %12 = tpu.matmul %11, %10, %cst_9 {dimension_numbers = #tpu.dot_dimension_numbers<[1], [0], [0], [1], [0, 0, 1, 1], [], []>} : vector<16x32xbf16>, vector<32x32xbf16>, vector<16x32xf32> -> vector<16x32xf32>
    %c0_10 = arith.constant 0 : index
    %c0_11 = arith.constant 0 : index
    %13 = vector.load %arg5[%c0_10, %c0_11] : memref<1x32xf32, #tpu.memory_space<vmem>>, vector<1x32xf32>
    %14 = vector.broadcast %13 : vector<1x32xf32> to vector<16x32xf32>
    %15 = arith.addf %12, %14 : vector<16x32xf32>
    %c0_12 = arith.constant 0 : index
    %c0_13 = arith.constant 0 : index
    %c0_14 = arith.constant 0 : index
    %16 = vector.load %arg6[%c0_12, %c0_13, %c0_14] : memref<2x32x96xbf16, #tpu.memory_space<vmem>>, vector<1x32x96xbf16>
    %17 = vector.shape_cast %16 : vector<1x32x96xbf16> to vector<32x96xbf16>
    %18 = arith.truncf %15 : vector<16x32xf32> to vector<16x32xbf16>
    %cst_15 = arith.constant dense<0.000000e+00> : vector<16x96xf32>
    %19 = tpu.matmul %18, %17, %cst_15 {dimension_numbers = #tpu.dot_dimension_numbers<[1], [0], [0], [1], [0, 0, 1, 1], [], []>} : vector<16x32xbf16>, vector<32x96xbf16>, vector<16x96xf32> -> vector<16x96xf32>
    %c0_16 = arith.constant 0 : index
    %c0_17 = arith.constant 0 : index
    %c0_18 = arith.constant 0 : index
    %20 = vector.load %arg7[%c0_16, %c0_17, %c0_18] : memref<2x1x96xf32, #tpu.memory_space<vmem>>, vector<1x1x96xf32>
    %21 = vector.shape_cast %20 : vector<1x1x96xf32> to vector<1x96xf32>
    %22 = vector.broadcast %21 : vector<1x96xf32> to vector<16x96xf32>
    %23 = arith.addf %19, %22 : vector<16x96xf32>
    %24 = vector.extract_strided_slice %23 {offsets = [0, 0], sizes = [16, 32], strides = [1, 1]} : vector<16x96xf32> to vector<16x32xf32>
    %25 = vector.shape_cast %24 : vector<16x32xf32> to vector<2x8x32xf32>
    %26 = vector.extract_strided_slice %23 {offsets = [0, 32], sizes = [16, 32], strides = [1, 1]} : vector<16x96xf32> to vector<16x32xf32>
    %27 = vector.shape_cast %26 : vector<16x32xf32> to vector<2x8x32xf32>
    %28 = vector.extract_strided_slice %23 {offsets = [0, 64], sizes = [16, 32], strides = [1, 1]} : vector<16x96xf32> to vector<16x32xf32>
    %29 = vector.shape_cast %28 : vector<16x32xf32> to vector<2x8x32xf32>
    %c0_19 = arith.constant 0 : index
    %c0_20 = arith.constant 0 : index
    %c0_21 = arith.constant 0 : index
    %30 = vector.load %arg8[%c0_19, %c0_20, %c0_21] : memref<2x32x32xbf16, #tpu.memory_space<vmem>>, vector<1x32x32xbf16>
    %31 = vector.shape_cast %30 : vector<1x32x32xbf16> to vector<32x32xbf16>
    %32 = vector.extract_strided_slice %25 {offsets = [0, 0, 0], sizes = [2, 8, 16], strides = [1, 1, 1]} : vector<2x8x32xf32> to vector<2x8x16xf32>
    %33 = arith.truncf %32 : vector<2x8x16xf32> to vector<2x8x16xbf16>
    %34 = vector.extract_strided_slice %27 {offsets = [0, 0, 0], sizes = [2, 8, 16], strides = [1, 1, 1]} : vector<2x8x32xf32> to vector<2x8x16xf32>
    %35 = arith.truncf %34 : vector<2x8x16xf32> to vector<2x8x16xbf16>
    %36 = vector.extract_strided_slice %29 {offsets = [0, 0, 0], sizes = [2, 8, 16], strides = [1, 1, 1]} : vector<2x8x32xf32> to vector<2x8x16xf32>
    %37 = arith.truncf %36 : vector<2x8x16xf32> to vector<2x8x16xbf16>
    "tpu.trace_start"() <{level = 10 : i32, message = "bqd,bkd->bqk"}> : () -> ()
    %cst_22 = arith.constant dense<0.000000e+00> : vector<2x8x8xf32>
    %38 = tpu.matmul %33, %35, %cst_22 {dimension_numbers = #tpu.dot_dimension_numbers<[2], [2], [1], [1], [0, 0, 0, 1, 1, 1], [0], [0]>} : vector<2x8x16xbf16>, vector<2x8x16xbf16>, vector<2x8x8xf32> -> vector<2x8x8xf32>
    "tpu.trace_stop"() : () -> ()
    %cst_23 = arith.constant 2.500000e-01 : f32
    %39 = vector.broadcast %cst_23 : f32 to vector<2x8x8xf32>
    %40 = arith.mulf %38, %39 : vector<2x8x8xf32>
    %cst_24 = arith.constant dense<0xFF800000> : vector<2x8xf32>
    %41 = vector.multi_reduction <maximumf>, %40, %cst_24 [2] : vector<2x8x8xf32> to vector<2x8xf32>
    %42 = vector.shape_cast %41 : vector<2x8xf32> to vector<2x8x1xf32>
    %43 = vector.broadcast %42 : vector<2x8x1xf32> to vector<2x8x8xf32>
    %44 = arith.subf %40, %43 : vector<2x8x8xf32>
    %45 = math.exp %44 : vector<2x8x8xf32>
    %cst_25 = arith.constant dense<0.000000e+00> : vector<2x8xf32>
    %46 = vector.multi_reduction <add>, %45, %cst_25 [2] : vector<2x8x8xf32> to vector<2x8xf32>
    %47 = vector.shape_cast %46 : vector<2x8xf32> to vector<2x8x1xf32>
    %48 = tpu.reciprocal %47 {approx = true} : vector<2x8x1xf32> -> vector<2x8x1xf32>
    %49 = vector.broadcast %48 : vector<2x8x1xf32> to vector<2x8x8xf32>
    %50 = arith.mulf %45, %49 : vector<2x8x8xf32>
    %51 = arith.truncf %50 : vector<2x8x8xf32> to vector<2x8x8xbf16>
    "tpu.trace_start"() <{level = 10 : i32, message = "bqk,bkd->bqd"}> : () -> ()
    %cst_26 = arith.constant dense<0.000000e+00> : vector<2x8x16xf32>
    %52 = tpu.matmul %51, %37, %cst_26 {dimension_numbers = #tpu.dot_dimension_numbers<[2], [1], [1], [2], [0, 0, 0, 1, 1, 2], [0], [0]>} : vector<2x8x8xbf16>, vector<2x8x16xbf16>, vector<2x8x16xf32> -> vector<2x8x16xf32>
    "tpu.trace_stop"() : () -> ()
    %53 = vector.extract_strided_slice %25 {offsets = [0, 0, 16], sizes = [2, 8, 16], strides = [1, 1, 1]} : vector<2x8x32xf32> to vector<2x8x16xf32>
    %54 = arith.truncf %53 : vector<2x8x16xf32> to vector<2x8x16xbf16>
    %55 = vector.extract_strided_slice %27 {offsets = [0, 0, 16], sizes = [2, 8, 16], strides = [1, 1, 1]} : vector<2x8x32xf32> to vector<2x8x16xf32>
    %56 = arith.truncf %55 : vector<2x8x16xf32> to vector<2x8x16xbf16>
    %57 = vector.extract_strided_slice %29 {offsets = [0, 0, 16], sizes = [2, 8, 16], strides = [1, 1, 1]} : vector<2x8x32xf32> to vector<2x8x16xf32>
    %58 = arith.truncf %57 : vector<2x8x16xf32> to vector<2x8x16xbf16>
    "tpu.trace_start"() <{level = 10 : i32, message = "bqd,bkd->bqk"}> : () -> ()
    %cst_27 = arith.constant dense<0.000000e+00> : vector<2x8x8xf32>
    %59 = tpu.matmul %54, %56, %cst_27 {dimension_numbers = #tpu.dot_dimension_numbers<[2], [2], [1], [1], [0, 0, 0, 1, 1, 1], [0], [0]>} : vector<2x8x16xbf16>, vector<2x8x16xbf16>, vector<2x8x8xf32> -> vector<2x8x8xf32>
    "tpu.trace_stop"() : () -> ()
    %cst_28 = arith.constant 2.500000e-01 : f32
    %60 = vector.broadcast %cst_28 : f32 to vector<2x8x8xf32>
    %61 = arith.mulf %59, %60 : vector<2x8x8xf32>
    %cst_29 = arith.constant dense<0xFF800000> : vector<2x8xf32>
    %62 = vector.multi_reduction <maximumf>, %61, %cst_29 [2] : vector<2x8x8xf32> to vector<2x8xf32>
    %63 = vector.shape_cast %62 : vector<2x8xf32> to vector<2x8x1xf32>
    %64 = vector.broadcast %63 : vector<2x8x1xf32> to vector<2x8x8xf32>
    %65 = arith.subf %61, %64 : vector<2x8x8xf32>
    %66 = math.exp %65 : vector<2x8x8xf32>
    %cst_30 = arith.constant dense<0.000000e+00> : vector<2x8xf32>
    %67 = vector.multi_reduction <add>, %66, %cst_30 [2] : vector<2x8x8xf32> to vector<2x8xf32>
    %68 = vector.shape_cast %67 : vector<2x8xf32> to vector<2x8x1xf32>
    %69 = tpu.reciprocal %68 {approx = true} : vector<2x8x1xf32> -> vector<2x8x1xf32>
    %70 = vector.broadcast %69 : vector<2x8x1xf32> to vector<2x8x8xf32>
    %71 = arith.mulf %66, %70 : vector<2x8x8xf32>
    %72 = arith.truncf %71 : vector<2x8x8xf32> to vector<2x8x8xbf16>
    "tpu.trace_start"() <{level = 10 : i32, message = "bqk,bkd->bqd"}> : () -> ()
    %cst_31 = arith.constant dense<0.000000e+00> : vector<2x8x16xf32>
    %73 = tpu.matmul %72, %58, %cst_31 {dimension_numbers = #tpu.dot_dimension_numbers<[2], [1], [1], [2], [0, 0, 0, 1, 1, 2], [0], [0]>} : vector<2x8x8xbf16>, vector<2x8x16xbf16>, vector<2x8x16xf32> -> vector<2x8x16xf32>
    "tpu.trace_stop"() : () -> ()
    %74 = tpu.concatenate %52, %73 in 2 : vector<2x8x16xf32>, vector<2x8x16xf32> -> vector<2x8x32xf32>
    %75 = vector.shape_cast %74 : vector<2x8x32xf32> to vector<16x32xf32>
    %76 = arith.truncf %75 : vector<16x32xf32> to vector<16x32xbf16>
    %cst_32 = arith.constant dense<0.000000e+00> : vector<16x32xf32>
    %77 = tpu.matmul %76, %31, %cst_32 {dimension_numbers = #tpu.dot_dimension_numbers<[1], [0], [0], [1], [0, 0, 1, 1], [], []>} : vector<16x32xbf16>, vector<32x32xbf16>, vector<16x32xf32> -> vector<16x32xf32>
    %c0_33 = arith.constant 0 : index
    %c0_34 = arith.constant 0 : index
    %c0_35 = arith.constant 0 : index
    %78 = vector.load %arg9[%c0_33, %c0_34, %c0_35] : memref<2x1x32xf32, #tpu.memory_space<vmem>>, vector<1x1x32xf32>
    %79 = vector.shape_cast %78 : vector<1x1x32xf32> to vector<1x32xf32>
    %80 = vector.broadcast %79 : vector<1x32xf32> to vector<16x32xf32>
    %81 = arith.addf %77, %80 : vector<16x32xf32>
    %82 = arith.addf %15, %81 : vector<16x32xf32>
    %c0_36 = arith.constant 0 : index
    %c0_37 = arith.constant 0 : index
    %c0_38 = arith.constant 0 : index
    %83 = vector.load %arg10[%c0_36, %c0_37, %c0_38] : memref<2x1x32xf32, #tpu.memory_space<vmem>>, vector<1x1x32xf32>
    %84 = vector.shape_cast %83 : vector<1x1x32xf32> to vector<1x32xf32>
    %c0_39 = arith.constant 0 : index
    %c0_40 = arith.constant 0 : index
    %c0_41 = arith.constant 0 : index
    %85 = vector.load %arg11[%c0_39, %c0_40, %c0_41] : memref<2x1x32xf32, #tpu.memory_space<vmem>>, vector<1x1x32xf32>
    %86 = vector.shape_cast %85 : vector<1x1x32xf32> to vector<1x32xf32>
    %cst_42 = arith.constant dense<0.000000e+00> : vector<16xf32>
    %87 = vector.multi_reduction <add>, %82, %cst_42 [1] : vector<16x32xf32> to vector<16xf32>
    %88 = vector.shape_cast %87 : vector<16xf32> to vector<16x1xf32>
    %cst_43 = arith.constant 3.200000e+01 : f32
    %89 = vector.broadcast %cst_43 : f32 to vector<16x1xf32>
    %90 = arith.divf %88, %89 : vector<16x1xf32>
    %91 = vector.broadcast %90 : vector<16x1xf32> to vector<16x32xf32>
    %92 = arith.subf %82, %91 : vector<16x32xf32>
    %93 = arith.mulf %92, %92 : vector<16x32xf32>
    %cst_44 = arith.constant dense<0.000000e+00> : vector<16xf32>
    %94 = vector.multi_reduction <add>, %93, %cst_44 [1] : vector<16x32xf32> to vector<16xf32>
    %95 = vector.shape_cast %94 : vector<16xf32> to vector<16x1xf32>
    %cst_45 = arith.constant 3.200000e+01 : f32
    %96 = vector.broadcast %cst_45 : f32 to vector<16x1xf32>
    %97 = arith.divf %95, %96 : vector<16x1xf32>
    %98 = vector.broadcast %90 : vector<16x1xf32> to vector<16x32xf32>
    %99 = arith.subf %82, %98 : vector<16x32xf32>
    %cst_46 = arith.constant 9.99999974E-6 : f32
    %100 = vector.broadcast %cst_46 : f32 to vector<16x1xf32>
    %101 = arith.addf %97, %100 : vector<16x1xf32>
    %102 = math.rsqrt %101 : vector<16x1xf32>
    %103 = vector.broadcast %102 : vector<16x1xf32> to vector<16x32xf32>
    %104 = arith.mulf %99, %103 : vector<16x32xf32>
    %105 = vector.broadcast %84 : vector<1x32xf32> to vector<16x32xf32>
    %106 = arith.mulf %104, %105 : vector<16x32xf32>
    %107 = vector.broadcast %86 : vector<1x32xf32> to vector<16x32xf32>
    %108 = arith.addf %106, %107 : vector<16x32xf32>
    %c0_47 = arith.constant 0 : index
    %c0_48 = arith.constant 0 : index
    %c0_49 = arith.constant 0 : index
    %109 = vector.load %arg12[%c0_47, %c0_48, %c0_49] : memref<2x32x96xbf16, #tpu.memory_space<vmem>>, vector<1x32x96xbf16>
    %110 = vector.shape_cast %109 : vector<1x32x96xbf16> to vector<32x96xbf16>
    %111 = arith.truncf %108 : vector<16x32xf32> to vector<16x32xbf16>
    %cst_50 = arith.constant dense<0.000000e+00> : vector<16x96xf32>
    %112 = tpu.matmul %111, %110, %cst_50 {dimension_numbers = #tpu.dot_dimension_numbers<[1], [0], [0], [1], [0, 0, 1, 1], [], []>} : vector<16x32xbf16>, vector<32x96xbf16>, vector<16x96xf32> -> vector<16x96xf32>
    %c0_51 = arith.constant 0 : index
    %c0_52 = arith.constant 0 : index
    %c0_53 = arith.constant 0 : index
    %113 = vector.load %arg13[%c0_51, %c0_52, %c0_53] : memref<2x1x96xf32, #tpu.memory_space<vmem>>, vector<1x1x96xf32>
    %114 = vector.shape_cast %113 : vector<1x1x96xf32> to vector<1x96xf32>
    %115 = vector.broadcast %114 : vector<1x96xf32> to vector<16x96xf32>
    %116 = arith.addf %112, %115 : vector<16x96xf32>
    %cst_54 = arith.constant 0.000000e+00 : f32
    %117 = vector.broadcast %cst_54 : f32 to vector<16x96xf32>
    %118 = arith.maximumf %116, %117 : vector<16x96xf32>
    %c0_55 = arith.constant 0 : index
    %c0_56 = arith.constant 0 : index
    %c0_57 = arith.constant 0 : index
    %119 = vector.load %arg14[%c0_55, %c0_56, %c0_57] : memref<2x96x32xbf16, #tpu.memory_space<vmem>>, vector<1x96x32xbf16>
    %120 = vector.shape_cast %119 : vector<1x96x32xbf16> to vector<96x32xbf16>
    %121 = arith.truncf %118 : vector<16x96xf32> to vector<16x96xbf16>
    %cst_58 = arith.constant dense<0.000000e+00> : vector<16x32xf32>
    %122 = tpu.matmul %121, %120, %cst_58 {dimension_numbers = #tpu.dot_dimension_numbers<[1], [0], [0], [1], [0, 0, 1, 1], [], []>} : vector<16x96xbf16>, vector<96x32xbf16>, vector<16x32xf32> -> vector<16x32xf32>
    %c0_59 = arith.constant 0 : index
    %c0_60 = arith.constant 0 : index
    %c0_61 = arith.constant 0 : index
    %123 = vector.load %arg15[%c0_59, %c0_60, %c0_61] : memref<2x1x32xf32, #tpu.memory_space<vmem>>, vector<1x1x32xf32>
    %124 = vector.shape_cast %123 : vector<1x1x32xf32> to vector<1x32xf32>
    %125 = vector.broadcast %124 : vector<1x32xf32> to vector<16x32xf32>
    %126 = arith.addf %122, %125 : vector<16x32xf32>
    %127 = arith.addf %108, %126 : vector<16x32xf32>
    %c0_62 = arith.constant 0 : index
    %c0_63 = arith.constant 0 : index
    %c0_64 = arith.constant 0 : index
    %128 = vector.load %arg16[%c0_62, %c0_63, %c0_64] : memref<2x1x32xf32, #tpu.memory_space<vmem>>, vector<1x1x32xf32>
    %129 = vector.shape_cast %128 : vector<1x1x32xf32> to vector<1x32xf32>
    %c0_65 = arith.constant 0 : index
    %c0_66 = arith.constant 0 : index
    %c0_67 = arith.constant 0 : index
    %130 = vector.load %arg17[%c0_65, %c0_66, %c0_67] : memref<2x1x32xf32, #tpu.memory_space<vmem>>, vector<1x1x32xf32>
    %131 = vector.shape_cast %130 : vector<1x1x32xf32> to vector<1x32xf32>
    %cst_68 = arith.constant dense<0.000000e+00> : vector<16xf32>
    %132 = vector.multi_reduction <add>, %127, %cst_68 [1] : vector<16x32xf32> to vector<16xf32>
    %133 = vector.shape_cast %132 : vector<16xf32> to vector<16x1xf32>
    %cst_69 = arith.constant 3.200000e+01 : f32
    %134 = vector.broadcast %cst_69 : f32 to vector<16x1xf32>
    %135 = arith.divf %133, %134 : vector<16x1xf32>
    %136 = vector.broadcast %135 : vector<16x1xf32> to vector<16x32xf32>
    %137 = arith.subf %127, %136 : vector<16x32xf32>
    %138 = arith.mulf %137, %137 : vector<16x32xf32>
    %cst_70 = arith.constant dense<0.000000e+00> : vector<16xf32>
    %139 = vector.multi_reduction <add>, %138, %cst_70 [1] : vector<16x32xf32> to vector<16xf32>
    %140 = vector.shape_cast %139 : vector<16xf32> to vector<16x1xf32>
    %cst_71 = arith.constant 3.200000e+01 : f32
    %141 = vector.broadcast %cst_71 : f32 to vector<16x1xf32>
    %142 = arith.divf %140, %141 : vector<16x1xf32>
    %143 = vector.broadcast %135 : vector<16x1xf32> to vector<16x32xf32>
    %144 = arith.subf %127, %143 : vector<16x32xf32>
    %cst_72 = arith.constant 9.99999974E-6 : f32
    %145 = vector.broadcast %cst_72 : f32 to vector<16x1xf32>
    %146 = arith.addf %142, %145 : vector<16x1xf32>
    %147 = math.rsqrt %146 : vector<16x1xf32>
    %148 = vector.broadcast %147 : vector<16x1xf32> to vector<16x32xf32>
    %149 = arith.mulf %144, %148 : vector<16x32xf32>
    %150 = vector.broadcast %129 : vector<1x32xf32> to vector<16x32xf32>
    %151 = arith.mulf %149, %150 : vector<16x32xf32>
    %152 = vector.broadcast %131 : vector<1x32xf32> to vector<16x32xf32>
    %153 = arith.addf %151, %152 : vector<16x32xf32>
    %c1 = arith.constant 1 : index
    %c0_73 = arith.constant 0 : index
    %c0_74 = arith.constant 0 : index
    %154 = vector.load %arg6[%c1, %c0_73, %c0_74] : memref<2x32x96xbf16, #tpu.memory_space<vmem>>, vector<1x32x96xbf16>
    %155 = vector.shape_cast %154 : vector<1x32x96xbf16> to vector<32x96xbf16>
    %156 = arith.truncf %153 : vector<16x32xf32> to vector<16x32xbf16>
    %cst_75 = arith.constant dense<0.000000e+00> : vector<16x96xf32>
    %157 = tpu.matmul %156, %155, %cst_75 {dimension_numbers = #tpu.dot_dimension_numbers<[1], [0], [0], [1], [0, 0, 1, 1], [], []>} : vector<16x32xbf16>, vector<32x96xbf16>, vector<16x96xf32> -> vector<16x96xf32>
    %c1_76 = arith.constant 1 : index
    %c0_77 = arith.constant 0 : index
    %c0_78 = arith.constant 0 : index
    %158 = vector.load %arg7[%c1_76, %c0_77, %c0_78] : memref<2x1x96xf32, #tpu.memory_space<vmem>>, vector<1x1x96xf32>
    %159 = vector.shape_cast %158 : vector<1x1x96xf32> to vector<1x96xf32>
    %160 = vector.broadcast %159 : vector<1x96xf32> to vector<16x96xf32>
    %161 = arith.addf %157, %160 : vector<16x96xf32>
    %162 = vector.extract_strided_slice %161 {offsets = [0, 0], sizes = [16, 32], strides = [1, 1]} : vector<16x96xf32> to vector<16x32xf32>
    %163 = vector.shape_cast %162 : vector<16x32xf32> to vector<2x8x32xf32>
    %164 = vector.extract_strided_slice %161 {offsets = [0, 32], sizes = [16, 32], strides = [1, 1]} : vector<16x96xf32> to vector<16x32xf32>
    %165 = vector.shape_cast %164 : vector<16x32xf32> to vector<2x8x32xf32>
    %166 = vector.extract_strided_slice %161 {offsets = [0, 64], sizes = [16, 32], strides = [1, 1]} : vector<16x96xf32> to vector<16x32xf32>
    %167 = vector.shape_cast %166 : vector<16x32xf32> to vector<2x8x32xf32>
    %c1_79 = arith.constant 1 : index
    %c0_80 = arith.constant 0 : index
    %c0_81 = arith.constant 0 : index
    %168 = vector.load %arg8[%c1_79, %c0_80, %c0_81] : memref<2x32x32xbf16, #tpu.memory_space<vmem>>, vector<1x32x32xbf16>
    %169 = vector.shape_cast %168 : vector<1x32x32xbf16> to vector<32x32xbf16>
    %170 = vector.extract_strided_slice %163 {offsets = [0, 0, 0], sizes = [2, 8, 16], strides = [1, 1, 1]} : vector<2x8x32xf32> to vector<2x8x16xf32>
    %171 = arith.truncf %170 : vector<2x8x16xf32> to vector<2x8x16xbf16>
    %172 = vector.extract_strided_slice %165 {offsets = [0, 0, 0], sizes = [2, 8, 16], strides = [1, 1, 1]} : vector<2x8x32xf32> to vector<2x8x16xf32>
    %173 = arith.truncf %172 : vector<2x8x16xf32> to vector<2x8x16xbf16>
    %174 = vector.extract_strided_slice %167 {offsets = [0, 0, 0], sizes = [2, 8, 16], strides = [1, 1, 1]} : vector<2x8x32xf32> to vector<2x8x16xf32>
    %175 = arith.truncf %174 : vector<2x8x16xf32> to vector<2x8x16xbf16>
    "tpu.trace_start"() <{level = 10 : i32, message = "bqd,bkd->bqk"}> : () -> ()
    %cst_82 = arith.constant dense<0.000000e+00> : vector<2x8x8xf32>
    %176 = tpu.matmul %171, %173, %cst_82 {dimension_numbers = #tpu.dot_dimension_numbers<[2], [2], [1], [1], [0, 0, 0, 1, 1, 1], [0], [0]>} : vector<2x8x16xbf16>, vector<2x8x16xbf16>, vector<2x8x8xf32> -> vector<2x8x8xf32>
    "tpu.trace_stop"() : () -> ()
    %cst_83 = arith.constant 2.500000e-01 : f32
    %177 = vector.broadcast %cst_83 : f32 to vector<2x8x8xf32>
    %178 = arith.mulf %176, %177 : vector<2x8x8xf32>
    %cst_84 = arith.constant dense<0xFF800000> : vector<2x8xf32>
    %179 = vector.multi_reduction <maximumf>, %178, %cst_84 [2] : vector<2x8x8xf32> to vector<2x8xf32>
    %180 = vector.shape_cast %179 : vector<2x8xf32> to vector<2x8x1xf32>
    %181 = vector.broadcast %180 : vector<2x8x1xf32> to vector<2x8x8xf32>
    %182 = arith.subf %178, %181 : vector<2x8x8xf32>
    %183 = math.exp %182 : vector<2x8x8xf32>
    %cst_85 = arith.constant dense<0.000000e+00> : vector<2x8xf32>
    %184 = vector.multi_reduction <add>, %183, %cst_85 [2] : vector<2x8x8xf32> to vector<2x8xf32>
    %185 = vector.shape_cast %184 : vector<2x8xf32> to vector<2x8x1xf32>
    %186 = tpu.reciprocal %185 {approx = true} : vector<2x8x1xf32> -> vector<2x8x1xf32>
    %187 = vector.broadcast %186 : vector<2x8x1xf32> to vector<2x8x8xf32>
    %188 = arith.mulf %183, %187 : vector<2x8x8xf32>
    %189 = arith.truncf %188 : vector<2x8x8xf32> to vector<2x8x8xbf16>
    "tpu.trace_start"() <{level = 10 : i32, message = "bqk,bkd->bqd"}> : () -> ()
    %cst_86 = arith.constant dense<0.000000e+00> : vector<2x8x16xf32>
    %190 = tpu.matmul %189, %175, %cst_86 {dimension_numbers = #tpu.dot_dimension_numbers<[2], [1], [1], [2], [0, 0, 0, 1, 1, 2], [0], [0]>} : vector<2x8x8xbf16>, vector<2x8x16xbf16>, vector<2x8x16xf32> -> vector<2x8x16xf32>
    "tpu.trace_stop"() : () -> ()
    %191 = vector.extract_strided_slice %163 {offsets = [0, 0, 16], sizes = [2, 8, 16], strides = [1, 1, 1]} : vector<2x8x32xf32> to vector<2x8x16xf32>
    %192 = arith.truncf %191 : vector<2x8x16xf32> to vector<2x8x16xbf16>
    %193 = vector.extract_strided_slice %165 {offsets = [0, 0, 16], sizes = [2, 8, 16], strides = [1, 1, 1]} : vector<2x8x32xf32> to vector<2x8x16xf32>
    %194 = arith.truncf %193 : vector<2x8x16xf32> to vector<2x8x16xbf16>
    %195 = vector.extract_strided_slice %167 {offsets = [0, 0, 16], sizes = [2, 8, 16], strides = [1, 1, 1]} : vector<2x8x32xf32> to vector<2x8x16xf32>
    %196 = arith.truncf %195 : vector<2x8x16xf32> to vector<2x8x16xbf16>
    "tpu.trace_start"() <{level = 10 : i32, message = "bqd,bkd->bqk"}> : () -> ()
    %cst_87 = arith.constant dense<0.000000e+00> : vector<2x8x8xf32>
    %197 = tpu.matmul %192, %194, %cst_87 {dimension_numbers = #tpu.dot_dimension_numbers<[2], [2], [1], [1], [0, 0, 0, 1, 1, 1], [0], [0]>} : vector<2x8x16xbf16>, vector<2x8x16xbf16>, vector<2x8x8xf32> -> vector<2x8x8xf32>
    "tpu.trace_stop"() : () -> ()
    %cst_88 = arith.constant 2.500000e-01 : f32
    %198 = vector.broadcast %cst_88 : f32 to vector<2x8x8xf32>
    %199 = arith.mulf %197, %198 : vector<2x8x8xf32>
    %cst_89 = arith.constant dense<0xFF800000> : vector<2x8xf32>
    %200 = vector.multi_reduction <maximumf>, %199, %cst_89 [2] : vector<2x8x8xf32> to vector<2x8xf32>
    %201 = vector.shape_cast %200 : vector<2x8xf32> to vector<2x8x1xf32>
    %202 = vector.broadcast %201 : vector<2x8x1xf32> to vector<2x8x8xf32>
    %203 = arith.subf %199, %202 : vector<2x8x8xf32>
    %204 = math.exp %203 : vector<2x8x8xf32>
    %cst_90 = arith.constant dense<0.000000e+00> : vector<2x8xf32>
    %205 = vector.multi_reduction <add>, %204, %cst_90 [2] : vector<2x8x8xf32> to vector<2x8xf32>
    %206 = vector.shape_cast %205 : vector<2x8xf32> to vector<2x8x1xf32>
    %207 = tpu.reciprocal %206 {approx = true} : vector<2x8x1xf32> -> vector<2x8x1xf32>
    %208 = vector.broadcast %207 : vector<2x8x1xf32> to vector<2x8x8xf32>
    %209 = arith.mulf %204, %208 : vector<2x8x8xf32>
    %210 = arith.truncf %209 : vector<2x8x8xf32> to vector<2x8x8xbf16>
    "tpu.trace_start"() <{level = 10 : i32, message = "bqk,bkd->bqd"}> : () -> ()
    %cst_91 = arith.constant dense<0.000000e+00> : vector<2x8x16xf32>
    %211 = tpu.matmul %210, %196, %cst_91 {dimension_numbers = #tpu.dot_dimension_numbers<[2], [1], [1], [2], [0, 0, 0, 1, 1, 2], [0], [0]>} : vector<2x8x8xbf16>, vector<2x8x16xbf16>, vector<2x8x16xf32> -> vector<2x8x16xf32>
    "tpu.trace_stop"() : () -> ()
    %212 = tpu.concatenate %190, %211 in 2 : vector<2x8x16xf32>, vector<2x8x16xf32> -> vector<2x8x32xf32>
    %213 = vector.shape_cast %212 : vector<2x8x32xf32> to vector<16x32xf32>
    %214 = arith.truncf %213 : vector<16x32xf32> to vector<16x32xbf16>
    %cst_92 = arith.constant dense<0.000000e+00> : vector<16x32xf32>
    %215 = tpu.matmul %214, %169, %cst_92 {dimension_numbers = #tpu.dot_dimension_numbers<[1], [0], [0], [1], [0, 0, 1, 1], [], []>} : vector<16x32xbf16>, vector<32x32xbf16>, vector<16x32xf32> -> vector<16x32xf32>
    %c1_93 = arith.constant 1 : index
    %c0_94 = arith.constant 0 : index
    %c0_95 = arith.constant 0 : index
    %216 = vector.load %arg9[%c1_93, %c0_94, %c0_95] : memref<2x1x32xf32, #tpu.memory_space<vmem>>, vector<1x1x32xf32>
    %217 = vector.shape_cast %216 : vector<1x1x32xf32> to vector<1x32xf32>
    %218 = vector.broadcast %217 : vector<1x32xf32> to vector<16x32xf32>
    %219 = arith.addf %215, %218 : vector<16x32xf32>
    %220 = arith.addf %153, %219 : vector<16x32xf32>
    %c1_96 = arith.constant 1 : index
    %c0_97 = arith.constant 0 : index
    %c0_98 = arith.constant 0 : index
    %221 = vector.load %arg10[%c1_96, %c0_97, %c0_98] : memref<2x1x32xf32, #tpu.memory_space<vmem>>, vector<1x1x32xf32>
    %222 = vector.shape_cast %221 : vector<1x1x32xf32> to vector<1x32xf32>
    %c1_99 = arith.constant 1 : index
    %c0_100 = arith.constant 0 : index
    %c0_101 = arith.constant 0 : index
    %223 = vector.load %arg11[%c1_99, %c0_100, %c0_101] : memref<2x1x32xf32, #tpu.memory_space<vmem>>, vector<1x1x32xf32>
    %224 = vector.shape_cast %223 : vector<1x1x32xf32> to vector<1x32xf32>
    %cst_102 = arith.constant dense<0.000000e+00> : vector<16xf32>
    %225 = vector.multi_reduction <add>, %220, %cst_102 [1] : vector<16x32xf32> to vector<16xf32>
    %226 = vector.shape_cast %225 : vector<16xf32> to vector<16x1xf32>
    %cst_103 = arith.constant 3.200000e+01 : f32
    %227 = vector.broadcast %cst_103 : f32 to vector<16x1xf32>
    %228 = arith.divf %226, %227 : vector<16x1xf32>
    %229 = vector.broadcast %228 : vector<16x1xf32> to vector<16x32xf32>
    %230 = arith.subf %220, %229 : vector<16x32xf32>
    %231 = arith.mulf %230, %230 : vector<16x32xf32>
    %cst_104 = arith.constant dense<0.000000e+00> : vector<16xf32>
    %232 = vector.multi_reduction <add>, %231, %cst_104 [1] : vector<16x32xf32> to vector<16xf32>
    %233 = vector.shape_cast %232 : vector<16xf32> to vector<16x1xf32>
    %cst_105 = arith.constant 3.200000e+01 : f32
    %234 = vector.broadcast %cst_105 : f32 to vector<16x1xf32>
    %235 = arith.divf %233, %234 : vector<16x1xf32>
    %236 = vector.broadcast %228 : vector<16x1xf32> to vector<16x32xf32>
    %237 = arith.subf %220, %236 : vector<16x32xf32>
    %cst_106 = arith.constant 9.99999974E-6 : f32
    %238 = vector.broadcast %cst_106 : f32 to vector<16x1xf32>
    %239 = arith.addf %235, %238 : vector<16x1xf32>
    %240 = math.rsqrt %239 : vector<16x1xf32>
    %241 = vector.broadcast %240 : vector<16x1xf32> to vector<16x32xf32>
    %242 = arith.mulf %237, %241 : vector<16x32xf32>
    %243 = vector.broadcast %222 : vector<1x32xf32> to vector<16x32xf32>
    %244 = arith.mulf %242, %243 : vector<16x32xf32>
    %245 = vector.broadcast %224 : vector<1x32xf32> to vector<16x32xf32>
    %246 = arith.addf %244, %245 : vector<16x32xf32>
    %c1_107 = arith.constant 1 : index
    %c0_108 = arith.constant 0 : index
    %c0_109 = arith.constant 0 : index
    %247 = vector.load %arg12[%c1_107, %c0_108, %c0_109] : memref<2x32x96xbf16, #tpu.memory_space<vmem>>, vector<1x32x96xbf16>
    %248 = vector.shape_cast %247 : vector<1x32x96xbf16> to vector<32x96xbf16>
    %249 = arith.truncf %246 : vector<16x32xf32> to vector<16x32xbf16>
    %cst_110 = arith.constant dense<0.000000e+00> : vector<16x96xf32>
    %250 = tpu.matmul %249, %248, %cst_110 {dimension_numbers = #tpu.dot_dimension_numbers<[1], [0], [0], [1], [0, 0, 1, 1], [], []>} : vector<16x32xbf16>, vector<32x96xbf16>, vector<16x96xf32> -> vector<16x96xf32>
    %c1_111 = arith.constant 1 : index
    %c0_112 = arith.constant 0 : index
    %c0_113 = arith.constant 0 : index
    %251 = vector.load %arg13[%c1_111, %c0_112, %c0_113] : memref<2x1x96xf32, #tpu.memory_space<vmem>>, vector<1x1x96xf32>
    %252 = vector.shape_cast %251 : vector<1x1x96xf32> to vector<1x96xf32>
    %253 = vector.broadcast %252 : vector<1x96xf32> to vector<16x96xf32>
    %254 = arith.addf %250, %253 : vector<16x96xf32>
    %cst_114 = arith.constant 0.000000e+00 : f32
    %255 = vector.broadcast %cst_114 : f32 to vector<16x96xf32>
    %256 = arith.maximumf %254, %255 : vector<16x96xf32>
    %c1_115 = arith.constant 1 : index
    %c0_116 = arith.constant 0 : index
    %c0_117 = arith.constant 0 : index
    %257 = vector.load %arg14[%c1_115, %c0_116, %c0_117] : memref<2x96x32xbf16, #tpu.memory_space<vmem>>, vector<1x96x32xbf16>
    %258 = vector.shape_cast %257 : vector<1x96x32xbf16> to vector<96x32xbf16>
    %259 = arith.truncf %256 : vector<16x96xf32> to vector<16x96xbf16>
    %cst_118 = arith.constant dense<0.000000e+00> : vector<16x32xf32>
    %260 = tpu.matmul %259, %258, %cst_118 {dimension_numbers = #tpu.dot_dimension_numbers<[1], [0], [0], [1], [0, 0, 1, 1], [], []>} : vector<16x96xbf16>, vector<96x32xbf16>, vector<16x32xf32> -> vector<16x32xf32>
    %c1_119 = arith.constant 1 : index
    %c0_120 = arith.constant 0 : index
    %c0_121 = arith.constant 0 : index
    %261 = vector.load %arg15[%c1_119, %c0_120, %c0_121] : memref<2x1x32xf32, #tpu.memory_space<vmem>>, vector<1x1x32xf32>
    %262 = vector.shape_cast %261 : vector<1x1x32xf32> to vector<1x32xf32>
    %263 = vector.broadcast %262 : vector<1x32xf32> to vector<16x32xf32>
    %264 = arith.addf %260, %263 : vector<16x32xf32>
    %265 = arith.addf %246, %264 : vector<16x32xf32>
    %c1_122 = arith.constant 1 : index
    %c0_123 = arith.constant 0 : index
    %c0_124 = arith.constant 0 : index
    %266 = vector.load %arg16[%c1_122, %c0_123, %c0_124] : memref<2x1x32xf32, #tpu.memory_space<vmem>>, vector<1x1x32xf32>
    %267 = vector.shape_cast %266 : vector<1x1x32xf32> to vector<1x32xf32>
    %c1_125 = arith.constant 1 : index
    %c0_126 = arith.constant 0 : index
    %c0_127 = arith.constant 0 : index
    %268 = vector.load %arg17[%c1_125, %c0_126, %c0_127] : memref<2x1x32xf32, #tpu.memory_space<vmem>>, vector<1x1x32xf32>
    %269 = vector.shape_cast %268 : vector<1x1x32xf32> to vector<1x32xf32>
    %cst_128 = arith.constant dense<0.000000e+00> : vector<16xf32>
    %270 = vector.multi_reduction <add>, %265, %cst_128 [1] : vector<16x32xf32> to vector<16xf32>
    %271 = vector.shape_cast %270 : vector<16xf32> to vector<16x1xf32>
    %cst_129 = arith.constant 3.200000e+01 : f32
    %272 = vector.broadcast %cst_129 : f32 to vector<16x1xf32>
    %273 = arith.divf %271, %272 : vector<16x1xf32>
    %274 = vector.broadcast %273 : vector<16x1xf32> to vector<16x32xf32>
    %275 = arith.subf %265, %274 : vector<16x32xf32>
    %276 = arith.mulf %275, %275 : vector<16x32xf32>
    %cst_130 = arith.constant dense<0.000000e+00> : vector<16xf32>
    %277 = vector.multi_reduction <add>, %276, %cst_130 [1] : vector<16x32xf32> to vector<16xf32>
    %278 = vector.shape_cast %277 : vector<16xf32> to vector<16x1xf32>
    %cst_131 = arith.constant 3.200000e+01 : f32
    %279 = vector.broadcast %cst_131 : f32 to vector<16x1xf32>
    %280 = arith.divf %278, %279 : vector<16x1xf32>
    %281 = vector.broadcast %273 : vector<16x1xf32> to vector<16x32xf32>
    %282 = arith.subf %265, %281 : vector<16x32xf32>
    %cst_132 = arith.constant 9.99999974E-6 : f32
    %283 = vector.broadcast %cst_132 : f32 to vector<16x1xf32>
    %284 = arith.addf %280, %283 : vector<16x1xf32>
    %285 = math.rsqrt %284 : vector<16x1xf32>
    %286 = vector.broadcast %285 : vector<16x1xf32> to vector<16x32xf32>
    %287 = arith.mulf %282, %286 : vector<16x32xf32>
    %288 = vector.broadcast %267 : vector<1x32xf32> to vector<16x32xf32>
    %289 = arith.mulf %287, %288 : vector<16x32xf32>
    %290 = vector.broadcast %269 : vector<1x32xf32> to vector<16x32xf32>
    %291 = arith.addf %289, %290 : vector<16x32xf32>
    %c0_133 = arith.constant 0 : index
    %c0_134 = arith.constant 0 : index
    %292 = vector.load %arg18[%c0_133, %c0_134] : memref<1x32xf32, #tpu.memory_space<vmem>>, vector<1x32xf32>
    %c0_135 = arith.constant 0 : index
    %c0_136 = arith.constant 0 : index
    %293 = vector.load %arg19[%c0_135, %c0_136] : memref<1x32xf32, #tpu.memory_space<vmem>>, vector<1x32xf32>
    %cst_137 = arith.constant dense<0.000000e+00> : vector<16xf32>
    %294 = vector.multi_reduction <add>, %291, %cst_137 [1] : vector<16x32xf32> to vector<16xf32>
    %295 = vector.shape_cast %294 : vector<16xf32> to vector<16x1xf32>
    %cst_138 = arith.constant 3.200000e+01 : f32
    %296 = vector.broadcast %cst_138 : f32 to vector<16x1xf32>
    %297 = arith.divf %295, %296 : vector<16x1xf32>
    %298 = vector.broadcast %297 : vector<16x1xf32> to vector<16x32xf32>
    %299 = arith.subf %291, %298 : vector<16x32xf32>
    %300 = arith.mulf %299, %299 : vector<16x32xf32>
    %cst_139 = arith.constant dense<0.000000e+00> : vector<16xf32>
    %301 = vector.multi_reduction <add>, %300, %cst_139 [1] : vector<16x32xf32> to vector<16xf32>
    %302 = vector.shape_cast %301 : vector<16xf32> to vector<16x1xf32>
    %cst_140 = arith.constant 3.200000e+01 : f32
    %303 = vector.broadcast %cst_140 : f32 to vector<16x1xf32>
    %304 = arith.divf %302, %303 : vector<16x1xf32>
    %305 = vector.broadcast %297 : vector<16x1xf32> to vector<16x32xf32>
    %306 = arith.subf %291, %305 : vector<16x32xf32>
    %cst_141 = arith.constant 9.99999974E-6 : f32
    %307 = vector.broadcast %cst_141 : f32 to vector<16x1xf32>
    %308 = arith.addf %304, %307 : vector<16x1xf32>
    %309 = math.rsqrt %308 : vector<16x1xf32>
    %310 = vector.broadcast %309 : vector<16x1xf32> to vector<16x32xf32>
    %311 = arith.mulf %306, %310 : vector<16x32xf32>
    %312 = vector.broadcast %292 : vector<1x32xf32> to vector<16x32xf32>
    %313 = arith.mulf %311, %312 : vector<16x32xf32>
    %314 = vector.broadcast %293 : vector<1x32xf32> to vector<16x32xf32>
    %315 = arith.addf %313, %314 : vector<16x32xf32>
    %c0_142 = arith.constant 0 : index
    %c0_143 = arith.constant 0 : index
    %316 = vector.load %arg1[%c0_142, %c0_143] : memref<16x32xf32, #tpu.memory_space<vmem>>, vector<16x32xf32>
    %c0_144 = arith.constant 0 : index
    %c0_145 = arith.constant 0 : index
    %c0_146 = arith.constant 0 : index
    %317 = vector.load %arg20[%c0_144, %c0_145, %c0_146] : memref<2x32x96xbf16, #tpu.memory_space<vmem>>, vector<1x32x96xbf16>
    %318 = vector.shape_cast %317 : vector<1x32x96xbf16> to vector<32x96xbf16>
    %319 = arith.truncf %316 : vector<16x32xf32> to vector<16x32xbf16>
    %cst_147 = arith.constant dense<0.000000e+00> : vector<16x96xf32>
    %320 = tpu.matmul %319, %318, %cst_147 {dimension_numbers = #tpu.dot_dimension_numbers<[1], [0], [0], [1], [0, 0, 1, 1], [], []>} : vector<16x32xbf16>, vector<32x96xbf16>, vector<16x96xf32> -> vector<16x96xf32>
    %c0_148 = arith.constant 0 : index
    %c0_149 = arith.constant 0 : index
    %c0_150 = arith.constant 0 : index
    %321 = vector.load %arg21[%c0_148, %c0_149, %c0_150] : memref<2x1x96xf32, #tpu.memory_space<vmem>>, vector<1x1x96xf32>
    %322 = vector.shape_cast %321 : vector<1x1x96xf32> to vector<1x96xf32>
    %323 = vector.broadcast %322 : vector<1x96xf32> to vector<16x96xf32>
    %324 = arith.addf %320, %323 : vector<16x96xf32>
    %325 = vector.extract_strided_slice %324 {offsets = [0, 0], sizes = [16, 32], strides = [1, 1]} : vector<16x96xf32> to vector<16x32xf32>
    %326 = vector.shape_cast %325 : vector<16x32xf32> to vector<2x8x32xf32>
    %327 = vector.extract_strided_slice %324 {offsets = [0, 32], sizes = [16, 32], strides = [1, 1]} : vector<16x96xf32> to vector<16x32xf32>
    %328 = vector.shape_cast %327 : vector<16x32xf32> to vector<2x8x32xf32>
    %329 = vector.extract_strided_slice %324 {offsets = [0, 64], sizes = [16, 32], strides = [1, 1]} : vector<16x96xf32> to vector<16x32xf32>
    %330 = vector.shape_cast %329 : vector<16x32xf32> to vector<2x8x32xf32>
    %c0_151 = arith.constant 0 : index
    %c0_152 = arith.constant 0 : index
    %c0_153 = arith.constant 0 : index
    %331 = vector.load %arg22[%c0_151, %c0_152, %c0_153] : memref<2x32x32xbf16, #tpu.memory_space<vmem>>, vector<1x32x32xbf16>
    %332 = vector.shape_cast %331 : vector<1x32x32xbf16> to vector<32x32xbf16>
    %333 = vector.extract_strided_slice %326 {offsets = [0, 0, 0], sizes = [2, 8, 16], strides = [1, 1, 1]} : vector<2x8x32xf32> to vector<2x8x16xf32>
    %334 = arith.truncf %333 : vector<2x8x16xf32> to vector<2x8x16xbf16>
    %335 = vector.extract_strided_slice %328 {offsets = [0, 0, 0], sizes = [2, 8, 16], strides = [1, 1, 1]} : vector<2x8x32xf32> to vector<2x8x16xf32>
    %336 = arith.truncf %335 : vector<2x8x16xf32> to vector<2x8x16xbf16>
    %337 = vector.extract_strided_slice %330 {offsets = [0, 0, 0], sizes = [2, 8, 16], strides = [1, 1, 1]} : vector<2x8x32xf32> to vector<2x8x16xf32>
    %338 = arith.truncf %337 : vector<2x8x16xf32> to vector<2x8x16xbf16>
    "tpu.trace_start"() <{level = 10 : i32, message = "bqd,bkd->bqk"}> : () -> ()
    %cst_154 = arith.constant dense<0.000000e+00> : vector<2x8x8xf32>
    %339 = tpu.matmul %334, %336, %cst_154 {dimension_numbers = #tpu.dot_dimension_numbers<[2], [2], [1], [1], [0, 0, 0, 1, 1, 1], [0], [0]>} : vector<2x8x16xbf16>, vector<2x8x16xbf16>, vector<2x8x8xf32> -> vector<2x8x8xf32>
    "tpu.trace_stop"() : () -> ()
    %cst_155 = arith.constant 2.500000e-01 : f32
    %340 = vector.broadcast %cst_155 : f32 to vector<2x8x8xf32>
    %341 = arith.mulf %339, %340 : vector<2x8x8xf32>
    %cst_156 = arith.constant dense<0xFF800000> : vector<2x8xf32>
    %342 = vector.multi_reduction <maximumf>, %341, %cst_156 [2] : vector<2x8x8xf32> to vector<2x8xf32>
    %343 = vector.shape_cast %342 : vector<2x8xf32> to vector<2x8x1xf32>
    %344 = vector.broadcast %343 : vector<2x8x1xf32> to vector<2x8x8xf32>
    %345 = arith.subf %341, %344 : vector<2x8x8xf32>
    %346 = math.exp %345 : vector<2x8x8xf32>
    %cst_157 = arith.constant dense<0.000000e+00> : vector<2x8xf32>
    %347 = vector.multi_reduction <add>, %346, %cst_157 [2] : vector<2x8x8xf32> to vector<2x8xf32>
    %348 = vector.shape_cast %347 : vector<2x8xf32> to vector<2x8x1xf32>
    %349 = tpu.reciprocal %348 {approx = true} : vector<2x8x1xf32> -> vector<2x8x1xf32>
    %350 = vector.broadcast %349 : vector<2x8x1xf32> to vector<2x8x8xf32>
    %351 = arith.mulf %346, %350 : vector<2x8x8xf32>
    %352 = arith.truncf %351 : vector<2x8x8xf32> to vector<2x8x8xbf16>
    "tpu.trace_start"() <{level = 10 : i32, message = "bqk,bkd->bqd"}> : () -> ()
    %cst_158 = arith.constant dense<0.000000e+00> : vector<2x8x16xf32>
    %353 = tpu.matmul %352, %338, %cst_158 {dimension_numbers = #tpu.dot_dimension_numbers<[2], [1], [1], [2], [0, 0, 0, 1, 1, 2], [0], [0]>} : vector<2x8x8xbf16>, vector<2x8x16xbf16>, vector<2x8x16xf32> -> vector<2x8x16xf32>
    "tpu.trace_stop"() : () -> ()
    %354 = vector.extract_strided_slice %326 {offsets = [0, 0, 16], sizes = [2, 8, 16], strides = [1, 1, 1]} : vector<2x8x32xf32> to vector<2x8x16xf32>
    %355 = arith.truncf %354 : vector<2x8x16xf32> to vector<2x8x16xbf16>
    %356 = vector.extract_strided_slice %328 {offsets = [0, 0, 16], sizes = [2, 8, 16], strides = [1, 1, 1]} : vector<2x8x32xf32> to vector<2x8x16xf32>
    %357 = arith.truncf %356 : vector<2x8x16xf32> to vector<2x8x16xbf16>
    %358 = vector.extract_strided_slice %330 {offsets = [0, 0, 16], sizes = [2, 8, 16], strides = [1, 1, 1]} : vector<2x8x32xf32> to vector<2x8x16xf32>
    %359 = arith.truncf %358 : vector<2x8x16xf32> to vector<2x8x16xbf16>
    "tpu.trace_start"() <{level = 10 : i32, message = "bqd,bkd->bqk"}> : () -> ()
    %cst_159 = arith.constant dense<0.000000e+00> : vector<2x8x8xf32>
    %360 = tpu.matmul %355, %357, %cst_159 {dimension_numbers = #tpu.dot_dimension_numbers<[2], [2], [1], [1], [0, 0, 0, 1, 1, 1], [0], [0]>} : vector<2x8x16xbf16>, vector<2x8x16xbf16>, vector<2x8x8xf32> -> vector<2x8x8xf32>
    "tpu.trace_stop"() : () -> ()
    %cst_160 = arith.constant 2.500000e-01 : f32
    %361 = vector.broadcast %cst_160 : f32 to vector<2x8x8xf32>
    %362 = arith.mulf %360, %361 : vector<2x8x8xf32>
    %cst_161 = arith.constant dense<0xFF800000> : vector<2x8xf32>
    %363 = vector.multi_reduction <maximumf>, %362, %cst_161 [2] : vector<2x8x8xf32> to vector<2x8xf32>
    %364 = vector.shape_cast %363 : vector<2x8xf32> to vector<2x8x1xf32>
    %365 = vector.broadcast %364 : vector<2x8x1xf32> to vector<2x8x8xf32>
    %366 = arith.subf %362, %365 : vector<2x8x8xf32>
    %367 = math.exp %366 : vector<2x8x8xf32>
    %cst_162 = arith.constant dense<0.000000e+00> : vector<2x8xf32>
    %368 = vector.multi_reduction <add>, %367, %cst_162 [2] : vector<2x8x8xf32> to vector<2x8xf32>
    %369 = vector.shape_cast %368 : vector<2x8xf32> to vector<2x8x1xf32>
    %370 = tpu.reciprocal %369 {approx = true} : vector<2x8x1xf32> -> vector<2x8x1xf32>
    %371 = vector.broadcast %370 : vector<2x8x1xf32> to vector<2x8x8xf32>
    %372 = arith.mulf %367, %371 : vector<2x8x8xf32>
    %373 = arith.truncf %372 : vector<2x8x8xf32> to vector<2x8x8xbf16>
    "tpu.trace_start"() <{level = 10 : i32, message = "bqk,bkd->bqd"}> : () -> ()
    %cst_163 = arith.constant dense<0.000000e+00> : vector<2x8x16xf32>
    %374 = tpu.matmul %373, %359, %cst_163 {dimension_numbers = #tpu.dot_dimension_numbers<[2], [1], [1], [2], [0, 0, 0, 1, 1, 2], [0], [0]>} : vector<2x8x8xbf16>, vector<2x8x16xbf16>, vector<2x8x16xf32> -> vector<2x8x16xf32>
    "tpu.trace_stop"() : () -> ()
    %375 = tpu.concatenate %353, %374 in 2 : vector<2x8x16xf32>, vector<2x8x16xf32> -> vector<2x8x32xf32>
    %376 = vector.shape_cast %375 : vector<2x8x32xf32> to vector<16x32xf32>
    %377 = arith.truncf %376 : vector<16x32xf32> to vector<16x32xbf16>
    %cst_164 = arith.constant dense<0.000000e+00> : vector<16x32xf32>
    %378 = tpu.matmul %377, %332, %cst_164 {dimension_numbers = #tpu.dot_dimension_numbers<[1], [0], [0], [1], [0, 0, 1, 1], [], []>} : vector<16x32xbf16>, vector<32x32xbf16>, vector<16x32xf32> -> vector<16x32xf32>
    %c0_165 = arith.constant 0 : index
    %c0_166 = arith.constant 0 : index
    %c0_167 = arith.constant 0 : index
    %379 = vector.load %arg23[%c0_165, %c0_166, %c0_167] : memref<2x1x32xf32, #tpu.memory_space<vmem>>, vector<1x1x32xf32>
    %380 = vector.shape_cast %379 : vector<1x1x32xf32> to vector<1x32xf32>
    %381 = vector.broadcast %380 : vector<1x32xf32> to vector<16x32xf32>
    %382 = arith.addf %378, %381 : vector<16x32xf32>
    %383 = arith.addf %316, %382 : vector<16x32xf32>
    %c0_168 = arith.constant 0 : index
    %c0_169 = arith.constant 0 : index
    %c0_170 = arith.constant 0 : index
    %384 = vector.load %arg30[%c0_168, %c0_169, %c0_170] : memref<2x1x32xf32, #tpu.memory_space<vmem>>, vector<1x1x32xf32>
    %385 = vector.shape_cast %384 : vector<1x1x32xf32> to vector<1x32xf32>
    %c0_171 = arith.constant 0 : index
    %c0_172 = arith.constant 0 : index
    %c0_173 = arith.constant 0 : index
    %386 = vector.load %arg31[%c0_171, %c0_172, %c0_173] : memref<2x1x32xf32, #tpu.memory_space<vmem>>, vector<1x1x32xf32>
    %387 = vector.shape_cast %386 : vector<1x1x32xf32> to vector<1x32xf32>
    %cst_174 = arith.constant dense<0.000000e+00> : vector<16xf32>
    %388 = vector.multi_reduction <add>, %383, %cst_174 [1] : vector<16x32xf32> to vector<16xf32>
    %389 = vector.shape_cast %388 : vector<16xf32> to vector<16x1xf32>
    %cst_175 = arith.constant 3.200000e+01 : f32
    %390 = vector.broadcast %cst_175 : f32 to vector<16x1xf32>
    %391 = arith.divf %389, %390 : vector<16x1xf32>
    %392 = vector.broadcast %391 : vector<16x1xf32> to vector<16x32xf32>
    %393 = arith.subf %383, %392 : vector<16x32xf32>
    %394 = arith.mulf %393, %393 : vector<16x32xf32>
    %cst_176 = arith.constant dense<0.000000e+00> : vector<16xf32>
    %395 = vector.multi_reduction <add>, %394, %cst_176 [1] : vector<16x32xf32> to vector<16xf32>
    %396 = vector.shape_cast %395 : vector<16xf32> to vector<16x1xf32>
    %cst_177 = arith.constant 3.200000e+01 : f32
    %397 = vector.broadcast %cst_177 : f32 to vector<16x1xf32>
    %398 = arith.divf %396, %397 : vector<16x1xf32>
    %399 = vector.broadcast %391 : vector<16x1xf32> to vector<16x32xf32>
    %400 = arith.subf %383, %399 : vector<16x32xf32>
    %cst_178 = arith.constant 9.99999974E-6 : f32
    %401 = vector.broadcast %cst_178 : f32 to vector<16x1xf32>
    %402 = arith.addf %398, %401 : vector<16x1xf32>
    %403 = math.rsqrt %402 : vector<16x1xf32>
    %404 = vector.broadcast %403 : vector<16x1xf32> to vector<16x32xf32>
    %405 = arith.mulf %400, %404 : vector<16x32xf32>
    %406 = vector.broadcast %385 : vector<1x32xf32> to vector<16x32xf32>
    %407 = arith.mulf %405, %406 : vector<16x32xf32>
    %408 = vector.broadcast %387 : vector<1x32xf32> to vector<16x32xf32>
    %409 = arith.addf %407, %408 : vector<16x32xf32>
    %c0_179 = arith.constant 0 : index
    %c0_180 = arith.constant 0 : index
    %c0_181 = arith.constant 0 : index
    %410 = vector.load %arg24[%c0_179, %c0_180, %c0_181] : memref<2x32x32xbf16, #tpu.memory_space<vmem>>, vector<1x32x32xbf16>
    %411 = vector.shape_cast %410 : vector<1x32x32xbf16> to vector<32x32xbf16>
    %412 = arith.truncf %409 : vector<16x32xf32> to vector<16x32xbf16>
    %cst_182 = arith.constant dense<0.000000e+00> : vector<16x32xf32>
    %413 = tpu.matmul %412, %411, %cst_182 {dimension_numbers = #tpu.dot_dimension_numbers<[1], [0], [0], [1], [0, 0, 1, 1], [], []>} : vector<16x32xbf16>, vector<32x32xbf16>, vector<16x32xf32> -> vector<16x32xf32>
    %c0_183 = arith.constant 0 : index
    %c0_184 = arith.constant 0 : index
    %c0_185 = arith.constant 0 : index
    %414 = vector.load %arg25[%c0_183, %c0_184, %c0_185] : memref<2x1x32xf32, #tpu.memory_space<vmem>>, vector<1x1x32xf32>
    %415 = vector.shape_cast %414 : vector<1x1x32xf32> to vector<1x32xf32>
    %416 = vector.broadcast %415 : vector<1x32xf32> to vector<16x32xf32>
    %417 = arith.addf %413, %416 : vector<16x32xf32>
    %418 = vector.shape_cast %417 : vector<16x32xf32> to vector<2x8x32xf32>
    %c0_186 = arith.constant 0 : index
    %c0_187 = arith.constant 0 : index
    %c0_188 = arith.constant 0 : index
    %419 = vector.load %arg26[%c0_186, %c0_187, %c0_188] : memref<2x32x64xbf16, #tpu.memory_space<vmem>>, vector<1x32x64xbf16>
    %420 = vector.shape_cast %419 : vector<1x32x64xbf16> to vector<32x64xbf16>
    %421 = arith.truncf %315 : vector<16x32xf32> to vector<16x32xbf16>
    %cst_189 = arith.constant dense<0.000000e+00> : vector<16x64xf32>
    %422 = tpu.matmul %421, %420, %cst_189 {dimension_numbers = #tpu.dot_dimension_numbers<[1], [0], [0], [1], [0, 0, 1, 1], [], []>} : vector<16x32xbf16>, vector<32x64xbf16>, vector<16x64xf32> -> vector<16x64xf32>
    %c0_190 = arith.constant 0 : index
    %c0_191 = arith.constant 0 : index
    %c0_192 = arith.constant 0 : index
    %423 = vector.load %arg27[%c0_190, %c0_191, %c0_192] : memref<2x1x64xf32, #tpu.memory_space<vmem>>, vector<1x1x64xf32>
    %424 = vector.shape_cast %423 : vector<1x1x64xf32> to vector<1x64xf32>
    %425 = vector.broadcast %424 : vector<1x64xf32> to vector<16x64xf32>
    %426 = arith.addf %422, %425 : vector<16x64xf32>
    %427 = vector.extract_strided_slice %426 {offsets = [0, 0], sizes = [16, 32], strides = [1, 1]} : vector<16x64xf32> to vector<16x32xf32>
    %428 = vector.shape_cast %427 : vector<16x32xf32> to vector<2x8x32xf32>
    %429 = vector.extract_strided_slice %426 {offsets = [0, 32], sizes = [16, 32], strides = [1, 1]} : vector<16x64xf32> to vector<16x32xf32>
    %430 = vector.shape_cast %429 : vector<16x32xf32> to vector<2x8x32xf32>
    %c0_193 = arith.constant 0 : index
    %c0_194 = arith.constant 0 : index
    %c0_195 = arith.constant 0 : index
    %431 = vector.load %arg28[%c0_193, %c0_194, %c0_195] : memref<2x32x32xbf16, #tpu.memory_space<vmem>>, vector<1x32x32xbf16>
    %432 = vector.shape_cast %431 : vector<1x32x32xbf16> to vector<32x32xbf16>
    %433 = vector.extract_strided_slice %418 {offsets = [0, 0, 0], sizes = [2, 8, 16], strides = [1, 1, 1]} : vector<2x8x32xf32> to vector<2x8x16xf32>
    %434 = arith.truncf %433 : vector<2x8x16xf32> to vector<2x8x16xbf16>
    %435 = vector.extract_strided_slice %428 {offsets = [0, 0, 0], sizes = [2, 8, 16], strides = [1, 1, 1]} : vector<2x8x32xf32> to vector<2x8x16xf32>
    %436 = arith.truncf %435 : vector<2x8x16xf32> to vector<2x8x16xbf16>
    %437 = vector.extract_strided_slice %430 {offsets = [0, 0, 0], sizes = [2, 8, 16], strides = [1, 1, 1]} : vector<2x8x32xf32> to vector<2x8x16xf32>
    %438 = arith.truncf %437 : vector<2x8x16xf32> to vector<2x8x16xbf16>
    "tpu.trace_start"() <{level = 10 : i32, message = "bqd,bkd->bqk"}> : () -> ()
    %cst_196 = arith.constant dense<0.000000e+00> : vector<2x8x8xf32>
    %439 = tpu.matmul %434, %436, %cst_196 {dimension_numbers = #tpu.dot_dimension_numbers<[2], [2], [1], [1], [0, 0, 0, 1, 1, 1], [0], [0]>} : vector<2x8x16xbf16>, vector<2x8x16xbf16>, vector<2x8x8xf32> -> vector<2x8x8xf32>
    "tpu.trace_stop"() : () -> ()
    %cst_197 = arith.constant 2.500000e-01 : f32
    %440 = vector.broadcast %cst_197 : f32 to vector<2x8x8xf32>
    %441 = arith.mulf %439, %440 : vector<2x8x8xf32>
    %cst_198 = arith.constant dense<0xFF800000> : vector<2x8xf32>
    %442 = vector.multi_reduction <maximumf>, %441, %cst_198 [2] : vector<2x8x8xf32> to vector<2x8xf32>
    %443 = vector.shape_cast %442 : vector<2x8xf32> to vector<2x8x1xf32>
    %444 = vector.broadcast %443 : vector<2x8x1xf32> to vector<2x8x8xf32>
    %445 = arith.subf %441, %444 : vector<2x8x8xf32>
    %446 = math.exp %445 : vector<2x8x8xf32>
    %cst_199 = arith.constant dense<0.000000e+00> : vector<2x8xf32>
    %447 = vector.multi_reduction <add>, %446, %cst_199 [2] : vector<2x8x8xf32> to vector<2x8xf32>
    %448 = vector.shape_cast %447 : vector<2x8xf32> to vector<2x8x1xf32>
    %449 = tpu.reciprocal %448 {approx = true} : vector<2x8x1xf32> -> vector<2x8x1xf32>
    %450 = vector.broadcast %449 : vector<2x8x1xf32> to vector<2x8x8xf32>
    %451 = arith.mulf %446, %450 : vector<2x8x8xf32>
    %452 = arith.truncf %451 : vector<2x8x8xf32> to vector<2x8x8xbf16>
    "tpu.trace_start"() <{level = 10 : i32, message = "bqk,bkd->bqd"}> : () -> ()
    %cst_200 = arith.constant dense<0.000000e+00> : vector<2x8x16xf32>
    %453 = tpu.matmul %452, %438, %cst_200 {dimension_numbers = #tpu.dot_dimension_numbers<[2], [1], [1], [2], [0, 0, 0, 1, 1, 2], [0], [0]>} : vector<2x8x8xbf16>, vector<2x8x16xbf16>, vector<2x8x16xf32> -> vector<2x8x16xf32>
    "tpu.trace_stop"() : () -> ()
    %454 = vector.extract_strided_slice %418 {offsets = [0, 0, 16], sizes = [2, 8, 16], strides = [1, 1, 1]} : vector<2x8x32xf32> to vector<2x8x16xf32>
    %455 = arith.truncf %454 : vector<2x8x16xf32> to vector<2x8x16xbf16>
    %456 = vector.extract_strided_slice %428 {offsets = [0, 0, 16], sizes = [2, 8, 16], strides = [1, 1, 1]} : vector<2x8x32xf32> to vector<2x8x16xf32>
    %457 = arith.truncf %456 : vector<2x8x16xf32> to vector<2x8x16xbf16>
    %458 = vector.extract_strided_slice %430 {offsets = [0, 0, 16], sizes = [2, 8, 16], strides = [1, 1, 1]} : vector<2x8x32xf32> to vector<2x8x16xf32>
    %459 = arith.truncf %458 : vector<2x8x16xf32> to vector<2x8x16xbf16>
    "tpu.trace_start"() <{level = 10 : i32, message = "bqd,bkd->bqk"}> : () -> ()
    %cst_201 = arith.constant dense<0.000000e+00> : vector<2x8x8xf32>
    %460 = tpu.matmul %455, %457, %cst_201 {dimension_numbers = #tpu.dot_dimension_numbers<[2], [2], [1], [1], [0, 0, 0, 1, 1, 1], [0], [0]>} : vector<2x8x16xbf16>, vector<2x8x16xbf16>, vector<2x8x8xf32> -> vector<2x8x8xf32>
    "tpu.trace_stop"() : () -> ()
    %cst_202 = arith.constant 2.500000e-01 : f32
    %461 = vector.broadcast %cst_202 : f32 to vector<2x8x8xf32>
    %462 = arith.mulf %460, %461 : vector<2x8x8xf32>
    %cst_203 = arith.constant dense<0xFF800000> : vector<2x8xf32>
    %463 = vector.multi_reduction <maximumf>, %462, %cst_203 [2] : vector<2x8x8xf32> to vector<2x8xf32>
    %464 = vector.shape_cast %463 : vector<2x8xf32> to vector<2x8x1xf32>
    %465 = vector.broadcast %464 : vector<2x8x1xf32> to vector<2x8x8xf32>
    %466 = arith.subf %462, %465 : vector<2x8x8xf32>
    %467 = math.exp %466 : vector<2x8x8xf32>
    %cst_204 = arith.constant dense<0.000000e+00> : vector<2x8xf32>
    %468 = vector.multi_reduction <add>, %467, %cst_204 [2] : vector<2x8x8xf32> to vector<2x8xf32>
    %469 = vector.shape_cast %468 : vector<2x8xf32> to vector<2x8x1xf32>
    %470 = tpu.reciprocal %469 {approx = true} : vector<2x8x1xf32> -> vector<2x8x1xf32>
    %471 = vector.broadcast %470 : vector<2x8x1xf32> to vector<2x8x8xf32>
    %472 = arith.mulf %467, %471 : vector<2x8x8xf32>
    %473 = arith.truncf %472 : vector<2x8x8xf32> to vector<2x8x8xbf16>
    "tpu.trace_start"() <{level = 10 : i32, message = "bqk,bkd->bqd"}> : () -> ()
    %cst_205 = arith.constant dense<0.000000e+00> : vector<2x8x16xf32>
    %474 = tpu.matmul %473, %459, %cst_205 {dimension_numbers = #tpu.dot_dimension_numbers<[2], [1], [1], [2], [0, 0, 0, 1, 1, 2], [0], [0]>} : vector<2x8x8xbf16>, vector<2x8x16xbf16>, vector<2x8x16xf32> -> vector<2x8x16xf32>
    "tpu.trace_stop"() : () -> ()
    %475 = tpu.concatenate %453, %474 in 2 : vector<2x8x16xf32>, vector<2x8x16xf32> -> vector<2x8x32xf32>
    %476 = vector.shape_cast %475 : vector<2x8x32xf32> to vector<16x32xf32>
    %477 = arith.truncf %476 : vector<16x32xf32> to vector<16x32xbf16>
    %cst_206 = arith.constant dense<0.000000e+00> : vector<16x32xf32>
    %478 = tpu.matmul %477, %432, %cst_206 {dimension_numbers = #tpu.dot_dimension_numbers<[1], [0], [0], [1], [0, 0, 1, 1], [], []>} : vector<16x32xbf16>, vector<32x32xbf16>, vector<16x32xf32> -> vector<16x32xf32>
    %c0_207 = arith.constant 0 : index
    %c0_208 = arith.constant 0 : index
    %c0_209 = arith.constant 0 : index
    %479 = vector.load %arg29[%c0_207, %c0_208, %c0_209] : memref<2x1x32xf32, #tpu.memory_space<vmem>>, vector<1x1x32xf32>
    %480 = vector.shape_cast %479 : vector<1x1x32xf32> to vector<1x32xf32>
    %481 = vector.broadcast %480 : vector<1x32xf32> to vector<16x32xf32>
    %482 = arith.addf %478, %481 : vector<16x32xf32>
    %483 = arith.addf %409, %482 : vector<16x32xf32>
    %c0_210 = arith.constant 0 : index
    %c0_211 = arith.constant 0 : index
    %c0_212 = arith.constant 0 : index
    %484 = vector.load %arg32[%c0_210, %c0_211, %c0_212] : memref<2x1x32xf32, #tpu.memory_space<vmem>>, vector<1x1x32xf32>
    %485 = vector.shape_cast %484 : vector<1x1x32xf32> to vector<1x32xf32>
    %c0_213 = arith.constant 0 : index
    %c0_214 = arith.constant 0 : index
    %c0_215 = arith.constant 0 : index
    %486 = vector.load %arg33[%c0_213, %c0_214, %c0_215] : memref<2x1x32xf32, #tpu.memory_space<vmem>>, vector<1x1x32xf32>
    %487 = vector.shape_cast %486 : vector<1x1x32xf32> to vector<1x32xf32>
    %cst_216 = arith.constant dense<0.000000e+00> : vector<16xf32>
    %488 = vector.multi_reduction <add>, %483, %cst_216 [1] : vector<16x32xf32> to vector<16xf32>
    %489 = vector.shape_cast %488 : vector<16xf32> to vector<16x1xf32>
    %cst_217 = arith.constant 3.200000e+01 : f32
    %490 = vector.broadcast %cst_217 : f32 to vector<16x1xf32>
    %491 = arith.divf %489, %490 : vector<16x1xf32>
    %492 = vector.broadcast %491 : vector<16x1xf32> to vector<16x32xf32>
    %493 = arith.subf %483, %492 : vector<16x32xf32>
    %494 = arith.mulf %493, %493 : vector<16x32xf32>
    %cst_218 = arith.constant dense<0.000000e+00> : vector<16xf32>
    %495 = vector.multi_reduction <add>, %494, %cst_218 [1] : vector<16x32xf32> to vector<16xf32>
    %496 = vector.shape_cast %495 : vector<16xf32> to vector<16x1xf32>
    %cst_219 = arith.constant 3.200000e+01 : f32
    %497 = vector.broadcast %cst_219 : f32 to vector<16x1xf32>
    %498 = arith.divf %496, %497 : vector<16x1xf32>
    %499 = vector.broadcast %491 : vector<16x1xf32> to vector<16x32xf32>
    %500 = arith.subf %483, %499 : vector<16x32xf32>
    %cst_220 = arith.constant 9.99999974E-6 : f32
    %501 = vector.broadcast %cst_220 : f32 to vector<16x1xf32>
    %502 = arith.addf %498, %501 : vector<16x1xf32>
    %503 = math.rsqrt %502 : vector<16x1xf32>
    %504 = vector.broadcast %503 : vector<16x1xf32> to vector<16x32xf32>
    %505 = arith.mulf %500, %504 : vector<16x32xf32>
    %506 = vector.broadcast %485 : vector<1x32xf32> to vector<16x32xf32>
    %507 = arith.mulf %505, %506 : vector<16x32xf32>
    %508 = vector.broadcast %487 : vector<1x32xf32> to vector<16x32xf32>
    %509 = arith.addf %507, %508 : vector<16x32xf32>
    %c0_221 = arith.constant 0 : index
    %c0_222 = arith.constant 0 : index
    %c0_223 = arith.constant 0 : index
    %510 = vector.load %arg36[%c0_221, %c0_222, %c0_223] : memref<2x32x96xbf16, #tpu.memory_space<vmem>>, vector<1x32x96xbf16>
    %511 = vector.shape_cast %510 : vector<1x32x96xbf16> to vector<32x96xbf16>
    %512 = arith.truncf %509 : vector<16x32xf32> to vector<16x32xbf16>
    %cst_224 = arith.constant dense<0.000000e+00> : vector<16x96xf32>
    %513 = tpu.matmul %512, %511, %cst_224 {dimension_numbers = #tpu.dot_dimension_numbers<[1], [0], [0], [1], [0, 0, 1, 1], [], []>} : vector<16x32xbf16>, vector<32x96xbf16>, vector<16x96xf32> -> vector<16x96xf32>
    %c0_225 = arith.constant 0 : index
    %c0_226 = arith.constant 0 : index
    %c0_227 = arith.constant 0 : index
    %514 = vector.load %arg37[%c0_225, %c0_226, %c0_227] : memref<2x1x96xf32, #tpu.memory_space<vmem>>, vector<1x1x96xf32>
    %515 = vector.shape_cast %514 : vector<1x1x96xf32> to vector<1x96xf32>
    %516 = vector.broadcast %515 : vector<1x96xf32> to vector<16x96xf32>
    %517 = arith.addf %513, %516 : vector<16x96xf32>
    %cst_228 = arith.constant 0.000000e+00 : f32
    %518 = vector.broadcast %cst_228 : f32 to vector<16x96xf32>
    %519 = arith.maximumf %517, %518 : vector<16x96xf32>
    %c0_229 = arith.constant 0 : index
    %c0_230 = arith.constant 0 : index
    %c0_231 = arith.constant 0 : index
    %520 = vector.load %arg38[%c0_229, %c0_230, %c0_231] : memref<2x96x32xbf16, #tpu.memory_space<vmem>>, vector<1x96x32xbf16>
    %521 = vector.shape_cast %520 : vector<1x96x32xbf16> to vector<96x32xbf16>
    %522 = arith.truncf %519 : vector<16x96xf32> to vector<16x96xbf16>
    %cst_232 = arith.constant dense<0.000000e+00> : vector<16x32xf32>
    %523 = tpu.matmul %522, %521, %cst_232 {dimension_numbers = #tpu.dot_dimension_numbers<[1], [0], [0], [1], [0, 0, 1, 1], [], []>} : vector<16x96xbf16>, vector<96x32xbf16>, vector<16x32xf32> -> vector<16x32xf32>
    %c0_233 = arith.constant 0 : index
    %c0_234 = arith.constant 0 : index
    %c0_235 = arith.constant 0 : index
    %524 = vector.load %arg39[%c0_233, %c0_234, %c0_235] : memref<2x1x32xf32, #tpu.memory_space<vmem>>, vector<1x1x32xf32>
    %525 = vector.shape_cast %524 : vector<1x1x32xf32> to vector<1x32xf32>
    %526 = vector.broadcast %525 : vector<1x32xf32> to vector<16x32xf32>
    %527 = arith.addf %523, %526 : vector<16x32xf32>
    %528 = arith.addf %509, %527 : vector<16x32xf32>
    %c0_236 = arith.constant 0 : index
    %c0_237 = arith.constant 0 : index
    %c0_238 = arith.constant 0 : index
    %529 = vector.load %arg34[%c0_236, %c0_237, %c0_238] : memref<2x1x32xf32, #tpu.memory_space<vmem>>, vector<1x1x32xf32>
    %530 = vector.shape_cast %529 : vector<1x1x32xf32> to vector<1x32xf32>
    %c0_239 = arith.constant 0 : index
    %c0_240 = arith.constant 0 : index
    %c0_241 = arith.constant 0 : index
    %531 = vector.load %arg35[%c0_239, %c0_240, %c0_241] : memref<2x1x32xf32, #tpu.memory_space<vmem>>, vector<1x1x32xf32>
    %532 = vector.shape_cast %531 : vector<1x1x32xf32> to vector<1x32xf32>
    %cst_242 = arith.constant dense<0.000000e+00> : vector<16xf32>
    %533 = vector.multi_reduction <add>, %528, %cst_242 [1] : vector<16x32xf32> to vector<16xf32>
    %534 = vector.shape_cast %533 : vector<16xf32> to vector<16x1xf32>
    %cst_243 = arith.constant 3.200000e+01 : f32
    %535 = vector.broadcast %cst_243 : f32 to vector<16x1xf32>
    %536 = arith.divf %534, %535 : vector<16x1xf32>
    %537 = vector.broadcast %536 : vector<16x1xf32> to vector<16x32xf32>
    %538 = arith.subf %528, %537 : vector<16x32xf32>
    %539 = arith.mulf %538, %538 : vector<16x32xf32>
    %cst_244 = arith.constant dense<0.000000e+00> : vector<16xf32>
    %540 = vector.multi_reduction <add>, %539, %cst_244 [1] : vector<16x32xf32> to vector<16xf32>
    %541 = vector.shape_cast %540 : vector<16xf32> to vector<16x1xf32>
    %cst_245 = arith.constant 3.200000e+01 : f32
    %542 = vector.broadcast %cst_245 : f32 to vector<16x1xf32>
    %543 = arith.divf %541, %542 : vector<16x1xf32>
    %544 = vector.broadcast %536 : vector<16x1xf32> to vector<16x32xf32>
    %545 = arith.subf %528, %544 : vector<16x32xf32>
    %cst_246 = arith.constant 9.99999974E-6 : f32
    %546 = vector.broadcast %cst_246 : f32 to vector<16x1xf32>
    %547 = arith.addf %543, %546 : vector<16x1xf32>
    %548 = math.rsqrt %547 : vector<16x1xf32>
    %549 = vector.broadcast %548 : vector<16x1xf32> to vector<16x32xf32>
    %550 = arith.mulf %545, %549 : vector<16x32xf32>
    %551 = vector.broadcast %530 : vector<1x32xf32> to vector<16x32xf32>
    %552 = arith.mulf %550, %551 : vector<16x32xf32>
    %553 = vector.broadcast %532 : vector<1x32xf32> to vector<16x32xf32>
    %554 = arith.addf %552, %553 : vector<16x32xf32>
    %c1_247 = arith.constant 1 : index
    %c0_248 = arith.constant 0 : index
    %c0_249 = arith.constant 0 : index
    %555 = vector.load %arg20[%c1_247, %c0_248, %c0_249] : memref<2x32x96xbf16, #tpu.memory_space<vmem>>, vector<1x32x96xbf16>
    %556 = vector.shape_cast %555 : vector<1x32x96xbf16> to vector<32x96xbf16>
    %557 = arith.truncf %554 : vector<16x32xf32> to vector<16x32xbf16>
    %cst_250 = arith.constant dense<0.000000e+00> : vector<16x96xf32>
    %558 = tpu.matmul %557, %556, %cst_250 {dimension_numbers = #tpu.dot_dimension_numbers<[1], [0], [0], [1], [0, 0, 1, 1], [], []>} : vector<16x32xbf16>, vector<32x96xbf16>, vector<16x96xf32> -> vector<16x96xf32>
    %c1_251 = arith.constant 1 : index
    %c0_252 = arith.constant 0 : index
    %c0_253 = arith.constant 0 : index
    %559 = vector.load %arg21[%c1_251, %c0_252, %c0_253] : memref<2x1x96xf32, #tpu.memory_space<vmem>>, vector<1x1x96xf32>
    %560 = vector.shape_cast %559 : vector<1x1x96xf32> to vector<1x96xf32>
    %561 = vector.broadcast %560 : vector<1x96xf32> to vector<16x96xf32>
    %562 = arith.addf %558, %561 : vector<16x96xf32>
    %563 = vector.extract_strided_slice %562 {offsets = [0, 0], sizes = [16, 32], strides = [1, 1]} : vector<16x96xf32> to vector<16x32xf32>
    %564 = vector.shape_cast %563 : vector<16x32xf32> to vector<2x8x32xf32>
    %565 = vector.extract_strided_slice %562 {offsets = [0, 32], sizes = [16, 32], strides = [1, 1]} : vector<16x96xf32> to vector<16x32xf32>
    %566 = vector.shape_cast %565 : vector<16x32xf32> to vector<2x8x32xf32>
    %567 = vector.extract_strided_slice %562 {offsets = [0, 64], sizes = [16, 32], strides = [1, 1]} : vector<16x96xf32> to vector<16x32xf32>
    %568 = vector.shape_cast %567 : vector<16x32xf32> to vector<2x8x32xf32>
    %c1_254 = arith.constant 1 : index
    %c0_255 = arith.constant 0 : index
    %c0_256 = arith.constant 0 : index
    %569 = vector.load %arg22[%c1_254, %c0_255, %c0_256] : memref<2x32x32xbf16, #tpu.memory_space<vmem>>, vector<1x32x32xbf16>
    %570 = vector.shape_cast %569 : vector<1x32x32xbf16> to vector<32x32xbf16>
    %571 = vector.extract_strided_slice %564 {offsets = [0, 0, 0], sizes = [2, 8, 16], strides = [1, 1, 1]} : vector<2x8x32xf32> to vector<2x8x16xf32>
    %572 = arith.truncf %571 : vector<2x8x16xf32> to vector<2x8x16xbf16>
    %573 = vector.extract_strided_slice %566 {offsets = [0, 0, 0], sizes = [2, 8, 16], strides = [1, 1, 1]} : vector<2x8x32xf32> to vector<2x8x16xf32>
    %574 = arith.truncf %573 : vector<2x8x16xf32> to vector<2x8x16xbf16>
    %575 = vector.extract_strided_slice %568 {offsets = [0, 0, 0], sizes = [2, 8, 16], strides = [1, 1, 1]} : vector<2x8x32xf32> to vector<2x8x16xf32>
    %576 = arith.truncf %575 : vector<2x8x16xf32> to vector<2x8x16xbf16>
    "tpu.trace_start"() <{level = 10 : i32, message = "bqd,bkd->bqk"}> : () -> ()
    %cst_257 = arith.constant dense<0.000000e+00> : vector<2x8x8xf32>
    %577 = tpu.matmul %572, %574, %cst_257 {dimension_numbers = #tpu.dot_dimension_numbers<[2], [2], [1], [1], [0, 0, 0, 1, 1, 1], [0], [0]>} : vector<2x8x16xbf16>, vector<2x8x16xbf16>, vector<2x8x8xf32> -> vector<2x8x8xf32>
    "tpu.trace_stop"() : () -> ()
    %cst_258 = arith.constant 2.500000e-01 : f32
    %578 = vector.broadcast %cst_258 : f32 to vector<2x8x8xf32>
    %579 = arith.mulf %577, %578 : vector<2x8x8xf32>
    %cst_259 = arith.constant dense<0xFF800000> : vector<2x8xf32>
    %580 = vector.multi_reduction <maximumf>, %579, %cst_259 [2] : vector<2x8x8xf32> to vector<2x8xf32>
    %581 = vector.shape_cast %580 : vector<2x8xf32> to vector<2x8x1xf32>
    %582 = vector.broadcast %581 : vector<2x8x1xf32> to vector<2x8x8xf32>
    %583 = arith.subf %579, %582 : vector<2x8x8xf32>
    %584 = math.exp %583 : vector<2x8x8xf32>
    %cst_260 = arith.constant dense<0.000000e+00> : vector<2x8xf32>
    %585 = vector.multi_reduction <add>, %584, %cst_260 [2] : vector<2x8x8xf32> to vector<2x8xf32>
    %586 = vector.shape_cast %585 : vector<2x8xf32> to vector<2x8x1xf32>
    %587 = tpu.reciprocal %586 {approx = true} : vector<2x8x1xf32> -> vector<2x8x1xf32>
    %588 = vector.broadcast %587 : vector<2x8x1xf32> to vector<2x8x8xf32>
    %589 = arith.mulf %584, %588 : vector<2x8x8xf32>
    %590 = arith.truncf %589 : vector<2x8x8xf32> to vector<2x8x8xbf16>
    "tpu.trace_start"() <{level = 10 : i32, message = "bqk,bkd->bqd"}> : () -> ()
    %cst_261 = arith.constant dense<0.000000e+00> : vector<2x8x16xf32>
    %591 = tpu.matmul %590, %576, %cst_261 {dimension_numbers = #tpu.dot_dimension_numbers<[2], [1], [1], [2], [0, 0, 0, 1, 1, 2], [0], [0]>} : vector<2x8x8xbf16>, vector<2x8x16xbf16>, vector<2x8x16xf32> -> vector<2x8x16xf32>
    "tpu.trace_stop"() : () -> ()
    %592 = vector.extract_strided_slice %564 {offsets = [0, 0, 16], sizes = [2, 8, 16], strides = [1, 1, 1]} : vector<2x8x32xf32> to vector<2x8x16xf32>
    %593 = arith.truncf %592 : vector<2x8x16xf32> to vector<2x8x16xbf16>
    %594 = vector.extract_strided_slice %566 {offsets = [0, 0, 16], sizes = [2, 8, 16], strides = [1, 1, 1]} : vector<2x8x32xf32> to vector<2x8x16xf32>
    %595 = arith.truncf %594 : vector<2x8x16xf32> to vector<2x8x16xbf16>
    %596 = vector.extract_strided_slice %568 {offsets = [0, 0, 16], sizes = [2, 8, 16], strides = [1, 1, 1]} : vector<2x8x32xf32> to vector<2x8x16xf32>
    %597 = arith.truncf %596 : vector<2x8x16xf32> to vector<2x8x16xbf16>
    "tpu.trace_start"() <{level = 10 : i32, message = "bqd,bkd->bqk"}> : () -> ()
    %cst_262 = arith.constant dense<0.000000e+00> : vector<2x8x8xf32>
    %598 = tpu.matmul %593, %595, %cst_262 {dimension_numbers = #tpu.dot_dimension_numbers<[2], [2], [1], [1], [0, 0, 0, 1, 1, 1], [0], [0]>} : vector<2x8x16xbf16>, vector<2x8x16xbf16>, vector<2x8x8xf32> -> vector<2x8x8xf32>
    "tpu.trace_stop"() : () -> ()
    %cst_263 = arith.constant 2.500000e-01 : f32
    %599 = vector.broadcast %cst_263 : f32 to vector<2x8x8xf32>
    %600 = arith.mulf %598, %599 : vector<2x8x8xf32>
    %cst_264 = arith.constant dense<0xFF800000> : vector<2x8xf32>
    %601 = vector.multi_reduction <maximumf>, %600, %cst_264 [2] : vector<2x8x8xf32> to vector<2x8xf32>
    %602 = vector.shape_cast %601 : vector<2x8xf32> to vector<2x8x1xf32>
    %603 = vector.broadcast %602 : vector<2x8x1xf32> to vector<2x8x8xf32>
    %604 = arith.subf %600, %603 : vector<2x8x8xf32>
    %605 = math.exp %604 : vector<2x8x8xf32>
    %cst_265 = arith.constant dense<0.000000e+00> : vector<2x8xf32>
    %606 = vector.multi_reduction <add>, %605, %cst_265 [2] : vector<2x8x8xf32> to vector<2x8xf32>
    %607 = vector.shape_cast %606 : vector<2x8xf32> to vector<2x8x1xf32>
    %608 = tpu.reciprocal %607 {approx = true} : vector<2x8x1xf32> -> vector<2x8x1xf32>
    %609 = vector.broadcast %608 : vector<2x8x1xf32> to vector<2x8x8xf32>
    %610 = arith.mulf %605, %609 : vector<2x8x8xf32>
    %611 = arith.truncf %610 : vector<2x8x8xf32> to vector<2x8x8xbf16>
    "tpu.trace_start"() <{level = 10 : i32, message = "bqk,bkd->bqd"}> : () -> ()
    %cst_266 = arith.constant dense<0.000000e+00> : vector<2x8x16xf32>
    %612 = tpu.matmul %611, %597, %cst_266 {dimension_numbers = #tpu.dot_dimension_numbers<[2], [1], [1], [2], [0, 0, 0, 1, 1, 2], [0], [0]>} : vector<2x8x8xbf16>, vector<2x8x16xbf16>, vector<2x8x16xf32> -> vector<2x8x16xf32>
    "tpu.trace_stop"() : () -> ()
    %613 = tpu.concatenate %591, %612 in 2 : vector<2x8x16xf32>, vector<2x8x16xf32> -> vector<2x8x32xf32>
    %614 = vector.shape_cast %613 : vector<2x8x32xf32> to vector<16x32xf32>
    %615 = arith.truncf %614 : vector<16x32xf32> to vector<16x32xbf16>
    %cst_267 = arith.constant dense<0.000000e+00> : vector<16x32xf32>
    %616 = tpu.matmul %615, %570, %cst_267 {dimension_numbers = #tpu.dot_dimension_numbers<[1], [0], [0], [1], [0, 0, 1, 1], [], []>} : vector<16x32xbf16>, vector<32x32xbf16>, vector<16x32xf32> -> vector<16x32xf32>
    %c1_268 = arith.constant 1 : index
    %c0_269 = arith.constant 0 : index
    %c0_270 = arith.constant 0 : index
    %617 = vector.load %arg23[%c1_268, %c0_269, %c0_270] : memref<2x1x32xf32, #tpu.memory_space<vmem>>, vector<1x1x32xf32>
    %618 = vector.shape_cast %617 : vector<1x1x32xf32> to vector<1x32xf32>
    %619 = vector.broadcast %618 : vector<1x32xf32> to vector<16x32xf32>
    %620 = arith.addf %616, %619 : vector<16x32xf32>
    %621 = arith.addf %554, %620 : vector<16x32xf32>
    %c1_271 = arith.constant 1 : index
    %c0_272 = arith.constant 0 : index
    %c0_273 = arith.constant 0 : index
    %622 = vector.load %arg30[%c1_271, %c0_272, %c0_273] : memref<2x1x32xf32, #tpu.memory_space<vmem>>, vector<1x1x32xf32>
    %623 = vector.shape_cast %622 : vector<1x1x32xf32> to vector<1x32xf32>
    %c1_274 = arith.constant 1 : index
    %c0_275 = arith.constant 0 : index
    %c0_276 = arith.constant 0 : index
    %624 = vector.load %arg31[%c1_274, %c0_275, %c0_276] : memref<2x1x32xf32, #tpu.memory_space<vmem>>, vector<1x1x32xf32>
    %625 = vector.shape_cast %624 : vector<1x1x32xf32> to vector<1x32xf32>
    %cst_277 = arith.constant dense<0.000000e+00> : vector<16xf32>
    %626 = vector.multi_reduction <add>, %621, %cst_277 [1] : vector<16x32xf32> to vector<16xf32>
    %627 = vector.shape_cast %626 : vector<16xf32> to vector<16x1xf32>
    %cst_278 = arith.constant 3.200000e+01 : f32
    %628 = vector.broadcast %cst_278 : f32 to vector<16x1xf32>
    %629 = arith.divf %627, %628 : vector<16x1xf32>
    %630 = vector.broadcast %629 : vector<16x1xf32> to vector<16x32xf32>
    %631 = arith.subf %621, %630 : vector<16x32xf32>
    %632 = arith.mulf %631, %631 : vector<16x32xf32>
    %cst_279 = arith.constant dense<0.000000e+00> : vector<16xf32>
    %633 = vector.multi_reduction <add>, %632, %cst_279 [1] : vector<16x32xf32> to vector<16xf32>
    %634 = vector.shape_cast %633 : vector<16xf32> to vector<16x1xf32>
    %cst_280 = arith.constant 3.200000e+01 : f32
    %635 = vector.broadcast %cst_280 : f32 to vector<16x1xf32>
    %636 = arith.divf %634, %635 : vector<16x1xf32>
    %637 = vector.broadcast %629 : vector<16x1xf32> to vector<16x32xf32>
    %638 = arith.subf %621, %637 : vector<16x32xf32>
    %cst_281 = arith.constant 9.99999974E-6 : f32
    %639 = vector.broadcast %cst_281 : f32 to vector<16x1xf32>
    %640 = arith.addf %636, %639 : vector<16x1xf32>
    %641 = math.rsqrt %640 : vector<16x1xf32>
    %642 = vector.broadcast %641 : vector<16x1xf32> to vector<16x32xf32>
    %643 = arith.mulf %638, %642 : vector<16x32xf32>
    %644 = vector.broadcast %623 : vector<1x32xf32> to vector<16x32xf32>
    %645 = arith.mulf %643, %644 : vector<16x32xf32>
    %646 = vector.broadcast %625 : vector<1x32xf32> to vector<16x32xf32>
    %647 = arith.addf %645, %646 : vector<16x32xf32>
    %c1_282 = arith.constant 1 : index
    %c0_283 = arith.constant 0 : index
    %c0_284 = arith.constant 0 : index
    %648 = vector.load %arg24[%c1_282, %c0_283, %c0_284] : memref<2x32x32xbf16, #tpu.memory_space<vmem>>, vector<1x32x32xbf16>
    %649 = vector.shape_cast %648 : vector<1x32x32xbf16> to vector<32x32xbf16>
    %650 = arith.truncf %647 : vector<16x32xf32> to vector<16x32xbf16>
    %cst_285 = arith.constant dense<0.000000e+00> : vector<16x32xf32>
    %651 = tpu.matmul %650, %649, %cst_285 {dimension_numbers = #tpu.dot_dimension_numbers<[1], [0], [0], [1], [0, 0, 1, 1], [], []>} : vector<16x32xbf16>, vector<32x32xbf16>, vector<16x32xf32> -> vector<16x32xf32>
    %c1_286 = arith.constant 1 : index
    %c0_287 = arith.constant 0 : index
    %c0_288 = arith.constant 0 : index
    %652 = vector.load %arg25[%c1_286, %c0_287, %c0_288] : memref<2x1x32xf32, #tpu.memory_space<vmem>>, vector<1x1x32xf32>
    %653 = vector.shape_cast %652 : vector<1x1x32xf32> to vector<1x32xf32>
    %654 = vector.broadcast %653 : vector<1x32xf32> to vector<16x32xf32>
    %655 = arith.addf %651, %654 : vector<16x32xf32>
    %656 = vector.shape_cast %655 : vector<16x32xf32> to vector<2x8x32xf32>
    %c1_289 = arith.constant 1 : index
    %c0_290 = arith.constant 0 : index
    %c0_291 = arith.constant 0 : index
    %657 = vector.load %arg26[%c1_289, %c0_290, %c0_291] : memref<2x32x64xbf16, #tpu.memory_space<vmem>>, vector<1x32x64xbf16>
    %658 = vector.shape_cast %657 : vector<1x32x64xbf16> to vector<32x64xbf16>
    %659 = arith.truncf %315 : vector<16x32xf32> to vector<16x32xbf16>
    %cst_292 = arith.constant dense<0.000000e+00> : vector<16x64xf32>
    %660 = tpu.matmul %659, %658, %cst_292 {dimension_numbers = #tpu.dot_dimension_numbers<[1], [0], [0], [1], [0, 0, 1, 1], [], []>} : vector<16x32xbf16>, vector<32x64xbf16>, vector<16x64xf32> -> vector<16x64xf32>
    %c1_293 = arith.constant 1 : index
    %c0_294 = arith.constant 0 : index
    %c0_295 = arith.constant 0 : index
    %661 = vector.load %arg27[%c1_293, %c0_294, %c0_295] : memref<2x1x64xf32, #tpu.memory_space<vmem>>, vector<1x1x64xf32>
    %662 = vector.shape_cast %661 : vector<1x1x64xf32> to vector<1x64xf32>
    %663 = vector.broadcast %662 : vector<1x64xf32> to vector<16x64xf32>
    %664 = arith.addf %660, %663 : vector<16x64xf32>
    %665 = vector.extract_strided_slice %664 {offsets = [0, 0], sizes = [16, 32], strides = [1, 1]} : vector<16x64xf32> to vector<16x32xf32>
    %666 = vector.shape_cast %665 : vector<16x32xf32> to vector<2x8x32xf32>
    %667 = vector.extract_strided_slice %664 {offsets = [0, 32], sizes = [16, 32], strides = [1, 1]} : vector<16x64xf32> to vector<16x32xf32>
    %668 = vector.shape_cast %667 : vector<16x32xf32> to vector<2x8x32xf32>
    %c1_296 = arith.constant 1 : index
    %c0_297 = arith.constant 0 : index
    %c0_298 = arith.constant 0 : index
    %669 = vector.load %arg28[%c1_296, %c0_297, %c0_298] : memref<2x32x32xbf16, #tpu.memory_space<vmem>>, vector<1x32x32xbf16>
    %670 = vector.shape_cast %669 : vector<1x32x32xbf16> to vector<32x32xbf16>
    %671 = vector.extract_strided_slice %656 {offsets = [0, 0, 0], sizes = [2, 8, 16], strides = [1, 1, 1]} : vector<2x8x32xf32> to vector<2x8x16xf32>
    %672 = arith.truncf %671 : vector<2x8x16xf32> to vector<2x8x16xbf16>
    %673 = vector.extract_strided_slice %666 {offsets = [0, 0, 0], sizes = [2, 8, 16], strides = [1, 1, 1]} : vector<2x8x32xf32> to vector<2x8x16xf32>
    %674 = arith.truncf %673 : vector<2x8x16xf32> to vector<2x8x16xbf16>
    %675 = vector.extract_strided_slice %668 {offsets = [0, 0, 0], sizes = [2, 8, 16], strides = [1, 1, 1]} : vector<2x8x32xf32> to vector<2x8x16xf32>
    %676 = arith.truncf %675 : vector<2x8x16xf32> to vector<2x8x16xbf16>
    "tpu.trace_start"() <{level = 10 : i32, message = "bqd,bkd->bqk"}> : () -> ()
    %cst_299 = arith.constant dense<0.000000e+00> : vector<2x8x8xf32>
    %677 = tpu.matmul %672, %674, %cst_299 {dimension_numbers = #tpu.dot_dimension_numbers<[2], [2], [1], [1], [0, 0, 0, 1, 1, 1], [0], [0]>} : vector<2x8x16xbf16>, vector<2x8x16xbf16>, vector<2x8x8xf32> -> vector<2x8x8xf32>
    "tpu.trace_stop"() : () -> ()
    %cst_300 = arith.constant 2.500000e-01 : f32
    %678 = vector.broadcast %cst_300 : f32 to vector<2x8x8xf32>
    %679 = arith.mulf %677, %678 : vector<2x8x8xf32>
    %cst_301 = arith.constant dense<0xFF800000> : vector<2x8xf32>
    %680 = vector.multi_reduction <maximumf>, %679, %cst_301 [2] : vector<2x8x8xf32> to vector<2x8xf32>
    %681 = vector.shape_cast %680 : vector<2x8xf32> to vector<2x8x1xf32>
    %682 = vector.broadcast %681 : vector<2x8x1xf32> to vector<2x8x8xf32>
    %683 = arith.subf %679, %682 : vector<2x8x8xf32>
    %684 = math.exp %683 : vector<2x8x8xf32>
    %cst_302 = arith.constant dense<0.000000e+00> : vector<2x8xf32>
    %685 = vector.multi_reduction <add>, %684, %cst_302 [2] : vector<2x8x8xf32> to vector<2x8xf32>
    %686 = vector.shape_cast %685 : vector<2x8xf32> to vector<2x8x1xf32>
    %687 = tpu.reciprocal %686 {approx = true} : vector<2x8x1xf32> -> vector<2x8x1xf32>
    %688 = vector.broadcast %687 : vector<2x8x1xf32> to vector<2x8x8xf32>
    %689 = arith.mulf %684, %688 : vector<2x8x8xf32>
    %690 = arith.truncf %689 : vector<2x8x8xf32> to vector<2x8x8xbf16>
    "tpu.trace_start"() <{level = 10 : i32, message = "bqk,bkd->bqd"}> : () -> ()
    %cst_303 = arith.constant dense<0.000000e+00> : vector<2x8x16xf32>
    %691 = tpu.matmul %690, %676, %cst_303 {dimension_numbers = #tpu.dot_dimension_numbers<[2], [1], [1], [2], [0, 0, 0, 1, 1, 2], [0], [0]>} : vector<2x8x8xbf16>, vector<2x8x16xbf16>, vector<2x8x16xf32> -> vector<2x8x16xf32>
    "tpu.trace_stop"() : () -> ()
    %692 = vector.extract_strided_slice %656 {offsets = [0, 0, 16], sizes = [2, 8, 16], strides = [1, 1, 1]} : vector<2x8x32xf32> to vector<2x8x16xf32>
    %693 = arith.truncf %692 : vector<2x8x16xf32> to vector<2x8x16xbf16>
    %694 = vector.extract_strided_slice %666 {offsets = [0, 0, 16], sizes = [2, 8, 16], strides = [1, 1, 1]} : vector<2x8x32xf32> to vector<2x8x16xf32>
    %695 = arith.truncf %694 : vector<2x8x16xf32> to vector<2x8x16xbf16>
    %696 = vector.extract_strided_slice %668 {offsets = [0, 0, 16], sizes = [2, 8, 16], strides = [1, 1, 1]} : vector<2x8x32xf32> to vector<2x8x16xf32>
    %697 = arith.truncf %696 : vector<2x8x16xf32> to vector<2x8x16xbf16>
    "tpu.trace_start"() <{level = 10 : i32, message = "bqd,bkd->bqk"}> : () -> ()
    %cst_304 = arith.constant dense<0.000000e+00> : vector<2x8x8xf32>
    %698 = tpu.matmul %693, %695, %cst_304 {dimension_numbers = #tpu.dot_dimension_numbers<[2], [2], [1], [1], [0, 0, 0, 1, 1, 1], [0], [0]>} : vector<2x8x16xbf16>, vector<2x8x16xbf16>, vector<2x8x8xf32> -> vector<2x8x8xf32>
    "tpu.trace_stop"() : () -> ()
    %cst_305 = arith.constant 2.500000e-01 : f32
    %699 = vector.broadcast %cst_305 : f32 to vector<2x8x8xf32>
    %700 = arith.mulf %698, %699 : vector<2x8x8xf32>
    %cst_306 = arith.constant dense<0xFF800000> : vector<2x8xf32>
    %701 = vector.multi_reduction <maximumf>, %700, %cst_306 [2] : vector<2x8x8xf32> to vector<2x8xf32>
    %702 = vector.shape_cast %701 : vector<2x8xf32> to vector<2x8x1xf32>
    %703 = vector.broadcast %702 : vector<2x8x1xf32> to vector<2x8x8xf32>
    %704 = arith.subf %700, %703 : vector<2x8x8xf32>
    %705 = math.exp %704 : vector<2x8x8xf32>
    %cst_307 = arith.constant dense<0.000000e+00> : vector<2x8xf32>
    %706 = vector.multi_reduction <add>, %705, %cst_307 [2] : vector<2x8x8xf32> to vector<2x8xf32>
    %707 = vector.shape_cast %706 : vector<2x8xf32> to vector<2x8x1xf32>
    %708 = tpu.reciprocal %707 {approx = true} : vector<2x8x1xf32> -> vector<2x8x1xf32>
    %709 = vector.broadcast %708 : vector<2x8x1xf32> to vector<2x8x8xf32>
    %710 = arith.mulf %705, %709 : vector<2x8x8xf32>
    %711 = arith.truncf %710 : vector<2x8x8xf32> to vector<2x8x8xbf16>
    "tpu.trace_start"() <{level = 10 : i32, message = "bqk,bkd->bqd"}> : () -> ()
    %cst_308 = arith.constant dense<0.000000e+00> : vector<2x8x16xf32>
    %712 = tpu.matmul %711, %697, %cst_308 {dimension_numbers = #tpu.dot_dimension_numbers<[2], [1], [1], [2], [0, 0, 0, 1, 1, 2], [0], [0]>} : vector<2x8x8xbf16>, vector<2x8x16xbf16>, vector<2x8x16xf32> -> vector<2x8x16xf32>
    "tpu.trace_stop"() : () -> ()
    %713 = tpu.concatenate %691, %712 in 2 : vector<2x8x16xf32>, vector<2x8x16xf32> -> vector<2x8x32xf32>
    %714 = vector.shape_cast %713 : vector<2x8x32xf32> to vector<16x32xf32>
    %715 = arith.truncf %714 : vector<16x32xf32> to vector<16x32xbf16>
    %cst_309 = arith.constant dense<0.000000e+00> : vector<16x32xf32>
    %716 = tpu.matmul %715, %670, %cst_309 {dimension_numbers = #tpu.dot_dimension_numbers<[1], [0], [0], [1], [0, 0, 1, 1], [], []>} : vector<16x32xbf16>, vector<32x32xbf16>, vector<16x32xf32> -> vector<16x32xf32>
    %c1_310 = arith.constant 1 : index
    %c0_311 = arith.constant 0 : index
    %c0_312 = arith.constant 0 : index
    %717 = vector.load %arg29[%c1_310, %c0_311, %c0_312] : memref<2x1x32xf32, #tpu.memory_space<vmem>>, vector<1x1x32xf32>
    %718 = vector.shape_cast %717 : vector<1x1x32xf32> to vector<1x32xf32>
    %719 = vector.broadcast %718 : vector<1x32xf32> to vector<16x32xf32>
    %720 = arith.addf %716, %719 : vector<16x32xf32>
    %721 = arith.addf %647, %720 : vector<16x32xf32>
    %c1_313 = arith.constant 1 : index
    %c0_314 = arith.constant 0 : index
    %c0_315 = arith.constant 0 : index
    %722 = vector.load %arg32[%c1_313, %c0_314, %c0_315] : memref<2x1x32xf32, #tpu.memory_space<vmem>>, vector<1x1x32xf32>
    %723 = vector.shape_cast %722 : vector<1x1x32xf32> to vector<1x32xf32>
    %c1_316 = arith.constant 1 : index
    %c0_317 = arith.constant 0 : index
    %c0_318 = arith.constant 0 : index
    %724 = vector.load %arg33[%c1_316, %c0_317, %c0_318] : memref<2x1x32xf32, #tpu.memory_space<vmem>>, vector<1x1x32xf32>
    %725 = vector.shape_cast %724 : vector<1x1x32xf32> to vector<1x32xf32>
    %cst_319 = arith.constant dense<0.000000e+00> : vector<16xf32>
    %726 = vector.multi_reduction <add>, %721, %cst_319 [1] : vector<16x32xf32> to vector<16xf32>
    %727 = vector.shape_cast %726 : vector<16xf32> to vector<16x1xf32>
    %cst_320 = arith.constant 3.200000e+01 : f32
    %728 = vector.broadcast %cst_320 : f32 to vector<16x1xf32>
    %729 = arith.divf %727, %728 : vector<16x1xf32>
    %730 = vector.broadcast %729 : vector<16x1xf32> to vector<16x32xf32>
    %731 = arith.subf %721, %730 : vector<16x32xf32>
    %732 = arith.mulf %731, %731 : vector<16x32xf32>
    %cst_321 = arith.constant dense<0.000000e+00> : vector<16xf32>
    %733 = vector.multi_reduction <add>, %732, %cst_321 [1] : vector<16x32xf32> to vector<16xf32>
    %734 = vector.shape_cast %733 : vector<16xf32> to vector<16x1xf32>
    %cst_322 = arith.constant 3.200000e+01 : f32
    %735 = vector.broadcast %cst_322 : f32 to vector<16x1xf32>
    %736 = arith.divf %734, %735 : vector<16x1xf32>
    %737 = vector.broadcast %729 : vector<16x1xf32> to vector<16x32xf32>
    %738 = arith.subf %721, %737 : vector<16x32xf32>
    %cst_323 = arith.constant 9.99999974E-6 : f32
    %739 = vector.broadcast %cst_323 : f32 to vector<16x1xf32>
    %740 = arith.addf %736, %739 : vector<16x1xf32>
    %741 = math.rsqrt %740 : vector<16x1xf32>
    %742 = vector.broadcast %741 : vector<16x1xf32> to vector<16x32xf32>
    %743 = arith.mulf %738, %742 : vector<16x32xf32>
    %744 = vector.broadcast %723 : vector<1x32xf32> to vector<16x32xf32>
    %745 = arith.mulf %743, %744 : vector<16x32xf32>
    %746 = vector.broadcast %725 : vector<1x32xf32> to vector<16x32xf32>
    %747 = arith.addf %745, %746 : vector<16x32xf32>
    %c1_324 = arith.constant 1 : index
    %c0_325 = arith.constant 0 : index
    %c0_326 = arith.constant 0 : index
    %748 = vector.load %arg36[%c1_324, %c0_325, %c0_326] : memref<2x32x96xbf16, #tpu.memory_space<vmem>>, vector<1x32x96xbf16>
    %749 = vector.shape_cast %748 : vector<1x32x96xbf16> to vector<32x96xbf16>
    %750 = arith.truncf %747 : vector<16x32xf32> to vector<16x32xbf16>
    %cst_327 = arith.constant dense<0.000000e+00> : vector<16x96xf32>
    %751 = tpu.matmul %750, %749, %cst_327 {dimension_numbers = #tpu.dot_dimension_numbers<[1], [0], [0], [1], [0, 0, 1, 1], [], []>} : vector<16x32xbf16>, vector<32x96xbf16>, vector<16x96xf32> -> vector<16x96xf32>
    %c1_328 = arith.constant 1 : index
    %c0_329 = arith.constant 0 : index
    %c0_330 = arith.constant 0 : index
    %752 = vector.load %arg37[%c1_328, %c0_329, %c0_330] : memref<2x1x96xf32, #tpu.memory_space<vmem>>, vector<1x1x96xf32>
    %753 = vector.shape_cast %752 : vector<1x1x96xf32> to vector<1x96xf32>
    %754 = vector.broadcast %753 : vector<1x96xf32> to vector<16x96xf32>
    %755 = arith.addf %751, %754 : vector<16x96xf32>
    %cst_331 = arith.constant 0.000000e+00 : f32
    %756 = vector.broadcast %cst_331 : f32 to vector<16x96xf32>
    %757 = arith.maximumf %755, %756 : vector<16x96xf32>
    %c1_332 = arith.constant 1 : index
    %c0_333 = arith.constant 0 : index
    %c0_334 = arith.constant 0 : index
    %758 = vector.load %arg38[%c1_332, %c0_333, %c0_334] : memref<2x96x32xbf16, #tpu.memory_space<vmem>>, vector<1x96x32xbf16>
    %759 = vector.shape_cast %758 : vector<1x96x32xbf16> to vector<96x32xbf16>
    %760 = arith.truncf %757 : vector<16x96xf32> to vector<16x96xbf16>
    %cst_335 = arith.constant dense<0.000000e+00> : vector<16x32xf32>
    %761 = tpu.matmul %760, %759, %cst_335 {dimension_numbers = #tpu.dot_dimension_numbers<[1], [0], [0], [1], [0, 0, 1, 1], [], []>} : vector<16x96xbf16>, vector<96x32xbf16>, vector<16x32xf32> -> vector<16x32xf32>
    %c1_336 = arith.constant 1 : index
    %c0_337 = arith.constant 0 : index
    %c0_338 = arith.constant 0 : index
    %762 = vector.load %arg39[%c1_336, %c0_337, %c0_338] : memref<2x1x32xf32, #tpu.memory_space<vmem>>, vector<1x1x32xf32>
    %763 = vector.shape_cast %762 : vector<1x1x32xf32> to vector<1x32xf32>
    %764 = vector.broadcast %763 : vector<1x32xf32> to vector<16x32xf32>
    %765 = arith.addf %761, %764 : vector<16x32xf32>
    %766 = arith.addf %747, %765 : vector<16x32xf32>
    %c1_339 = arith.constant 1 : index
    %c0_340 = arith.constant 0 : index
    %c0_341 = arith.constant 0 : index
    %767 = vector.load %arg34[%c1_339, %c0_340, %c0_341] : memref<2x1x32xf32, #tpu.memory_space<vmem>>, vector<1x1x32xf32>
    %768 = vector.shape_cast %767 : vector<1x1x32xf32> to vector<1x32xf32>
    %c1_342 = arith.constant 1 : index
    %c0_343 = arith.constant 0 : index
    %c0_344 = arith.constant 0 : index
    %769 = vector.load %arg35[%c1_342, %c0_343, %c0_344] : memref<2x1x32xf32, #tpu.memory_space<vmem>>, vector<1x1x32xf32>
    %770 = vector.shape_cast %769 : vector<1x1x32xf32> to vector<1x32xf32>
    %cst_345 = arith.constant dense<0.000000e+00> : vector<16xf32>
    %771 = vector.multi_reduction <add>, %766, %cst_345 [1] : vector<16x32xf32> to vector<16xf32>
    %772 = vector.shape_cast %771 : vector<16xf32> to vector<16x1xf32>
    %cst_346 = arith.constant 3.200000e+01 : f32
    %773 = vector.broadcast %cst_346 : f32 to vector<16x1xf32>
    %774 = arith.divf %772, %773 : vector<16x1xf32>
    %775 = vector.broadcast %774 : vector<16x1xf32> to vector<16x32xf32>
    %776 = arith.subf %766, %775 : vector<16x32xf32>
    %777 = arith.mulf %776, %776 : vector<16x32xf32>
    %cst_347 = arith.constant dense<0.000000e+00> : vector<16xf32>
    %778 = vector.multi_reduction <add>, %777, %cst_347 [1] : vector<16x32xf32> to vector<16xf32>
    %779 = vector.shape_cast %778 : vector<16xf32> to vector<16x1xf32>
    %cst_348 = arith.constant 3.200000e+01 : f32
    %780 = vector.broadcast %cst_348 : f32 to vector<16x1xf32>
    %781 = arith.divf %779, %780 : vector<16x1xf32>
    %782 = vector.broadcast %774 : vector<16x1xf32> to vector<16x32xf32>
    %783 = arith.subf %766, %782 : vector<16x32xf32>
    %cst_349 = arith.constant 9.99999974E-6 : f32
    %784 = vector.broadcast %cst_349 : f32 to vector<16x1xf32>
    %785 = arith.addf %781, %784 : vector<16x1xf32>
    %786 = math.rsqrt %785 : vector<16x1xf32>
    %787 = vector.broadcast %786 : vector<16x1xf32> to vector<16x32xf32>
    %788 = arith.mulf %783, %787 : vector<16x32xf32>
    %789 = vector.broadcast %768 : vector<1x32xf32> to vector<16x32xf32>
    %790 = arith.mulf %788, %789 : vector<16x32xf32>
    %791 = vector.broadcast %770 : vector<1x32xf32> to vector<16x32xf32>
    %792 = arith.addf %790, %791 : vector<16x32xf32>
    %c0_350 = arith.constant 0 : index
    %c0_351 = arith.constant 0 : index
    %793 = vector.load %arg40[%c0_350, %c0_351] : memref<1x32xf32, #tpu.memory_space<vmem>>, vector<1x32xf32>
    %c0_352 = arith.constant 0 : index
    %c0_353 = arith.constant 0 : index
    %794 = vector.load %arg41[%c0_352, %c0_353] : memref<1x32xf32, #tpu.memory_space<vmem>>, vector<1x32xf32>
    %cst_354 = arith.constant dense<0.000000e+00> : vector<16xf32>
    %795 = vector.multi_reduction <add>, %792, %cst_354 [1] : vector<16x32xf32> to vector<16xf32>
    %796 = vector.shape_cast %795 : vector<16xf32> to vector<16x1xf32>
    %cst_355 = arith.constant 3.200000e+01 : f32
    %797 = vector.broadcast %cst_355 : f32 to vector<16x1xf32>
    %798 = arith.divf %796, %797 : vector<16x1xf32>
    %799 = vector.broadcast %798 : vector<16x1xf32> to vector<16x32xf32>
    %800 = arith.subf %792, %799 : vector<16x32xf32>
    %801 = arith.mulf %800, %800 : vector<16x32xf32>
    %cst_356 = arith.constant dense<0.000000e+00> : vector<16xf32>
    %802 = vector.multi_reduction <add>, %801, %cst_356 [1] : vector<16x32xf32> to vector<16xf32>
    %803 = vector.shape_cast %802 : vector<16xf32> to vector<16x1xf32>
    %cst_357 = arith.constant 3.200000e+01 : f32
    %804 = vector.broadcast %cst_357 : f32 to vector<16x1xf32>
    %805 = arith.divf %803, %804 : vector<16x1xf32>
    %806 = vector.broadcast %798 : vector<16x1xf32> to vector<16x32xf32>
    %807 = arith.subf %792, %806 : vector<16x32xf32>
    %cst_358 = arith.constant 9.99999974E-6 : f32
    %808 = vector.broadcast %cst_358 : f32 to vector<16x1xf32>
    %809 = arith.addf %805, %808 : vector<16x1xf32>
    %810 = math.rsqrt %809 : vector<16x1xf32>
    %811 = vector.broadcast %810 : vector<16x1xf32> to vector<16x32xf32>
    %812 = arith.mulf %807, %811 : vector<16x32xf32>
    %813 = vector.broadcast %793 : vector<1x32xf32> to vector<16x32xf32>
    %814 = arith.mulf %812, %813 : vector<16x32xf32>
    %815 = vector.broadcast %794 : vector<1x32xf32> to vector<16x32xf32>
    %816 = arith.addf %814, %815 : vector<16x32xf32>
    %817 = vector.shape_cast %816 : vector<16x32xf32> to vector<2x8x32xf32>
    %c0_359 = arith.constant 0 : index
    %c0_360 = arith.constant 0 : index
    %c0_361 = arith.constant 0 : index
    %818 = vector.load %arg42[%c0_359, %c0_360, %c0_361] : memref<2x8x32xf32, #tpu.memory_space<vmem>>, vector<2x8x32xf32>
    tpu.vector_store %arg42[%c0_359, %c0_360, %c0_361], %817 {strides = array<i32>} : memref<2x8x32xf32, #tpu.memory_space<vmem>>, vector<2x8x32xf32>,
    return
  }
}

</mosaic_0001>

<llo_original>
// kernel: gdlt_forward.1
$region0: #{gdlt_forward.1}
  #allocation0 [shape = 'u32[]', space=smem, size = 0x4, offset = 0x4, fixed_abs, tag = 'smem constant byte address 0x4 - core index']
  #allocation1 [shape = 'u32[144,128]{1,0:T(1,128)}', space=vmem, size = 0x12000, scoped, tag = 'internal scratch']
  %s0 = inlined_call_operand.smem [shape: u32[43], index: -1, kind: input, shape index: {}]
  %s1 = sld [smem:[%s0]]
  %s2 = scalar_lea.smem %s0, 1
  %s3 = sld [smem:[%s2]]
  %s4 = scalar_lea.smem %s0, 2
  %s5 = sld [smem:[%s4]]
  %s6 = scalar_lea.smem %s0, 3
  %s7 = sld [smem:[%s6]]
  %s8 = scalar_lea.smem %s0, 4
  %s9 = sld [smem:[%s8]]
  %s10 = scalar_lea.smem %s0, 5
  %s11 = sld [smem:[%s10]]
  %s12 = scalar_lea.smem %s0, 6
  %s13 = sld [smem:[%s12]]
  %s14 = scalar_lea.smem %s0, 7
  %s15 = sld [smem:[%s14]]
  %s16 = scalar_lea.smem %s0, 8
  %s17 = sld [smem:[%s16]]
  %s18 = scalar_lea.smem %s0, 9
  %s19 = sld [smem:[%s18]]
  %s20 = scalar_lea.smem %s0, 10
  %s21 = sld [smem:[%s20]]
  %s22 = scalar_lea.smem %s0, 11
  %s23 = sld [smem:[%s22]]
  %s24 = scalar_lea.smem %s0, 12
  %s25 = sld [smem:[%s24]]
  %s26 = scalar_lea.smem %s0, 13
  %s27 = sld [smem:[%s26]]
  %s28 = scalar_lea.smem %s0, 14
  %s29 = sld [smem:[%s28]]
  %s30 = scalar_lea.smem %s0, 15
  %s31 = sld [smem:[%s30]]
  %s32 = scalar_lea.smem %s0, 16
  %s33 = sld [smem:[%s32]]
  %s34 = scalar_lea.smem %s0, 17
  %s35 = sld [smem:[%s34]]
  %s36 = scalar_lea.smem %s0, 18
  %s37 = sld [smem:[%s36]]
  %s38 = scalar_lea.smem %s0, 19
  %s39 = sld [smem:[%s38]]
  %s40 = scalar_lea.smem %s0, 20
  %s41 = sld [smem:[%s40]]
  %s42 = scalar_lea.smem %s0, 21
  %s43 = sld [smem:[%s42]]
  %s44 = scalar_lea.smem %s0, 22
  %s45 = sld [smem:[%s44]]
  %s46 = scalar_lea.smem %s0, 23
  %s47 = sld [smem:[%s46]]
  %s48 = scalar_lea.smem %s0, 24
  %s49 = sld [smem:[%s48]]
  %s50 = scalar_lea.smem %s0, 25
  %s51 = sld [smem:[%s50]]
  %s52 = scalar_lea.smem %s0, 26
  %s53 = sld [smem:[%s52]]
  %s54 = scalar_lea.smem %s0, 27
  %s55 = sld [smem:[%s54]]
  %s56 = scalar_lea.smem %s0, 28
  %s57 = sld [smem:[%s56]]
  %s58 = scalar_lea.smem %s0, 29
  %s59 = sld [smem:[%s58]]
  %s60 = scalar_lea.smem %s0, 30
  %s61 = sld [smem:[%s60]]
  %s62 = scalar_lea.smem %s0, 31
  %s63 = sld [smem:[%s62]]
  %s64 = scalar_lea.smem %s0, 32
  %s65 = sld [smem:[%s64]]
  %s66 = scalar_lea.smem %s0, 33
  %s67 = sld [smem:[%s66]]
  %s68 = scalar_lea.smem %s0, 34
  %s69 = sld [smem:[%s68]]
  %s70 = scalar_lea.smem %s0, 35
  %s71 = sld [smem:[%s70]]
  %s72 = scalar_lea.smem %s0, 36
  %s73 = sld [smem:[%s72]]
  %s74 = scalar_lea.smem %s0, 37
  %s75 = sld [smem:[%s74]]
  %s76 = scalar_lea.smem %s0, 38
  %s77 = sld [smem:[%s76]]
  %s78 = scalar_lea.smem %s0, 39
  %s79 = sld [smem:[%s78]]
  %s80 = scalar_lea.smem %s0, 40
  %s81 = sld [smem:[%s80]]
  %s82 = scalar_lea.smem %s0, 41
  %s83 = sld [smem:[%s82]]
  %s84 = scalar_lea.smem %s0, 42
  %s85 = sld [smem:[%s84]]
  %s86 = sld [smem:[#allocation0]]
  $region178: #{gdlt_forward.1} parent=0
    _
  %s88 = ssub.s32 1, %s86
  %s89 = scalar_select 0, %s88, %s86
  // Predicated region
  $region2: #{gdlt_forward.1} parent=0 // pred_check
    _
  $region3: #{gdlt_forward.1} parent=0 // pred_check_branch
    %91 = sbr.rel (0) target = $region5
  $region4: #{gdlt_forward.1} parent=0 // pred_region
    _
  $region5: #{gdlt_forward.1} parent=0 // pred_fallthru
    _
  // Predicated region
  $region6: #{gdlt_forward.1} parent=0 // pred_check
    _
  $region7: #{gdlt_forward.1} parent=0 // pred_check_branch
    %93 = sbr.rel (0) target = $region9
  $region8: #{gdlt_forward.1} parent=0 // pred_region
    _
  $region9: #{gdlt_forward.1} parent=0 // pred_fallthru
    _
  // Predicated region
  $region10: #{gdlt_forward.1} parent=0 // pred_check
    _
  $region11: #{gdlt_forward.1} parent=0 // pred_check_branch
    %95 = sbr.rel (0) target = $region13
  $region12: #{gdlt_forward.1} parent=0 // pred_region
    _
  $region13: #{gdlt_forward.1} parent=0 // pred_fallthru
    _
  // Predicated region
  $region14: #{gdlt_forward.1} parent=0 // pred_check
    _
  $region15: #{gdlt_forward.1} parent=0 // pred_check_branch
    %97 = sbr.rel (0) target = $region17
  $region16: #{gdlt_forward.1} parent=0 // pred_region
    _
  $region17: #{gdlt_forward.1} parent=0 // pred_fallthru
    _
  // Predicated region
  $region18: #{gdlt_forward.1} parent=0 // pred_check
    _
  $region19: #{gdlt_forward.1} parent=0 // pred_check_branch
    %99 = sbr.rel (0) target = $region21
  $region20: #{gdlt_forward.1} parent=0 // pred_region
    _
  $region21: #{gdlt_forward.1} parent=0 // pred_fallthru
    _
  // Predicated region
  $region22: #{gdlt_forward.1} parent=0 // pred_check
    _
  $region23: #{gdlt_forward.1} parent=0 // pred_check_branch
    %101 = sbr.rel (0) target = $region25
  $region24: #{gdlt_forward.1} parent=0 // pred_region
    _
  $region25: #{gdlt_forward.1} parent=0 // pred_fallthru
    _
  // Predicated region
  $region26: #{gdlt_forward.1} parent=0 // pred_check
    _
  $region27: #{gdlt_forward.1} parent=0 // pred_check_branch
    %103 = sbr.rel (0) target = $region29
  $region28: #{gdlt_forward.1} parent=0 // pred_region
    _
  $region29: #{gdlt_forward.1} parent=0 // pred_fallthru
    _
  // Predicated region
  $region30: #{gdlt_forward.1} parent=0 // pred_check
    _
  $region31: #{gdlt_forward.1} parent=0 // pred_check_branch
    %105 = sbr.rel (0) target = $region33
  $region32: #{gdlt_forward.1} parent=0 // pred_region
    _
  $region33: #{gdlt_forward.1} parent=0 // pred_fallthru
    _
  // Predicated region
  $region34: #{gdlt_forward.1} parent=0 // pred_check
    _
  $region35: #{gdlt_forward.1} parent=0 // pred_check_branch
    %107 = sbr.rel (0) target = $region37
  $region36: #{gdlt_forward.1} parent=0 // pred_region
    _
  $region37: #{gdlt_forward.1} parent=0 // pred_fallthru
    _
  // Predicated region
  $region38: #{gdlt_forward.1} parent=0 // pred_check
    _
  $region39: #{gdlt_forward.1} parent=0 // pred_check_branch
    %109 = sbr.rel (0) target = $region41
  $region40: #{gdlt_forward.1} parent=0 // pred_region
    _
  $region41: #{gdlt_forward.1} parent=0 // pred_fallthru
    _
  // Predicated region
  $region42: #{gdlt_forward.1} parent=0 // pred_check
    _
  $region43: #{gdlt_forward.1} parent=0 // pred_check_branch
    %111 = sbr.rel (0) target = $region45
  $region44: #{gdlt_forward.1} parent=0 // pred_region
    _
  $region45: #{gdlt_forward.1} parent=0 // pred_fallthru
    _
  // Predicated region
  $region46: #{gdlt_forward.1} parent=0 // pred_check
    _
  $region47: #{gdlt_forward.1} parent=0 // pred_check_branch
    %113 = sbr.rel (0) target = $region49
  $region48: #{gdlt_forward.1} parent=0 // pred_region
    _
  $region49: #{gdlt_forward.1} parent=0 // pred_fallthru
    _
  // Predicated region
  $region50: #{gdlt_forward.1} parent=0 // pred_check
    _
  $region51: #{gdlt_forward.1} parent=0 // pred_check_branch
    %115 = sbr.rel (0) target = $region53
  $region52: #{gdlt_forward.1} parent=0 // pred_region
    _
  $region53: #{gdlt_forward.1} parent=0 // pred_fallthru
    _
  // Predicated region
  $region54: #{gdlt_forward.1} parent=0 // pred_check
    _
  $region55: #{gdlt_forward.1} parent=0 // pred_check_branch
    %117 = sbr.rel (0) target = $region57
  $region56: #{gdlt_forward.1} parent=0 // pred_region
    _
  $region57: #{gdlt_forward.1} parent=0 // pred_fallthru
    _
  // Predicated region
  $region58: #{gdlt_forward.1} parent=0 // pred_check
    _
  $region59: #{gdlt_forward.1} parent=0 // pred_check_branch
    %119 = sbr.rel (0) target = $region61
  $region60: #{gdlt_forward.1} parent=0 // pred_region
    _
  $region61: #{gdlt_forward.1} parent=0 // pred_fallthru
    _
  // Predicated region
  $region62: #{gdlt_forward.1} parent=0 // pred_check
    _
  $region63: #{gdlt_forward.1} parent=0 // pred_check_branch
    %121 = sbr.rel (0) target = $region65
  $region64: #{gdlt_forward.1} parent=0 // pred_region
    _
  $region65: #{gdlt_forward.1} parent=0 // pred_fallthru
    _
  // Predicated region
  $region66: #{gdlt_forward.1} parent=0 // pred_check
    _
  $region67: #{gdlt_forward.1} parent=0 // pred_check_branch
    %123 = sbr.rel (0) target = $region69
  $region68: #{gdlt_forward.1} parent=0 // pred_region
    _
  $region69: #{gdlt_forward.1} parent=0 // pred_fallthru
    _
  // Predicated region
  $region70: #{gdlt_forward.1} parent=0 // pred_check
    _
  $region71: #{gdlt_forward.1} parent=0 // pred_check_branch
    %125 = sbr.rel (0) target = $region73
  $region72: #{gdlt_forward.1} parent=0 // pred_region
    _
  $region73: #{gdlt_forward.1} parent=0 // pred_fallthru
    _
  // Predicated region
  $region74: #{gdlt_forward.1} parent=0 // pred_check
    _
  $region75: #{gdlt_forward.1} parent=0 // pred_check_branch
    %127 = sbr.rel (0) target = $region77
  $region76: #{gdlt_forward.1} parent=0 // pred_region
    _
  $region77: #{gdlt_forward.1} parent=0 // pred_fallthru
    _
  // Predicated region
  $region78: #{gdlt_forward.1} parent=0 // pred_check
    _
  $region79: #{gdlt_forward.1} parent=0 // pred_check_branch
    %129 = sbr.rel (0) target = $region81
  $region80: #{gdlt_forward.1} parent=0 // pred_region
    _
  $region81: #{gdlt_forward.1} parent=0 // pred_fallthru
    _
  // Predicated region
  $region82: #{gdlt_forward.1} parent=0 // pred_check
    _
  $region83: #{gdlt_forward.1} parent=0 // pred_check_branch
    %131 = sbr.rel (0) target = $region85
  $region84: #{gdlt_forward.1} parent=0 // pred_region
    _
  $region85: #{gdlt_forward.1} parent=0 // pred_fallthru
    _
  // Predicated region
  $region86: #{gdlt_forward.1} parent=0 // pred_check
    _
  $region87: #{gdlt_forward.1} parent=0 // pred_check_branch
    %133 = sbr.rel (0) target = $region89
  $region88: #{gdlt_forward.1} parent=0 // pred_region
    _
  $region89: #{gdlt_forward.1} parent=0 // pred_fallthru
    _
  // Predicated region
  $region90: #{gdlt_forward.1} parent=0 // pred_check
    _
  $region91: #{gdlt_forward.1} parent=0 // pred_check_branch
    %135 = sbr.rel (0) target = $region93
  $region92: #{gdlt_forward.1} parent=0 // pred_region
    _
  $region93: #{gdlt_forward.1} parent=0 // pred_fallthru
    _
  // Predicated region
  $region94: #{gdlt_forward.1} parent=0 // pred_check
    _
  $region95: #{gdlt_forward.1} parent=0 // pred_check_branch
    %137 = sbr.rel (0) target = $region97
  $region96: #{gdlt_forward.1} parent=0 // pred_region
    _
  $region97: #{gdlt_forward.1} parent=0 // pred_fallthru
    _
  // Predicated region
  $region98: #{gdlt_forward.1} parent=0 // pred_check
    _
  $region99: #{gdlt_forward.1} parent=0 // pred_check_branch
    %139 = sbr.rel (0) target = $region101
  $region100: #{gdlt_forward.1} parent=0 // pred_region
    _
  $region101: #{gdlt_forward.1} parent=0 // pred_fallthru
    _
  // Predicated region
  $region102: #{gdlt_forward.1} parent=0 // pred_check
    _
  $region103: #{gdlt_forward.1} parent=0 // pred_check_branch
    %141 = sbr.rel (0) target = $region105
  $region104: #{gdlt_forward.1} parent=0 // pred_region
    _
  $region105: #{gdlt_forward.1} parent=0 // pred_fallthru
    _
  // Predicated region
  $region106: #{gdlt_forward.1} parent=0 // pred_check
    _
  $region107: #{gdlt_forward.1} parent=0 // pred_check_branch
    %143 = sbr.rel (0) target = $region109
  $region108: #{gdlt_forward.1} parent=0 // pred_region
    _
  $region109: #{gdlt_forward.1} parent=0 // pred_fallthru
    _
  // Predicated region
  $region110: #{gdlt_forward.1} parent=0 // pred_check
    _
  $region111: #{gdlt_forward.1} parent=0 // pred_check_branch
    %145 = sbr.rel (0) target = $region113
  $region112: #{gdlt_forward.1} parent=0 // pred_region
    _
  $region113: #{gdlt_forward.1} parent=0 // pred_fallthru
    _
  // Predicated region
  $region114: #{gdlt_forward.1} parent=0 // pred_check
    _
  $region115: #{gdlt_forward.1} parent=0 // pred_check_branch
    %147 = sbr.rel (0) target = $region117
  $region116: #{gdlt_forward.1} parent=0 // pred_region
    _
  $region117: #{gdlt_forward.1} parent=0 // pred_fallthru
    _
  // Predicated region
  $region118: #{gdlt_forward.1} parent=0 // pred_check
    _
  $region119: #{gdlt_forward.1} parent=0 // pred_check_branch
    %149 = sbr.rel (0) target = $region121
  $region120: #{gdlt_forward.1} parent=0 // pred_region
    _
  $region121: #{gdlt_forward.1} parent=0 // pred_fallthru
    _
  // Predicated region
  $region122: #{gdlt_forward.1} parent=0 // pred_check
    _
  $region123: #{gdlt_forward.1} parent=0 // pred_check_branch
    %151 = sbr.rel (0) target = $region125
  $region124: #{gdlt_forward.1} parent=0 // pred_region
    _
  $region125: #{gdlt_forward.1} parent=0 // pred_fallthru
    _
  // Predicated region
  $region126: #{gdlt_forward.1} parent=0 // pred_check
    _
  $region127: #{gdlt_forward.1} parent=0 // pred_check_branch
    %153 = sbr.rel (0) target = $region129
  $region128: #{gdlt_forward.1} parent=0 // pred_region
    _
  $region129: #{gdlt_forward.1} parent=0 // pred_fallthru
    _
  // Predicated region
  $region130: #{gdlt_forward.1} parent=0 // pred_check
    _
  $region131: #{gdlt_forward.1} parent=0 // pred_check_branch
    %155 = sbr.rel (0) target = $region133
  $region132: #{gdlt_forward.1} parent=0 // pred_region
    _
  $region133: #{gdlt_forward.1} parent=0 // pred_fallthru
    _
  // Predicated region
  $region134: #{gdlt_forward.1} parent=0 // pred_check
    _
  $region135: #{gdlt_forward.1} parent=0 // pred_check_branch
    %157 = sbr.rel (0) target = $region137
  $region136: #{gdlt_forward.1} parent=0 // pred_region
    _
  $region137: #{gdlt_forward.1} parent=0 // pred_fallthru
    _
  // Predicated region
  $region138: #{gdlt_forward.1} parent=0 // pred_check
    _
  $region139: #{gdlt_forward.1} parent=0 // pred_check_branch
    %159 = sbr.rel (0) target = $region141
  $region140: #{gdlt_forward.1} parent=0 // pred_region
    _
  $region141: #{gdlt_forward.1} parent=0 // pred_fallthru
    _
  // Predicated region
  $region142: #{gdlt_forward.1} parent=0 // pred_check
    _
  $region143: #{gdlt_forward.1} parent=0 // pred_check_branch
    %161 = sbr.rel (0) target = $region145
  $region144: #{gdlt_forward.1} parent=0 // pred_region
    _
  $region145: #{gdlt_forward.1} parent=0 // pred_fallthru
    _
  // Predicated region
  $region146: #{gdlt_forward.1} parent=0 // pred_check
    _
  $region147: #{gdlt_forward.1} parent=0 // pred_check_branch
    %163 = sbr.rel (0) target = $region149
  $region148: #{gdlt_forward.1} parent=0 // pred_region
    _
  $region149: #{gdlt_forward.1} parent=0 // pred_fallthru
    _
  // Predicated region
  $region150: #{gdlt_forward.1} parent=0 // pred_check
    _
  $region151: #{gdlt_forward.1} parent=0 // pred_check_branch
    %165 = sbr.rel (0) target = $region153
  $region152: #{gdlt_forward.1} parent=0 // pred_region
    _
  $region153: #{gdlt_forward.1} parent=0 // pred_fallthru
    _
  // Predicated region
  $region154: #{gdlt_forward.1} parent=0 // pred_check
    _
  $region155: #{gdlt_forward.1} parent=0 // pred_check_branch
    %167 = sbr.rel (0) target = $region157
  $region156: #{gdlt_forward.1} parent=0 // pred_region
    _
  $region157: #{gdlt_forward.1} parent=0 // pred_fallthru
    _
  // Predicated region
  $region158: #{gdlt_forward.1} parent=0 // pred_check
    _
  $region159: #{gdlt_forward.1} parent=0 // pred_check_branch
    %169 = sbr.rel (0) target = $region161
  $region160: #{gdlt_forward.1} parent=0 // pred_region
    _
  $region161: #{gdlt_forward.1} parent=0 // pred_fallthru
    _
  // Predicated region
  $region162: #{gdlt_forward.1} parent=0 // pred_check
    _
  $region163: #{gdlt_forward.1} parent=0 // pred_check_branch
    %171 = sbr.rel (0) target = $region165
  $region164: #{gdlt_forward.1} parent=0 // pred_region
    _
  $region165: #{gdlt_forward.1} parent=0 // pred_fallthru
    _
  // Predicated region
  $region166: #{gdlt_forward.1} parent=0 // pred_check
    _
  $region167: #{gdlt_forward.1} parent=0 // pred_check_branch
    %173 = sbr.rel (0) target = $region169
  $region168: #{gdlt_forward.1} parent=0 // pred_region
    _
  $region169: #{gdlt_forward.1} parent=0 // pred_fallthru
    _
  %v175 = vld [vmem:[%s1] sm:$0xff]
  %v176 = vld [vmem:[%s1 + $0x8] sm:$0xff]
  %v177 = vld [vmem:[%s5] sm:$0xf]
  %v178 = vld [vmem:[%s5 + $0x4] sm:$0xf]
  %v179 = vld [vmem:[%s5 + $0x8] sm:$0xf]
  %v180 = vld [vmem:[%s5 + $0xc] sm:$0xf]
  %v181 = vld [vmem:[%s5 + $0x10] sm:$0xf]
  %v182 = vld [vmem:[%s5 + $0x14] sm:$0xf]
  %v183 = vld [vmem:[%s5 + $0x18] sm:$0xf]
  %v184 = vld [vmem:[%s5 + $0x1c] sm:$0xf]
  %v185 = vpack.c.bf16 %v176, %v175
  %v186 = vld [vmem:[%s7] sm:$0x1]
  %v188 = vlaneseq
  %v189 = vshrl.u32 %v188, 7
  %v190 = vsub.s32 0, %v189
  %v191 = vrot.slane %v186, %v190
  %v201 = vunpack.c.l.b16 %v177
  %v202 = vunpack.c.l.b16 %v178
  %v203 = vunpack.c.l.b16 %v179
  %v204 = vunpack.c.l.b16 %v180
  %v205 = vunpack.c.l.b16 %v181
  %v206 = vunpack.c.l.b16 %v182
  %v207 = vunpack.c.l.b16 %v183
  %v208 = vunpack.c.l.b16 %v184
  %v209 = vpack.c.b16 %v202, %v201
  %v210 = vpack.c.b16 %v204, %v203
  %v211 = vpack.c.b16 %v206, %v205
  %v212 = vpack.c.b16 %v208, %v207
  %vm217 = vcmask 523264
  %v219 = vsel %vm217, %v185, 0
  %221 = vmatprep.subr.bf16.mxu0 0
  %222 = vmatpush1.bf16.msra.mxu0 0
  %223 = vmatprep.subr.bf16.mxu0 0
  %224 = vmatpush1.bf16.msra.mxu0 0
  %225 = vmatprep.subr.bf16.mxu0 0
  %226 = vmatpush1.bf16.msra.mxu0 0
  %227 = vmatprep.subr.bf16.mxu0 0
  %228 = vmatpush1.bf16.msra.mxu0 0
  %229 = vmatprep.subr.bf16.mxu0 0
  %230 = vmatpush1.bf16.msra.mxu0 %v212
  %231 = vmatprep.subr.bf16.mxu0 0
  %232 = vmatpush1.bf16.msra.mxu0 %v211
  %233 = vmatprep.subr.bf16.mxu0 0
  %234 = vmatpush1.bf16.msra.mxu0 %v210
  %235 = vmatprep.subr.bf16.mxu0 0
  %236 = vmatpush1.bf16.msra.mxu0 %v209
  %237 = vmatprep.subr.bf16.mxu0 0
  %238 = vmatpush2.bf16.msra.mxu0 0
  %239 = vmatprep.subr.bf16.mxu0 0
  %240 = vmatpush2.bf16.msra.mxu0 0
  %241 = vmatprep.subr.bf16.mxu0 0
  %242 = vmatpush2.bf16.msra.mxu0 0
  %243 = vmatprep.subr.bf16.mxu0 0
  %244 = vmatpush2.bf16.msra.mxu0 0
  %245 = vmatprep.subr.bf16.mxu0 0
  %246 = vmatpush2.bf16.msra.mxu0 0
  %247 = vmatprep.subr.bf16.mxu0 0
  %248 = vmatpush2.bf16.msra.mxu0 0
  %249 = vmatprep.subr.bf16.mxu0 0
  %250 = vmatpush2.bf16.msra.mxu0 0
  %251 = vmatprep.subr.bf16.mxu0 0
  %252 = vmatpush2.bf16.msra.mxu0 0
  %253 = vmatprep.mubr.bf16.mxu0 0
  %254 = vmatmul.mubr.bf16.gmra.mxu0 %v219
  %v255 = vpop.f32.mrf.mxu0
  %v256 = vadd.f32 %v191, %v255
  %v257 = vpop.f32.mrf.mxu0
  %v258 = vpop.f32.mrf.mxu0
  %v259 = vadd.f32 %v191, %v258
  %v260 = vpop.f32.mrf.mxu0
  %261 = vdwg.mxu0
  %v262 = vmax.f32 %v256, 0.0
  %v263 = vmax.f32 %v259, 0.0
  %v264 = vld [vmem:[%s9] sm:$0xf]
  %v265 = vld [vmem:[%s9 + $0x4] sm:$0xf]
  %v266 = vld [vmem:[%s9 + $0x8] sm:$0xf]
  %v267 = vld [vmem:[%s9 + $0xc] sm:$0xf]
  %v268 = vpack.c.bf16 %v263, %v262
  %v269 = vld [vmem:[%s11] sm:$0x1]
  %v271 = vlaneseq
  %v272 = vshrl.u32 %v271, 7
  %v273 = vsub.s32 0, %v272
  %v274 = vrot.slane %v269, %v273
  %v280 = vunpack.c.l.b16 %v264
  %v281 = vunpack.c.l.b16 %v265
  %v282 = vunpack.c.l.b16 %v266
  %v283 = vunpack.c.l.b16 %v267
  %v284 = vpack.c.b16 %v281, %v280
  %v285 = vpack.c.b16 %v283, %v282
  %vm288 = vcmask 261120
  %v290 = vsel %vm288, %v268, 0
  %292 = vmatprep.subr.bf16.mxu0 0
  %293 = vmatpush1.bf16.msra.mxu0 0
  %294 = vmatprep.subr.bf16.mxu0 0
  %295 = vmatpush1.bf16.msra.mxu0 0
  %296 = vmatprep.subr.bf16.mxu0 0
  %297 = vmatpush1.bf16.msra.mxu0 0
  %298 = vmatprep.subr.bf16.mxu0 0
  %299 = vmatpush1.bf16.msra.mxu0 0
  %300 = vmatprep.subr.bf16.mxu0 0
  %301 = vmatpush1.bf16.msra.mxu0 0
  %302 = vmatprep.subr.bf16.mxu0 0
  %303 = vmatpush1.bf16.msra.mxu0 0
  %304 = vmatprep.subr.bf16.mxu0 0
  %305 = vmatpush1.bf16.msra.mxu0 %v285
  %306 = vmatprep.subr.bf16.mxu0 0
  %307 = vmatpush1.bf16.msra.mxu0 %v284
  %308 = vmatprep.subr.bf16.mxu0 0
  %309 = vmatpush2.bf16.msra.mxu0 0
  %310 = vmatprep.subr.bf16.mxu0 0
  %311 = vmatpush2.bf16.msra.mxu0 0
  %312 = vmatprep.subr.bf16.mxu0 0
  %313 = vmatpush2.bf16.msra.mxu0 0
  %314 = vmatprep.subr.bf16.mxu0 0
  %315 = vmatpush2.bf16.msra.mxu0 0
  %316 = vmatprep.subr.bf16.mxu0 0
  %317 = vmatpush2.bf16.msra.mxu0 0
  %318 = vmatprep.subr.bf16.mxu0 0
  %319 = vmatpush2.bf16.msra.mxu0 0
  %320 = vmatprep.subr.bf16.mxu0 0
  %321 = vmatpush2.bf16.msra.mxu0 0
  %322 = vmatprep.subr.bf16.mxu0 0
  %323 = vmatpush2.bf16.msra.mxu0 0
  %324 = vmatprep.mubr.bf16.mxu0 0
  %325 = vmatmul.mubr.bf16.gmra.mxu0 %v290
  %v326 = vpop.f32.mrf.mxu0
  %v327 = vadd.f32 %v274, %v326
  %v328 = vpop.f32.mrf.mxu0
  %v329 = vpop.f32.mrf.mxu0
  %v330 = vadd.f32 %v274, %v329
  %v331 = vpop.f32.mrf.mxu0
  %332 = vdwg.mxu0
  %v333 = vld [vmem:[%s13] sm:$0xf]
  %v334 = vld [vmem:[%s13 + $0x4] sm:$0xf]
  %v335 = vld [vmem:[%s13 + $0x8] sm:$0xf]
  %v336 = vld [vmem:[%s13 + $0xc] sm:$0xf]
  %v337 = vpack.c.bf16 %v330, %v327
  %v338 = vld [vmem:[%s15] sm:$0x1]
  %v340 = vlaneseq
  %v341 = vshrl.u32 %v340, 7
  %v342 = vsub.s32 0, %v341
  %v343 = vrot.slane %v338, %v342
  %v349 = vunpack.c.l.b16 %v333
  %v350 = vunpack.c.l.b16 %v334
  %v351 = vunpack.c.l.b16 %v335
  %v352 = vunpack.c.l.b16 %v336
  %v353 = vpack.c.b16 %v350, %v349
  %v354 = vpack.c.b16 %v352, %v351
  %v358 = vsel %vm288, %v337, 0
  %360 = vmatprep.subr.bf16.mxu0 0
  %361 = vmatpush1.bf16.msra.mxu0 0
  %362 = vmatprep.subr.bf16.mxu0 0
  %363 = vmatpush1.bf16.msra.mxu0 0
  %364 = vmatprep.subr.bf16.mxu0 0
  %365 = vmatpush1.bf16.msra.mxu0 0
  %366 = vmatprep.subr.bf16.mxu0 0
  %367 = vmatpush1.bf16.msra.mxu0 0
  %368 = vmatprep.subr.bf16.mxu0 0
  %369 = vmatpush1.bf16.msra.mxu0 0
  %370 = vmatprep.subr.bf16.mxu0 0
  %371 = vmatpush1.bf16.msra.mxu0 0
  %372 = vmatprep.subr.bf16.mxu0 0
  %373 = vmatpush1.bf16.msra.mxu0 %v354
  %374 = vmatprep.subr.bf16.mxu0 0
  %375 = vmatpush1.bf16.msra.mxu0 %v353
  %376 = vmatprep.subr.bf16.mxu0 0
  %377 = vmatpush2.bf16.msra.mxu0 0
  %378 = vmatprep.subr.bf16.mxu0 0
  %379 = vmatpush2.bf16.msra.mxu0 0
  %380 = vmatprep.subr.bf16.mxu0 0
  %381 = vmatpush2.bf16.msra.mxu0 0
  %382 = vmatprep.subr.bf16.mxu0 0
  %383 = vmatpush2.bf16.msra.mxu0 0
  %384 = vmatprep.subr.bf16.mxu0 0
  %385 = vmatpush2.bf16.msra.mxu0 0
  %386 = vmatprep.subr.bf16.mxu0 0
  %387 = vmatpush2.bf16.msra.mxu0 0
  %388 = vmatprep.subr.bf16.mxu0 0
  %389 = vmatpush2.bf16.msra.mxu0 0
  %390 = vmatprep.subr.bf16.mxu0 0
  %391 = vmatpush2.bf16.msra.mxu0 0
  %392 = vmatprep.mubr.bf16.mxu0 0
  %393 = vmatmul.mubr.bf16.gmra.mxu0 %v358
  %v394 = vpop.f32.mrf.mxu0
  %v395 = vadd.f32 %v343, %v394
  %v396 = vpop.f32.mrf.mxu0
  %v397 = vpop.f32.mrf.mxu0
  %v398 = vadd.f32 %v343, %v397
  %v399 = vpop.f32.mrf.mxu0
  %400 = vdwg.mxu0
  %v401 = vld [vmem:[%s17] sm:$0xf]
  %v402 = vld [vmem:[%s17 + $0x4] sm:$0xf]
  %v403 = vld [vmem:[%s17 + $0x8] sm:$0xf]
  %v404 = vld [vmem:[%s17 + $0xc] sm:$0xf]
  %v405 = vpack.c.bf16 %v395, %v395
  %v406 = vpack.c.bf16 %v398, %v398
  %408 = vrot.lane.b32.xlu0 %v405, 96
  %v409 = vpop.permute.xlu0 %408
  %vm410 = vcmask 130048
  %v412 = vsel %vm410, %v405, 0
  %v415 = vsel %vm410, %v409, 0
  %417 = vmatprep.subr.bf16.mxu0 0
  %418 = vmatpush1.bf16.xpose.msra.mxu0 0
  %419 = vmatprep.subr.bf16.mxu0 0
  %420 = vmatpush1.bf16.xpose.msra.mxu0 0
  %421 = vmatprep.subr.bf16.mxu0 0
  %422 = vmatpush1.bf16.xpose.msra.mxu0 0
  %423 = vmatprep.subr.bf16.mxu0 0
  %424 = vmatpush1.bf16.xpose.msra.mxu0 0
  %425 = vmatprep.subr.bf16.mxu0 0
  %426 = vmatpush1.bf16.xpose.msra.mxu0 0
  %427 = vmatprep.subr.bf16.mxu0 0
  %428 = vmatpush1.bf16.xpose.msra.mxu0 0
  %429 = vmatprep.subr.bf16.mxu0 0
  %430 = vmatpush1.bf16.xpose.msra.mxu0 0
  %431 = vmatprep.subr.bf16.mxu0 0
  %432 = vmatpush1.bf16.xpose.msra.mxu0 %v415
  %433 = vmatprep.subr.bf16.mxu0 0
  %434 = vmatpush2.bf16.xpose.msra.mxu0 0
  %435 = vmatprep.subr.bf16.mxu0 0
  %436 = vmatpush2.bf16.xpose.msra.mxu0 0
  %437 = vmatprep.subr.bf16.mxu0 0
  %438 = vmatpush2.bf16.xpose.msra.mxu0 0
  %439 = vmatprep.subr.bf16.mxu0 0
  %440 = vmatpush2.bf16.xpose.msra.mxu0 0
  %441 = vmatprep.subr.bf16.mxu0 0
  %442 = vmatpush2.bf16.xpose.msra.mxu0 0
  %443 = vmatprep.subr.bf16.mxu0 0
  %444 = vmatpush2.bf16.xpose.msra.mxu0 0
  %445 = vmatprep.subr.bf16.mxu0 0
  %446 = vmatpush2.bf16.xpose.msra.mxu0 0
  %447 = vmatprep.subr.bf16.mxu0 0
  %448 = vmatpush2.bf16.xpose.msra.mxu0 0
  %449 = vmatprep.mubr.bf16.mxu0 0
  %450 = vmatmul.mubr.bf16.gmra.mxu0 %v412
  %v451 = vpop.f32.mrf.mxu0
  %v452 = vadd.f32 0.0, %v451
  %v453 = vpop.f32.mrf.mxu0
  %v454 = vpop.f32.mrf.mxu0
  %v455 = vpop.f32.mrf.mxu0
  %456 = vdwg.mxu0
  %458 = vrot.lane.b32.xlu0 %v406, 96
  %v459 = vpop.permute.xlu0 %458
  %v461 = vsel %vm410, %v406, 0
  %v464 = vsel %vm410, %v459, 0
  %466 = vmatprep.subr.bf16.mxu0 0
  %467 = vmatpush1.bf16.xpose.msra.mxu0 0
  %468 = vmatprep.subr.bf16.mxu0 0
  %469 = vmatpush1.bf16.xpose.msra.mxu0 0
  %470 = vmatprep.subr.bf16.mxu0 0
  %471 = vmatpush1.bf16.xpose.msra.mxu0 0
  %472 = vmatprep.subr.bf16.mxu0 0
  %473 = vmatpush1.bf16.xpose.msra.mxu0 0
  %474 = vmatprep.subr.bf16.mxu0 0
  %475 = vmatpush1.bf16.xpose.msra.mxu0 0
  %476 = vmatprep.subr.bf16.mxu0 0
  %477 = vmatpush1.bf16.xpose.msra.mxu0 0
  %478 = vmatprep.subr.bf16.mxu0 0
  %479 = vmatpush1.bf16.xpose.msra.mxu0 0
  %480 = vmatprep.subr.bf16.mxu0 0
  %481 = vmatpush1.bf16.xpose.msra.mxu0 %v464
  %482 = vmatprep.subr.bf16.mxu0 0
  %483 = vmatpush2.bf16.xpose.msra.mxu0 0
  %484 = vmatprep.subr.bf16.mxu0 0
  %485 = vmatpush2.bf16.xpose.msra.mxu0 0
  %486 = vmatprep.subr.bf16.mxu0 0
  %487 = vmatpush2.bf16.xpose.msra.mxu0 0
  %488 = vmatprep.subr.bf16.mxu0 0
  %489 = vmatpush2.bf16.xpose.msra.mxu0 0
  %490 = vmatprep.subr.bf16.mxu0 0
  %491 = vmatpush2.bf16.xpose.msra.mxu0 0
  %492 = vmatprep.subr.bf16.mxu0 0
  %493 = vmatpush2.bf16.xpose.msra.mxu0 0
  %494 = vmatprep.subr.bf16.mxu0 0
  %495 = vmatpush2.bf16.xpose.msra.mxu0 0
  %496 = vmatprep.subr.bf16.mxu0 0
  %497 = vmatpush2.bf16.xpose.msra.mxu0 0
  %498 = vmatprep.mubr.bf16.mxu0 0
  %499 = vmatmul.mubr.bf16.gmra.mxu0 %v461
  %v500 = vpop.f32.mrf.mxu0
  %v501 = vadd.f32 0.0, %v500
  %v502 = vpop.f32.mrf.mxu0
  %v503 = vpop.f32.mrf.mxu0
  %v504 = vpop.f32.mrf.mxu0
  %505 = vdwg.mxu0
  %v506 = vmul.f32 %v452, 0.25
  %v507 = vmul.f32 %v501, 0.25
  %vm508 = vcmask 64512
  %v509 = vsel %vm508, %v506, -inf
  %510 = vmax.xlane.f32.xlu0 %v509
  %v511 = vpop.xlane.xlu0 %510
  %v512 = vsel %vm508, %v507, -inf
  %513 = vmax.xlane.f32.xlu0 %v512
  %v514 = vpop.xlane.xlu0 %513
  %v515 = vsub.f32 %v506, %v511
  %v516 = vsub.f32 %v507, %v514
  %v517 = vmul.f32 %v515, 1.442695
  %v518 = vpow.pop %v517
  %v519 = vmul.f32 %v516, 1.442695
  %v520 = vpow.pop %v519
  %v521 = vsel %vm508, %v518, 0.0
  %522 = vadd.xlane.f32.xlu0 %v521
  %v523 = vpop.xlane.xlu0 %522
  %v524 = vsel %vm508, %v520, 0.0
  %525 = vadd.xlane.f32.xlu0 %v524
  %v526 = vpop.xlane.xlu0 %525
  %v527 = vrcp.pop %v523
  %v528 = vrcp.pop %v526
  %v529 = vmul.f32 %v518, %v527
  %v530 = vmul.f32 %v520, %v528
  %v531 = vpack.c.bf16 %v529, %v529
  %v532 = vpack.c.bf16 %v530, %v530
  %533 = vrot.lane.b32.xlu0 %v405, 64
  %v534 = vpop.permute.xlu0 %533
  %v536 = vsel %vm508, %v531, 0
  %vm538 = vcmask 1043456
  %v540 = vsel %vm538, %v534, 0
  %542 = vmatprep.subr.bf16.mxu0 0
  %543 = vmatpush1.bf16.msra.mxu0 0
  %544 = vmatprep.subr.bf16.mxu0 0
  %545 = vmatpush1.bf16.msra.mxu0 0
  %546 = vmatprep.subr.bf16.mxu0 0
  %547 = vmatpush1.bf16.msra.mxu0 0
  %548 = vmatprep.subr.bf16.mxu0 0
  %549 = vmatpush1.bf16.msra.mxu0 0
  %550 = vmatprep.subr.bf16.mxu0 0
  %551 = vmatpush1.bf16.msra.mxu0 0
  %552 = vmatprep.subr.bf16.mxu0 0
  %553 = vmatpush1.bf16.msra.mxu0 0
  %554 = vmatprep.subr.bf16.mxu0 0
  %555 = vmatpush1.bf16.msra.mxu0 0
  %556 = vmatprep.subr.bf16.mxu0 0
  %557 = vmatpush1.bf16.msra.mxu0 %v540
  %558 = vmatprep.subr.bf16.mxu0 0
  %559 = vmatpush2.bf16.msra.mxu0 0
  %560 = vmatprep.subr.bf16.mxu0 0
  %561 = vmatpush2.bf16.msra.mxu0 0
  %562 = vmatprep.subr.bf16.mxu0 0
  %563 = vmatpush2.bf16.msra.mxu0 0
  %564 = vmatprep.subr.bf16.mxu0 0
  %565 = vmatpush2.bf16.msra.mxu0 0
  %566 = vmatprep.subr.bf16.mxu0 0
  %567 = vmatpush2.bf16.msra.mxu0 0
  %568 = vmatprep.subr.bf16.mxu0 0
  %569 = vmatpush2.bf16.msra.mxu0 0
  %570 = vmatprep.subr.bf16.mxu0 0
  %571 = vmatpush2.bf16.msra.mxu0 0
  %572 = vmatprep.subr.bf16.mxu0 0
  %573 = vmatpush2.bf16.msra.mxu0 0
  %574 = vmatprep.mubr.bf16.mxu0 0
  %575 = vmatmul.mubr.bf16.gmra.mxu0 %v536
  %v576 = vpop.f32.mrf.mxu0
  %v577 = vadd.f32 0.0, %v576
  %v578 = vpop.f32.mrf.mxu0
  %v579 = vpop.f32.mrf.mxu0
  %v580 = vpop.f32.mrf.mxu0
  %581 = vdwg.mxu0
  %582 = vrot.lane.b32.xlu0 %v406, 64
  %v583 = vpop.permute.xlu0 %582
  %v585 = vsel %vm508, %v532, 0
  %v588 = vsel %vm538, %v583, 0
  %590 = vmatprep.subr.bf16.mxu0 0
  %591 = vmatpush1.bf16.msra.mxu0 0
  %592 = vmatprep.subr.bf16.mxu0 0
  %593 = vmatpush1.bf16.msra.mxu0 0
  %594 = vmatprep.subr.bf16.mxu0 0
  %595 = vmatpush1.bf16.msra.mxu0 0
  %596 = vmatprep.subr.bf16.mxu0 0
  %597 = vmatpush1.bf16.msra.mxu0 0
  %598 = vmatprep.subr.bf16.mxu0 0
  %599 = vmatpush1.bf16.msra.mxu0 0
  %600 = vmatprep.subr.bf16.mxu0 0
  %601 = vmatpush1.bf16.msra.mxu0 0
  %602 = vmatprep.subr.bf16.mxu0 0
  %603 = vmatpush1.bf16.msra.mxu0 0
  %604 = vmatprep.subr.bf16.mxu0 0
  %605 = vmatpush1.bf16.msra.mxu0 %v588
  %606 = vmatprep.subr.bf16.mxu0 0
  %607 = vmatpush2.bf16.msra.mxu0 0
  %608 = vmatprep.subr.bf16.mxu0 0
  %609 = vmatpush2.bf16.msra.mxu0 0
  %610 = vmatprep.subr.bf16.mxu0 0
  %611 = vmatpush2.bf16.msra.mxu0 0
  %612 = vmatprep.subr.bf16.mxu0 0
  %613 = vmatpush2.bf16.msra.mxu0 0
  %614 = vmatprep.subr.bf16.mxu0 0
  %615 = vmatpush2.bf16.msra.mxu0 0
  %616 = vmatprep.subr.bf16.mxu0 0
  %617 = vmatpush2.bf16.msra.mxu0 0
  %618 = vmatprep.subr.bf16.mxu0 0
  %619 = vmatpush2.bf16.msra.mxu0 0
  %620 = vmatprep.subr.bf16.mxu0 0
  %621 = vmatpush2.bf16.msra.mxu0 0
  %622 = vmatprep.mubr.bf16.mxu0 0
  %623 = vmatmul.mubr.bf16.gmra.mxu0 %v585
  %v624 = vpop.f32.mrf.mxu0
  %v625 = vadd.f32 0.0, %v624
  %v626 = vpop.f32.mrf.mxu0
  %v627 = vpop.f32.mrf.mxu0
  %v628 = vpop.f32.mrf.mxu0
  %629 = vdwg.mxu0
  %630 = vrot.lane.b32.xlu0 %v405, 112
  %v631 = vpop.permute.xlu0 %630
  %632 = vrot.lane.b32.xlu0 %v405, 80
  %v633 = vpop.permute.xlu0 %632
  %v635 = vsel %vm410, %v631, 0
  %v638 = vsel %vm410, %v633, 0
  %640 = vmatprep.subr.bf16.mxu0 0
  %641 = vmatpush1.bf16.xpose.msra.mxu0 0
  %642 = vmatprep.subr.bf16.mxu0 0
  %643 = vmatpush1.bf16.xpose.msra.mxu0 0
  %644 = vmatprep.subr.bf16.mxu0 0
  %645 = vmatpush1.bf16.xpose.msra.mxu0 0
  %646 = vmatprep.subr.bf16.mxu0 0
  %647 = vmatpush1.bf16.xpose.msra.mxu0 0
  %648 = vmatprep.subr.bf16.mxu0 0
  %649 = vmatpush1.bf16.xpose.msra.mxu0 0
  %650 = vmatprep.subr.bf16.mxu0 0
  %651 = vmatpush1.bf16.xpose.msra.mxu0 0
  %652 = vmatprep.subr.bf16.mxu0 0
  %653 = vmatpush1.bf16.xpose.msra.mxu0 0
  %654 = vmatprep.subr.bf16.mxu0 0
  %655 = vmatpush1.bf16.xpose.msra.mxu0 %v638
  %656 = vmatprep.subr.bf16.mxu0 0
  %657 = vmatpush2.bf16.xpose.msra.mxu0 0
  %658 = vmatprep.subr.bf16.mxu0 0
  %659 = vmatpush2.bf16.xpose.msra.mxu0 0
  %660 = vmatprep.subr.bf16.mxu0 0
  %661 = vmatpush2.bf16.xpose.msra.mxu0 0
  %662 = vmatprep.subr.bf16.mxu0 0
  %663 = vmatpush2.bf16.xpose.msra.mxu0 0
  %664 = vmatprep.subr.bf16.mxu0 0
  %665 = vmatpush2.bf16.xpose.msra.mxu0 0
  %666 = vmatprep.subr.bf16.mxu0 0
  %667 = vmatpush2.bf16.xpose.msra.mxu0 0
  %668 = vmatprep.subr.bf16.mxu0 0
  %669 = vmatpush2.bf16.xpose.msra.mxu0 0
  %670 = vmatprep.subr.bf16.mxu0 0
  %671 = vmatpush2.bf16.xpose.msra.mxu0 0
  %672 = vmatprep.mubr.bf16.mxu0 0
  %673 = vmatmul.mubr.bf16.gmra.mxu0 %v635
  %v674 = vpop.f32.mrf.mxu0
  %v675 = vadd.f32 0.0, %v674
  %v676 = vpop.f32.mrf.mxu0
  %v677 = vpop.f32.mrf.mxu0
  %v678 = vpop.f32.mrf.mxu0
  %679 = vdwg.mxu0
  %680 = vrot.lane.b32.xlu0 %v406, 112
  %v681 = vpop.permute.xlu0 %680
  %682 = vrot.lane.b32.xlu0 %v406, 80
  %v683 = vpop.permute.xlu0 %682
  %v685 = vsel %vm410, %v681, 0
  %v688 = vsel %vm410, %v683, 0
  %690 = vmatprep.subr.bf16.mxu0 0
  %691 = vmatpush1.bf16.xpose.msra.mxu0 0
  %692 = vmatprep.subr.bf16.mxu0 0
  %693 = vmatpush1.bf16.xpose.msra.mxu0 0
  %694 = vmatprep.subr.bf16.mxu0 0
  %695 = vmatpush1.bf16.xpose.msra.mxu0 0
  %696 = vmatprep.subr.bf16.mxu0 0
  %697 = vmatpush1.bf16.xpose.msra.mxu0 0
  %698 = vmatprep.subr.bf16.mxu0 0
  %699 = vmatpush1.bf16.xpose.msra.mxu0 0
  %700 = vmatprep.subr.bf16.mxu0 0
  %701 = vmatpush1.bf16.xpose.msra.mxu0 0
  %702 = vmatprep.subr.bf16.mxu0 0
  %703 = vmatpush1.bf16.xpose.msra.mxu0 0
  %704 = vmatprep.subr.bf16.mxu0 0
  %705 = vmatpush1.bf16.xpose.msra.mxu0 %v688
  %706 = vmatprep.subr.bf16.mxu0 0
  %707 = vmatpush2.bf16.xpose.msra.mxu0 0
  %708 = vmatprep.subr.bf16.mxu0 0
  %709 = vmatpush2.bf16.xpose.msra.mxu0 0
  %710 = vmatprep.subr.bf16.mxu0 0
  %711 = vmatpush2.bf16.xpose.msra.mxu0 0
  %712 = vmatprep.subr.bf16.mxu0 0
  %713 = vmatpush2.bf16.xpose.msra.mxu0 0
  %714 = vmatprep.subr.bf16.mxu0 0
  %715 = vmatpush2.bf16.xpose.msra.mxu0 0
  %716 = vmatprep.subr.bf16.mxu0 0
  %717 = vmatpush2.bf16.xpose.msra.mxu0 0
  %718 = vmatprep.subr.bf16.mxu0 0
  %719 = vmatpush2.bf16.xpose.msra.mxu0 0
  %720 = vmatprep.subr.bf16.mxu0 0
  %721 = vmatpush2.bf16.xpose.msra.mxu0 0
  %722 = vmatprep.mubr.bf16.mxu0 0
  %723 = vmatmul.mubr.bf16.gmra.mxu0 %v685
  %v724 = vpop.f32.mrf.mxu0
  %v725 = vadd.f32 0.0, %v724
  %v726 = vpop.f32.mrf.mxu0
  %v727 = vpop.f32.mrf.mxu0
  %v728 = vpop.f32.mrf.mxu0
  %729 = vdwg.mxu0
  %v730 = vmul.f32 %v675, 0.25
  %v731 = vmul.f32 %v725, 0.25
  %v732 = vsel %vm508, %v730, -inf
  %733 = vmax.xlane.f32.xlu0 %v732
  %v734 = vpop.xlane.xlu0 %733
  %v735 = vsel %vm508, %v731, -inf
  %736 = vmax.xlane.f32.xlu0 %v735
  %v737 = vpop.xlane.xlu0 %736
  %v738 = vsub.f32 %v730, %v734
  %v739 = vsub.f32 %v731, %v737
  %v740 = vmul.f32 %v738, 1.442695
  %v741 = vpow.pop %v740
  %v742 = vmul.f32 %v739, 1.442695
  %v743 = vpow.pop %v742
  %v744 = vsel %vm508, %v741, 0.0
  %745 = vadd.xlane.f32.xlu0 %v744
  %v746 = vpop.xlane.xlu0 %745
  %v747 = vsel %vm508, %v743, 0.0
  %748 = vadd.xlane.f32.xlu0 %v747
  %v749 = vpop.xlane.xlu0 %748
  %v750 = vrcp.pop %v746
  %v751 = vrcp.pop %v749
  %v752 = vmul.f32 %v741, %v750
  %v753 = vmul.f32 %v743, %v751
  %v754 = vpack.c.bf16 %v752, %v752
  %v755 = vpack.c.bf16 %v753, %v753
  %756 = vrot.lane.b32.xlu0 %v405, 48
  %v757 = vpop.permute.xlu0 %756
  %v759 = vsel %vm508, %v754, 0
  %v762 = vsel %vm538, %v757, 0
  %764 = vmatprep.subr.bf16.mxu0 0
  %765 = vmatpush1.bf16.msra.mxu0 0
  %766 = vmatprep.subr.bf16.mxu0 0
  %767 = vmatpush1.bf16.msra.mxu0 0
  %768 = vmatprep.subr.bf16.mxu0 0
  %769 = vmatpush1.bf16.msra.mxu0 0
  %770 = vmatprep.subr.bf16.mxu0 0
  %771 = vmatpush1.bf16.msra.mxu0 0
  %772 = vmatprep.subr.bf16.mxu0 0
  %773 = vmatpush1.bf16.msra.mxu0 0
  %774 = vmatprep.subr.bf16.mxu0 0
  %775 = vmatpush1.bf16.msra.mxu0 0
  %776 = vmatprep.subr.bf16.mxu0 0
  %777 = vmatpush1.bf16.msra.mxu0 0
  %778 = vmatprep.subr.bf16.mxu0 0
  %779 = vmatpush1.bf16.msra.mxu0 %v762
  %780 = vmatprep.subr.bf16.mxu0 0
  %781 = vmatpush2.bf16.msra.mxu0 0
  %782 = vmatprep.subr.bf16.mxu0 0
  %783 = vmatpush2.bf16.msra.mxu0 0
  %784 = vmatprep.subr.bf16.mxu0 0
  %785 = vmatpush2.bf16.msra.mxu0 0
  %786 = vmatprep.subr.bf16.mxu0 0
  %787 = vmatpush2.bf16.msra.mxu0 0
  %788 = vmatprep.subr.bf16.mxu0 0
  %789 = vmatpush2.bf16.msra.mxu0 0
  %790 = vmatprep.subr.bf16.mxu0 0
  %791 = vmatpush2.bf16.msra.mxu0 0
  %792 = vmatprep.subr.bf16.mxu0 0
  %793 = vmatpush2.bf16.msra.mxu0 0
  %794 = vmatprep.subr.bf16.mxu0 0
  %795 = vmatpush2.bf16.msra.mxu0 0
  %796 = vmatprep.mubr.bf16.mxu0 0
  %797 = vmatmul.mubr.bf16.gmra.mxu0 %v759
  %v798 = vpop.f32.mrf.mxu0
  %v799 = vadd.f32 0.0, %v798
  %v800 = vpop.f32.mrf.mxu0
  %v801 = vpop.f32.mrf.mxu0
  %v802 = vpop.f32.mrf.mxu0
  %803 = vdwg.mxu0
  %804 = vrot.lane.b32.xlu0 %v406, 48
  %v805 = vpop.permute.xlu0 %804
  %v807 = vsel %vm508, %v755, 0
  %v810 = vsel %vm538, %v805, 0
  %812 = vmatprep.subr.bf16.mxu0 0
  %813 = vmatpush1.bf16.msra.mxu0 0
  %814 = vmatprep.subr.bf16.mxu0 0
  %815 = vmatpush1.bf16.msra.mxu0 0
  %816 = vmatprep.subr.bf16.mxu0 0
  %817 = vmatpush1.bf16.msra.mxu0 0
  %818 = vmatprep.subr.bf16.mxu0 0
  %819 = vmatpush1.bf16.msra.mxu0 0
  %820 = vmatprep.subr.bf16.mxu0 0
  %821 = vmatpush1.bf16.msra.mxu0 0
  %822 = vmatprep.subr.bf16.mxu0 0
  %823 = vmatpush1.bf16.msra.mxu0 0
  %824 = vmatprep.subr.bf16.mxu0 0
  %825 = vmatpush1.bf16.msra.mxu0 0
  %826 = vmatprep.subr.bf16.mxu0 0
  %827 = vmatpush1.bf16.msra.mxu0 %v810
  %828 = vmatprep.subr.bf16.mxu0 0
  %829 = vmatpush2.bf16.msra.mxu0 0
  %830 = vmatprep.subr.bf16.mxu0 0
  %831 = vmatpush2.bf16.msra.mxu0 0
  %832 = vmatprep.subr.bf16.mxu0 0
  %833 = vmatpush2.bf16.msra.mxu0 0
  %834 = vmatprep.subr.bf16.mxu0 0
  %835 = vmatpush2.bf16.msra.mxu0 0
  %836 = vmatprep.subr.bf16.mxu0 0
  %837 = vmatpush2.bf16.msra.mxu0 0
  %838 = vmatprep.subr.bf16.mxu0 0
  %839 = vmatpush2.bf16.msra.mxu0 0
  %840 = vmatprep.subr.bf16.mxu0 0
  %841 = vmatpush2.bf16.msra.mxu0 0
  %842 = vmatprep.subr.bf16.mxu0 0
  %843 = vmatpush2.bf16.msra.mxu0 0
  %844 = vmatprep.mubr.bf16.mxu0 0
  %845 = vmatmul.mubr.bf16.gmra.mxu0 %v807
  %v846 = vpop.f32.mrf.mxu0
  %v847 = vadd.f32 0.0, %v846
  %v848 = vpop.f32.mrf.mxu0
  %v849 = vpop.f32.mrf.mxu0
  %v850 = vpop.f32.mrf.mxu0
  %851 = vdwg.mxu0
  %854 = vrot.lane.b32.xlu0 %v799, 16
  %v855 = vpop.permute.xlu0 %854
  %856 = vrot.lane.b32.xlu0 %v847, 16
  %v857 = vpop.permute.xlu0 %856
  %v860 = vsel %vm410, %v577, %v855
  %v861 = vsel %vm410, %v625, %v857
  %v862 = vpack.c.bf16 %v861, %v860
  %v863 = vld [vmem:[%s19] sm:$0x1]
  %v865 = vlaneseq
  %v866 = vshrl.u32 %v865, 7
  %v867 = vsub.s32 0, %v866
  %v868 = vrot.slane %v863, %v867
  %v874 = vunpack.c.l.b16 %v401
  %v875 = vunpack.c.l.b16 %v402
  %v876 = vunpack.c.l.b16 %v403
  %v877 = vunpack.c.l.b16 %v404
  %v878 = vpack.c.b16 %v875, %v874
  %v879 = vpack.c.b16 %v877, %v876
  %v883 = vsel %vm288, %v862, 0
  %885 = vmatprep.subr.bf16.mxu0 0
  %886 = vmatpush1.bf16.msra.mxu0 0
  %887 = vmatprep.subr.bf16.mxu0 0
  %888 = vmatpush1.bf16.msra.mxu0 0
  %889 = vmatprep.subr.bf16.mxu0 0
  %890 = vmatpush1.bf16.msra.mxu0 0
  %891 = vmatprep.subr.bf16.mxu0 0
  %892 = vmatpush1.bf16.msra.mxu0 0
  %893 = vmatprep.subr.bf16.mxu0 0
  %894 = vmatpush1.bf16.msra.mxu0 0
  %895 = vmatprep.subr.bf16.mxu0 0
  %896 = vmatpush1.bf16.msra.mxu0 0
  %897 = vmatprep.subr.bf16.mxu0 0
  %898 = vmatpush1.bf16.msra.mxu0 %v879
  %899 = vmatprep.subr.bf16.mxu0 0
  %900 = vmatpush1.bf16.msra.mxu0 %v878
  %901 = vmatprep.subr.bf16.mxu0 0
  %902 = vmatpush2.bf16.msra.mxu0 0
  %903 = vmatprep.subr.bf16.mxu0 0
  %904 = vmatpush2.bf16.msra.mxu0 0
  %905 = vmatprep.subr.bf16.mxu0 0
  %906 = vmatpush2.bf16.msra.mxu0 0
  %907 = vmatprep.subr.bf16.mxu0 0
  %908 = vmatpush2.bf16.msra.mxu0 0
  %909 = vmatprep.subr.bf16.mxu0 0
  %910 = vmatpush2.bf16.msra.mxu0 0
  %911 = vmatprep.subr.bf16.mxu0 0
  %912 = vmatpush2.bf16.msra.mxu0 0
  %913 = vmatprep.subr.bf16.mxu0 0
  %914 = vmatpush2.bf16.msra.mxu0 0
  %915 = vmatprep.subr.bf16.mxu0 0
  %916 = vmatpush2.bf16.msra.mxu0 0
  %917 = vmatprep.mubr.bf16.mxu0 0
  %918 = vmatmul.mubr.bf16.gmra.mxu0 %v883
  %v919 = vpop.f32.mrf.mxu0
  %v920 = vadd.f32 %v868, %v919
  %v921 = vpop.f32.mrf.mxu0
  %v922 = vpop.f32.mrf.mxu0
  %v923 = vadd.f32 %v868, %v922
  %v924 = vpop.f32.mrf.mxu0
  %925 = vdwg.mxu0
  %v926 = vadd.f32 %v327, %v920
  %v927 = vadd.f32 %v330, %v923
  %v928 = vld [vmem:[%s21] sm:$0x1]
  %v929 = vld [vmem:[%s23] sm:$0x1]
  %v930 = vsel %vm288, %v926, 0.0
  %931 = vadd.xlane.f32.xlu0 %v930
  %v932 = vpop.xlane.xlu0 %931
  %v933 = vsel %vm288, %v927, 0.0
  %934 = vadd.xlane.f32.xlu0 %v933
  %v935 = vpop.xlane.xlu0 %934
  %v936 = vrcp.pop 32.0
  %v937 = vmul.f32 %v932, %v936
  %v938 = vmul.f32 %v935, %v936
  %v939 = vsub.f32 %v926, %v937
  %v940 = vsub.f32 %v927, %v938
  %v941 = vmul.f32 %v939, %v939
  %v942 = vmul.f32 %v940, %v940
  %v943 = vsel %vm288, %v941, 0.0
  %944 = vadd.xlane.f32.xlu0 %v943
  %v945 = vpop.xlane.xlu0 %944
  %v946 = vsel %vm288, %v942, 0.0
  %947 = vadd.xlane.f32.xlu0 %v946
  %v948 = vpop.xlane.xlu0 %947
  %v949 = vmul.f32 %v945, %v936
  %v950 = vmul.f32 %v948, %v936
  %v951 = vadd.f32 %v949, 1e-05
  %v952 = vadd.f32 %v950, 1e-05
  %v953 = vrsqrt.pop %v951
  %v954 = vrsqrt.pop %v952
  %v955 = vmul.f32 %v939, %v953
  %v956 = vmul.f32 %v940, %v954
  %v958 = vlaneseq
  %v959 = vshrl.u32 %v958, 7
  %v960 = vsub.s32 0, %v959
  %v961 = vrot.slane %v928, %v960
  %v963 = vmul.f32 %v955, %v961
  %v964 = vmul.f32 %v956, %v961
  %v966 = vlaneseq
  %v967 = vshrl.u32 %v966, 7
  %v968 = vsub.s32 0, %v967
  %v969 = vrot.slane %v929, %v968
  %v971 = vadd.f32 %v963, %v969
  %v972 = vadd.f32 %v964, %v969
  %v973 = vld [vmem:[%s25] sm:$0xf]
  %v974 = vld [vmem:[%s25 + $0x4] sm:$0xf]
  %v975 = vld [vmem:[%s25 + $0x8] sm:$0xf]
  %v976 = vld [vmem:[%s25 + $0xc] sm:$0xf]
  %v977 = vpack.c.bf16 %v972, %v971
  %v978 = vld [vmem:[%s27] sm:$0x1]
  %v980 = vlaneseq
  %v981 = vshrl.u32 %v980, 7
  %v982 = vsub.s32 0, %v981
  %v983 = vrot.slane %v978, %v982
  %v989 = vunpack.c.l.b16 %v973
  %v990 = vunpack.c.l.b16 %v974
  %v991 = vunpack.c.l.b16 %v975
  %v992 = vunpack.c.l.b16 %v976
  %v993 = vpack.c.b16 %v990, %v989
  %v994 = vpack.c.b16 %v992, %v991
  %v998 = vsel %vm288, %v977, 0
  %1000 = vmatprep.subr.bf16.mxu0 0
  %1001 = vmatpush1.bf16.msra.mxu0 0
  %1002 = vmatprep.subr.bf16.mxu0 0
  %1003 = vmatpush1.bf16.msra.mxu0 0
  %1004 = vmatprep.subr.bf16.mxu0 0
  %1005 = vmatpush1.bf16.msra.mxu0 0
  %1006 = vmatprep.subr.bf16.mxu0 0
  %1007 = vmatpush1.bf16.msra.mxu0 0
  %1008 = vmatprep.subr.bf16.mxu0 0
  %1009 = vmatpush1.bf16.msra.mxu0 0
  %1010 = vmatprep.subr.bf16.mxu0 0
  %1011 = vmatpush1.bf16.msra.mxu0 0
  %1012 = vmatprep.subr.bf16.mxu0 0
  %1013 = vmatpush1.bf16.msra.mxu0 %v994
  %1014 = vmatprep.subr.bf16.mxu0 0
  %1015 = vmatpush1.bf16.msra.mxu0 %v993
  %1016 = vmatprep.subr.bf16.mxu0 0
  %1017 = vmatpush2.bf16.msra.mxu0 0
  %1018 = vmatprep.subr.bf16.mxu0 0
  %1019 = vmatpush2.bf16.msra.mxu0 0
  %1020 = vmatprep.subr.bf16.mxu0 0
  %1021 = vmatpush2.bf16.msra.mxu0 0
  %1022 = vmatprep.subr.bf16.mxu0 0
  %1023 = vmatpush2.bf16.msra.mxu0 0
  %1024 = vmatprep.subr.bf16.mxu0 0
  %1025 = vmatpush2.bf16.msra.mxu0 0
  %1026 = vmatprep.subr.bf16.mxu0 0
  %1027 = vmatpush2.bf16.msra.mxu0 0
  %1028 = vmatprep.subr.bf16.mxu0 0
  %1029 = vmatpush2.bf16.msra.mxu0 0
  %1030 = vmatprep.subr.bf16.mxu0 0
  %1031 = vmatpush2.bf16.msra.mxu0 0
  %1032 = vmatprep.mubr.bf16.mxu0 0
  %1033 = vmatmul.mubr.bf16.gmra.mxu0 %v998
  %v1034 = vpop.f32.mrf.mxu0
  %v1035 = vadd.f32 %v983, %v1034
  %v1036 = vpop.f32.mrf.mxu0
  %v1037 = vpop.f32.mrf.mxu0
  %v1038 = vadd.f32 %v983, %v1037
  %v1039 = vpop.f32.mrf.mxu0
  %1040 = vdwg.mxu0
  %v1041 = vmax.f32 %v1035, 0.0
  %v1042 = vmax.f32 %v1038, 0.0
  %v1043 = vld [vmem:[%s29] sm:$0xf]
  %v1044 = vld [vmem:[%s29 + $0x4] sm:$0xf]
  %v1045 = vld [vmem:[%s29 + $0x8] sm:$0xf]
  %v1046 = vld [vmem:[%s29 + $0xc] sm:$0xf]
  %v1047 = vld [vmem:[%s29 + $0x10] sm:$0xf]
  %v1048 = vld [vmem:[%s29 + $0x14] sm:$0xf]
  %v1049 = vld [vmem:[%s29 + $0x18] sm:$0xf]
  %v1050 = vld [vmem:[%s29 + $0x1c] sm:$0xf]
  %v1051 = vld [vmem:[%s29 + $0x20] sm:$0xf]
  %v1052 = vld [vmem:[%s29 + $0x24] sm:$0xf]
  %v1053 = vld [vmem:[%s29 + $0x28] sm:$0xf]
  %v1054 = vld [vmem:[%s29 + $0x2c] sm:$0xf]
  %v1055 = vpack.c.bf16 %v1042, %v1041
  %v1056 = vld [vmem:[%s31] sm:$0x1]
  %v1058 = vlaneseq
  %v1059 = vshrl.u32 %v1058, 7
  %v1060 = vsub.s32 0, %v1059
  %v1061 = vrot.slane %v1056, %v1060
  %v1075 = vunpack.c.l.b16 %v1043
  %v1076 = vunpack.c.l.b16 %v1044
  %v1077 = vunpack.c.l.b16 %v1045
  %v1078 = vunpack.c.l.b16 %v1046
  %v1079 = vunpack.c.l.b16 %v1047
  %v1080 = vunpack.c.l.b16 %v1048
  %v1081 = vunpack.c.l.b16 %v1049
  %v1082 = vunpack.c.l.b16 %v1050
  %v1083 = vunpack.c.l.b16 %v1051
  %v1084 = vunpack.c.l.b16 %v1052
  %v1085 = vunpack.c.l.b16 %v1053
  %v1086 = vunpack.c.l.b16 %v1054
  %v1087 = vpack.c.b16 %v1076, %v1075
  %v1088 = vpack.c.b16 %v1078, %v1077
  %v1089 = vpack.c.b16 %v1080, %v1079
  %v1090 = vpack.c.b16 %v1082, %v1081
  %v1091 = vpack.c.b16 %v1084, %v1083
  %v1092 = vpack.c.b16 %v1086, %v1085
  %vm1099 = vcmask 785408
  %v1101 = vsel %vm1099, %v1055, 0
  %1103 = vmatprep.subr.bf16.mxu0 0
  %1104 = vmatpush1.bf16.msra.mxu0 0
  %1105 = vmatprep.subr.bf16.mxu0 0
  %1106 = vmatpush1.bf16.msra.mxu0 0
  %1107 = vmatprep.subr.bf16.mxu0 0
  %1108 = vmatpush1.bf16.msra.mxu0 %v1092
  %1109 = vmatprep.subr.bf16.mxu0 0
  %1110 = vmatpush1.bf16.msra.mxu0 %v1091
  %1111 = vmatprep.subr.bf16.mxu0 0
  %1112 = vmatpush1.bf16.msra.mxu0 %v1090
  %1113 = vmatprep.subr.bf16.mxu0 0
  %1114 = vmatpush1.bf16.msra.mxu0 %v1089
  %1115 = vmatprep.subr.bf16.mxu0 0
  %1116 = vmatpush1.bf16.msra.mxu0 %v1088
  %1117 = vmatprep.subr.bf16.mxu0 0
  %1118 = vmatpush1.bf16.msra.mxu0 %v1087
  %1119 = vmatprep.subr.bf16.mxu0 0
  %1120 = vmatpush2.bf16.msra.mxu0 0
  %1121 = vmatprep.subr.bf16.mxu0 0
  %1122 = vmatpush2.bf16.msra.mxu0 0
  %1123 = vmatprep.subr.bf16.mxu0 0
  %1124 = vmatpush2.bf16.msra.mxu0 0
  %1125 = vmatprep.subr.bf16.mxu0 0
  %1126 = vmatpush2.bf16.msra.mxu0 0
  %1127 = vmatprep.subr.bf16.mxu0 0
  %1128 = vmatpush2.bf16.msra.mxu0 0
  %1129 = vmatprep.subr.bf16.mxu0 0
  %1130 = vmatpush2.bf16.msra.mxu0 0
  %1131 = vmatprep.subr.bf16.mxu0 0
  %1132 = vmatpush2.bf16.msra.mxu0 0
  %1133 = vmatprep.subr.bf16.mxu0 0
  %1134 = vmatpush2.bf16.msra.mxu0 0
  %1135 = vmatprep.mubr.bf16.mxu0 0
  %1136 = vmatmul.mubr.bf16.gmra.mxu0 %v1101
  %v1137 = vpop.f32.mrf.mxu0
  %v1138 = vadd.f32 %v1061, %v1137
  %v1139 = vpop.f32.mrf.mxu0
  %v1140 = vpop.f32.mrf.mxu0
  %v1141 = vadd.f32 %v1061, %v1140
  %v1142 = vpop.f32.mrf.mxu0
  %1143 = vdwg.mxu0
  %v1144 = vadd.f32 %v971, %v1138
  %v1145 = vadd.f32 %v972, %v1141
  %v1146 = vld [vmem:[%s33] sm:$0x1]
  %v1147 = vld [vmem:[%s35] sm:$0x1]
  %v1148 = vsel %vm288, %v1144, 0.0
  %1149 = vadd.xlane.f32.xlu0 %v1148
  %v1150 = vpop.xlane.xlu0 %1149
  %v1151 = vsel %vm288, %v1145, 0.0
  %1152 = vadd.xlane.f32.xlu0 %v1151
  %v1153 = vpop.xlane.xlu0 %1152
  %v1154 = vmul.f32 %v1150, %v936
  %v1155 = vmul.f32 %v1153, %v936
  %v1156 = vsub.f32 %v1144, %v1154
  %v1157 = vsub.f32 %v1145, %v1155
  %v1158 = vmul.f32 %v1156, %v1156
  %v1159 = vmul.f32 %v1157, %v1157
  %v1160 = vsel %vm288, %v1158, 0.0
  %1161 = vadd.xlane.f32.xlu0 %v1160
  %v1162 = vpop.xlane.xlu0 %1161
  %v1163 = vsel %vm288, %v1159, 0.0
  %1164 = vadd.xlane.f32.xlu0 %v1163
  %v1165 = vpop.xlane.xlu0 %1164
  %v1166 = vmul.f32 %v1162, %v936
  %v1167 = vmul.f32 %v1165, %v936
  %v1168 = vadd.f32 %v1166, 1e-05
  %v1169 = vadd.f32 %v1167, 1e-05
  %v1170 = vrsqrt.pop %v1168
  %v1171 = vrsqrt.pop %v1169
  %v1172 = vmul.f32 %v1156, %v1170
  %v1173 = vmul.f32 %v1157, %v1171
  %v1175 = vlaneseq
  %v1176 = vshrl.u32 %v1175, 7
  %v1177 = vsub.s32 0, %v1176
  %v1178 = vrot.slane %v1146, %v1177
  %v1180 = vmul.f32 %v1172, %v1178
  %v1181 = vmul.f32 %v1173, %v1178
  %v1183 = vlaneseq
  %v1184 = vshrl.u32 %v1183, 7
  %v1185 = vsub.s32 0, %v1184
  %v1186 = vrot.slane %v1147, %v1185
  %v1188 = vadd.f32 %v1180, %v1186
  %v1189 = vadd.f32 %v1181, %v1186
  %s1190 = scalar_lea.vmem %s13, 16
  %v1191 = vld [vmem:[%s1190] sm:$0xf]
  %v1192 = vld [vmem:[%s1190 + $0x4] sm:$0xf]
  %v1193 = vld [vmem:[%s1190 + $0x8] sm:$0xf]
  %v1194 = vld [vmem:[%s1190 + $0xc] sm:$0xf]
  %v1195 = vpack.c.bf16 %v1189, %v1188
  %s1196 = scalar_lea.vmem %s15, 1
  %v1197 = vld [vmem:[%s1196] sm:$0x1]
  %v1199 = vlaneseq
  %v1200 = vshrl.u32 %v1199, 7
  %v1201 = vsub.s32 0, %v1200
  %v1202 = vrot.slane %v1197, %v1201
  %v1208 = vunpack.c.l.b16 %v1191
  %v1209 = vunpack.c.l.b16 %v1192
  %v1210 = vunpack.c.l.b16 %v1193
  %v1211 = vunpack.c.l.b16 %v1194
  %v1212 = vpack.c.b16 %v1209, %v1208
  %v1213 = vpack.c.b16 %v1211, %v1210
  %v1217 = vsel %vm288, %v1195, 0
  %1219 = vmatprep.subr.bf16.mxu0 0
  %1220 = vmatpush1.bf16.msra.mxu0 0
  %1221 = vmatprep.subr.bf16.mxu0 0
  %1222 = vmatpush1.bf16.msra.mxu0 0
  %1223 = vmatprep.subr.bf16.mxu0 0
  %1224 = vmatpush1.bf16.msra.mxu0 0
  %1225 = vmatprep.subr.bf16.mxu0 0
  %1226 = vmatpush1.bf16.msra.mxu0 0
  %1227 = vmatprep.subr.bf16.mxu0 0
  %1228 = vmatpush1.bf16.msra.mxu0 0
  %1229 = vmatprep.subr.bf16.mxu0 0
  %1230 = vmatpush1.bf16.msra.mxu0 0
  %1231 = vmatprep.subr.bf16.mxu0 0
  %1232 = vmatpush1.bf16.msra.mxu0 %v1213
  %1233 = vmatprep.subr.bf16.mxu0 0
  %1234 = vmatpush1.bf16.msra.mxu0 %v1212
  %1235 = vmatprep.subr.bf16.mxu0 0
  %1236 = vmatpush2.bf16.msra.mxu0 0
  %1237 = vmatprep.subr.bf16.mxu0 0
  %1238 = vmatpush2.bf16.msra.mxu0 0
  %1239 = vmatprep.subr.bf16.mxu0 0
  %1240 = vmatpush2.bf16.msra.mxu0 0
  %1241 = vmatprep.subr.bf16.mxu0 0
  %1242 = vmatpush2.bf16.msra.mxu0 0
  %1243 = vmatprep.subr.bf16.mxu0 0
  %1244 = vmatpush2.bf16.msra.mxu0 0
  %1245 = vmatprep.subr.bf16.mxu0 0
  %1246 = vmatpush2.bf16.msra.mxu0 0
  %1247 = vmatprep.subr.bf16.mxu0 0
  %1248 = vmatpush2.bf16.msra.mxu0 0
  %1249 = vmatprep.subr.bf16.mxu0 0
  %1250 = vmatpush2.bf16.msra.mxu0 0
  %1251 = vmatprep.mubr.bf16.mxu0 0
  %1252 = vmatmul.mubr.bf16.gmra.mxu0 %v1217
  %v1253 = vpop.f32.mrf.mxu0
  %v1254 = vadd.f32 %v1202, %v1253
  %v1255 = vpop.f32.mrf.mxu0
  %v1256 = vpop.f32.mrf.mxu0
  %v1257 = vadd.f32 %v1202, %v1256
  %v1258 = vpop.f32.mrf.mxu0
  %1259 = vdwg.mxu0
  %s1260 = scalar_lea.vmem %s17, 16
  %v1261 = vld [vmem:[%s1260] sm:$0xf]
  %v1262 = vld [vmem:[%s1260 + $0x4] sm:$0xf]
  %v1263 = vld [vmem:[%s1260 + $0x8] sm:$0xf]
  %v1264 = vld [vmem:[%s1260 + $0xc] sm:$0xf]
  %v1265 = vpack.c.bf16 %v1254, %v1254
  %v1266 = vpack.c.bf16 %v1257, %v1257
  %1268 = vrot.lane.b32.xlu0 %v1265, 96
  %v1269 = vpop.permute.xlu0 %1268
  %v1271 = vsel %vm410, %v1265, 0
  %v1274 = vsel %vm410, %v1269, 0
  %1276 = vmatprep.subr.bf16.mxu0 0
  %1277 = vmatpush1.bf16.xpose.msra.mxu0 0
  %1278 = vmatprep.subr.bf16.mxu0 0
  %1279 = vmatpush1.bf16.xpose.msra.mxu0 0
  %1280 = vmatprep.subr.bf16.mxu0 0
  %1281 = vmatpush1.bf16.xpose.msra.mxu0 0
  %1282 = vmatprep.subr.bf16.mxu0 0
  %1283 = vmatpush1.bf16.xpose.msra.mxu0 0
  %1284 = vmatprep.subr.bf16.mxu0 0
  %1285 = vmatpush1.bf16.xpose.msra.mxu0 0
  %1286 = vmatprep.subr.bf16.mxu0 0
  %1287 = vmatpush1.bf16.xpose.msra.mxu0 0
  %1288 = vmatprep.subr.bf16.mxu0 0
  %1289 = vmatpush1.bf16.xpose.msra.mxu0 0
  %1290 = vmatprep.subr.bf16.mxu0 0
  %1291 = vmatpush1.bf16.xpose.msra.mxu0 %v1274
  %1292 = vmatprep.subr.bf16.mxu0 0
  %1293 = vmatpush2.bf16.xpose.msra.mxu0 0
  %1294 = vmatprep.subr.bf16.mxu0 0
  %1295 = vmatpush2.bf16.xpose.msra.mxu0 0
  %1296 = vmatprep.subr.bf16.mxu0 0
  %1297 = vmatpush2.bf16.xpose.msra.mxu0 0
  %1298 = vmatprep.subr.bf16.mxu0 0
  %1299 = vmatpush2.bf16.xpose.msra.mxu0 0
  %1300 = vmatprep.subr.bf16.mxu0 0
  %1301 = vmatpush2.bf16.xpose.msra.mxu0 0
  %1302 = vmatprep.subr.bf16.mxu0 0
  %1303 = vmatpush2.bf16.xpose.msra.mxu0 0
  %1304 = vmatprep.subr.bf16.mxu0 0
  %1305 = vmatpush2.bf16.xpose.msra.mxu0 0
  %1306 = vmatprep.subr.bf16.mxu0 0
  %1307 = vmatpush2.bf16.xpose.msra.mxu0 0
  %1308 = vmatprep.mubr.bf16.mxu0 0
  %1309 = vmatmul.mubr.bf16.gmra.mxu0 %v1271
  %v1310 = vpop.f32.mrf.mxu0
  %v1311 = vadd.f32 0.0, %v1310
  %v1312 = vpop.f32.mrf.mxu0
  %v1313 = vpop.f32.mrf.mxu0
  %v1314 = vpop.f32.mrf.mxu0
  %1315 = vdwg.mxu0
  %1317 = vrot.lane.b32.xlu0 %v1266, 96
  %v1318 = vpop.permute.xlu0 %1317
  %v1320 = vsel %vm410, %v1266, 0
  %v1323 = vsel %vm410, %v1318, 0
  %1325 = vmatprep.subr.bf16.mxu0 0
  %1326 = vmatpush1.bf16.xpose.msra.mxu0 0
  %1327 = vmatprep.subr.bf16.mxu0 0
  %1328 = vmatpush1.bf16.xpose.msra.mxu0 0
  %1329 = vmatprep.subr.bf16.mxu0 0
  %1330 = vmatpush1.bf16.xpose.msra.mxu0 0
  %1331 = vmatprep.subr.bf16.mxu0 0
  %1332 = vmatpush1.bf16.xpose.msra.mxu0 0
  %1333 = vmatprep.subr.bf16.mxu0 0
  %1334 = vmatpush1.bf16.xpose.msra.mxu0 0
  %1335 = vmatprep.subr.bf16.mxu0 0
  %1336 = vmatpush1.bf16.xpose.msra.mxu0 0
  %1337 = vmatprep.subr.bf16.mxu0 0
  %1338 = vmatpush1.bf16.xpose.msra.mxu0 0
  %1339 = vmatprep.subr.bf16.mxu0 0
  %1340 = vmatpush1.bf16.xpose.msra.mxu0 %v1323
  %1341 = vmatprep.subr.bf16.mxu0 0
  %1342 = vmatpush2.bf16.xpose.msra.mxu0 0
  %1343 = vmatprep.subr.bf16.mxu0 0
  %1344 = vmatpush2.bf16.xpose.msra.mxu0 0
  %1345 = vmatprep.subr.bf16.mxu0 0
  %1346 = vmatpush2.bf16.xpose.msra.mxu0 0
  %1347 = vmatprep.subr.bf16.mxu0 0
  %1348 = vmatpush2.bf16.xpose.msra.mxu0 0
  %1349 = vmatprep.subr.bf16.mxu0 0
  %1350 = vmatpush2.bf16.xpose.msra.mxu0 0
  %1351 = vmatprep.subr.bf16.mxu0 0
  %1352 = vmatpush2.bf16.xpose.msra.mxu0 0
  %1353 = vmatprep.subr.bf16.mxu0 0
  %1354 = vmatpush2.bf16.xpose.msra.mxu0 0
  %1355 = vmatprep.subr.bf16.mxu0 0
  %1356 = vmatpush2.bf16.xpose.msra.mxu0 0
  %1357 = vmatprep.mubr.bf16.mxu0 0
  %1358 = vmatmul.mubr.bf16.gmra.mxu0 %v1320
  %v1359 = vpop.f32.mrf.mxu0
  %v1360 = vadd.f32 0.0, %v1359
  %v1361 = vpop.f32.mrf.mxu0
  %v1362 = vpop.f32.mrf.mxu0
  %v1363 = vpop.f32.mrf.mxu0
  %1364 = vdwg.mxu0
  %v1365 = vmul.f32 %v1311, 0.25
  %v1366 = vmul.f32 %v1360, 0.25
  %v1367 = vsel %vm508, %v1365, -inf
  %1368 = vmax.xlane.f32.xlu0 %v1367
  %v1369 = vpop.xlane.xlu0 %1368
  %v1370 = vsel %vm508, %v1366, -inf
  %1371 = vmax.xlane.f32.xlu0 %v1370
  %v1372 = vpop.xlane.xlu0 %1371
  %v1373 = vsub.f32 %v1365, %v1369
  %v1374 = vsub.f32 %v1366, %v1372
  %v1375 = vmul.f32 %v1373, 1.442695
  %v1376 = vpow.pop %v1375
  %v1377 = vmul.f32 %v1374, 1.442695
  %v1378 = vpow.pop %v1377
  %v1379 = vsel %vm508, %v1376, 0.0
  %1380 = vadd.xlane.f32.xlu0 %v1379
  %v1381 = vpop.xlane.xlu0 %1380
  %v1382 = vsel %vm508, %v1378, 0.0
  %1383 = vadd.xlane.f32.xlu0 %v1382
  %v1384 = vpop.xlane.xlu0 %1383
  %v1385 = vrcp.pop %v1381
  %v1386 = vrcp.pop %v1384
  %v1387 = vmul.f32 %v1376, %v1385
  %v1388 = vmul.f32 %v1378, %v1386
  %v1389 = vpack.c.bf16 %v1387, %v1387
  %v1390 = vpack.c.bf16 %v1388, %v1388
  %1391 = vrot.lane.b32.xlu0 %v1265, 64
  %v1392 = vpop.permute.xlu0 %1391
  %v1394 = vsel %vm508, %v1389, 0
  %v1397 = vsel %vm538, %v1392, 0
  %1399 = vmatprep.subr.bf16.mxu0 0
  %1400 = vmatpush1.bf16.msra.mxu0 0
  %1401 = vmatprep.subr.bf16.mxu0 0
  %1402 = vmatpush1.bf16.msra.mxu0 0
  %1403 = vmatprep.subr.bf16.mxu0 0
  %1404 = vmatpush1.bf16.msra.mxu0 0
  %1405 = vmatprep.subr.bf16.mxu0 0
  %1406 = vmatpush1.bf16.msra.mxu0 0
  %1407 = vmatprep.subr.bf16.mxu0 0
  %1408 = vmatpush1.bf16.msra.mxu0 0
  %1409 = vmatprep.subr.bf16.mxu0 0
  %1410 = vmatpush1.bf16.msra.mxu0 0
  %1411 = vmatprep.subr.bf16.mxu0 0
  %1412 = vmatpush1.bf16.msra.mxu0 0
  %1413 = vmatprep.subr.bf16.mxu0 0
  %1414 = vmatpush1.bf16.msra.mxu0 %v1397
  %1415 = vmatprep.subr.bf16.mxu0 0
  %1416 = vmatpush2.bf16.msra.mxu0 0
  %1417 = vmatprep.subr.bf16.mxu0 0
  %1418 = vmatpush2.bf16.msra.mxu0 0
  %1419 = vmatprep.subr.bf16.mxu0 0
  %1420 = vmatpush2.bf16.msra.mxu0 0
  %1421 = vmatprep.subr.bf16.mxu0 0
  %1422 = vmatpush2.bf16.msra.mxu0 0
  %1423 = vmatprep.subr.bf16.mxu0 0
  %1424 = vmatpush2.bf16.msra.mxu0 0
  %1425 = vmatprep.subr.bf16.mxu0 0
  %1426 = vmatpush2.bf16.msra.mxu0 0
  %1427 = vmatprep.subr.bf16.mxu0 0
  %1428 = vmatpush2.bf16.msra.mxu0 0
  %1429 = vmatprep.subr.bf16.mxu0 0
  %1430 = vmatpush2.bf16.msra.mxu0 0
  %1431 = vmatprep.mubr.bf16.mxu0 0
  %1432 = vmatmul.mubr.bf16.gmra.mxu0 %v1394
  %v1433 = vpop.f32.mrf.mxu0
  %v1434 = vadd.f32 0.0, %v1433
  %v1435 = vpop.f32.mrf.mxu0
  %v1436 = vpop.f32.mrf.mxu0
  %v1437 = vpop.f32.mrf.mxu0
  %1438 = vdwg.mxu0
  %1439 = vrot.lane.b32.xlu0 %v1266, 64
  %v1440 = vpop.permute.xlu0 %1439
  %v1442 = vsel %vm508, %v1390, 0
  %v1445 = vsel %vm538, %v1440, 0
  %1447 = vmatprep.subr.bf16.mxu0 0
  %1448 = vmatpush1.bf16.msra.mxu0 0
  %1449 = vmatprep.subr.bf16.mxu0 0
  %1450 = vmatpush1.bf16.msra.mxu0 0
  %1451 = vmatprep.subr.bf16.mxu0 0
  %1452 = vmatpush1.bf16.msra.mxu0 0
  %1453 = vmatprep.subr.bf16.mxu0 0
  %1454 = vmatpush1.bf16.msra.mxu0 0
  %1455 = vmatprep.subr.bf16.mxu0 0
  %1456 = vmatpush1.bf16.msra.mxu0 0
  %1457 = vmatprep.subr.bf16.mxu0 0
  %1458 = vmatpush1.bf16.msra.mxu0 0
  %1459 = vmatprep.subr.bf16.mxu0 0
  %1460 = vmatpush1.bf16.msra.mxu0 0
  %1461 = vmatprep.subr.bf16.mxu0 0
  %1462 = vmatpush1.bf16.msra.mxu0 %v1445
  %1463 = vmatprep.subr.bf16.mxu0 0
  %1464 = vmatpush2.bf16.msra.mxu0 0
  %1465 = vmatprep.subr.bf16.mxu0 0
  %1466 = vmatpush2.bf16.msra.mxu0 0
  %1467 = vmatprep.subr.bf16.mxu0 0
  %1468 = vmatpush2.bf16.msra.mxu0 0
  %1469 = vmatprep.subr.bf16.mxu0 0
  %1470 = vmatpush2.bf16.msra.mxu0 0
  %1471 = vmatprep.subr.bf16.mxu0 0
  %1472 = vmatpush2.bf16.msra.mxu0 0
  %1473 = vmatprep.subr.bf16.mxu0 0
  %1474 = vmatpush2.bf16.msra.mxu0 0
  %1475 = vmatprep.subr.bf16.mxu0 0
  %1476 = vmatpush2.bf16.msra.mxu0 0
  %1477 = vmatprep.subr.bf16.mxu0 0
  %1478 = vmatpush2.bf16.msra.mxu0 0
  %1479 = vmatprep.mubr.bf16.mxu0 0
  %1480 = vmatmul.mubr.bf16.gmra.mxu0 %v1442
  %v1481 = vpop.f32.mrf.mxu0
  %v1482 = vadd.f32 0.0, %v1481
  %v1483 = vpop.f32.mrf.mxu0
  %v1484 = vpop.f32.mrf.mxu0
  %v1485 = vpop.f32.mrf.mxu0
  %1486 = vdwg.mxu0
  %1487 = vrot.lane.b32.xlu0 %v1265, 112
  %v1488 = vpop.permute.xlu0 %1487
  %1489 = vrot.lane.b32.xlu0 %v1265, 80
  %v1490 = vpop.permute.xlu0 %1489
  %v1492 = vsel %vm410, %v1488, 0
  %v1495 = vsel %vm410, %v1490, 0
  %1497 = vmatprep.subr.bf16.mxu0 0
  %1498 = vmatpush1.bf16.xpose.msra.mxu0 0
  %1499 = vmatprep.subr.bf16.mxu0 0
  %1500 = vmatpush1.bf16.xpose.msra.mxu0 0
  %1501 = vmatprep.subr.bf16.mxu0 0
  %1502 = vmatpush1.bf16.xpose.msra.mxu0 0
  %1503 = vmatprep.subr.bf16.mxu0 0
  %1504 = vmatpush1.bf16.xpose.msra.mxu0 0
  %1505 = vmatprep.subr.bf16.mxu0 0
  %1506 = vmatpush1.bf16.xpose.msra.mxu0 0
  %1507 = vmatprep.subr.bf16.mxu0 0
  %1508 = vmatpush1.bf16.xpose.msra.mxu0 0
  %1509 = vmatprep.subr.bf16.mxu0 0
  %1510 = vmatpush1.bf16.xpose.msra.mxu0 0
  %1511 = vmatprep.subr.bf16.mxu0 0
  %1512 = vmatpush1.bf16.xpose.msra.mxu0 %v1495
  %1513 = vmatprep.subr.bf16.mxu0 0
  %1514 = vmatpush2.bf16.xpose.msra.mxu0 0
  %1515 = vmatprep.subr.bf16.mxu0 0
  %1516 = vmatpush2.bf16.xpose.msra.mxu0 0
  %1517 = vmatprep.subr.bf16.mxu0 0
  %1518 = vmatpush2.bf16.xpose.msra.mxu0 0
  %1519 = vmatprep.subr.bf16.mxu0 0
  %1520 = vmatpush2.bf16.xpose.msra.mxu0 0
  %1521 = vmatprep.subr.bf16.mxu0 0
  %1522 = vmatpush2.bf16.xpose.msra.mxu0 0
  %1523 = vmatprep.subr.bf16.mxu0 0
  %1524 = vmatpush2.bf16.xpose.msra.mxu0 0
  %1525 = vmatprep.subr.bf16.mxu0 0
  %1526 = vmatpush2.bf16.xpose.msra.mxu0 0
  %1527 = vmatprep.subr.bf16.mxu0 0
  %1528 = vmatpush2.bf16.xpose.msra.mxu0 0
  %1529 = vmatprep.mubr.bf16.mxu0 0
  %1530 = vmatmul.mubr.bf16.gmra.mxu0 %v1492
  %v1531 = vpop.f32.mrf.mxu0
  %v1532 = vadd.f32 0.0, %v1531
  %v1533 = vpop.f32.mrf.mxu0
  %v1534 = vpop.f32.mrf.mxu0
  %v1535 = vpop.f32.mrf.mxu0
  %1536 = vdwg.mxu0
  %1537 = vrot.lane.b32.xlu0 %v1266, 112
  %v1538 = vpop.permute.xlu0 %1537
  %1539 = vrot.lane.b32.xlu0 %v1266, 80
  %v1540 = vpop.permute.xlu0 %1539
  %v1542 = vsel %vm410, %v1538, 0
  %v1545 = vsel %vm410, %v1540, 0
  %1547 = vmatprep.subr.bf16.mxu0 0
  %1548 = vmatpush1.bf16.xpose.msra.mxu0 0
  %1549 = vmatprep.subr.bf16.mxu0 0
  %1550 = vmatpush1.bf16.xpose.msra.mxu0 0
  %1551 = vmatprep.subr.bf16.mxu0 0
  %1552 = vmatpush1.bf16.xpose.msra.mxu0 0
  %1553 = vmatprep.subr.bf16.mxu0 0
  %1554 = vmatpush1.bf16.xpose.msra.mxu0 0
  %1555 = vmatprep.subr.bf16.mxu0 0
  %1556 = vmatpush1.bf16.xpose.msra.mxu0 0
  %1557 = vmatprep.subr.bf16.mxu0 0
  %1558 = vmatpush1.bf16.xpose.msra.mxu0 0
  %1559 = vmatprep.subr.bf16.mxu0 0
  %1560 = vmatpush1.bf16.xpose.msra.mxu0 0
  %1561 = vmatprep.subr.bf16.mxu0 0
  %1562 = vmatpush1.bf16.xpose.msra.mxu0 %v1545
  %1563 = vmatprep.subr.bf16.mxu0 0
  %1564 = vmatpush2.bf16.xpose.msra.mxu0 0
  %1565 = vmatprep.subr.bf16.mxu0 0
  %1566 = vmatpush2.bf16.xpose.msra.mxu0 0
  %1567 = vmatprep.subr.bf16.mxu0 0
  %1568 = vmatpush2.bf16.xpose.msra.mxu0 0
  %1569 = vmatprep.subr.bf16.mxu0 0
  %1570 = vmatpush2.bf16.xpose.msra.mxu0 0
  %1571 = vmatprep.subr.bf16.mxu0 0
  %1572 = vmatpush2.bf16.xpose.msra.mxu0 0
  %1573 = vmatprep.subr.bf16.mxu0 0
  %1574 = vmatpush2.bf16.xpose.msra.mxu0 0
  %1575 = vmatprep.subr.bf16.mxu0 0
  %1576 = vmatpush2.bf16.xpose.msra.mxu0 0
  %1577 = vmatprep.subr.bf16.mxu0 0
  %1578 = vmatpush2.bf16.xpose.msra.mxu0 0
  %1579 = vmatprep.mubr.bf16.mxu0 0
  %1580 = vmatmul.mubr.bf16.gmra.mxu0 %v1542
  %v1581 = vpop.f32.mrf.mxu0
  %v1582 = vadd.f32 0.0, %v1581
  %v1583 = vpop.f32.mrf.mxu0
  %v1584 = vpop.f32.mrf.mxu0
  %v1585 = vpop.f32.mrf.mxu0
  %1586 = vdwg.mxu0
  %v1587 = vmul.f32 %v1532, 0.25
  %v1588 = vmul.f32 %v1582, 0.25
  %v1589 = vsel %vm508, %v1587, -inf
  %1590 = vmax.xlane.f32.xlu0 %v1589
  %v1591 = vpop.xlane.xlu0 %1590
  %v1592 = vsel %vm508, %v1588, -inf
  %1593 = vmax.xlane.f32.xlu0 %v1592
  %v1594 = vpop.xlane.xlu0 %1593
  %v1595 = vsub.f32 %v1587, %v1591
  %v1596 = vsub.f32 %v1588, %v1594
  %v1597 = vmul.f32 %v1595, 1.442695
  %v1598 = vpow.pop %v1597
  %v1599 = vmul.f32 %v1596, 1.442695
  %v1600 = vpow.pop %v1599
  %v1601 = vsel %vm508, %v1598, 0.0
  %1602 = vadd.xlane.f32.xlu0 %v1601
  %v1603 = vpop.xlane.xlu0 %1602
  %v1604 = vsel %vm508, %v1600, 0.0
  %1605 = vadd.xlane.f32.xlu0 %v1604
  %v1606 = vpop.xlane.xlu0 %1605
  %v1607 = vrcp.pop %v1603
  %v1608 = vrcp.pop %v1606
  %v1609 = vmul.f32 %v1598, %v1607
  %v1610 = vmul.f32 %v1600, %v1608
  %v1611 = vpack.c.bf16 %v1609, %v1609
  %v1612 = vpack.c.bf16 %v1610, %v1610
  %1613 = vrot.lane.b32.xlu0 %v1265, 48
  %v1614 = vpop.permute.xlu0 %1613
  %v1616 = vsel %vm508, %v1611, 0
  %v1619 = vsel %vm538, %v1614, 0
  %1621 = vmatprep.subr.bf16.mxu0 0
  %1622 = vmatpush1.bf16.msra.mxu0 0
  %1623 = vmatprep.subr.bf16.mxu0 0
  %1624 = vmatpush1.bf16.msra.mxu0 0
  %1625 = vmatprep.subr.bf16.mxu0 0
  %1626 = vmatpush1.bf16.msra.mxu0 0
  %1627 = vmatprep.subr.bf16.mxu0 0
  %1628 = vmatpush1.bf16.msra.mxu0 0
  %1629 = vmatprep.subr.bf16.mxu0 0
  %1630 = vmatpush1.bf16.msra.mxu0 0
  %1631 = vmatprep.subr.bf16.mxu0 0
  %1632 = vmatpush1.bf16.msra.mxu0 0
  %1633 = vmatprep.subr.bf16.mxu0 0
  %1634 = vmatpush1.bf16.msra.mxu0 0
  %1635 = vmatprep.subr.bf16.mxu0 0
  %1636 = vmatpush1.bf16.msra.mxu0 %v1619
  %1637 = vmatprep.subr.bf16.mxu0 0
  %1638 = vmatpush2.bf16.msra.mxu0 0
  %1639 = vmatprep.subr.bf16.mxu0 0
  %1640 = vmatpush2.bf16.msra.mxu0 0
  %1641 = vmatprep.subr.bf16.mxu0 0
  %1642 = vmatpush2.bf16.msra.mxu0 0
  %1643 = vmatprep.subr.bf16.mxu0 0
  %1644 = vmatpush2.bf16.msra.mxu0 0
  %1645 = vmatprep.subr.bf16.mxu0 0
  %1646 = vmatpush2.bf16.msra.mxu0 0
  %1647 = vmatprep.subr.bf16.mxu0 0
  %1648 = vmatpush2.bf16.msra.mxu0 0
  %1649 = vmatprep.subr.bf16.mxu0 0
  %1650 = vmatpush2.bf16.msra.mxu0 0
  %1651 = vmatprep.subr.bf16.mxu0 0
  %1652 = vmatpush2.bf16.msra.mxu0 0
  %1653 = vmatprep.mubr.bf16.mxu0 0
  %1654 = vmatmul.mubr.bf16.gmra.mxu0 %v1616
  %v1655 = vpop.f32.mrf.mxu0
  %v1656 = vadd.f32 0.0, %v1655
  %v1657 = vpop.f32.mrf.mxu0
  %v1658 = vpop.f32.mrf.mxu0
  %v1659 = vpop.f32.mrf.mxu0
  %1660 = vdwg.mxu0
  %1661 = vrot.lane.b32.xlu0 %v1266, 48
  %v1662 = vpop.permute.xlu0 %1661
  %v1664 = vsel %vm508, %v1612, 0
  %v1667 = vsel %vm538, %v1662, 0
  %1669 = vmatprep.subr.bf16.mxu0 0
  %1670 = vmatpush1.bf16.msra.mxu0 0
  %1671 = vmatprep.subr.bf16.mxu0 0
  %1672 = vmatpush1.bf16.msra.mxu0 0
  %1673 = vmatprep.subr.bf16.mxu0 0
  %1674 = vmatpush1.bf16.msra.mxu0 0
  %1675 = vmatprep.subr.bf16.mxu0 0
  %1676 = vmatpush1.bf16.msra.mxu0 0
  %1677 = vmatprep.subr.bf16.mxu0 0
  %1678 = vmatpush1.bf16.msra.mxu0 0
  %1679 = vmatprep.subr.bf16.mxu0 0
  %1680 = vmatpush1.bf16.msra.mxu0 0
  %1681 = vmatprep.subr.bf16.mxu0 0
  %1682 = vmatpush1.bf16.msra.mxu0 0
  %1683 = vmatprep.subr.bf16.mxu0 0
  %1684 = vmatpush1.bf16.msra.mxu0 %v1667
  %1685 = vmatprep.subr.bf16.mxu0 0
  %1686 = vmatpush2.bf16.msra.mxu0 0
  %1687 = vmatprep.subr.bf16.mxu0 0
  %1688 = vmatpush2.bf16.msra.mxu0 0
  %1689 = vmatprep.subr.bf16.mxu0 0
  %1690 = vmatpush2.bf16.msra.mxu0 0
  %1691 = vmatprep.subr.bf16.mxu0 0
  %1692 = vmatpush2.bf16.msra.mxu0 0
  %1693 = vmatprep.subr.bf16.mxu0 0
  %1694 = vmatpush2.bf16.msra.mxu0 0
  %1695 = vmatprep.subr.bf16.mxu0 0
  %1696 = vmatpush2.bf16.msra.mxu0 0
  %1697 = vmatprep.subr.bf16.mxu0 0
  %1698 = vmatpush2.bf16.msra.mxu0 0
  %1699 = vmatprep.subr.bf16.mxu0 0
  %1700 = vmatpush2.bf16.msra.mxu0 0
  %1701 = vmatprep.mubr.bf16.mxu0 0
  %1702 = vmatmul.mubr.bf16.gmra.mxu0 %v1664
  %v1703 = vpop.f32.mrf.mxu0
  %v1704 = vadd.f32 0.0, %v1703
  %v1705 = vpop.f32.mrf.mxu0
  %v1706 = vpop.f32.mrf.mxu0
  %v1707 = vpop.f32.mrf.mxu0
  %1708 = vdwg.mxu0
  %1711 = vrot.lane.b32.xlu0 %v1656, 16
  %v1712 = vpop.permute.xlu0 %1711
  %1713 = vrot.lane.b32.xlu0 %v1704, 16
  %v1714 = vpop.permute.xlu0 %1713
  %v1717 = vsel %vm410, %v1434, %v1712
  %v1718 = vsel %vm410, %v1482, %v1714
  %v1719 = vpack.c.bf16 %v1718, %v1717
  %s1720 = scalar_lea.vmem %s19, 1
  %v1721 = vld [vmem:[%s1720] sm:$0x1]
  %v1723 = vlaneseq
  %v1724 = vshrl.u32 %v1723, 7
  %v1725 = vsub.s32 0, %v1724
  %v1726 = vrot.slane %v1721, %v1725
  %v1732 = vunpack.c.l.b16 %v1261
  %v1733 = vunpack.c.l.b16 %v1262
  %v1734 = vunpack.c.l.b16 %v1263
  %v1735 = vunpack.c.l.b16 %v1264
  %v1736 = vpack.c.b16 %v1733, %v1732
  %v1737 = vpack.c.b16 %v1735, %v1734
  %v1741 = vsel %vm288, %v1719, 0
  %1743 = vmatprep.subr.bf16.mxu0 0
  %1744 = vmatpush1.bf16.msra.mxu0 0
  %1745 = vmatprep.subr.bf16.mxu0 0
  %1746 = vmatpush1.bf16.msra.mxu0 0
  %1747 = vmatprep.subr.bf16.mxu0 0
  %1748 = vmatpush1.bf16.msra.mxu0 0
  %1749 = vmatprep.subr.bf16.mxu0 0
  %1750 = vmatpush1.bf16.msra.mxu0 0
  %1751 = vmatprep.subr.bf16.mxu0 0
  %1752 = vmatpush1.bf16.msra.mxu0 0
  %1753 = vmatprep.subr.bf16.mxu0 0
  %1754 = vmatpush1.bf16.msra.mxu0 0
  %1755 = vmatprep.subr.bf16.mxu0 0
  %1756 = vmatpush1.bf16.msra.mxu0 %v1737
  %1757 = vmatprep.subr.bf16.mxu0 0
  %1758 = vmatpush1.bf16.msra.mxu0 %v1736
  %1759 = vmatprep.subr.bf16.mxu0 0
  %1760 = vmatpush2.bf16.msra.mxu0 0
  %1761 = vmatprep.subr.bf16.mxu0 0
  %1762 = vmatpush2.bf16.msra.mxu0 0
  %1763 = vmatprep.subr.bf16.mxu0 0
  %1764 = vmatpush2.bf16.msra.mxu0 0
  %1765 = vmatprep.subr.bf16.mxu0 0
  %1766 = vmatpush2.bf16.msra.mxu0 0
  %1767 = vmatprep.subr.bf16.mxu0 0
  %1768 = vmatpush2.bf16.msra.mxu0 0
  %1769 = vmatprep.subr.bf16.mxu0 0
  %1770 = vmatpush2.bf16.msra.mxu0 0
  %1771 = vmatprep.subr.bf16.mxu0 0
  %1772 = vmatpush2.bf16.msra.mxu0 0
  %1773 = vmatprep.subr.bf16.mxu0 0
  %1774 = vmatpush2.bf16.msra.mxu0 0
  %1775 = vmatprep.mubr.bf16.mxu0 0
  %1776 = vmatmul.mubr.bf16.gmra.mxu0 %v1741
  %v1777 = vpop.f32.mrf.mxu0
  %v1778 = vadd.f32 %v1726, %v1777
  %v1779 = vpop.f32.mrf.mxu0
  %v1780 = vpop.f32.mrf.mxu0
  %v1781 = vadd.f32 %v1726, %v1780
  %v1782 = vpop.f32.mrf.mxu0
  %1783 = vdwg.mxu0
  %v1784 = vadd.f32 %v1188, %v1778
  %v1785 = vadd.f32 %v1189, %v1781
  %s1786 = scalar_lea.vmem %s21, 1
  %v1787 = vld [vmem:[%s1786] sm:$0x1]
  %s1788 = scalar_lea.vmem %s23, 1
  %v1789 = vld [vmem:[%s1788] sm:$0x1]
  %v1790 = vsel %vm288, %v1784, 0.0
  %1791 = vadd.xlane.f32.xlu0 %v1790
  %v1792 = vpop.xlane.xlu0 %1791
  %v1793 = vsel %vm288, %v1785, 0.0
  %1794 = vadd.xlane.f32.xlu0 %v1793
  %v1795 = vpop.xlane.xlu0 %1794
  %v1796 = vmul.f32 %v1792, %v936
  %v1797 = vmul.f32 %v1795, %v936
  %v1798 = vsub.f32 %v1784, %v1796
  %v1799 = vsub.f32 %v1785, %v1797
  %v1800 = vmul.f32 %v1798, %v1798
  %v1801 = vmul.f32 %v1799, %v1799
  %v1802 = vsel %vm288, %v1800, 0.0
  %1803 = vadd.xlane.f32.xlu0 %v1802
  %v1804 = vpop.xlane.xlu0 %1803
  %v1805 = vsel %vm288, %v1801, 0.0
  %1806 = vadd.xlane.f32.xlu0 %v1805
  %v1807 = vpop.xlane.xlu0 %1806
  %v1808 = vmul.f32 %v1804, %v936
  %v1809 = vmul.f32 %v1807, %v936
  %v1810 = vadd.f32 %v1808, 1e-05
  %v1811 = vadd.f32 %v1809, 1e-05
  %v1812 = vrsqrt.pop %v1810
  %v1813 = vrsqrt.pop %v1811
  %v1814 = vmul.f32 %v1798, %v1812
  %v1815 = vmul.f32 %v1799, %v1813
  %v1817 = vlaneseq
  %v1818 = vshrl.u32 %v1817, 7
  %v1819 = vsub.s32 0, %v1818
  %v1820 = vrot.slane %v1787, %v1819
  %v1822 = vmul.f32 %v1814, %v1820
  %v1823 = vmul.f32 %v1815, %v1820
  %v1825 = vlaneseq
  %v1826 = vshrl.u32 %v1825, 7
  %v1827 = vsub.s32 0, %v1826
  %v1828 = vrot.slane %v1789, %v1827
  %v1830 = vadd.f32 %v1822, %v1828
  %v1831 = vadd.f32 %v1823, %v1828
  %s1832 = scalar_lea.vmem %s25, 16
  %v1833 = vld [vmem:[%s1832] sm:$0xf]
  %v1834 = vld [vmem:[%s1832 + $0x4] sm:$0xf]
  %v1835 = vld [vmem:[%s1832 + $0x8] sm:$0xf]
  %v1836 = vld [vmem:[%s1832 + $0xc] sm:$0xf]
  %v1837 = vpack.c.bf16 %v1831, %v1830
  %s1838 = scalar_lea.vmem %s27, 1
  %v1839 = vld [vmem:[%s1838] sm:$0x1]
  %v1841 = vlaneseq
  %v1842 = vshrl.u32 %v1841, 7
  %v1843 = vsub.s32 0, %v1842
  %v1844 = vrot.slane %v1839, %v1843
  %v1850 = vunpack.c.l.b16 %v1833
  %v1851 = vunpack.c.l.b16 %v1834
  %v1852 = vunpack.c.l.b16 %v1835
  %v1853 = vunpack.c.l.b16 %v1836
  %v1854 = vpack.c.b16 %v1851, %v1850
  %v1855 = vpack.c.b16 %v1853, %v1852
  %v1859 = vsel %vm288, %v1837, 0
  %1861 = vmatprep.subr.bf16.mxu0 0
  %1862 = vmatpush1.bf16.msra.mxu0 0
  %1863 = vmatprep.subr.bf16.mxu0 0
  %1864 = vmatpush1.bf16.msra.mxu0 0
  %1865 = vmatprep.subr.bf16.mxu0 0
  %1866 = vmatpush1.bf16.msra.mxu0 0
  %1867 = vmatprep.subr.bf16.mxu0 0
  %1868 = vmatpush1.bf16.msra.mxu0 0
  %1869 = vmatprep.subr.bf16.mxu0 0
  %1870 = vmatpush1.bf16.msra.mxu0 0
  %1871 = vmatprep.subr.bf16.mxu0 0
  %1872 = vmatpush1.bf16.msra.mxu0 0
  %1873 = vmatprep.subr.bf16.mxu0 0
  %1874 = vmatpush1.bf16.msra.mxu0 %v1855
  %1875 = vmatprep.subr.bf16.mxu0 0
  %1876 = vmatpush1.bf16.msra.mxu0 %v1854
  %1877 = vmatprep.subr.bf16.mxu0 0
  %1878 = vmatpush2.bf16.msra.mxu0 0
  %1879 = vmatprep.subr.bf16.mxu0 0
  %1880 = vmatpush2.bf16.msra.mxu0 0
  %1881 = vmatprep.subr.bf16.mxu0 0
  %1882 = vmatpush2.bf16.msra.mxu0 0
  %1883 = vmatprep.subr.bf16.mxu0 0
  %1884 = vmatpush2.bf16.msra.mxu0 0
  %1885 = vmatprep.subr.bf16.mxu0 0
  %1886 = vmatpush2.bf16.msra.mxu0 0
  %1887 = vmatprep.subr.bf16.mxu0 0
  %1888 = vmatpush2.bf16.msra.mxu0 0
  %1889 = vmatprep.subr.bf16.mxu0 0
  %1890 = vmatpush2.bf16.msra.mxu0 0
  %1891 = vmatprep.subr.bf16.mxu0 0
  %1892 = vmatpush2.bf16.msra.mxu0 0
  %1893 = vmatprep.mubr.bf16.mxu0 0
  %1894 = vmatmul.mubr.bf16.gmra.mxu0 %v1859
  %v1895 = vpop.f32.mrf.mxu0
  %v1896 = vadd.f32 %v1844, %v1895
  %v1897 = vpop.f32.mrf.mxu0
  %v1898 = vpop.f32.mrf.mxu0
  %v1899 = vadd.f32 %v1844, %v1898
  %v1900 = vpop.f32.mrf.mxu0
  %1901 = vdwg.mxu0
  %v1902 = vmax.f32 %v1896, 0.0
  %v1903 = vmax.f32 %v1899, 0.0
  %s1904 = scalar_lea.vmem %s29, 48
  %v1905 = vld [vmem:[%s1904] sm:$0xf]
  %v1906 = vld [vmem:[%s1904 + $0x4] sm:$0xf]
  %v1907 = vld [vmem:[%s1904 + $0x8] sm:$0xf]
  %v1908 = vld [vmem:[%s1904 + $0xc] sm:$0xf]
  %v1909 = vld [vmem:[%s1904 + $0x10] sm:$0xf]
  %v1910 = vld [vmem:[%s1904 + $0x14] sm:$0xf]
  %v1911 = vld [vmem:[%s1904 + $0x18] sm:$0xf]
  %v1912 = vld [vmem:[%s1904 + $0x1c] sm:$0xf]
  %v1913 = vld [vmem:[%s1904 + $0x20] sm:$0xf]
  %v1914 = vld [vmem:[%s1904 + $0x24] sm:$0xf]
  %v1915 = vld [vmem:[%s1904 + $0x28] sm:$0xf]
  %v1916 = vld [vmem:[%s1904 + $0x2c] sm:$0xf]
  %v1917 = vpack.c.bf16 %v1903, %v1902
  %s1918 = scalar_lea.vmem %s31, 1
  %v1919 = vld [vmem:[%s1918] sm:$0x1]
  %v1921 = vlaneseq
  %v1922 = vshrl.u32 %v1921, 7
  %v1923 = vsub.s32 0, %v1922
  %v1924 = vrot.slane %v1919, %v1923
  %v1938 = vunpack.c.l.b16 %v1905
  %v1939 = vunpack.c.l.b16 %v1906
  %v1940 = vunpack.c.l.b16 %v1907
  %v1941 = vunpack.c.l.b16 %v1908
  %v1942 = vunpack.c.l.b16 %v1909
  %v1943 = vunpack.c.l.b16 %v1910
  %v1944 = vunpack.c.l.b16 %v1911
  %v1945 = vunpack.c.l.b16 %v1912
  %v1946 = vunpack.c.l.b16 %v1913
  %v1947 = vunpack.c.l.b16 %v1914
  %v1948 = vunpack.c.l.b16 %v1915
  %v1949 = vunpack.c.l.b16 %v1916
  %v1950 = vpack.c.b16 %v1939, %v1938
  %v1951 = vpack.c.b16 %v1941, %v1940
  %v1952 = vpack.c.b16 %v1943, %v1942
  %v1953 = vpack.c.b16 %v1945, %v1944
  %v1954 = vpack.c.b16 %v1947, %v1946
  %v1955 = vpack.c.b16 %v1949, %v1948
  %v1963 = vsel %vm1099, %v1917, 0
  %1965 = vmatprep.subr.bf16.mxu0 0
  %1966 = vmatpush1.bf16.msra.mxu0 0
  %1967 = vmatprep.subr.bf16.mxu0 0
  %1968 = vmatpush1.bf16.msra.mxu0 0
  %1969 = vmatprep.subr.bf16.mxu0 0
  %1970 = vmatpush1.bf16.msra.mxu0 %v1955
  %1971 = vmatprep.subr.bf16.mxu0 0
  %1972 = vmatpush1.bf16.msra.mxu0 %v1954
  %1973 = vmatprep.subr.bf16.mxu0 0
  %1974 = vmatpush1.bf16.msra.mxu0 %v1953
  %1975 = vmatprep.subr.bf16.mxu0 0
  %1976 = vmatpush1.bf16.msra.mxu0 %v1952
  %1977 = vmatprep.subr.bf16.mxu0 0
  %1978 = vmatpush1.bf16.msra.mxu0 %v1951
  %1979 = vmatprep.subr.bf16.mxu0 0
  %1980 = vmatpush1.bf16.msra.mxu0 %v1950
  %1981 = vmatprep.subr.bf16.mxu0 0
  %1982 = vmatpush2.bf16.msra.mxu0 0
  %1983 = vmatprep.subr.bf16.mxu0 0
  %1984 = vmatpush2.bf16.msra.mxu0 0
  %1985 = vmatprep.subr.bf16.mxu0 0
  %1986 = vmatpush2.bf16.msra.mxu0 0
  %1987 = vmatprep.subr.bf16.mxu0 0
  %1988 = vmatpush2.bf16.msra.mxu0 0
  %1989 = vmatprep.subr.bf16.mxu0 0
  %1990 = vmatpush2.bf16.msra.mxu0 0
  %1991 = vmatprep.subr.bf16.mxu0 0
  %1992 = vmatpush2.bf16.msra.mxu0 0
  %1993 = vmatprep.subr.bf16.mxu0 0
  %1994 = vmatpush2.bf16.msra.mxu0 0
  %1995 = vmatprep.subr.bf16.mxu0 0
  %1996 = vmatpush2.bf16.msra.mxu0 0
  %1997 = vmatprep.mubr.bf16.mxu0 0
  %1998 = vmatmul.mubr.bf16.gmra.mxu0 %v1963
  %v1999 = vpop.f32.mrf.mxu0
  %v2000 = vadd.f32 %v1924, %v1999
  %v2001 = vpop.f32.mrf.mxu0
  %v2002 = vpop.f32.mrf.mxu0
  %v2003 = vadd.f32 %v1924, %v2002
  %v2004 = vpop.f32.mrf.mxu0
  %2005 = vdwg.mxu0
  %v2006 = vadd.f32 %v1830, %v2000
  %v2007 = vadd.f32 %v1831, %v2003
  %s2008 = scalar_lea.vmem %s33, 1
  %v2009 = vld [vmem:[%s2008] sm:$0x1]
  %s2010 = scalar_lea.vmem %s35, 1
  %v2011 = vld [vmem:[%s2010] sm:$0x1]
  %v2012 = vsel %vm288, %v2006, 0.0
  %2013 = vadd.xlane.f32.xlu0 %v2012
  %v2014 = vpop.xlane.xlu0 %2013
  %v2015 = vsel %vm288, %v2007, 0.0
  %2016 = vadd.xlane.f32.xlu0 %v2015
  %v2017 = vpop.xlane.xlu0 %2016
  %v2018 = vmul.f32 %v2014, %v936
  %v2019 = vmul.f32 %v2017, %v936
  %v2020 = vsub.f32 %v2006, %v2018
  %v2021 = vsub.f32 %v2007, %v2019
  %v2022 = vmul.f32 %v2020, %v2020
  %v2023 = vmul.f32 %v2021, %v2021
  %v2024 = vsel %vm288, %v2022, 0.0
  %2025 = vadd.xlane.f32.xlu0 %v2024
  %v2026 = vpop.xlane.xlu0 %2025
  %v2027 = vsel %vm288, %v2023, 0.0
  %2028 = vadd.xlane.f32.xlu0 %v2027
  %v2029 = vpop.xlane.xlu0 %2028
  %v2030 = vmul.f32 %v2026, %v936
  %v2031 = vmul.f32 %v2029, %v936
  %v2032 = vadd.f32 %v2030, 1e-05
  %v2033 = vadd.f32 %v2031, 1e-05
  %v2034 = vrsqrt.pop %v2032
  %v2035 = vrsqrt.pop %v2033
  %v2036 = vmul.f32 %v2020, %v2034
  %v2037 = vmul.f32 %v2021, %v2035
  %v2039 = vlaneseq
  %v2040 = vshrl.u32 %v2039, 7
  %v2041 = vsub.s32 0, %v2040
  %v2042 = vrot.slane %v2009, %v2041
  %v2044 = vmul.f32 %v2036, %v2042
  %v2045 = vmul.f32 %v2037, %v2042
  %v2047 = vlaneseq
  %v2048 = vshrl.u32 %v2047, 7
  %v2049 = vsub.s32 0, %v2048
  %v2050 = vrot.slane %v2011, %v2049
  %v2052 = vadd.f32 %v2044, %v2050
  %v2053 = vadd.f32 %v2045, %v2050
  %v2054 = vld [vmem:[%s37] sm:$0x1]
  %v2055 = vld [vmem:[%s39] sm:$0x1]
  %v2056 = vsel %vm288, %v2052, 0.0
  %2057 = vadd.xlane.f32.xlu0 %v2056
  %v2058 = vpop.xlane.xlu0 %2057
  %v2059 = vsel %vm288, %v2053, 0.0
  %2060 = vadd.xlane.f32.xlu0 %v2059
  %v2061 = vpop.xlane.xlu0 %2060
  %v2062 = vmul.f32 %v2058, %v936
  %v2063 = vmul.f32 %v2061, %v936
  %v2064 = vsub.f32 %v2052, %v2062
  %v2065 = vsub.f32 %v2053, %v2063
  %v2066 = vmul.f32 %v2064, %v2064
  %v2067 = vmul.f32 %v2065, %v2065
  %v2068 = vsel %vm288, %v2066, 0.0
  %2069 = vadd.xlane.f32.xlu0 %v2068
  %v2070 = vpop.xlane.xlu0 %2069
  %v2071 = vsel %vm288, %v2067, 0.0
  %2072 = vadd.xlane.f32.xlu0 %v2071
  %v2073 = vpop.xlane.xlu0 %2072
  %v2074 = vmul.f32 %v2070, %v936
  %v2075 = vmul.f32 %v2073, %v936
  %v2076 = vadd.f32 %v2074, 1e-05
  %v2077 = vadd.f32 %v2075, 1e-05
  %v2078 = vrsqrt.pop %v2076
  %v2079 = vrsqrt.pop %v2077
  %v2080 = vmul.f32 %v2064, %v2078
  %v2081 = vmul.f32 %v2065, %v2079
  %v2083 = vlaneseq
  %v2084 = vshrl.u32 %v2083, 7
  %v2085 = vsub.s32 0, %v2084
  %v2086 = vrot.slane %v2054, %v2085
  %v2088 = vmul.f32 %v2080, %v2086
  %v2089 = vmul.f32 %v2081, %v2086
  %v2091 = vlaneseq
  %v2092 = vshrl.u32 %v2091, 7
  %v2093 = vsub.s32 0, %v2092
  %v2094 = vrot.slane %v2055, %v2093
  %v2096 = vadd.f32 %v2088, %v2094
  %v2097 = vadd.f32 %v2089, %v2094
  %v2098 = vld [vmem:[%s3] sm:$0xff]
  %v2099 = vld [vmem:[%s3 + $0x8] sm:$0xff]
  %v2100 = vld [vmem:[%s41] sm:$0xf]
  %v2101 = vld [vmem:[%s41 + $0x4] sm:$0xf]
  %v2102 = vld [vmem:[%s41 + $0x8] sm:$0xf]
  %v2103 = vld [vmem:[%s41 + $0xc] sm:$0xf]
  %v2104 = vpack.c.bf16 %v2099, %v2098
  %v2105 = vld [vmem:[%s43] sm:$0x1]
  %v2107 = vlaneseq
  %v2108 = vshrl.u32 %v2107, 7
  %v2109 = vsub.s32 0, %v2108
  %v2110 = vrot.slane %v2105, %v2109
  %v2116 = vunpack.c.l.b16 %v2100
  %v2117 = vunpack.c.l.b16 %v2101
  %v2118 = vunpack.c.l.b16 %v2102
  %v2119 = vunpack.c.l.b16 %v2103
  %v2120 = vpack.c.b16 %v2117, %v2116
  %v2121 = vpack.c.b16 %v2119, %v2118
  %v2125 = vsel %vm288, %v2104, 0
  %2127 = vmatprep.subr.bf16.mxu0 0
  %2128 = vmatpush1.bf16.msra.mxu0 0
  %2129 = vmatprep.subr.bf16.mxu0 0
  %2130 = vmatpush1.bf16.msra.mxu0 0
  %2131 = vmatprep.subr.bf16.mxu0 0
  %2132 = vmatpush1.bf16.msra.mxu0 0
  %2133 = vmatprep.subr.bf16.mxu0 0
  %2134 = vmatpush1.bf16.msra.mxu0 0
  %2135 = vmatprep.subr.bf16.mxu0 0
  %2136 = vmatpush1.bf16.msra.mxu0 0
  %2137 = vmatprep.subr.bf16.mxu0 0
  %2138 = vmatpush1.bf16.msra.mxu0 0
  %2139 = vmatprep.subr.bf16.mxu0 0
  %2140 = vmatpush1.bf16.msra.mxu0 %v2121
  %2141 = vmatprep.subr.bf16.mxu0 0
  %2142 = vmatpush1.bf16.msra.mxu0 %v2120
  %2143 = vmatprep.subr.bf16.mxu0 0
  %2144 = vmatpush2.bf16.msra.mxu0 0
  %2145 = vmatprep.subr.bf16.mxu0 0
  %2146 = vmatpush2.bf16.msra.mxu0 0
  %2147 = vmatprep.subr.bf16.mxu0 0
  %2148 = vmatpush2.bf16.msra.mxu0 0
  %2149 = vmatprep.subr.bf16.mxu0 0
  %2150 = vmatpush2.bf16.msra.mxu0 0
  %2151 = vmatprep.subr.bf16.mxu0 0
  %2152 = vmatpush2.bf16.msra.mxu0 0
  %2153 = vmatprep.subr.bf16.mxu0 0
  %2154 = vmatpush2.bf16.msra.mxu0 0
  %2155 = vmatprep.subr.bf16.mxu0 0
  %2156 = vmatpush2.bf16.msra.mxu0 0
  %2157 = vmatprep.subr.bf16.mxu0 0
  %2158 = vmatpush2.bf16.msra.mxu0 0
  %2159 = vmatprep.mubr.bf16.mxu0 0
  %2160 = vmatmul.mubr.bf16.gmra.mxu0 %v2125
  %v2161 = vpop.f32.mrf.mxu0
  %v2162 = vadd.f32 %v2110, %v2161
  %v2163 = vpop.f32.mrf.mxu0
  %v2164 = vpop.f32.mrf.mxu0
  %v2165 = vadd.f32 %v2110, %v2164
  %v2166 = vpop.f32.mrf.mxu0
  %2167 = vdwg.mxu0
  %v2168 = vld [vmem:[%s45] sm:$0xf]
  %v2169 = vld [vmem:[%s45 + $0x4] sm:$0xf]
  %v2170 = vld [vmem:[%s45 + $0x8] sm:$0xf]
  %v2171 = vld [vmem:[%s45 + $0xc] sm:$0xf]
  %v2172 = vpack.c.bf16 %v2162, %v2162
  %v2173 = vpack.c.bf16 %v2165, %v2165
  %2175 = vrot.lane.b32.xlu0 %v2172, 96
  %v2176 = vpop.permute.xlu0 %2175
  %v2178 = vsel %vm410, %v2172, 0
  %v2181 = vsel %vm410, %v2176, 0
  %2183 = vmatprep.subr.bf16.mxu0 0
  %2184 = vmatpush1.bf16.xpose.msra.mxu0 0
  %2185 = vmatprep.subr.bf16.mxu0 0
  %2186 = vmatpush1.bf16.xpose.msra.mxu0 0
  %2187 = vmatprep.subr.bf16.mxu0 0
  %2188 = vmatpush1.bf16.xpose.msra.mxu0 0
  %2189 = vmatprep.subr.bf16.mxu0 0
  %2190 = vmatpush1.bf16.xpose.msra.mxu0 0
  %2191 = vmatprep.subr.bf16.mxu0 0
  %2192 = vmatpush1.bf16.xpose.msra.mxu0 0
  %2193 = vmatprep.subr.bf16.mxu0 0
  %2194 = vmatpush1.bf16.xpose.msra.mxu0 0
  %2195 = vmatprep.subr.bf16.mxu0 0
  %2196 = vmatpush1.bf16.xpose.msra.mxu0 0
  %2197 = vmatprep.subr.bf16.mxu0 0
  %2198 = vmatpush1.bf16.xpose.msra.mxu0 %v2181
  %2199 = vmatprep.subr.bf16.mxu0 0
  %2200 = vmatpush2.bf16.xpose.msra.mxu0 0
  %2201 = vmatprep.subr.bf16.mxu0 0
  %2202 = vmatpush2.bf16.xpose.msra.mxu0 0
  %2203 = vmatprep.subr.bf16.mxu0 0
  %2204 = vmatpush2.bf16.xpose.msra.mxu0 0
  %2205 = vmatprep.subr.bf16.mxu0 0
  %2206 = vmatpush2.bf16.xpose.msra.mxu0 0
  %2207 = vmatprep.subr.bf16.mxu0 0
  %2208 = vmatpush2.bf16.xpose.msra.mxu0 0
  %2209 = vmatprep.subr.bf16.mxu0 0
  %2210 = vmatpush2.bf16.xpose.msra.mxu0 0
  %2211 = vmatprep.subr.bf16.mxu0 0
  %2212 = vmatpush2.bf16.xpose.msra.mxu0 0
  %2213 = vmatprep.subr.bf16.mxu0 0
  %2214 = vmatpush2.bf16.xpose.msra.mxu0 0
  %2215 = vmatprep.mubr.bf16.mxu0 0
  %2216 = vmatmul.mubr.bf16.gmra.mxu0 %v2178
  %v2217 = vpop.f32.mrf.mxu0
  %v2218 = vadd.f32 0.0, %v2217
  %v2219 = vpop.f32.mrf.mxu0
  %v2220 = vpop.f32.mrf.mxu0
  %v2221 = vpop.f32.mrf.mxu0
  %2222 = vdwg.mxu0
  %2224 = vrot.lane.b32.xlu0 %v2173, 96
  %v2225 = vpop.permute.xlu0 %2224
  %v2227 = vsel %vm410, %v2173, 0
  %v2230 = vsel %vm410, %v2225, 0
  %2232 = vmatprep.subr.bf16.mxu0 0
  %2233 = vmatpush1.bf16.xpose.msra.mxu0 0
  %2234 = vmatprep.subr.bf16.mxu0 0
  %2235 = vmatpush1.bf16.xpose.msra.mxu0 0
  %2236 = vmatprep.subr.bf16.mxu0 0
  %2237 = vmatpush1.bf16.xpose.msra.mxu0 0
  %2238 = vmatprep.subr.bf16.mxu0 0
  %2239 = vmatpush1.bf16.xpose.msra.mxu0 0
  %2240 = vmatprep.subr.bf16.mxu0 0
  %2241 = vmatpush1.bf16.xpose.msra.mxu0 0
  %2242 = vmatprep.subr.bf16.mxu0 0
  %2243 = vmatpush1.bf16.xpose.msra.mxu0 0
  %2244 = vmatprep.subr.bf16.mxu0 0
  %2245 = vmatpush1.bf16.xpose.msra.mxu0 0
  %2246 = vmatprep.subr.bf16.mxu0 0
  %2247 = vmatpush1.bf16.xpose.msra.mxu0 %v2230
  %2248 = vmatprep.subr.bf16.mxu0 0
  %2249 = vmatpush2.bf16.xpose.msra.mxu0 0
  %2250 = vmatprep.subr.bf16.mxu0 0
  %2251 = vmatpush2.bf16.xpose.msra.mxu0 0
  %2252 = vmatprep.subr.bf16.mxu0 0
  %2253 = vmatpush2.bf16.xpose.msra.mxu0 0
  %2254 = vmatprep.subr.bf16.mxu0 0
  %2255 = vmatpush2.bf16.xpose.msra.mxu0 0
  %2256 = vmatprep.subr.bf16.mxu0 0
  %2257 = vmatpush2.bf16.xpose.msra.mxu0 0
  %2258 = vmatprep.subr.bf16.mxu0 0
  %2259 = vmatpush2.bf16.xpose.msra.mxu0 0
  %2260 = vmatprep.subr.bf16.mxu0 0
  %2261 = vmatpush2.bf16.xpose.msra.mxu0 0
  %2262 = vmatprep.subr.bf16.mxu0 0
  %2263 = vmatpush2.bf16.xpose.msra.mxu0 0
  %2264 = vmatprep.mubr.bf16.mxu0 0
  %2265 = vmatmul.mubr.bf16.gmra.mxu0 %v2227
  %v2266 = vpop.f32.mrf.mxu0
  %v2267 = vadd.f32 0.0, %v2266
  %v2268 = vpop.f32.mrf.mxu0
  %v2269 = vpop.f32.mrf.mxu0
  %v2270 = vpop.f32.mrf.mxu0
  %2271 = vdwg.mxu0
  %v2272 = vmul.f32 %v2218, 0.25
  %v2273 = vmul.f32 %v2267, 0.25
  %v2274 = vsel %vm508, %v2272, -inf
  %2275 = vmax.xlane.f32.xlu0 %v2274
  %v2276 = vpop.xlane.xlu0 %2275
  %v2277 = vsel %vm508, %v2273, -inf
  %2278 = vmax.xlane.f32.xlu0 %v2277
  %v2279 = vpop.xlane.xlu0 %2278
  %v2280 = vsub.f32 %v2272, %v2276
  %v2281 = vsub.f32 %v2273, %v2279
  %v2282 = vmul.f32 %v2280, 1.442695
  %v2283 = vpow.pop %v2282
  %v2284 = vmul.f32 %v2281, 1.442695
  %v2285 = vpow.pop %v2284
  %v2286 = vsel %vm508, %v2283, 0.0
  %2287 = vadd.xlane.f32.xlu0 %v2286
  %v2288 = vpop.xlane.xlu0 %2287
  %v2289 = vsel %vm508, %v2285, 0.0
  %2290 = vadd.xlane.f32.xlu0 %v2289
  %v2291 = vpop.xlane.xlu0 %2290
  %v2292 = vrcp.pop %v2288
  %v2293 = vrcp.pop %v2291
  %v2294 = vmul.f32 %v2283, %v2292
  %v2295 = vmul.f32 %v2285, %v2293
  %v2296 = vpack.c.bf16 %v2294, %v2294
  %v2297 = vpack.c.bf16 %v2295, %v2295
  %2298 = vrot.lane.b32.xlu0 %v2172, 64
  %v2299 = vpop.permute.xlu0 %2298
  %v2301 = vsel %vm508, %v2296, 0
  %v2304 = vsel %vm538, %v2299, 0
  %2306 = vmatprep.subr.bf16.mxu0 0
  %2307 = vmatpush1.bf16.msra.mxu0 0
  %2308 = vmatprep.subr.bf16.mxu0 0
  %2309 = vmatpush1.bf16.msra.mxu0 0
  %2310 = vmatprep.subr.bf16.mxu0 0
  %2311 = vmatpush1.bf16.msra.mxu0 0
  %2312 = vmatprep.subr.bf16.mxu0 0
  %2313 = vmatpush1.bf16.msra.mxu0 0
  %2314 = vmatprep.subr.bf16.mxu0 0
  %2315 = vmatpush1.bf16.msra.mxu0 0
  %2316 = vmatprep.subr.bf16.mxu0 0
  %2317 = vmatpush1.bf16.msra.mxu0 0
  %2318 = vmatprep.subr.bf16.mxu0 0
  %2319 = vmatpush1.bf16.msra.mxu0 0
  %2320 = vmatprep.subr.bf16.mxu0 0
  %2321 = vmatpush1.bf16.msra.mxu0 %v2304
  %2322 = vmatprep.subr.bf16.mxu0 0
  %2323 = vmatpush2.bf16.msra.mxu0 0
  %2324 = vmatprep.subr.bf16.mxu0 0
  %2325 = vmatpush2.bf16.msra.mxu0 0
  %2326 = vmatprep.subr.bf16.mxu0 0
  %2327 = vmatpush2.bf16.msra.mxu0 0
  %2328 = vmatprep.subr.bf16.mxu0 0
  %2329 = vmatpush2.bf16.msra.mxu0 0
  %2330 = vmatprep.subr.bf16.mxu0 0
  %2331 = vmatpush2.bf16.msra.mxu0 0
  %2332 = vmatprep.subr.bf16.mxu0 0
  %2333 = vmatpush2.bf16.msra.mxu0 0
  %2334 = vmatprep.subr.bf16.mxu0 0
  %2335 = vmatpush2.bf16.msra.mxu0 0
  %2336 = vmatprep.subr.bf16.mxu0 0
  %2337 = vmatpush2.bf16.msra.mxu0 0
  %2338 = vmatprep.mubr.bf16.mxu0 0
  %2339 = vmatmul.mubr.bf16.gmra.mxu0 %v2301
  %v2340 = vpop.f32.mrf.mxu0
  %v2341 = vadd.f32 0.0, %v2340
  %v2342 = vpop.f32.mrf.mxu0
  %v2343 = vpop.f32.mrf.mxu0
  %v2344 = vpop.f32.mrf.mxu0
  %2345 = vdwg.mxu0
  %2346 = vrot.lane.b32.xlu0 %v2173, 64
  %v2347 = vpop.permute.xlu0 %2346
  %v2349 = vsel %vm508, %v2297, 0
  %v2352 = vsel %vm538, %v2347, 0
  %2354 = vmatprep.subr.bf16.mxu0 0
  %2355 = vmatpush1.bf16.msra.mxu0 0
  %2356 = vmatprep.subr.bf16.mxu0 0
  %2357 = vmatpush1.bf16.msra.mxu0 0
  %2358 = vmatprep.subr.bf16.mxu0 0
  %2359 = vmatpush1.bf16.msra.mxu0 0
  %2360 = vmatprep.subr.bf16.mxu0 0
  %2361 = vmatpush1.bf16.msra.mxu0 0
  %2362 = vmatprep.subr.bf16.mxu0 0
  %2363 = vmatpush1.bf16.msra.mxu0 0
  %2364 = vmatprep.subr.bf16.mxu0 0
  %2365 = vmatpush1.bf16.msra.mxu0 0
  %2366 = vmatprep.subr.bf16.mxu0 0
  %2367 = vmatpush1.bf16.msra.mxu0 0
  %2368 = vmatprep.subr.bf16.mxu0 0
  %2369 = vmatpush1.bf16.msra.mxu0 %v2352
  %2370 = vmatprep.subr.bf16.mxu0 0
  %2371 = vmatpush2.bf16.msra.mxu0 0
  %2372 = vmatprep.subr.bf16.mxu0 0
  %2373 = vmatpush2.bf16.msra.mxu0 0
  %2374 = vmatprep.subr.bf16.mxu0 0
  %2375 = vmatpush2.bf16.msra.mxu0 0
  %2376 = vmatprep.subr.bf16.mxu0 0
  %2377 = vmatpush2.bf16.msra.mxu0 0
  %2378 = vmatprep.subr.bf16.mxu0 0
  %2379 = vmatpush2.bf16.msra.mxu0 0
  %2380 = vmatprep.subr.bf16.mxu0 0
  %2381 = vmatpush2.bf16.msra.mxu0 0
  %2382 = vmatprep.subr.bf16.mxu0 0
  %2383 = vmatpush2.bf16.msra.mxu0 0
  %2384 = vmatprep.subr.bf16.mxu0 0
  %2385 = vmatpush2.bf16.msra.mxu0 0
  %2386 = vmatprep.mubr.bf16.mxu0 0
  %2387 = vmatmul.mubr.bf16.gmra.mxu0 %v2349
  %v2388 = vpop.f32.mrf.mxu0
  %v2389 = vadd.f32 0.0, %v2388
  %v2390 = vpop.f32.mrf.mxu0
  %v2391 = vpop.f32.mrf.mxu0
  %v2392 = vpop.f32.mrf.mxu0
  %2393 = vdwg.mxu0
  %2394 = vrot.lane.b32.xlu0 %v2172, 112
  %v2395 = vpop.permute.xlu0 %2394
  %2396 = vrot.lane.b32.xlu0 %v2172, 80
  %v2397 = vpop.permute.xlu0 %2396
  %v2399 = vsel %vm410, %v2395, 0
  %v2402 = vsel %vm410, %v2397, 0
  %2404 = vmatprep.subr.bf16.mxu0 0
  %2405 = vmatpush1.bf16.xpose.msra.mxu0 0
  %2406 = vmatprep.subr.bf16.mxu0 0
  %2407 = vmatpush1.bf16.xpose.msra.mxu0 0
  %2408 = vmatprep.subr.bf16.mxu0 0
  %2409 = vmatpush1.bf16.xpose.msra.mxu0 0
  %2410 = vmatprep.subr.bf16.mxu0 0
  %2411 = vmatpush1.bf16.xpose.msra.mxu0 0
  %2412 = vmatprep.subr.bf16.mxu0 0
  %2413 = vmatpush1.bf16.xpose.msra.mxu0 0
  %2414 = vmatprep.subr.bf16.mxu0 0
  %2415 = vmatpush1.bf16.xpose.msra.mxu0 0
  %2416 = vmatprep.subr.bf16.mxu0 0
  %2417 = vmatpush1.bf16.xpose.msra.mxu0 0
  %2418 = vmatprep.subr.bf16.mxu0 0
  %2419 = vmatpush1.bf16.xpose.msra.mxu0 %v2402
  %2420 = vmatprep.subr.bf16.mxu0 0
  %2421 = vmatpush2.bf16.xpose.msra.mxu0 0
  %2422 = vmatprep.subr.bf16.mxu0 0
  %2423 = vmatpush2.bf16.xpose.msra.mxu0 0
  %2424 = vmatprep.subr.bf16.mxu0 0
  %2425 = vmatpush2.bf16.xpose.msra.mxu0 0
  %2426 = vmatprep.subr.bf16.mxu0 0
  %2427 = vmatpush2.bf16.xpose.msra.mxu0 0
  %2428 = vmatprep.subr.bf16.mxu0 0
  %2429 = vmatpush2.bf16.xpose.msra.mxu0 0
  %2430 = vmatprep.subr.bf16.mxu0 0
  %2431 = vmatpush2.bf16.xpose.msra.mxu0 0
  %2432 = vmatprep.subr.bf16.mxu0 0
  %2433 = vmatpush2.bf16.xpose.msra.mxu0 0
  %2434 = vmatprep.subr.bf16.mxu0 0
  %2435 = vmatpush2.bf16.xpose.msra.mxu0 0
  %2436 = vmatprep.mubr.bf16.mxu0 0
  %2437 = vmatmul.mubr.bf16.gmra.mxu0 %v2399
  %v2438 = vpop.f32.mrf.mxu0
  %v2439 = vadd.f32 0.0, %v2438
  %v2440 = vpop.f32.mrf.mxu0
  %v2441 = vpop.f32.mrf.mxu0
  %v2442 = vpop.f32.mrf.mxu0
  %2443 = vdwg.mxu0
  %2444 = vrot.lane.b32.xlu0 %v2173, 112
  %v2445 = vpop.permute.xlu0 %2444
  %2446 = vrot.lane.b32.xlu0 %v2173, 80
  %v2447 = vpop.permute.xlu0 %2446
  %v2449 = vsel %vm410, %v2445, 0
  %v2452 = vsel %vm410, %v2447, 0
  %2454 = vmatprep.subr.bf16.mxu0 0
  %2455 = vmatpush1.bf16.xpose.msra.mxu0 0
  %2456 = vmatprep.subr.bf16.mxu0 0
  %2457 = vmatpush1.bf16.xpose.msra.mxu0 0
  %2458 = vmatprep.subr.bf16.mxu0 0
  %2459 = vmatpush1.bf16.xpose.msra.mxu0 0
  %2460 = vmatprep.subr.bf16.mxu0 0
  %2461 = vmatpush1.bf16.xpose.msra.mxu0 0
  %2462 = vmatprep.subr.bf16.mxu0 0
  %2463 = vmatpush1.bf16.xpose.msra.mxu0 0
  %2464 = vmatprep.subr.bf16.mxu0 0
  %2465 = vmatpush1.bf16.xpose.msra.mxu0 0
  %2466 = vmatprep.subr.bf16.mxu0 0
  %2467 = vmatpush1.bf16.xpose.msra.mxu0 0
  %2468 = vmatprep.subr.bf16.mxu0 0
  %2469 = vmatpush1.bf16.xpose.msra.mxu0 %v2452
  %2470 = vmatprep.subr.bf16.mxu0 0
  %2471 = vmatpush2.bf16.xpose.msra.mxu0 0
  %2472 = vmatprep.subr.bf16.mxu0 0
  %2473 = vmatpush2.bf16.xpose.msra.mxu0 0
  %2474 = vmatprep.subr.bf16.mxu0 0
  %2475 = vmatpush2.bf16.xpose.msra.mxu0 0
  %2476 = vmatprep.subr.bf16.mxu0 0
  %2477 = vmatpush2.bf16.xpose.msra.mxu0 0
  %2478 = vmatprep.subr.bf16.mxu0 0
  %2479 = vmatpush2.bf16.xpose.msra.mxu0 0
  %2480 = vmatprep.subr.bf16.mxu0 0
  %2481 = vmatpush2.bf16.xpose.msra.mxu0 0
  %2482 = vmatprep.subr.bf16.mxu0 0
  %2483 = vmatpush2.bf16.xpose.msra.mxu0 0
  %2484 = vmatprep.subr.bf16.mxu0 0
  %2485 = vmatpush2.bf16.xpose.msra.mxu0 0
  %2486 = vmatprep.mubr.bf16.mxu0 0
  %2487 = vmatmul.mubr.bf16.gmra.mxu0 %v2449
  %v2488 = vpop.f32.mrf.mxu0
  %v2489 = vadd.f32 0.0, %v2488
  %v2490 = vpop.f32.mrf.mxu0
  %v2491 = vpop.f32.mrf.mxu0
  %v2492 = vpop.f32.mrf.mxu0
  %2493 = vdwg.mxu0
  %v2494 = vmul.f32 %v2439, 0.25
  %v2495 = vmul.f32 %v2489, 0.25
  %v2496 = vsel %vm508, %v2494, -inf
  %2497 = vmax.xlane.f32.xlu0 %v2496
  %v2498 = vpop.xlane.xlu0 %2497
  %v2499 = vsel %vm508, %v2495, -inf
  %2500 = vmax.xlane.f32.xlu0 %v2499
  %v2501 = vpop.xlane.xlu0 %2500
  %v2502 = vsub.f32 %v2494, %v2498
  %v2503 = vsub.f32 %v2495, %v2501
  %v2504 = vmul.f32 %v2502, 1.442695
  %v2505 = vpow.pop %v2504
  %v2506 = vmul.f32 %v2503, 1.442695
  %v2507 = vpow.pop %v2506
  %v2508 = vsel %vm508, %v2505, 0.0
  %2509 = vadd.xlane.f32.xlu0 %v2508
  %v2510 = vpop.xlane.xlu0 %2509
  %v2511 = vsel %vm508, %v2507, 0.0
  %2512 = vadd.xlane.f32.xlu0 %v2511
  %v2513 = vpop.xlane.xlu0 %2512
  %v2514 = vrcp.pop %v2510
  %v2515 = vrcp.pop %v2513
  %v2516 = vmul.f32 %v2505, %v2514
  %v2517 = vmul.f32 %v2507, %v2515
  %v2518 = vpack.c.bf16 %v2516, %v2516
  %v2519 = vpack.c.bf16 %v2517, %v2517
  %2520 = vrot.lane.b32.xlu0 %v2172, 48
  %v2521 = vpop.permute.xlu0 %2520
  %v2523 = vsel %vm508, %v2518, 0
  %v2526 = vsel %vm538, %v2521, 0
  %2528 = vmatprep.subr.bf16.mxu0 0
  %2529 = vmatpush1.bf16.msra.mxu0 0
  %2530 = vmatprep.subr.bf16.mxu0 0
  %2531 = vmatpush1.bf16.msra.mxu0 0
  %2532 = vmatprep.subr.bf16.mxu0 0
  %2533 = vmatpush1.bf16.msra.mxu0 0
  %2534 = vmatprep.subr.bf16.mxu0 0
  %2535 = vmatpush1.bf16.msra.mxu0 0
  %2536 = vmatprep.subr.bf16.mxu0 0
  %2537 = vmatpush1.bf16.msra.mxu0 0
  %2538 = vmatprep.subr.bf16.mxu0 0
  %2539 = vmatpush1.bf16.msra.mxu0 0
  %2540 = vmatprep.subr.bf16.mxu0 0
  %2541 = vmatpush1.bf16.msra.mxu0 0
  %2542 = vmatprep.subr.bf16.mxu0 0
  %2543 = vmatpush1.bf16.msra.mxu0 %v2526
  %2544 = vmatprep.subr.bf16.mxu0 0
  %2545 = vmatpush2.bf16.msra.mxu0 0
  %2546 = vmatprep.subr.bf16.mxu0 0
  %2547 = vmatpush2.bf16.msra.mxu0 0
  %2548 = vmatprep.subr.bf16.mxu0 0
  %2549 = vmatpush2.bf16.msra.mxu0 0
  %2550 = vmatprep.subr.bf16.mxu0 0
  %2551 = vmatpush2.bf16.msra.mxu0 0
  %2552 = vmatprep.subr.bf16.mxu0 0
  %2553 = vmatpush2.bf16.msra.mxu0 0
  %2554 = vmatprep.subr.bf16.mxu0 0
  %2555 = vmatpush2.bf16.msra.mxu0 0
  %2556 = vmatprep.subr.bf16.mxu0 0
  %2557 = vmatpush2.bf16.msra.mxu0 0
  %2558 = vmatprep.subr.bf16.mxu0 0
  %2559 = vmatpush2.bf16.msra.mxu0 0
  %2560 = vmatprep.mubr.bf16.mxu0 0
  %2561 = vmatmul.mubr.bf16.gmra.mxu0 %v2523
  %v2562 = vpop.f32.mrf.mxu0
  %v2563 = vadd.f32 0.0, %v2562
  %v2564 = vpop.f32.mrf.mxu0
  %v2565 = vpop.f32.mrf.mxu0
  %v2566 = vpop.f32.mrf.mxu0
  %2567 = vdwg.mxu0
  %2568 = vrot.lane.b32.xlu0 %v2173, 48
  %v2569 = vpop.permute.xlu0 %2568
  %v2571 = vsel %vm508, %v2519, 0
  %v2574 = vsel %vm538, %v2569, 0
  %2576 = vmatprep.subr.bf16.mxu0 0
  %2577 = vmatpush1.bf16.msra.mxu0 0
  %2578 = vmatprep.subr.bf16.mxu0 0
  %2579 = vmatpush1.bf16.msra.mxu0 0
  %2580 = vmatprep.subr.bf16.mxu0 0
  %2581 = vmatpush1.bf16.msra.mxu0 0
  %2582 = vmatprep.subr.bf16.mxu0 0
  %2583 = vmatpush1.bf16.msra.mxu0 0
  %2584 = vmatprep.subr.bf16.mxu0 0
  %2585 = vmatpush1.bf16.msra.mxu0 0
  %2586 = vmatprep.subr.bf16.mxu0 0
  %2587 = vmatpush1.bf16.msra.mxu0 0
  %2588 = vmatprep.subr.bf16.mxu0 0
  %2589 = vmatpush1.bf16.msra.mxu0 0
  %2590 = vmatprep.subr.bf16.mxu0 0
  %2591 = vmatpush1.bf16.msra.mxu0 %v2574
  %2592 = vmatprep.subr.bf16.mxu0 0
  %2593 = vmatpush2.bf16.msra.mxu0 0
  %2594 = vmatprep.subr.bf16.mxu0 0
  %2595 = vmatpush2.bf16.msra.mxu0 0
  %2596 = vmatprep.subr.bf16.mxu0 0
  %2597 = vmatpush2.bf16.msra.mxu0 0
  %2598 = vmatprep.subr.bf16.mxu0 0
  %2599 = vmatpush2.bf16.msra.mxu0 0
  %2600 = vmatprep.subr.bf16.mxu0 0
  %2601 = vmatpush2.bf16.msra.mxu0 0
  %2602 = vmatprep.subr.bf16.mxu0 0
  %2603 = vmatpush2.bf16.msra.mxu0 0
  %2604 = vmatprep.subr.bf16.mxu0 0
  %2605 = vmatpush2.bf16.msra.mxu0 0
  %2606 = vmatprep.subr.bf16.mxu0 0
  %2607 = vmatpush2.bf16.msra.mxu0 0
  %2608 = vmatprep.mubr.bf16.mxu0 0
  %2609 = vmatmul.mubr.bf16.gmra.mxu0 %v2571
  %v2610 = vpop.f32.mrf.mxu0
  %v2611 = vadd.f32 0.0, %v2610
  %v2612 = vpop.f32.mrf.mxu0
  %v2613 = vpop.f32.mrf.mxu0
  %v2614 = vpop.f32.mrf.mxu0
  %2615 = vdwg.mxu0
  %2618 = vrot.lane.b32.xlu0 %v2563, 16
  %v2619 = vpop.permute.xlu0 %2618
  %2620 = vrot.lane.b32.xlu0 %v2611, 16
  %v2621 = vpop.permute.xlu0 %2620
  %v2624 = vsel %vm410, %v2341, %v2619
  %v2625 = vsel %vm410, %v2389, %v2621
  %v2626 = vpack.c.bf16 %v2625, %v2624
  %v2627 = vld [vmem:[%s47] sm:$0x1]
  %v2629 = vlaneseq
  %v2630 = vshrl.u32 %v2629, 7
  %v2631 = vsub.s32 0, %v2630
  %v2632 = vrot.slane %v2627, %v2631
  %v2638 = vunpack.c.l.b16 %v2168
  %v2639 = vunpack.c.l.b16 %v2169
  %v2640 = vunpack.c.l.b16 %v2170
  %v2641 = vunpack.c.l.b16 %v2171
  %v2642 = vpack.c.b16 %v2639, %v2638
  %v2643 = vpack.c.b16 %v2641, %v2640
  %v2647 = vsel %vm288, %v2626, 0
  %2649 = vmatprep.subr.bf16.mxu0 0
  %2650 = vmatpush1.bf16.msra.mxu0 0
  %2651 = vmatprep.subr.bf16.mxu0 0
  %2652 = vmatpush1.bf16.msra.mxu0 0
  %2653 = vmatprep.subr.bf16.mxu0 0
  %2654 = vmatpush1.bf16.msra.mxu0 0
  %2655 = vmatprep.subr.bf16.mxu0 0
  %2656 = vmatpush1.bf16.msra.mxu0 0
  %2657 = vmatprep.subr.bf16.mxu0 0
  %2658 = vmatpush1.bf16.msra.mxu0 0
  %2659 = vmatprep.subr.bf16.mxu0 0
  %2660 = vmatpush1.bf16.msra.mxu0 0
  %2661 = vmatprep.subr.bf16.mxu0 0
  %2662 = vmatpush1.bf16.msra.mxu0 %v2643
  %2663 = vmatprep.subr.bf16.mxu0 0
  %2664 = vmatpush1.bf16.msra.mxu0 %v2642
  %2665 = vmatprep.subr.bf16.mxu0 0
  %2666 = vmatpush2.bf16.msra.mxu0 0
  %2667 = vmatprep.subr.bf16.mxu0 0
  %2668 = vmatpush2.bf16.msra.mxu0 0
  %2669 = vmatprep.subr.bf16.mxu0 0
  %2670 = vmatpush2.bf16.msra.mxu0 0
  %2671 = vmatprep.subr.bf16.mxu0 0
  %2672 = vmatpush2.bf16.msra.mxu0 0
  %2673 = vmatprep.subr.bf16.mxu0 0
  %2674 = vmatpush2.bf16.msra.mxu0 0
  %2675 = vmatprep.subr.bf16.mxu0 0
  %2676 = vmatpush2.bf16.msra.mxu0 0
  %2677 = vmatprep.subr.bf16.mxu0 0
  %2678 = vmatpush2.bf16.msra.mxu0 0
  %2679 = vmatprep.subr.bf16.mxu0 0
  %2680 = vmatpush2.bf16.msra.mxu0 0
  %2681 = vmatprep.mubr.bf16.mxu0 0
  %2682 = vmatmul.mubr.bf16.gmra.mxu0 %v2647
  %v2683 = vpop.f32.mrf.mxu0
  %v2684 = vadd.f32 %v2632, %v2683
  %v2685 = vpop.f32.mrf.mxu0
  %v2686 = vpop.f32.mrf.mxu0
  %v2687 = vadd.f32 %v2632, %v2686
  %v2688 = vpop.f32.mrf.mxu0
  %2689 = vdwg.mxu0
  %v2690 = vadd.f32 %v2098, %v2684
  %v2691 = vadd.f32 %v2099, %v2687
  %v2692 = vld [vmem:[%s61] sm:$0x1]
  %v2693 = vld [vmem:[%s63] sm:$0x1]
  %v2694 = vsel %vm288, %v2690, 0.0
  %2695 = vadd.xlane.f32.xlu0 %v2694
  %v2696 = vpop.xlane.xlu0 %2695
  %v2697 = vsel %vm288, %v2691, 0.0
  %2698 = vadd.xlane.f32.xlu0 %v2697
  %v2699 = vpop.xlane.xlu0 %2698
  %v2700 = vmul.f32 %v2696, %v936
  %v2701 = vmul.f32 %v2699, %v936
  %v2702 = vsub.f32 %v2690, %v2700
  %v2703 = vsub.f32 %v2691, %v2701
  %v2704 = vmul.f32 %v2702, %v2702
  %v2705 = vmul.f32 %v2703, %v2703
  %v2706 = vsel %vm288, %v2704, 0.0
  %2707 = vadd.xlane.f32.xlu0 %v2706
  %v2708 = vpop.xlane.xlu0 %2707
  %v2709 = vsel %vm288, %v2705, 0.0
  %2710 = vadd.xlane.f32.xlu0 %v2709
  %v2711 = vpop.xlane.xlu0 %2710
  %v2712 = vmul.f32 %v2708, %v936
  %v2713 = vmul.f32 %v2711, %v936
  %v2714 = vadd.f32 %v2712, 1e-05
  %v2715 = vadd.f32 %v2713, 1e-05
  %v2716 = vrsqrt.pop %v2714
  %v2717 = vrsqrt.pop %v2715
  %v2718 = vmul.f32 %v2702, %v2716
  %v2719 = vmul.f32 %v2703, %v2717
  %v2721 = vlaneseq
  %v2722 = vshrl.u32 %v2721, 7
  %v2723 = vsub.s32 0, %v2722
  %v2724 = vrot.slane %v2692, %v2723
  %v2726 = vmul.f32 %v2718, %v2724
  %v2727 = vmul.f32 %v2719, %v2724
  %v2729 = vlaneseq
  %v2730 = vshrl.u32 %v2729, 7
  %v2731 = vsub.s32 0, %v2730
  %v2732 = vrot.slane %v2693, %v2731
  %v2734 = vadd.f32 %v2726, %v2732
  %v2735 = vadd.f32 %v2727, %v2732
  %v2736 = vld [vmem:[%s49] sm:$0xf]
  %v2737 = vld [vmem:[%s49 + $0x4] sm:$0xf]
  %v2738 = vld [vmem:[%s49 + $0x8] sm:$0xf]
  %v2739 = vld [vmem:[%s49 + $0xc] sm:$0xf]
  %v2740 = vpack.c.bf16 %v2735, %v2734
  %v2741 = vld [vmem:[%s51] sm:$0x1]
  %v2743 = vlaneseq
  %v2744 = vshrl.u32 %v2743, 7
  %v2745 = vsub.s32 0, %v2744
  %v2746 = vrot.slane %v2741, %v2745
  %v2752 = vunpack.c.l.b16 %v2736
  %v2753 = vunpack.c.l.b16 %v2737
  %v2754 = vunpack.c.l.b16 %v2738
  %v2755 = vunpack.c.l.b16 %v2739
  %v2756 = vpack.c.b16 %v2753, %v2752
  %v2757 = vpack.c.b16 %v2755, %v2754
  %v2761 = vsel %vm288, %v2740, 0
  %2763 = vmatprep.subr.bf16.mxu0 0
  %2764 = vmatpush1.bf16.msra.mxu0 0
  %2765 = vmatprep.subr.bf16.mxu0 0
  %2766 = vmatpush1.bf16.msra.mxu0 0
  %2767 = vmatprep.subr.bf16.mxu0 0
  %2768 = vmatpush1.bf16.msra.mxu0 0
  %2769 = vmatprep.subr.bf16.mxu0 0
  %2770 = vmatpush1.bf16.msra.mxu0 0
  %2771 = vmatprep.subr.bf16.mxu0 0
  %2772 = vmatpush1.bf16.msra.mxu0 0
  %2773 = vmatprep.subr.bf16.mxu0 0
  %2774 = vmatpush1.bf16.msra.mxu0 0
  %2775 = vmatprep.subr.bf16.mxu0 0
  %2776 = vmatpush1.bf16.msra.mxu0 %v2757
  %2777 = vmatprep.subr.bf16.mxu0 0
  %2778 = vmatpush1.bf16.msra.mxu0 %v2756
  %2779 = vmatprep.subr.bf16.mxu0 0
  %2780 = vmatpush2.bf16.msra.mxu0 0
  %2781 = vmatprep.subr.bf16.mxu0 0
  %2782 = vmatpush2.bf16.msra.mxu0 0
  %2783 = vmatprep.subr.bf16.mxu0 0
  %2784 = vmatpush2.bf16.msra.mxu0 0
  %2785 = vmatprep.subr.bf16.mxu0 0
  %2786 = vmatpush2.bf16.msra.mxu0 0
  %2787 = vmatprep.subr.bf16.mxu0 0
  %2788 = vmatpush2.bf16.msra.mxu0 0
  %2789 = vmatprep.subr.bf16.mxu0 0
  %2790 = vmatpush2.bf16.msra.mxu0 0
  %2791 = vmatprep.subr.bf16.mxu0 0
  %2792 = vmatpush2.bf16.msra.mxu0 0
  %2793 = vmatprep.subr.bf16.mxu0 0
  %2794 = vmatpush2.bf16.msra.mxu0 0
  %2795 = vmatprep.mubr.bf16.mxu0 0
  %2796 = vmatmul.mubr.bf16.gmra.mxu0 %v2761
  %v2797 = vpop.f32.mrf.mxu0
  %v2798 = vadd.f32 %v2746, %v2797
  %v2799 = vpop.f32.mrf.mxu0
  %v2800 = vpop.f32.mrf.mxu0
  %v2801 = vadd.f32 %v2746, %v2800
  %v2802 = vpop.f32.mrf.mxu0
  %2803 = vdwg.mxu0
  %v2804 = vld [vmem:[%s53] sm:$0xf]
  %v2805 = vld [vmem:[%s53 + $0x4] sm:$0xf]
  %v2806 = vld [vmem:[%s53 + $0x8] sm:$0xf]
  %v2807 = vld [vmem:[%s53 + $0xc] sm:$0xf]
  %v2808 = vpack.c.bf16 %v2097, %v2096
  %v2809 = vld [vmem:[%s55] sm:$0x1]
  %v2811 = vlaneseq
  %v2812 = vshrl.u32 %v2811, 7
  %v2813 = vsub.s32 0, %v2812
  %v2814 = vrot.slane %v2809, %v2813
  %v2820 = vunpack.c.l.b16 %v2804
  %v2821 = vunpack.c.l.b16 %v2805
  %v2822 = vunpack.c.l.b16 %v2806
  %v2823 = vunpack.c.l.b16 %v2807
  %v2824 = vpack.c.b16 %v2821, %v2820
  %v2825 = vpack.c.b16 %v2823, %v2822
  %v2829 = vsel %vm288, %v2808, 0
  %2831 = vmatprep.subr.bf16.mxu0 0
  %2832 = vmatpush1.bf16.msra.mxu0 0
  %2833 = vmatprep.subr.bf16.mxu0 0
  %2834 = vmatpush1.bf16.msra.mxu0 0
  %2835 = vmatprep.subr.bf16.mxu0 0
  %2836 = vmatpush1.bf16.msra.mxu0 0
  %2837 = vmatprep.subr.bf16.mxu0 0
  %2838 = vmatpush1.bf16.msra.mxu0 0
  %2839 = vmatprep.subr.bf16.mxu0 0
  %2840 = vmatpush1.bf16.msra.mxu0 0
  %2841 = vmatprep.subr.bf16.mxu0 0
  %2842 = vmatpush1.bf16.msra.mxu0 0
  %2843 = vmatprep.subr.bf16.mxu0 0
  %2844 = vmatpush1.bf16.msra.mxu0 %v2825
  %2845 = vmatprep.subr.bf16.mxu0 0
  %2846 = vmatpush1.bf16.msra.mxu0 %v2824
  %2847 = vmatprep.subr.bf16.mxu0 0
  %2848 = vmatpush2.bf16.msra.mxu0 0
  %2849 = vmatprep.subr.bf16.mxu0 0
  %2850 = vmatpush2.bf16.msra.mxu0 0
  %2851 = vmatprep.subr.bf16.mxu0 0
  %2852 = vmatpush2.bf16.msra.mxu0 0
  %2853 = vmatprep.subr.bf16.mxu0 0
  %2854 = vmatpush2.bf16.msra.mxu0 0
  %2855 = vmatprep.subr.bf16.mxu0 0
  %2856 = vmatpush2.bf16.msra.mxu0 0
  %2857 = vmatprep.subr.bf16.mxu0 0
  %2858 = vmatpush2.bf16.msra.mxu0 0
  %2859 = vmatprep.subr.bf16.mxu0 0
  %2860 = vmatpush2.bf16.msra.mxu0 0
  %2861 = vmatprep.subr.bf16.mxu0 0
  %2862 = vmatpush2.bf16.msra.mxu0 0
  %2863 = vmatprep.mubr.bf16.mxu0 0
  %2864 = vmatmul.mubr.bf16.gmra.mxu0 %v2829
  %v2865 = vpop.f32.mrf.mxu0
  %v2866 = vadd.f32 %v2814, %v2865
  %v2867 = vpop.f32.mrf.mxu0
  %v2868 = vpop.f32.mrf.mxu0
  %v2869 = vadd.f32 %v2814, %v2868
  %v2870 = vpop.f32.mrf.mxu0
  %2871 = vdwg.mxu0
  %v2872 = vld [vmem:[%s57] sm:$0xf]
  %v2873 = vld [vmem:[%s57 + $0x4] sm:$0xf]
  %v2874 = vld [vmem:[%s57 + $0x8] sm:$0xf]
  %v2875 = vld [vmem:[%s57 + $0xc] sm:$0xf]
  %v2876 = vpack.c.bf16 %v2798, %v2798
  %v2877 = vpack.c.bf16 %v2801, %v2801
  %v2878 = vpack.c.bf16 %v2866, %v2866
  %v2879 = vpack.c.bf16 %v2869, %v2869
  %v2881 = vsel %vm410, %v2876, 0
  %v2884 = vsel %vm410, %v2878, 0
  %2886 = vmatprep.subr.bf16.mxu0 0
  %2887 = vmatpush1.bf16.xpose.msra.mxu0 0
  %2888 = vmatprep.subr.bf16.mxu0 0
  %2889 = vmatpush1.bf16.xpose.msra.mxu0 0
  %2890 = vmatprep.subr.bf16.mxu0 0
  %2891 = vmatpush1.bf16.xpose.msra.mxu0 0
  %2892 = vmatprep.subr.bf16.mxu0 0
  %2893 = vmatpush1.bf16.xpose.msra.mxu0 0
  %2894 = vmatprep.subr.bf16.mxu0 0
  %2895 = vmatpush1.bf16.xpose.msra.mxu0 0
  %2896 = vmatprep.subr.bf16.mxu0 0
  %2897 = vmatpush1.bf16.xpose.msra.mxu0 0
  %2898 = vmatprep.subr.bf16.mxu0 0
  %2899 = vmatpush1.bf16.xpose.msra.mxu0 0
  %2900 = vmatprep.subr.bf16.mxu0 0
  %2901 = vmatpush1.bf16.xpose.msra.mxu0 %v2884
  %2902 = vmatprep.subr.bf16.mxu0 0
  %2903 = vmatpush2.bf16.xpose.msra.mxu0 0
  %2904 = vmatprep.subr.bf16.mxu0 0
  %2905 = vmatpush2.bf16.xpose.msra.mxu0 0
  %2906 = vmatprep.subr.bf16.mxu0 0
  %2907 = vmatpush2.bf16.xpose.msra.mxu0 0
  %2908 = vmatprep.subr.bf16.mxu0 0
  %2909 = vmatpush2.bf16.xpose.msra.mxu0 0
  %2910 = vmatprep.subr.bf16.mxu0 0
  %2911 = vmatpush2.bf16.xpose.msra.mxu0 0
  %2912 = vmatprep.subr.bf16.mxu0 0
  %2913 = vmatpush2.bf16.xpose.msra.mxu0 0
  %2914 = vmatprep.subr.bf16.mxu0 0
  %2915 = vmatpush2.bf16.xpose.msra.mxu0 0
  %2916 = vmatprep.subr.bf16.mxu0 0
  %2917 = vmatpush2.bf16.xpose.msra.mxu0 0
  %2918 = vmatprep.mubr.bf16.mxu0 0
  %2919 = vmatmul.mubr.bf16.gmra.mxu0 %v2881
  %v2920 = vpop.f32.mrf.mxu0
  %v2921 = vadd.f32 0.0, %v2920
  %v2922 = vpop.f32.mrf.mxu0
  %v2923 = vpop.f32.mrf.mxu0
  %v2924 = vpop.f32.mrf.mxu0
  %2925 = vdwg.mxu0
  %v2927 = vsel %vm410, %v2877, 0
  %v2930 = vsel %vm410, %v2879, 0
  %2932 = vmatprep.subr.bf16.mxu0 0
  %2933 = vmatpush1.bf16.xpose.msra.mxu0 0
  %2934 = vmatprep.subr.bf16.mxu0 0
  %2935 = vmatpush1.bf16.xpose.msra.mxu0 0
  %2936 = vmatprep.subr.bf16.mxu0 0
  %2937 = vmatpush1.bf16.xpose.msra.mxu0 0
  %2938 = vmatprep.subr.bf16.mxu0 0
  %2939 = vmatpush1.bf16.xpose.msra.mxu0 0
  %2940 = vmatprep.subr.bf16.mxu0 0
  %2941 = vmatpush1.bf16.xpose.msra.mxu0 0
  %2942 = vmatprep.subr.bf16.mxu0 0
  %2943 = vmatpush1.bf16.xpose.msra.mxu0 0
  %2944 = vmatprep.subr.bf16.mxu0 0
  %2945 = vmatpush1.bf16.xpose.msra.mxu0 0
  %2946 = vmatprep.subr.bf16.mxu0 0
  %2947 = vmatpush1.bf16.xpose.msra.mxu0 %v2930
  %2948 = vmatprep.subr.bf16.mxu0 0
  %2949 = vmatpush2.bf16.xpose.msra.mxu0 0
  %2950 = vmatprep.subr.bf16.mxu0 0
  %2951 = vmatpush2.bf16.xpose.msra.mxu0 0
  %2952 = vmatprep.subr.bf16.mxu0 0
  %2953 = vmatpush2.bf16.xpose.msra.mxu0 0
  %2954 = vmatprep.subr.bf16.mxu0 0
  %2955 = vmatpush2.bf16.xpose.msra.mxu0 0
  %2956 = vmatprep.subr.bf16.mxu0 0
  %2957 = vmatpush2.bf16.xpose.msra.mxu0 0
  %2958 = vmatprep.subr.bf16.mxu0 0
  %2959 = vmatpush2.bf16.xpose.msra.mxu0 0
  %2960 = vmatprep.subr.bf16.mxu0 0
  %2961 = vmatpush2.bf16.xpose.msra.mxu0 0
  %2962 = vmatprep.subr.bf16.mxu0 0
  %2963 = vmatpush2.bf16.xpose.msra.mxu0 0
  %2964 = vmatprep.mubr.bf16.mxu0 0
  %2965 = vmatmul.mubr.bf16.gmra.mxu0 %v2927
  %v2966 = vpop.f32.mrf.mxu0
  %v2967 = vadd.f32 0.0, %v2966
  %v2968 = vpop.f32.mrf.mxu0
  %v2969 = vpop.f32.mrf.mxu0
  %v2970 = vpop.f32.mrf.mxu0
  %2971 = vdwg.mxu0
  %v2972 = vmul.f32 %v2921, 0.25
  %v2973 = vmul.f32 %v2967, 0.25
  %v2974 = vsel %vm508, %v2972, -inf
  %2975 = vmax.xlane.f32.xlu0 %v2974
  %v2976 = vpop.xlane.xlu0 %2975
  %v2977 = vsel %vm508, %v2973, -inf
  %2978 = vmax.xlane.f32.xlu0 %v2977
  %v2979 = vpop.xlane.xlu0 %2978
  %v2980 = vsub.f32 %v2972, %v2976
  %v2981 = vsub.f32 %v2973, %v2979
  %v2982 = vmul.f32 %v2980, 1.442695
  %v2983 = vpow.pop %v2982
  %v2984 = vmul.f32 %v2981, 1.442695
  %v2985 = vpow.pop %v2984
  %v2986 = vsel %vm508, %v2983, 0.0
  %2987 = vadd.xlane.f32.xlu0 %v2986
  %v2988 = vpop.xlane.xlu0 %2987
  %v2989 = vsel %vm508, %v2985, 0.0
  %2990 = vadd.xlane.f32.xlu0 %v2989
  %v2991 = vpop.xlane.xlu0 %2990
  %v2992 = vrcp.pop %v2988
  %v2993 = vrcp.pop %v2991
  %v2994 = vmul.f32 %v2983, %v2992
  %v2995 = vmul.f32 %v2985, %v2993
  %v2996 = vpack.c.bf16 %v2994, %v2994
  %v2997 = vpack.c.bf16 %v2995, %v2995
  %2999 = vrot.lane.b32.xlu0 %v2878, 96
  %v3000 = vpop.permute.xlu0 %2999
  %v3002 = vsel %vm508, %v2996, 0
  %v3005 = vsel %vm538, %v3000, 0
  %3007 = vmatprep.subr.bf16.mxu0 0
  %3008 = vmatpush1.bf16.msra.mxu0 0
  %3009 = vmatprep.subr.bf16.mxu0 0
  %3010 = vmatpush1.bf16.msra.mxu0 0
  %3011 = vmatprep.subr.bf16.mxu0 0
  %3012 = vmatpush1.bf16.msra.mxu0 0
  %3013 = vmatprep.subr.bf16.mxu0 0
  %3014 = vmatpush1.bf16.msra.mxu0 0
  %3015 = vmatprep.subr.bf16.mxu0 0
  %3016 = vmatpush1.bf16.msra.mxu0 0
  %3017 = vmatprep.subr.bf16.mxu0 0
  %3018 = vmatpush1.bf16.msra.mxu0 0
  %3019 = vmatprep.subr.bf16.mxu0 0
  %3020 = vmatpush1.bf16.msra.mxu0 0
  %3021 = vmatprep.subr.bf16.mxu0 0
  %3022 = vmatpush1.bf16.msra.mxu0 %v3005
  %3023 = vmatprep.subr.bf16.mxu0 0
  %3024 = vmatpush2.bf16.msra.mxu0 0
  %3025 = vmatprep.subr.bf16.mxu0 0
  %3026 = vmatpush2.bf16.msra.mxu0 0
  %3027 = vmatprep.subr.bf16.mxu0 0
  %3028 = vmatpush2.bf16.msra.mxu0 0
  %3029 = vmatprep.subr.bf16.mxu0 0
  %3030 = vmatpush2.bf16.msra.mxu0 0
  %3031 = vmatprep.subr.bf16.mxu0 0
  %3032 = vmatpush2.bf16.msra.mxu0 0
  %3033 = vmatprep.subr.bf16.mxu0 0
  %3034 = vmatpush2.bf16.msra.mxu0 0
  %3035 = vmatprep.subr.bf16.mxu0 0
  %3036 = vmatpush2.bf16.msra.mxu0 0
  %3037 = vmatprep.subr.bf16.mxu0 0
  %3038 = vmatpush2.bf16.msra.mxu0 0
  %3039 = vmatprep.mubr.bf16.mxu0 0
  %3040 = vmatmul.mubr.bf16.gmra.mxu0 %v3002
  %v3041 = vpop.f32.mrf.mxu0
  %v3042 = vadd.f32 0.0, %v3041
  %v3043 = vpop.f32.mrf.mxu0
  %v3044 = vpop.f32.mrf.mxu0
  %v3045 = vpop.f32.mrf.mxu0
  %3046 = vdwg.mxu0
  %3048 = vrot.lane.b32.xlu0 %v2879, 96
  %v3049 = vpop.permute.xlu0 %3048
  %v3051 = vsel %vm508, %v2997, 0
  %v3054 = vsel %vm538, %v3049, 0
  %3056 = vmatprep.subr.bf16.mxu0 0
  %3057 = vmatpush1.bf16.msra.mxu0 0
  %3058 = vmatprep.subr.bf16.mxu0 0
  %3059 = vmatpush1.bf16.msra.mxu0 0
  %3060 = vmatprep.subr.bf16.mxu0 0
  %3061 = vmatpush1.bf16.msra.mxu0 0
  %3062 = vmatprep.subr.bf16.mxu0 0
  %3063 = vmatpush1.bf16.msra.mxu0 0
  %3064 = vmatprep.subr.bf16.mxu0 0
  %3065 = vmatpush1.bf16.msra.mxu0 0
  %3066 = vmatprep.subr.bf16.mxu0 0
  %3067 = vmatpush1.bf16.msra.mxu0 0
  %3068 = vmatprep.subr.bf16.mxu0 0
  %3069 = vmatpush1.bf16.msra.mxu0 0
  %3070 = vmatprep.subr.bf16.mxu0 0
  %3071 = vmatpush1.bf16.msra.mxu0 %v3054
  %3072 = vmatprep.subr.bf16.mxu0 0
  %3073 = vmatpush2.bf16.msra.mxu0 0
  %3074 = vmatprep.subr.bf16.mxu0 0
  %3075 = vmatpush2.bf16.msra.mxu0 0
  %3076 = vmatprep.subr.bf16.mxu0 0
  %3077 = vmatpush2.bf16.msra.mxu0 0
  %3078 = vmatprep.subr.bf16.mxu0 0
  %3079 = vmatpush2.bf16.msra.mxu0 0
  %3080 = vmatprep.subr.bf16.mxu0 0
  %3081 = vmatpush2.bf16.msra.mxu0 0
  %3082 = vmatprep.subr.bf16.mxu0 0
  %3083 = vmatpush2.bf16.msra.mxu0 0
  %3084 = vmatprep.subr.bf16.mxu0 0
  %3085 = vmatpush2.bf16.msra.mxu0 0
  %3086 = vmatprep.subr.bf16.mxu0 0
  %3087 = vmatpush2.bf16.msra.mxu0 0
  %3088 = vmatprep.mubr.bf16.mxu0 0
  %3089 = vmatmul.mubr.bf16.gmra.mxu0 %v3051
  %v3090 = vpop.f32.mrf.mxu0
  %v3091 = vadd.f32 0.0, %v3090
  %v3092 = vpop.f32.mrf.mxu0
  %v3093 = vpop.f32.mrf.mxu0
  %v3094 = vpop.f32.mrf.mxu0
  %3095 = vdwg.mxu0
  %3097 = vrot.lane.b32.xlu0 %v2876, 112
  %v3098 = vpop.permute.xlu0 %3097
  %3099 = vrot.lane.b32.xlu0 %v2878, 112
  %v3100 = vpop.permute.xlu0 %3099
  %v3102 = vsel %vm410, %v3098, 0
  %v3105 = vsel %vm410, %v3100, 0
  %3107 = vmatprep.subr.bf16.mxu0 0
  %3108 = vmatpush1.bf16.xpose.msra.mxu0 0
  %3109 = vmatprep.subr.bf16.mxu0 0
  %3110 = vmatpush1.bf16.xpose.msra.mxu0 0
  %3111 = vmatprep.subr.bf16.mxu0 0
  %3112 = vmatpush1.bf16.xpose.msra.mxu0 0
  %3113 = vmatprep.subr.bf16.mxu0 0
  %3114 = vmatpush1.bf16.xpose.msra.mxu0 0
  %3115 = vmatprep.subr.bf16.mxu0 0
  %3116 = vmatpush1.bf16.xpose.msra.mxu0 0
  %3117 = vmatprep.subr.bf16.mxu0 0
  %3118 = vmatpush1.bf16.xpose.msra.mxu0 0
  %3119 = vmatprep.subr.bf16.mxu0 0
  %3120 = vmatpush1.bf16.xpose.msra.mxu0 0
  %3121 = vmatprep.subr.bf16.mxu0 0
  %3122 = vmatpush1.bf16.xpose.msra.mxu0 %v3105
  %3123 = vmatprep.subr.bf16.mxu0 0
  %3124 = vmatpush2.bf16.xpose.msra.mxu0 0
  %3125 = vmatprep.subr.bf16.mxu0 0
  %3126 = vmatpush2.bf16.xpose.msra.mxu0 0
  %3127 = vmatprep.subr.bf16.mxu0 0
  %3128 = vmatpush2.bf16.xpose.msra.mxu0 0
  %3129 = vmatprep.subr.bf16.mxu0 0
  %3130 = vmatpush2.bf16.xpose.msra.mxu0 0
  %3131 = vmatprep.subr.bf16.mxu0 0
  %3132 = vmatpush2.bf16.xpose.msra.mxu0 0
  %3133 = vmatprep.subr.bf16.mxu0 0
  %3134 = vmatpush2.bf16.xpose.msra.mxu0 0
  %3135 = vmatprep.subr.bf16.mxu0 0
  %3136 = vmatpush2.bf16.xpose.msra.mxu0 0
  %3137 = vmatprep.subr.bf16.mxu0 0
  %3138 = vmatpush2.bf16.xpose.msra.mxu0 0
  %3139 = vmatprep.mubr.bf16.mxu0 0
  %3140 = vmatmul.mubr.bf16.gmra.mxu0 %v3102
  %v3141 = vpop.f32.mrf.mxu0
  %v3142 = vadd.f32 0.0, %v3141
  %v3143 = vpop.f32.mrf.mxu0
  %v3144 = vpop.f32.mrf.mxu0
  %v3145 = vpop.f32.mrf.mxu0
  %3146 = vdwg.mxu0
  %3148 = vrot.lane.b32.xlu0 %v2877, 112
  %v3149 = vpop.permute.xlu0 %3148
  %3150 = vrot.lane.b32.xlu0 %v2879, 112
  %v3151 = vpop.permute.xlu0 %3150
  %v3153 = vsel %vm410, %v3149, 0
  %v3156 = vsel %vm410, %v3151, 0
  %3158 = vmatprep.subr.bf16.mxu0 0
  %3159 = vmatpush1.bf16.xpose.msra.mxu0 0
  %3160 = vmatprep.subr.bf16.mxu0 0
  %3161 = vmatpush1.bf16.xpose.msra.mxu0 0
  %3162 = vmatprep.subr.bf16.mxu0 0
  %3163 = vmatpush1.bf16.xpose.msra.mxu0 0
  %3164 = vmatprep.subr.bf16.mxu0 0
  %3165 = vmatpush1.bf16.xpose.msra.mxu0 0
  %3166 = vmatprep.subr.bf16.mxu0 0
  %3167 = vmatpush1.bf16.xpose.msra.mxu0 0
  %3168 = vmatprep.subr.bf16.mxu0 0
  %3169 = vmatpush1.bf16.xpose.msra.mxu0 0
  %3170 = vmatprep.subr.bf16.mxu0 0
  %3171 = vmatpush1.bf16.xpose.msra.mxu0 0
  %3172 = vmatprep.subr.bf16.mxu0 0
  %3173 = vmatpush1.bf16.xpose.msra.mxu0 %v3156
  %3174 = vmatprep.subr.bf16.mxu0 0
  %3175 = vmatpush2.bf16.xpose.msra.mxu0 0
  %3176 = vmatprep.subr.bf16.mxu0 0
  %3177 = vmatpush2.bf16.xpose.msra.mxu0 0
  %3178 = vmatprep.subr.bf16.mxu0 0
  %3179 = vmatpush2.bf16.xpose.msra.mxu0 0
  %3180 = vmatprep.subr.bf16.mxu0 0
  %3181 = vmatpush2.bf16.xpose.msra.mxu0 0
  %3182 = vmatprep.subr.bf16.mxu0 0
  %3183 = vmatpush2.bf16.xpose.msra.mxu0 0
  %3184 = vmatprep.subr.bf16.mxu0 0
  %3185 = vmatpush2.bf16.xpose.msra.mxu0 0
  %3186 = vmatprep.subr.bf16.mxu0 0
  %3187 = vmatpush2.bf16.xpose.msra.mxu0 0
  %3188 = vmatprep.subr.bf16.mxu0 0
  %3189 = vmatpush2.bf16.xpose.msra.mxu0 0
  %3190 = vmatprep.mubr.bf16.mxu0 0
  %3191 = vmatmul.mubr.bf16.gmra.mxu0 %v3153
  %v3192 = vpop.f32.mrf.mxu0
  %v3193 = vadd.f32 0.0, %v3192
  %v3194 = vpop.f32.mrf.mxu0
  %v3195 = vpop.f32.mrf.mxu0
  %v3196 = vpop.f32.mrf.mxu0
  %3197 = vdwg.mxu0
  %v3198 = vmul.f32 %v3142, 0.25
  %v3199 = vmul.f32 %v3193, 0.25
  %v3200 = vsel %vm508, %v3198, -inf
  %3201 = vmax.xlane.f32.xlu0 %v3200
  %v3202 = vpop.xlane.xlu0 %3201
  %v3203 = vsel %vm508, %v3199, -inf
  %3204 = vmax.xlane.f32.xlu0 %v3203
  %v3205 = vpop.xlane.xlu0 %3204
  %v3206 = vsub.f32 %v3198, %v3202
  %v3207 = vsub.f32 %v3199, %v3205
  %v3208 = vmul.f32 %v3206, 1.442695
  %v3209 = vpow.pop %v3208
  %v3210 = vmul.f32 %v3207, 1.442695
  %v3211 = vpow.pop %v3210
  %v3212 = vsel %vm508, %v3209, 0.0
  %3213 = vadd.xlane.f32.xlu0 %v3212
  %v3214 = vpop.xlane.xlu0 %3213
  %v3215 = vsel %vm508, %v3211, 0.0
  %3216 = vadd.xlane.f32.xlu0 %v3215
  %v3217 = vpop.xlane.xlu0 %3216
  %v3218 = vrcp.pop %v3214
  %v3219 = vrcp.pop %v3217
  %v3220 = vmul.f32 %v3209, %v3218
  %v3221 = vmul.f32 %v3211, %v3219
  %v3222 = vpack.c.bf16 %v3220, %v3220
  %v3223 = vpack.c.bf16 %v3221, %v3221
  %3224 = vrot.lane.b32.xlu0 %v2878, 80
  %v3225 = vpop.permute.xlu0 %3224
  %v3227 = vsel %vm508, %v3222, 0
  %v3230 = vsel %vm538, %v3225, 0
  %3232 = vmatprep.subr.bf16.mxu0 0
  %3233 = vmatpush1.bf16.msra.mxu0 0
  %3234 = vmatprep.subr.bf16.mxu0 0
  %3235 = vmatpush1.bf16.msra.mxu0 0
  %3236 = vmatprep.subr.bf16.mxu0 0
  %3237 = vmatpush1.bf16.msra.mxu0 0
  %3238 = vmatprep.subr.bf16.mxu0 0
  %3239 = vmatpush1.bf16.msra.mxu0 0
  %3240 = vmatprep.subr.bf16.mxu0 0
  %3241 = vmatpush1.bf16.msra.mxu0 0
  %3242 = vmatprep.subr.bf16.mxu0 0
  %3243 = vmatpush1.bf16.msra.mxu0 0
  %3244 = vmatprep.subr.bf16.mxu0 0
  %3245 = vmatpush1.bf16.msra.mxu0 0
  %3246 = vmatprep.subr.bf16.mxu0 0
  %3247 = vmatpush1.bf16.msra.mxu0 %v3230
  %3248 = vmatprep.subr.bf16.mxu0 0
  %3249 = vmatpush2.bf16.msra.mxu0 0
  %3250 = vmatprep.subr.bf16.mxu0 0
  %3251 = vmatpush2.bf16.msra.mxu0 0
  %3252 = vmatprep.subr.bf16.mxu0 0
  %3253 = vmatpush2.bf16.msra.mxu0 0
  %3254 = vmatprep.subr.bf16.mxu0 0
  %3255 = vmatpush2.bf16.msra.mxu0 0
  %3256 = vmatprep.subr.bf16.mxu0 0
  %3257 = vmatpush2.bf16.msra.mxu0 0
  %3258 = vmatprep.subr.bf16.mxu0 0
  %3259 = vmatpush2.bf16.msra.mxu0 0
  %3260 = vmatprep.subr.bf16.mxu0 0
  %3261 = vmatpush2.bf16.msra.mxu0 0
  %3262 = vmatprep.subr.bf16.mxu0 0
  %3263 = vmatpush2.bf16.msra.mxu0 0
  %3264 = vmatprep.mubr.bf16.mxu0 0
  %3265 = vmatmul.mubr.bf16.gmra.mxu0 %v3227
  %v3266 = vpop.f32.mrf.mxu0
  %v3267 = vadd.f32 0.0, %v3266
  %v3268 = vpop.f32.mrf.mxu0
  %v3269 = vpop.f32.mrf.mxu0
  %v3270 = vpop.f32.mrf.mxu0
  %3271 = vdwg.mxu0
  %3272 = vrot.lane.b32.xlu0 %v2879, 80
  %v3273 = vpop.permute.xlu0 %3272
  %v3275 = vsel %vm508, %v3223, 0
  %v3278 = vsel %vm538, %v3273, 0
  %3280 = vmatprep.subr.bf16.mxu0 0
  %3281 = vmatpush1.bf16.msra.mxu0 0
  %3282 = vmatprep.subr.bf16.mxu0 0
  %3283 = vmatpush1.bf16.msra.mxu0 0
  %3284 = vmatprep.subr.bf16.mxu0 0
  %3285 = vmatpush1.bf16.msra.mxu0 0
  %3286 = vmatprep.subr.bf16.mxu0 0
  %3287 = vmatpush1.bf16.msra.mxu0 0
  %3288 = vmatprep.subr.bf16.mxu0 0
  %3289 = vmatpush1.bf16.msra.mxu0 0
  %3290 = vmatprep.subr.bf16.mxu0 0
  %3291 = vmatpush1.bf16.msra.mxu0 0
  %3292 = vmatprep.subr.bf16.mxu0 0
  %3293 = vmatpush1.bf16.msra.mxu0 0
  %3294 = vmatprep.subr.bf16.mxu0 0
  %3295 = vmatpush1.bf16.msra.mxu0 %v3278
  %3296 = vmatprep.subr.bf16.mxu0 0
  %3297 = vmatpush2.bf16.msra.mxu0 0
  %3298 = vmatprep.subr.bf16.mxu0 0
  %3299 = vmatpush2.bf16.msra.mxu0 0
  %3300 = vmatprep.subr.bf16.mxu0 0
  %3301 = vmatpush2.bf16.msra.mxu0 0
  %3302 = vmatprep.subr.bf16.mxu0 0
  %3303 = vmatpush2.bf16.msra.mxu0 0
  %3304 = vmatprep.subr.bf16.mxu0 0
  %3305 = vmatpush2.bf16.msra.mxu0 0
  %3306 = vmatprep.subr.bf16.mxu0 0
  %3307 = vmatpush2.bf16.msra.mxu0 0
  %3308 = vmatprep.subr.bf16.mxu0 0
  %3309 = vmatpush2.bf16.msra.mxu0 0
  %3310 = vmatprep.subr.bf16.mxu0 0
  %3311 = vmatpush2.bf16.msra.mxu0 0
  %3312 = vmatprep.mubr.bf16.mxu0 0
  %3313 = vmatmul.mubr.bf16.gmra.mxu0 %v3275
  %v3314 = vpop.f32.mrf.mxu0
  %v3315 = vadd.f32 0.0, %v3314
  %v3316 = vpop.f32.mrf.mxu0
  %v3317 = vpop.f32.mrf.mxu0
  %v3318 = vpop.f32.mrf.mxu0
  %3319 = vdwg.mxu0
  %3322 = vrot.lane.b32.xlu0 %v3267, 16
  %v3323 = vpop.permute.xlu0 %3322
  %3324 = vrot.lane.b32.xlu0 %v3315, 16
  %v3325 = vpop.permute.xlu0 %3324
  %v3328 = vsel %vm410, %v3042, %v3323
  %v3329 = vsel %vm410, %v3091, %v3325
  %v3330 = vpack.c.bf16 %v3329, %v3328
  %v3331 = vld [vmem:[%s59] sm:$0x1]
  %v3333 = vlaneseq
  %v3334 = vshrl.u32 %v3333, 7
  %v3335 = vsub.s32 0, %v3334
  %v3336 = vrot.slane %v3331, %v3335
  %v3342 = vunpack.c.l.b16 %v2872
  %v3343 = vunpack.c.l.b16 %v2873
  %v3344 = vunpack.c.l.b16 %v2874
  %v3345 = vunpack.c.l.b16 %v2875
  %v3346 = vpack.c.b16 %v3343, %v3342
  %v3347 = vpack.c.b16 %v3345, %v3344
  %v3351 = vsel %vm288, %v3330, 0
  %3353 = vmatprep.subr.bf16.mxu0 0
  %3354 = vmatpush1.bf16.msra.mxu0 0
  %3355 = vmatprep.subr.bf16.mxu0 0
  %3356 = vmatpush1.bf16.msra.mxu0 0
  %3357 = vmatprep.subr.bf16.mxu0 0
  %3358 = vmatpush1.bf16.msra.mxu0 0
  %3359 = vmatprep.subr.bf16.mxu0 0
  %3360 = vmatpush1.bf16.msra.mxu0 0
  %3361 = vmatprep.subr.bf16.mxu0 0
  %3362 = vmatpush1.bf16.msra.mxu0 0
  %3363 = vmatprep.subr.bf16.mxu0 0
  %3364 = vmatpush1.bf16.msra.mxu0 0
  %3365 = vmatprep.subr.bf16.mxu0 0
  %3366 = vmatpush1.bf16.msra.mxu0 %v3347
  %3367 = vmatprep.subr.bf16.mxu0 0
  %3368 = vmatpush1.bf16.msra.mxu0 %v3346
  %3369 = vmatprep.subr.bf16.mxu0 0
  %3370 = vmatpush2.bf16.msra.mxu0 0
  %3371 = vmatprep.subr.bf16.mxu0 0
  %3372 = vmatpush2.bf16.msra.mxu0 0
  %3373 = vmatprep.subr.bf16.mxu0 0
  %3374 = vmatpush2.bf16.msra.mxu0 0
  %3375 = vmatprep.subr.bf16.mxu0 0
  %3376 = vmatpush2.bf16.msra.mxu0 0
  %3377 = vmatprep.subr.bf16.mxu0 0
  %3378 = vmatpush2.bf16.msra.mxu0 0
  %3379 = vmatprep.subr.bf16.mxu0 0
  %3380 = vmatpush2.bf16.msra.mxu0 0
  %3381 = vmatprep.subr.bf16.mxu0 0
  %3382 = vmatpush2.bf16.msra.mxu0 0
  %3383 = vmatprep.subr.bf16.mxu0 0
  %3384 = vmatpush2.bf16.msra.mxu0 0
  %3385 = vmatprep.mubr.bf16.mxu0 0
  %3386 = vmatmul.mubr.bf16.gmra.mxu0 %v3351
  %v3387 = vpop.f32.mrf.mxu0
  %v3388 = vadd.f32 %v3336, %v3387
  %v3389 = vpop.f32.mrf.mxu0
  %v3390 = vpop.f32.mrf.mxu0
  %v3391 = vadd.f32 %v3336, %v3390
  %v3392 = vpop.f32.mrf.mxu0
  %3393 = vdwg.mxu0
  %v3394 = vadd.f32 %v2734, %v3388
  %v3395 = vadd.f32 %v2735, %v3391
  %v3396 = vld [vmem:[%s65] sm:$0x1]
  %v3397 = vld [vmem:[%s67] sm:$0x1]
  %v3398 = vsel %vm288, %v3394, 0.0
  %3399 = vadd.xlane.f32.xlu0 %v3398
  %v3400 = vpop.xlane.xlu0 %3399
  %v3401 = vsel %vm288, %v3395, 0.0
  %3402 = vadd.xlane.f32.xlu0 %v3401
  %v3403 = vpop.xlane.xlu0 %3402
  %v3404 = vmul.f32 %v3400, %v936
  %v3405 = vmul.f32 %v3403, %v936
  %v3406 = vsub.f32 %v3394, %v3404
  %v3407 = vsub.f32 %v3395, %v3405
  %v3408 = vmul.f32 %v3406, %v3406
  %v3409 = vmul.f32 %v3407, %v3407
  %v3410 = vsel %vm288, %v3408, 0.0
  %3411 = vadd.xlane.f32.xlu0 %v3410
  %v3412 = vpop.xlane.xlu0 %3411
  %v3413 = vsel %vm288, %v3409, 0.0
  %3414 = vadd.xlane.f32.xlu0 %v3413
  %v3415 = vpop.xlane.xlu0 %3414
  %v3416 = vmul.f32 %v3412, %v936
  %v3417 = vmul.f32 %v3415, %v936
  %v3418 = vadd.f32 %v3416, 1e-05
  %v3419 = vadd.f32 %v3417, 1e-05
  %v3420 = vrsqrt.pop %v3418
  %v3421 = vrsqrt.pop %v3419
  %v3422 = vmul.f32 %v3406, %v3420
  %v3423 = vmul.f32 %v3407, %v3421
  %v3425 = vlaneseq
  %v3426 = vshrl.u32 %v3425, 7
  %v3427 = vsub.s32 0, %v3426
  %v3428 = vrot.slane %v3396, %v3427
  %v3430 = vmul.f32 %v3422, %v3428
  %v3431 = vmul.f32 %v3423, %v3428
  %v3433 = vlaneseq
  %v3434 = vshrl.u32 %v3433, 7
  %v3435 = vsub.s32 0, %v3434
  %v3436 = vrot.slane %v3397, %v3435
  %v3438 = vadd.f32 %v3430, %v3436
  %v3439 = vadd.f32 %v3431, %v3436
  %v3440 = vld [vmem:[%s73] sm:$0xf]
  %v3441 = vld [vmem:[%s73 + $0x4] sm:$0xf]
  %v3442 = vld [vmem:[%s73 + $0x8] sm:$0xf]
  %v3443 = vld [vmem:[%s73 + $0xc] sm:$0xf]
  %v3444 = vpack.c.bf16 %v3439, %v3438
  %v3445 = vld [vmem:[%s75] sm:$0x1]
  %v3447 = vlaneseq
  %v3448 = vshrl.u32 %v3447, 7
  %v3449 = vsub.s32 0, %v3448
  %v3450 = vrot.slane %v3445, %v3449
  %v3456 = vunpack.c.l.b16 %v3440
  %v3457 = vunpack.c.l.b16 %v3441
  %v3458 = vunpack.c.l.b16 %v3442
  %v3459 = vunpack.c.l.b16 %v3443
  %v3460 = vpack.c.b16 %v3457, %v3456
  %v3461 = vpack.c.b16 %v3459, %v3458
  %v3465 = vsel %vm288, %v3444, 0
  %3467 = vmatprep.subr.bf16.mxu0 0
  %3468 = vmatpush1.bf16.msra.mxu0 0
  %3469 = vmatprep.subr.bf16.mxu0 0
  %3470 = vmatpush1.bf16.msra.mxu0 0
  %3471 = vmatprep.subr.bf16.mxu0 0
  %3472 = vmatpush1.bf16.msra.mxu0 0
  %3473 = vmatprep.subr.bf16.mxu0 0
  %3474 = vmatpush1.bf16.msra.mxu0 0
  %3475 = vmatprep.subr.bf16.mxu0 0
  %3476 = vmatpush1.bf16.msra.mxu0 0
  %3477 = vmatprep.subr.bf16.mxu0 0
  %3478 = vmatpush1.bf16.msra.mxu0 0
  %3479 = vmatprep.subr.bf16.mxu0 0
  %3480 = vmatpush1.bf16.msra.mxu0 %v3461
  %3481 = vmatprep.subr.bf16.mxu0 0
  %3482 = vmatpush1.bf16.msra.mxu0 %v3460
  %3483 = vmatprep.subr.bf16.mxu0 0
  %3484 = vmatpush2.bf16.msra.mxu0 0
  %3485 = vmatprep.subr.bf16.mxu0 0
  %3486 = vmatpush2.bf16.msra.mxu0 0
  %3487 = vmatprep.subr.bf16.mxu0 0
  %3488 = vmatpush2.bf16.msra.mxu0 0
  %3489 = vmatprep.subr.bf16.mxu0 0
  %3490 = vmatpush2.bf16.msra.mxu0 0
  %3491 = vmatprep.subr.bf16.mxu0 0
  %3492 = vmatpush2.bf16.msra.mxu0 0
  %3493 = vmatprep.subr.bf16.mxu0 0
  %3494 = vmatpush2.bf16.msra.mxu0 0
  %3495 = vmatprep.subr.bf16.mxu0 0
  %3496 = vmatpush2.bf16.msra.mxu0 0
  %3497 = vmatprep.subr.bf16.mxu0 0
  %3498 = vmatpush2.bf16.msra.mxu0 0
  %3499 = vmatprep.mubr.bf16.mxu0 0
  %3500 = vmatmul.mubr.bf16.gmra.mxu0 %v3465
  %v3501 = vpop.f32.mrf.mxu0
  %v3502 = vadd.f32 %v3450, %v3501
  %v3503 = vpop.f32.mrf.mxu0
  %v3504 = vpop.f32.mrf.mxu0
  %v3505 = vadd.f32 %v3450, %v3504
  %v3506 = vpop.f32.mrf.mxu0
  %3507 = vdwg.mxu0
  %v3508 = vmax.f32 %v3502, 0.0
  %v3509 = vmax.f32 %v3505, 0.0
  %v3510 = vld [vmem:[%s77] sm:$0xf]
  %v3511 = vld [vmem:[%s77 + $0x4] sm:$0xf]
  %v3512 = vld [vmem:[%s77 + $0x8] sm:$0xf]
  %v3513 = vld [vmem:[%s77 + $0xc] sm:$0xf]
  %v3514 = vld [vmem:[%s77 + $0x10] sm:$0xf]
  %v3515 = vld [vmem:[%s77 + $0x14] sm:$0xf]
  %v3516 = vld [vmem:[%s77 + $0x18] sm:$0xf]
  %v3517 = vld [vmem:[%s77 + $0x1c] sm:$0xf]
  %v3518 = vld [vmem:[%s77 + $0x20] sm:$0xf]
  %v3519 = vld [vmem:[%s77 + $0x24] sm:$0xf]
  %v3520 = vld [vmem:[%s77 + $0x28] sm:$0xf]
  %v3521 = vld [vmem:[%s77 + $0x2c] sm:$0xf]
  %v3522 = vpack.c.bf16 %v3509, %v3508
  %v3523 = vld [vmem:[%s79] sm:$0x1]
  %v3525 = vlaneseq
  %v3526 = vshrl.u32 %v3525, 7
  %v3527 = vsub.s32 0, %v3526
  %v3528 = vrot.slane %v3523, %v3527
  %v3542 = vunpack.c.l.b16 %v3510
  %v3543 = vunpack.c.l.b16 %v3511
  %v3544 = vunpack.c.l.b16 %v3512
  %v3545 = vunpack.c.l.b16 %v3513
  %v3546 = vunpack.c.l.b16 %v3514
  %v3547 = vunpack.c.l.b16 %v3515
  %v3548 = vunpack.c.l.b16 %v3516
  %v3549 = vunpack.c.l.b16 %v3517
  %v3550 = vunpack.c.l.b16 %v3518
  %v3551 = vunpack.c.l.b16 %v3519
  %v3552 = vunpack.c.l.b16 %v3520
  %v3553 = vunpack.c.l.b16 %v3521
  %v3554 = vpack.c.b16 %v3543, %v3542
  %v3555 = vpack.c.b16 %v3545, %v3544
  %v3556 = vpack.c.b16 %v3547, %v3546
  %v3557 = vpack.c.b16 %v3549, %v3548
  %v3558 = vpack.c.b16 %v3551, %v3550
  %v3559 = vpack.c.b16 %v3553, %v3552
  %v3567 = vsel %vm1099, %v3522, 0
  %3569 = vmatprep.subr.bf16.mxu0 0
  %3570 = vmatpush1.bf16.msra.mxu0 0
  %3571 = vmatprep.subr.bf16.mxu0 0
  %3572 = vmatpush1.bf16.msra.mxu0 0
  %3573 = vmatprep.subr.bf16.mxu0 0
  %3574 = vmatpush1.bf16.msra.mxu0 %v3559
  %3575 = vmatprep.subr.bf16.mxu0 0
  %3576 = vmatpush1.bf16.msra.mxu0 %v3558
  %3577 = vmatprep.subr.bf16.mxu0 0
  %3578 = vmatpush1.bf16.msra.mxu0 %v3557
  %3579 = vmatprep.subr.bf16.mxu0 0
  %3580 = vmatpush1.bf16.msra.mxu0 %v3556
  %3581 = vmatprep.subr.bf16.mxu0 0
  %3582 = vmatpush1.bf16.msra.mxu0 %v3555
  %3583 = vmatprep.subr.bf16.mxu0 0
  %3584 = vmatpush1.bf16.msra.mxu0 %v3554
  %3585 = vmatprep.subr.bf16.mxu0 0
  %3586 = vmatpush2.bf16.msra.mxu0 0
  %3587 = vmatprep.subr.bf16.mxu0 0
  %3588 = vmatpush2.bf16.msra.mxu0 0
  %3589 = vmatprep.subr.bf16.mxu0 0
  %3590 = vmatpush2.bf16.msra.mxu0 0
  %3591 = vmatprep.subr.bf16.mxu0 0
  %3592 = vmatpush2.bf16.msra.mxu0 0
  %3593 = vmatprep.subr.bf16.mxu0 0
  %3594 = vmatpush2.bf16.msra.mxu0 0
  %3595 = vmatprep.subr.bf16.mxu0 0
  %3596 = vmatpush2.bf16.msra.mxu0 0
  %3597 = vmatprep.subr.bf16.mxu0 0
  %3598 = vmatpush2.bf16.msra.mxu0 0
  %3599 = vmatprep.subr.bf16.mxu0 0
  %3600 = vmatpush2.bf16.msra.mxu0 0
  %3601 = vmatprep.mubr.bf16.mxu0 0
  %3602 = vmatmul.mubr.bf16.gmra.mxu0 %v3567
  %v3603 = vpop.f32.mrf.mxu0
  %v3604 = vadd.f32 %v3528, %v3603
  %v3605 = vpop.f32.mrf.mxu0
  %v3606 = vpop.f32.mrf.mxu0
  %v3607 = vadd.f32 %v3528, %v3606
  %v3608 = vpop.f32.mrf.mxu0
  %3609 = vdwg.mxu0
  %v3610 = vadd.f32 %v3438, %v3604
  %v3611 = vadd.f32 %v3439, %v3607
  %v3612 = vld [vmem:[%s69] sm:$0x1]
  %v3613 = vld [vmem:[%s71] sm:$0x1]
  %v3614 = vsel %vm288, %v3610, 0.0
  %3615 = vadd.xlane.f32.xlu0 %v3614
  %v3616 = vpop.xlane.xlu0 %3615
  %v3617 = vsel %vm288, %v3611, 0.0
  %3618 = vadd.xlane.f32.xlu0 %v3617
  %v3619 = vpop.xlane.xlu0 %3618
  %v3620 = vmul.f32 %v3616, %v936
  %v3621 = vmul.f32 %v3619, %v936
  %v3622 = vsub.f32 %v3610, %v3620
  %v3623 = vsub.f32 %v3611, %v3621
  %v3624 = vmul.f32 %v3622, %v3622
  %v3625 = vmul.f32 %v3623, %v3623
  %v3626 = vsel %vm288, %v3624, 0.0
  %3627 = vadd.xlane.f32.xlu0 %v3626
  %v3628 = vpop.xlane.xlu0 %3627
  %v3629 = vsel %vm288, %v3625, 0.0
  %3630 = vadd.xlane.f32.xlu0 %v3629
  %v3631 = vpop.xlane.xlu0 %3630
  %v3632 = vmul.f32 %v3628, %v936
  %v3633 = vmul.f32 %v3631, %v936
  %v3634 = vadd.f32 %v3632, 1e-05
  %v3635 = vadd.f32 %v3633, 1e-05
  %v3636 = vrsqrt.pop %v3634
  %v3637 = vrsqrt.pop %v3635
  %v3638 = vmul.f32 %v3622, %v3636
  %v3639 = vmul.f32 %v3623, %v3637
  %v3641 = vlaneseq
  %v3642 = vshrl.u32 %v3641, 7
  %v3643 = vsub.s32 0, %v3642
  %v3644 = vrot.slane %v3612, %v3643
  %v3646 = vmul.f32 %v3638, %v3644
  %v3647 = vmul.f32 %v3639, %v3644
  %v3649 = vlaneseq
  %v3650 = vshrl.u32 %v3649, 7
  %v3651 = vsub.s32 0, %v3650
  %v3652 = vrot.slane %v3613, %v3651
  %v3654 = vadd.f32 %v3646, %v3652
  %v3655 = vadd.f32 %v3647, %v3652
  %s3656 = scalar_lea.vmem %s41, 16
  %v3657 = vld [vmem:[%s3656] sm:$0xf]
  %v3658 = vld [vmem:[%s3656 + $0x4] sm:$0xf]
  %v3659 = vld [vmem:[%s3656 + $0x8] sm:$0xf]
  %v3660 = vld [vmem:[%s3656 + $0xc] sm:$0xf]
  %v3661 = vpack.c.bf16 %v3655, %v3654
  %s3662 = scalar_lea.vmem %s43, 1
  %v3663 = vld [vmem:[%s3662] sm:$0x1]
  %v3665 = vlaneseq
  %v3666 = vshrl.u32 %v3665, 7
  %v3667 = vsub.s32 0, %v3666
  %v3668 = vrot.slane %v3663, %v3667
  %v3674 = vunpack.c.l.b16 %v3657
  %v3675 = vunpack.c.l.b16 %v3658
  %v3676 = vunpack.c.l.b16 %v3659
  %v3677 = vunpack.c.l.b16 %v3660
  %v3678 = vpack.c.b16 %v3675, %v3674
  %v3679 = vpack.c.b16 %v3677, %v3676
  %v3683 = vsel %vm288, %v3661, 0
  %3685 = vmatprep.subr.bf16.mxu0 0
  %3686 = vmatpush1.bf16.msra.mxu0 0
  %3687 = vmatprep.subr.bf16.mxu0 0
  %3688 = vmatpush1.bf16.msra.mxu0 0
  %3689 = vmatprep.subr.bf16.mxu0 0
  %3690 = vmatpush1.bf16.msra.mxu0 0
  %3691 = vmatprep.subr.bf16.mxu0 0
  %3692 = vmatpush1.bf16.msra.mxu0 0
  %3693 = vmatprep.subr.bf16.mxu0 0
  %3694 = vmatpush1.bf16.msra.mxu0 0
  %3695 = vmatprep.subr.bf16.mxu0 0
  %3696 = vmatpush1.bf16.msra.mxu0 0
  %3697 = vmatprep.subr.bf16.mxu0 0
  %3698 = vmatpush1.bf16.msra.mxu0 %v3679
  %3699 = vmatprep.subr.bf16.mxu0 0
  %3700 = vmatpush1.bf16.msra.mxu0 %v3678
  %3701 = vmatprep.subr.bf16.mxu0 0
  %3702 = vmatpush2.bf16.msra.mxu0 0
  %3703 = vmatprep.subr.bf16.mxu0 0
  %3704 = vmatpush2.bf16.msra.mxu0 0
  %3705 = vmatprep.subr.bf16.mxu0 0
  %3706 = vmatpush2.bf16.msra.mxu0 0
  %3707 = vmatprep.subr.bf16.mxu0 0
  %3708 = vmatpush2.bf16.msra.mxu0 0
  %3709 = vmatprep.subr.bf16.mxu0 0
  %3710 = vmatpush2.bf16.msra.mxu0 0
  %3711 = vmatprep.subr.bf16.mxu0 0
  %3712 = vmatpush2.bf16.msra.mxu0 0
  %3713 = vmatprep.subr.bf16.mxu0 0
  %3714 = vmatpush2.bf16.msra.mxu0 0
  %3715 = vmatprep.subr.bf16.mxu0 0
  %3716 = vmatpush2.bf16.msra.mxu0 0
  %3717 = vmatprep.mubr.bf16.mxu0 0
  %3718 = vmatmul.mubr.bf16.gmra.mxu0 %v3683
  %v3719 = vpop.f32.mrf.mxu0
  %v3720 = vadd.f32 %v3668, %v3719
  %v3721 = vpop.f32.mrf.mxu0
  %v3722 = vpop.f32.mrf.mxu0
  %v3723 = vadd.f32 %v3668, %v3722
  %v3724 = vpop.f32.mrf.mxu0
  %3725 = vdwg.mxu0
  %s3726 = scalar_lea.vmem %s45, 16
  %v3727 = vld [vmem:[%s3726] sm:$0xf]
  %v3728 = vld [vmem:[%s3726 + $0x4] sm:$0xf]
  %v3729 = vld [vmem:[%s3726 + $0x8] sm:$0xf]
  %v3730 = vld [vmem:[%s3726 + $0xc] sm:$0xf]
  %v3731 = vpack.c.bf16 %v3720, %v3720
  %v3732 = vpack.c.bf16 %v3723, %v3723
  %3734 = vrot.lane.b32.xlu0 %v3731, 96
  %v3735 = vpop.permute.xlu0 %3734
  %v3737 = vsel %vm410, %v3731, 0
  %v3740 = vsel %vm410, %v3735, 0
  %3742 = vmatprep.subr.bf16.mxu0 0
  %3743 = vmatpush1.bf16.xpose.msra.mxu0 0
  %3744 = vmatprep.subr.bf16.mxu0 0
  %3745 = vmatpush1.bf16.xpose.msra.mxu0 0
  %3746 = vmatprep.subr.bf16.mxu0 0
  %3747 = vmatpush1.bf16.xpose.msra.mxu0 0
  %3748 = vmatprep.subr.bf16.mxu0 0
  %3749 = vmatpush1.bf16.xpose.msra.mxu0 0
  %3750 = vmatprep.subr.bf16.mxu0 0
  %3751 = vmatpush1.bf16.xpose.msra.mxu0 0
  %3752 = vmatprep.subr.bf16.mxu0 0
  %3753 = vmatpush1.bf16.xpose.msra.mxu0 0
  %3754 = vmatprep.subr.bf16.mxu0 0
  %3755 = vmatpush1.bf16.xpose.msra.mxu0 0
  %3756 = vmatprep.subr.bf16.mxu0 0
  %3757 = vmatpush1.bf16.xpose.msra.mxu0 %v3740
  %3758 = vmatprep.subr.bf16.mxu0 0
  %3759 = vmatpush2.bf16.xpose.msra.mxu0 0
  %3760 = vmatprep.subr.bf16.mxu0 0
  %3761 = vmatpush2.bf16.xpose.msra.mxu0 0
  %3762 = vmatprep.subr.bf16.mxu0 0
  %3763 = vmatpush2.bf16.xpose.msra.mxu0 0
  %3764 = vmatprep.subr.bf16.mxu0 0
  %3765 = vmatpush2.bf16.xpose.msra.mxu0 0
  %3766 = vmatprep.subr.bf16.mxu0 0
  %3767 = vmatpush2.bf16.xpose.msra.mxu0 0
  %3768 = vmatprep.subr.bf16.mxu0 0
  %3769 = vmatpush2.bf16.xpose.msra.mxu0 0
  %3770 = vmatprep.subr.bf16.mxu0 0
  %3771 = vmatpush2.bf16.xpose.msra.mxu0 0
  %3772 = vmatprep.subr.bf16.mxu0 0
  %3773 = vmatpush2.bf16.xpose.msra.mxu0 0
  %3774 = vmatprep.mubr.bf16.mxu0 0
  %3775 = vmatmul.mubr.bf16.gmra.mxu0 %v3737
  %v3776 = vpop.f32.mrf.mxu0
  %v3777 = vadd.f32 0.0, %v3776
  %v3778 = vpop.f32.mrf.mxu0
  %v3779 = vpop.f32.mrf.mxu0
  %v3780 = vpop.f32.mrf.mxu0
  %3781 = vdwg.mxu0
  %3783 = vrot.lane.b32.xlu0 %v3732, 96
  %v3784 = vpop.permute.xlu0 %3783
  %v3786 = vsel %vm410, %v3732, 0
  %v3789 = vsel %vm410, %v3784, 0
  %3791 = vmatprep.subr.bf16.mxu0 0
  %3792 = vmatpush1.bf16.xpose.msra.mxu0 0
  %3793 = vmatprep.subr.bf16.mxu0 0
  %3794 = vmatpush1.bf16.xpose.msra.mxu0 0
  %3795 = vmatprep.subr.bf16.mxu0 0
  %3796 = vmatpush1.bf16.xpose.msra.mxu0 0
  %3797 = vmatprep.subr.bf16.mxu0 0
  %3798 = vmatpush1.bf16.xpose.msra.mxu0 0
  %3799 = vmatprep.subr.bf16.mxu0 0
  %3800 = vmatpush1.bf16.xpose.msra.mxu0 0
  %3801 = vmatprep.subr.bf16.mxu0 0
  %3802 = vmatpush1.bf16.xpose.msra.mxu0 0
  %3803 = vmatprep.subr.bf16.mxu0 0
  %3804 = vmatpush1.bf16.xpose.msra.mxu0 0
  %3805 = vmatprep.subr.bf16.mxu0 0
  %3806 = vmatpush1.bf16.xpose.msra.mxu0 %v3789
  %3807 = vmatprep.subr.bf16.mxu0 0
  %3808 = vmatpush2.bf16.xpose.msra.mxu0 0
  %3809 = vmatprep.subr.bf16.mxu0 0
  %3810 = vmatpush2.bf16.xpose.msra.mxu0 0
  %3811 = vmatprep.subr.bf16.mxu0 0
  %3812 = vmatpush2.bf16.xpose.msra.mxu0 0
  %3813 = vmatprep.subr.bf16.mxu0 0
  %3814 = vmatpush2.bf16.xpose.msra.mxu0 0
  %3815 = vmatprep.subr.bf16.mxu0 0
  %3816 = vmatpush2.bf16.xpose.msra.mxu0 0
  %3817 = vmatprep.subr.bf16.mxu0 0
  %3818 = vmatpush2.bf16.xpose.msra.mxu0 0
  %3819 = vmatprep.subr.bf16.mxu0 0
  %3820 = vmatpush2.bf16.xpose.msra.mxu0 0
  %3821 = vmatprep.subr.bf16.mxu0 0
  %3822 = vmatpush2.bf16.xpose.msra.mxu0 0
  %3823 = vmatprep.mubr.bf16.mxu0 0
  %3824 = vmatmul.mubr.bf16.gmra.mxu0 %v3786
  %v3825 = vpop.f32.mrf.mxu0
  %v3826 = vadd.f32 0.0, %v3825
  %v3827 = vpop.f32.mrf.mxu0
  %v3828 = vpop.f32.mrf.mxu0
  %v3829 = vpop.f32.mrf.mxu0
  %3830 = vdwg.mxu0
  %v3831 = vmul.f32 %v3777, 0.25
  %v3832 = vmul.f32 %v3826, 0.25
  %v3833 = vsel %vm508, %v3831, -inf
  %3834 = vmax.xlane.f32.xlu0 %v3833
  %v3835 = vpop.xlane.xlu0 %3834
  %v3836 = vsel %vm508, %v3832, -inf
  %3837 = vmax.xlane.f32.xlu0 %v3836
  %v3838 = vpop.xlane.xlu0 %3837
  %v3839 = vsub.f32 %v3831, %v3835
  %v3840 = vsub.f32 %v3832, %v3838
  %v3841 = vmul.f32 %v3839, 1.442695
  %v3842 = vpow.pop %v3841
  %v3843 = vmul.f32 %v3840, 1.442695
  %v3844 = vpow.pop %v3843
  %v3845 = vsel %vm508, %v3842, 0.0
  %3846 = vadd.xlane.f32.xlu0 %v3845
  %v3847 = vpop.xlane.xlu0 %3846
  %v3848 = vsel %vm508, %v3844, 0.0
  %3849 = vadd.xlane.f32.xlu0 %v3848
  %v3850 = vpop.xlane.xlu0 %3849
  %v3851 = vrcp.pop %v3847
  %v3852 = vrcp.pop %v3850
  %v3853 = vmul.f32 %v3842, %v3851
  %v3854 = vmul.f32 %v3844, %v3852
  %v3855 = vpack.c.bf16 %v3853, %v3853
  %v3856 = vpack.c.bf16 %v3854, %v3854
  %3857 = vrot.lane.b32.xlu0 %v3731, 64
  %v3858 = vpop.permute.xlu0 %3857
  %v3860 = vsel %vm508, %v3855, 0
  %v3863 = vsel %vm538, %v3858, 0
  %3865 = vmatprep.subr.bf16.mxu0 0
  %3866 = vmatpush1.bf16.msra.mxu0 0
  %3867 = vmatprep.subr.bf16.mxu0 0
  %3868 = vmatpush1.bf16.msra.mxu0 0
  %3869 = vmatprep.subr.bf16.mxu0 0
  %3870 = vmatpush1.bf16.msra.mxu0 0
  %3871 = vmatprep.subr.bf16.mxu0 0
  %3872 = vmatpush1.bf16.msra.mxu0 0
  %3873 = vmatprep.subr.bf16.mxu0 0
  %3874 = vmatpush1.bf16.msra.mxu0 0
  %3875 = vmatprep.subr.bf16.mxu0 0
  %3876 = vmatpush1.bf16.msra.mxu0 0
  %3877 = vmatprep.subr.bf16.mxu0 0
  %3878 = vmatpush1.bf16.msra.mxu0 0
  %3879 = vmatprep.subr.bf16.mxu0 0
  %3880 = vmatpush1.bf16.msra.mxu0 %v3863
  %3881 = vmatprep.subr.bf16.mxu0 0
  %3882 = vmatpush2.bf16.msra.mxu0 0
  %3883 = vmatprep.subr.bf16.mxu0 0
  %3884 = vmatpush2.bf16.msra.mxu0 0
  %3885 = vmatprep.subr.bf16.mxu0 0
  %3886 = vmatpush2.bf16.msra.mxu0 0
  %3887 = vmatprep.subr.bf16.mxu0 0
  %3888 = vmatpush2.bf16.msra.mxu0 0
  %3889 = vmatprep.subr.bf16.mxu0 0
  %3890 = vmatpush2.bf16.msra.mxu0 0
  %3891 = vmatprep.subr.bf16.mxu0 0
  %3892 = vmatpush2.bf16.msra.mxu0 0
  %3893 = vmatprep.subr.bf16.mxu0 0
  %3894 = vmatpush2.bf16.msra.mxu0 0
  %3895 = vmatprep.subr.bf16.mxu0 0
  %3896 = vmatpush2.bf16.msra.mxu0 0
  %3897 = vmatprep.mubr.bf16.mxu0 0
  %3898 = vmatmul.mubr.bf16.gmra.mxu0 %v3860
  %v3899 = vpop.f32.mrf.mxu0
  %v3900 = vadd.f32 0.0, %v3899
  %v3901 = vpop.f32.mrf.mxu0
  %v3902 = vpop.f32.mrf.mxu0
  %v3903 = vpop.f32.mrf.mxu0
  %3904 = vdwg.mxu0
  %3905 = vrot.lane.b32.xlu0 %v3732, 64
  %v3906 = vpop.permute.xlu0 %3905
  %v3908 = vsel %vm508, %v3856, 0
  %v3911 = vsel %vm538, %v3906, 0
  %3913 = vmatprep.subr.bf16.mxu0 0
  %3914 = vmatpush1.bf16.msra.mxu0 0
  %3915 = vmatprep.subr.bf16.mxu0 0
  %3916 = vmatpush1.bf16.msra.mxu0 0
  %3917 = vmatprep.subr.bf16.mxu0 0
  %3918 = vmatpush1.bf16.msra.mxu0 0
  %3919 = vmatprep.subr.bf16.mxu0 0
  %3920 = vmatpush1.bf16.msra.mxu0 0
  %3921 = vmatprep.subr.bf16.mxu0 0
  %3922 = vmatpush1.bf16.msra.mxu0 0
  %3923 = vmatprep.subr.bf16.mxu0 0
  %3924 = vmatpush1.bf16.msra.mxu0 0
  %3925 = vmatprep.subr.bf16.mxu0 0
  %3926 = vmatpush1.bf16.msra.mxu0 0
  %3927 = vmatprep.subr.bf16.mxu0 0
  %3928 = vmatpush1.bf16.msra.mxu0 %v3911
  %3929 = vmatprep.subr.bf16.mxu0 0
  %3930 = vmatpush2.bf16.msra.mxu0 0
  %3931 = vmatprep.subr.bf16.mxu0 0
  %3932 = vmatpush2.bf16.msra.mxu0 0
  %3933 = vmatprep.subr.bf16.mxu0 0
  %3934 = vmatpush2.bf16.msra.mxu0 0
  %3935 = vmatprep.subr.bf16.mxu0 0
  %3936 = vmatpush2.bf16.msra.mxu0 0
  %3937 = vmatprep.subr.bf16.mxu0 0
  %3938 = vmatpush2.bf16.msra.mxu0 0
  %3939 = vmatprep.subr.bf16.mxu0 0
  %3940 = vmatpush2.bf16.msra.mxu0 0
  %3941 = vmatprep.subr.bf16.mxu0 0
  %3942 = vmatpush2.bf16.msra.mxu0 0
  %3943 = vmatprep.subr.bf16.mxu0 0
  %3944 = vmatpush2.bf16.msra.mxu0 0
  %3945 = vmatprep.mubr.bf16.mxu0 0
  %3946 = vmatmul.mubr.bf16.gmra.mxu0 %v3908
  %v3947 = vpop.f32.mrf.mxu0
  %v3948 = vadd.f32 0.0, %v3947
  %v3949 = vpop.f32.mrf.mxu0
  %v3950 = vpop.f32.mrf.mxu0
  %v3951 = vpop.f32.mrf.mxu0
  %3952 = vdwg.mxu0
  %3953 = vrot.lane.b32.xlu0 %v3731, 112
  %v3954 = vpop.permute.xlu0 %3953
  %3955 = vrot.lane.b32.xlu0 %v3731, 80
  %v3956 = vpop.permute.xlu0 %3955
  %v3958 = vsel %vm410, %v3954, 0
  %v3961 = vsel %vm410, %v3956, 0
  %3963 = vmatprep.subr.bf16.mxu0 0
  %3964 = vmatpush1.bf16.xpose.msra.mxu0 0
  %3965 = vmatprep.subr.bf16.mxu0 0
  %3966 = vmatpush1.bf16.xpose.msra.mxu0 0
  %3967 = vmatprep.subr.bf16.mxu0 0
  %3968 = vmatpush1.bf16.xpose.msra.mxu0 0
  %3969 = vmatprep.subr.bf16.mxu0 0
  %3970 = vmatpush1.bf16.xpose.msra.mxu0 0
  %3971 = vmatprep.subr.bf16.mxu0 0
  %3972 = vmatpush1.bf16.xpose.msra.mxu0 0
  %3973 = vmatprep.subr.bf16.mxu0 0
  %3974 = vmatpush1.bf16.xpose.msra.mxu0 0
  %3975 = vmatprep.subr.bf16.mxu0 0
  %3976 = vmatpush1.bf16.xpose.msra.mxu0 0
  %3977 = vmatprep.subr.bf16.mxu0 0
  %3978 = vmatpush1.bf16.xpose.msra.mxu0 %v3961
  %3979 = vmatprep.subr.bf16.mxu0 0
  %3980 = vmatpush2.bf16.xpose.msra.mxu0 0
  %3981 = vmatprep.subr.bf16.mxu0 0
  %3982 = vmatpush2.bf16.xpose.msra.mxu0 0
  %3983 = vmatprep.subr.bf16.mxu0 0
  %3984 = vmatpush2.bf16.xpose.msra.mxu0 0
  %3985 = vmatprep.subr.bf16.mxu0 0
  %3986 = vmatpush2.bf16.xpose.msra.mxu0 0
  %3987 = vmatprep.subr.bf16.mxu0 0
  %3988 = vmatpush2.bf16.xpose.msra.mxu0 0
  %3989 = vmatprep.subr.bf16.mxu0 0
  %3990 = vmatpush2.bf16.xpose.msra.mxu0 0
  %3991 = vmatprep.subr.bf16.mxu0 0
  %3992 = vmatpush2.bf16.xpose.msra.mxu0 0
  %3993 = vmatprep.subr.bf16.mxu0 0
  %3994 = vmatpush2.bf16.xpose.msra.mxu0 0
  %3995 = vmatprep.mubr.bf16.mxu0 0
  %3996 = vmatmul.mubr.bf16.gmra.mxu0 %v3958
  %v3997 = vpop.f32.mrf.mxu0
  %v3998 = vadd.f32 0.0, %v3997
  %v3999 = vpop.f32.mrf.mxu0
  %v4000 = vpop.f32.mrf.mxu0
  %v4001 = vpop.f32.mrf.mxu0
  %4002 = vdwg.mxu0
  %4003 = vrot.lane.b32.xlu0 %v3732, 112
  %v4004 = vpop.permute.xlu0 %4003
  %4005 = vrot.lane.b32.xlu0 %v3732, 80
  %v4006 = vpop.permute.xlu0 %4005
  %v4008 = vsel %vm410, %v4004, 0
  %v4011 = vsel %vm410, %v4006, 0
  %4013 = vmatprep.subr.bf16.mxu0 0
  %4014 = vmatpush1.bf16.xpose.msra.mxu0 0
  %4015 = vmatprep.subr.bf16.mxu0 0
  %4016 = vmatpush1.bf16.xpose.msra.mxu0 0
  %4017 = vmatprep.subr.bf16.mxu0 0
  %4018 = vmatpush1.bf16.xpose.msra.mxu0 0
  %4019 = vmatprep.subr.bf16.mxu0 0
  %4020 = vmatpush1.bf16.xpose.msra.mxu0 0
  %4021 = vmatprep.subr.bf16.mxu0 0
  %4022 = vmatpush1.bf16.xpose.msra.mxu0 0
  %4023 = vmatprep.subr.bf16.mxu0 0
  %4024 = vmatpush1.bf16.xpose.msra.mxu0 0
  %4025 = vmatprep.subr.bf16.mxu0 0
  %4026 = vmatpush1.bf16.xpose.msra.mxu0 0
  %4027 = vmatprep.subr.bf16.mxu0 0
  %4028 = vmatpush1.bf16.xpose.msra.mxu0 %v4011
  %4029 = vmatprep.subr.bf16.mxu0 0
  %4030 = vmatpush2.bf16.xpose.msra.mxu0 0
  %4031 = vmatprep.subr.bf16.mxu0 0
  %4032 = vmatpush2.bf16.xpose.msra.mxu0 0
  %4033 = vmatprep.subr.bf16.mxu0 0
  %4034 = vmatpush2.bf16.xpose.msra.mxu0 0
  %4035 = vmatprep.subr.bf16.mxu0 0
  %4036 = vmatpush2.bf16.xpose.msra.mxu0 0
  %4037 = vmatprep.subr.bf16.mxu0 0
  %4038 = vmatpush2.bf16.xpose.msra.mxu0 0
  %4039 = vmatprep.subr.bf16.mxu0 0
  %4040 = vmatpush2.bf16.xpose.msra.mxu0 0
  %4041 = vmatprep.subr.bf16.mxu0 0
  %4042 = vmatpush2.bf16.xpose.msra.mxu0 0
  %4043 = vmatprep.subr.bf16.mxu0 0
  %4044 = vmatpush2.bf16.xpose.msra.mxu0 0
  %4045 = vmatprep.mubr.bf16.mxu0 0
  %4046 = vmatmul.mubr.bf16.gmra.mxu0 %v4008
  %v4047 = vpop.f32.mrf.mxu0
  %v4048 = vadd.f32 0.0, %v4047
  %v4049 = vpop.f32.mrf.mxu0
  %v4050 = vpop.f32.mrf.mxu0
  %v4051 = vpop.f32.mrf.mxu0
  %4052 = vdwg.mxu0
  %v4053 = vmul.f32 %v3998, 0.25
  %v4054 = vmul.f32 %v4048, 0.25
  %v4055 = vsel %vm508, %v4053, -inf
  %4056 = vmax.xlane.f32.xlu0 %v4055
  %v4057 = vpop.xlane.xlu0 %4056
  %v4058 = vsel %vm508, %v4054, -inf
  %4059 = vmax.xlane.f32.xlu0 %v4058
  %v4060 = vpop.xlane.xlu0 %4059
  %v4061 = vsub.f32 %v4053, %v4057
  %v4062 = vsub.f32 %v4054, %v4060
  %v4063 = vmul.f32 %v4061, 1.442695
  %v4064 = vpow.pop %v4063
  %v4065 = vmul.f32 %v4062, 1.442695
  %v4066 = vpow.pop %v4065
  %v4067 = vsel %vm508, %v4064, 0.0
  %4068 = vadd.xlane.f32.xlu0 %v4067
  %v4069 = vpop.xlane.xlu0 %4068
  %v4070 = vsel %vm508, %v4066, 0.0
  %4071 = vadd.xlane.f32.xlu0 %v4070
  %v4072 = vpop.xlane.xlu0 %4071
  %v4073 = vrcp.pop %v4069
  %v4074 = vrcp.pop %v4072
  %v4075 = vmul.f32 %v4064, %v4073
  %v4076 = vmul.f32 %v4066, %v4074
  %v4077 = vpack.c.bf16 %v4075, %v4075
  %v4078 = vpack.c.bf16 %v4076, %v4076
  %4079 = vrot.lane.b32.xlu0 %v3731, 48
  %v4080 = vpop.permute.xlu0 %4079
  %v4082 = vsel %vm508, %v4077, 0
  %v4085 = vsel %vm538, %v4080, 0
  %4087 = vmatprep.subr.bf16.mxu0 0
  %4088 = vmatpush1.bf16.msra.mxu0 0
  %4089 = vmatprep.subr.bf16.mxu0 0
  %4090 = vmatpush1.bf16.msra.mxu0 0
  %4091 = vmatprep.subr.bf16.mxu0 0
  %4092 = vmatpush1.bf16.msra.mxu0 0
  %4093 = vmatprep.subr.bf16.mxu0 0
  %4094 = vmatpush1.bf16.msra.mxu0 0
  %4095 = vmatprep.subr.bf16.mxu0 0
  %4096 = vmatpush1.bf16.msra.mxu0 0
  %4097 = vmatprep.subr.bf16.mxu0 0
  %4098 = vmatpush1.bf16.msra.mxu0 0
  %4099 = vmatprep.subr.bf16.mxu0 0
  %4100 = vmatpush1.bf16.msra.mxu0 0
  %4101 = vmatprep.subr.bf16.mxu0 0
  %4102 = vmatpush1.bf16.msra.mxu0 %v4085
  %4103 = vmatprep.subr.bf16.mxu0 0
  %4104 = vmatpush2.bf16.msra.mxu0 0
  %4105 = vmatprep.subr.bf16.mxu0 0
  %4106 = vmatpush2.bf16.msra.mxu0 0
  %4107 = vmatprep.subr.bf16.mxu0 0
  %4108 = vmatpush2.bf16.msra.mxu0 0
  %4109 = vmatprep.subr.bf16.mxu0 0
  %4110 = vmatpush2.bf16.msra.mxu0 0
  %4111 = vmatprep.subr.bf16.mxu0 0
  %4112 = vmatpush2.bf16.msra.mxu0 0
  %4113 = vmatprep.subr.bf16.mxu0 0
  %4114 = vmatpush2.bf16.msra.mxu0 0
  %4115 = vmatprep.subr.bf16.mxu0 0
  %4116 = vmatpush2.bf16.msra.mxu0 0
  %4117 = vmatprep.subr.bf16.mxu0 0
  %4118 = vmatpush2.bf16.msra.mxu0 0
  %4119 = vmatprep.mubr.bf16.mxu0 0
  %4120 = vmatmul.mubr.bf16.gmra.mxu0 %v4082
  %v4121 = vpop.f32.mrf.mxu0
  %v4122 = vadd.f32 0.0, %v4121
  %v4123 = vpop.f32.mrf.mxu0
  %v4124 = vpop.f32.mrf.mxu0
  %v4125 = vpop.f32.mrf.mxu0
  %4126 = vdwg.mxu0
  %4127 = vrot.lane.b32.xlu0 %v3732, 48
  %v4128 = vpop.permute.xlu0 %4127
  %v4130 = vsel %vm508, %v4078, 0
  %v4133 = vsel %vm538, %v4128, 0
  %4135 = vmatprep.subr.bf16.mxu0 0
  %4136 = vmatpush1.bf16.msra.mxu0 0
  %4137 = vmatprep.subr.bf16.mxu0 0
  %4138 = vmatpush1.bf16.msra.mxu0 0
  %4139 = vmatprep.subr.bf16.mxu0 0
  %4140 = vmatpush1.bf16.msra.mxu0 0
  %4141 = vmatprep.subr.bf16.mxu0 0
  %4142 = vmatpush1.bf16.msra.mxu0 0
  %4143 = vmatprep.subr.bf16.mxu0 0
  %4144 = vmatpush1.bf16.msra.mxu0 0
  %4145 = vmatprep.subr.bf16.mxu0 0
  %4146 = vmatpush1.bf16.msra.mxu0 0
  %4147 = vmatprep.subr.bf16.mxu0 0
  %4148 = vmatpush1.bf16.msra.mxu0 0
  %4149 = vmatprep.subr.bf16.mxu0 0
  %4150 = vmatpush1.bf16.msra.mxu0 %v4133
  %4151 = vmatprep.subr.bf16.mxu0 0
  %4152 = vmatpush2.bf16.msra.mxu0 0
  %4153 = vmatprep.subr.bf16.mxu0 0
  %4154 = vmatpush2.bf16.msra.mxu0 0
  %4155 = vmatprep.subr.bf16.mxu0 0
  %4156 = vmatpush2.bf16.msra.mxu0 0
  %4157 = vmatprep.subr.bf16.mxu0 0
  %4158 = vmatpush2.bf16.msra.mxu0 0
  %4159 = vmatprep.subr.bf16.mxu0 0
  %4160 = vmatpush2.bf16.msra.mxu0 0
  %4161 = vmatprep.subr.bf16.mxu0 0
  %4162 = vmatpush2.bf16.msra.mxu0 0
  %4163 = vmatprep.subr.bf16.mxu0 0
  %4164 = vmatpush2.bf16.msra.mxu0 0
  %4165 = vmatprep.subr.bf16.mxu0 0
  %4166 = vmatpush2.bf16.msra.mxu0 0
  %4167 = vmatprep.mubr.bf16.mxu0 0
  %4168 = vmatmul.mubr.bf16.gmra.mxu0 %v4130
  %v4169 = vpop.f32.mrf.mxu0
  %v4170 = vadd.f32 0.0, %v4169
  %v4171 = vpop.f32.mrf.mxu0
  %v4172 = vpop.f32.mrf.mxu0
  %v4173 = vpop.f32.mrf.mxu0
  %4174 = vdwg.mxu0
  %4177 = vrot.lane.b32.xlu0 %v4122, 16
  %v4178 = vpop.permute.xlu0 %4177
  %4179 = vrot.lane.b32.xlu0 %v4170, 16
  %v4180 = vpop.permute.xlu0 %4179
  %v4183 = vsel %vm410, %v3900, %v4178
  %v4184 = vsel %vm410, %v3948, %v4180
  %v4185 = vpack.c.bf16 %v4184, %v4183
  %s4186 = scalar_lea.vmem %s47, 1
  %v4187 = vld [vmem:[%s4186] sm:$0x1]
  %v4189 = vlaneseq
  %v4190 = vshrl.u32 %v4189, 7
  %v4191 = vsub.s32 0, %v4190
  %v4192 = vrot.slane %v4187, %v4191
  %v4198 = vunpack.c.l.b16 %v3727
  %v4199 = vunpack.c.l.b16 %v3728
  %v4200 = vunpack.c.l.b16 %v3729
  %v4201 = vunpack.c.l.b16 %v3730
  %v4202 = vpack.c.b16 %v4199, %v4198
  %v4203 = vpack.c.b16 %v4201, %v4200
  %v4207 = vsel %vm288, %v4185, 0
  %4209 = vmatprep.subr.bf16.mxu0 0
  %4210 = vmatpush1.bf16.msra.mxu0 0
  %4211 = vmatprep.subr.bf16.mxu0 0
  %4212 = vmatpush1.bf16.msra.mxu0 0
  %4213 = vmatprep.subr.bf16.mxu0 0
  %4214 = vmatpush1.bf16.msra.mxu0 0
  %4215 = vmatprep.subr.bf16.mxu0 0
  %4216 = vmatpush1.bf16.msra.mxu0 0
  %4217 = vmatprep.subr.bf16.mxu0 0
  %4218 = vmatpush1.bf16.msra.mxu0 0
  %4219 = vmatprep.subr.bf16.mxu0 0
  %4220 = vmatpush1.bf16.msra.mxu0 0
  %4221 = vmatprep.subr.bf16.mxu0 0
  %4222 = vmatpush1.bf16.msra.mxu0 %v4203
  %4223 = vmatprep.subr.bf16.mxu0 0
  %4224 = vmatpush1.bf16.msra.mxu0 %v4202
  %4225 = vmatprep.subr.bf16.mxu0 0
  %4226 = vmatpush2.bf16.msra.mxu0 0
  %4227 = vmatprep.subr.bf16.mxu0 0
  %4228 = vmatpush2.bf16.msra.mxu0 0
  %4229 = vmatprep.subr.bf16.mxu0 0
  %4230 = vmatpush2.bf16.msra.mxu0 0
  %4231 = vmatprep.subr.bf16.mxu0 0
  %4232 = vmatpush2.bf16.msra.mxu0 0
  %4233 = vmatprep.subr.bf16.mxu0 0
  %4234 = vmatpush2.bf16.msra.mxu0 0
  %4235 = vmatprep.subr.bf16.mxu0 0
  %4236 = vmatpush2.bf16.msra.mxu0 0
  %4237 = vmatprep.subr.bf16.mxu0 0
  %4238 = vmatpush2.bf16.msra.mxu0 0
  %4239 = vmatprep.subr.bf16.mxu0 0
  %4240 = vmatpush2.bf16.msra.mxu0 0
  %4241 = vmatprep.mubr.bf16.mxu0 0
  %4242 = vmatmul.mubr.bf16.gmra.mxu0 %v4207
  %v4243 = vpop.f32.mrf.mxu0
  %v4244 = vadd.f32 %v4192, %v4243
  %v4245 = vpop.f32.mrf.mxu0
  %v4246 = vpop.f32.mrf.mxu0
  %v4247 = vadd.f32 %v4192, %v4246
  %v4248 = vpop.f32.mrf.mxu0
  %4249 = vdwg.mxu0
  %v4250 = vadd.f32 %v3654, %v4244
  %v4251 = vadd.f32 %v3655, %v4247
  %s4252 = scalar_lea.vmem %s61, 1
  %v4253 = vld [vmem:[%s4252] sm:$0x1]
  %s4254 = scalar_lea.vmem %s63, 1
  %v4255 = vld [vmem:[%s4254] sm:$0x1]
  %v4256 = vsel %vm288, %v4250, 0.0
  %4257 = vadd.xlane.f32.xlu0 %v4256
  %v4258 = vpop.xlane.xlu0 %4257
  %v4259 = vsel %vm288, %v4251, 0.0
  %4260 = vadd.xlane.f32.xlu0 %v4259
  %v4261 = vpop.xlane.xlu0 %4260
  %v4262 = vmul.f32 %v4258, %v936
  %v4263 = vmul.f32 %v4261, %v936
  %v4264 = vsub.f32 %v4250, %v4262
  %v4265 = vsub.f32 %v4251, %v4263
  %v4266 = vmul.f32 %v4264, %v4264
  %v4267 = vmul.f32 %v4265, %v4265
  %v4268 = vsel %vm288, %v4266, 0.0
  %4269 = vadd.xlane.f32.xlu0 %v4268
  %v4270 = vpop.xlane.xlu0 %4269
  %v4271 = vsel %vm288, %v4267, 0.0
  %4272 = vadd.xlane.f32.xlu0 %v4271
  %v4273 = vpop.xlane.xlu0 %4272
  %v4274 = vmul.f32 %v4270, %v936
  %v4275 = vmul.f32 %v4273, %v936
  %v4276 = vadd.f32 %v4274, 1e-05
  %v4277 = vadd.f32 %v4275, 1e-05
  %v4278 = vrsqrt.pop %v4276
  %v4279 = vrsqrt.pop %v4277
  %v4280 = vmul.f32 %v4264, %v4278
  %v4281 = vmul.f32 %v4265, %v4279
  %v4283 = vlaneseq
  %v4284 = vshrl.u32 %v4283, 7
  %v4285 = vsub.s32 0, %v4284
  %v4286 = vrot.slane %v4253, %v4285
  %v4288 = vmul.f32 %v4280, %v4286
  %v4289 = vmul.f32 %v4281, %v4286
  %v4291 = vlaneseq
  %v4292 = vshrl.u32 %v4291, 7
  %v4293 = vsub.s32 0, %v4292
  %v4294 = vrot.slane %v4255, %v4293
  %v4296 = vadd.f32 %v4288, %v4294
  %v4297 = vadd.f32 %v4289, %v4294
  %s4298 = scalar_lea.vmem %s49, 16
  %v4299 = vld [vmem:[%s4298] sm:$0xf]
  %v4300 = vld [vmem:[%s4298 + $0x4] sm:$0xf]
  %v4301 = vld [vmem:[%s4298 + $0x8] sm:$0xf]
  %v4302 = vld [vmem:[%s4298 + $0xc] sm:$0xf]
  %v4303 = vpack.c.bf16 %v4297, %v4296
  %s4304 = scalar_lea.vmem %s51, 1
  %v4305 = vld [vmem:[%s4304] sm:$0x1]
  %v4307 = vlaneseq
  %v4308 = vshrl.u32 %v4307, 7
  %v4309 = vsub.s32 0, %v4308
  %v4310 = vrot.slane %v4305, %v4309
  %v4316 = vunpack.c.l.b16 %v4299
  %v4317 = vunpack.c.l.b16 %v4300
  %v4318 = vunpack.c.l.b16 %v4301
  %v4319 = vunpack.c.l.b16 %v4302
  %v4320 = vpack.c.b16 %v4317, %v4316
  %v4321 = vpack.c.b16 %v4319, %v4318
  %v4325 = vsel %vm288, %v4303, 0
  %4327 = vmatprep.subr.bf16.mxu0 0
  %4328 = vmatpush1.bf16.msra.mxu0 0
  %4329 = vmatprep.subr.bf16.mxu0 0
  %4330 = vmatpush1.bf16.msra.mxu0 0
  %4331 = vmatprep.subr.bf16.mxu0 0
  %4332 = vmatpush1.bf16.msra.mxu0 0
  %4333 = vmatprep.subr.bf16.mxu0 0
  %4334 = vmatpush1.bf16.msra.mxu0 0
  %4335 = vmatprep.subr.bf16.mxu0 0
  %4336 = vmatpush1.bf16.msra.mxu0 0
  %4337 = vmatprep.subr.bf16.mxu0 0
  %4338 = vmatpush1.bf16.msra.mxu0 0
  %4339 = vmatprep.subr.bf16.mxu0 0
  %4340 = vmatpush1.bf16.msra.mxu0 %v4321
  %4341 = vmatprep.subr.bf16.mxu0 0
  %4342 = vmatpush1.bf16.msra.mxu0 %v4320
  %4343 = vmatprep.subr.bf16.mxu0 0
  %4344 = vmatpush2.bf16.msra.mxu0 0
  %4345 = vmatprep.subr.bf16.mxu0 0
  %4346 = vmatpush2.bf16.msra.mxu0 0
  %4347 = vmatprep.subr.bf16.mxu0 0
  %4348 = vmatpush2.bf16.msra.mxu0 0
  %4349 = vmatprep.subr.bf16.mxu0 0
  %4350 = vmatpush2.bf16.msra.mxu0 0
  %4351 = vmatprep.subr.bf16.mxu0 0
  %4352 = vmatpush2.bf16.msra.mxu0 0
  %4353 = vmatprep.subr.bf16.mxu0 0
  %4354 = vmatpush2.bf16.msra.mxu0 0
  %4355 = vmatprep.subr.bf16.mxu0 0
  %4356 = vmatpush2.bf16.msra.mxu0 0
  %4357 = vmatprep.subr.bf16.mxu0 0
  %4358 = vmatpush2.bf16.msra.mxu0 0
  %4359 = vmatprep.mubr.bf16.mxu0 0
  %4360 = vmatmul.mubr.bf16.gmra.mxu0 %v4325
  %v4361 = vpop.f32.mrf.mxu0
  %v4362 = vadd.f32 %v4310, %v4361
  %v4363 = vpop.f32.mrf.mxu0
  %v4364 = vpop.f32.mrf.mxu0
  %v4365 = vadd.f32 %v4310, %v4364
  %v4366 = vpop.f32.mrf.mxu0
  %4367 = vdwg.mxu0
  %s4368 = scalar_lea.vmem %s53, 16
  %v4369 = vld [vmem:[%s4368] sm:$0xf]
  %v4370 = vld [vmem:[%s4368 + $0x4] sm:$0xf]
  %v4371 = vld [vmem:[%s4368 + $0x8] sm:$0xf]
  %v4372 = vld [vmem:[%s4368 + $0xc] sm:$0xf]
  %s4373 = scalar_lea.vmem %s55, 1
  %v4374 = vld [vmem:[%s4373] sm:$0x1]
  %v4376 = vlaneseq
  %v4377 = vshrl.u32 %v4376, 7
  %v4378 = vsub.s32 0, %v4377
  %v4379 = vrot.slane %v4374, %v4378
  %v4385 = vunpack.c.l.b16 %v4369
  %v4386 = vunpack.c.l.b16 %v4370
  %v4387 = vunpack.c.l.b16 %v4371
  %v4388 = vunpack.c.l.b16 %v4372
  %v4389 = vpack.c.b16 %v4386, %v4385
  %v4390 = vpack.c.b16 %v4388, %v4387
  %4393 = vmatprep.subr.bf16.mxu0 0
  %4394 = vmatpush1.bf16.msra.mxu0 0
  %4395 = vmatprep.subr.bf16.mxu0 0
  %4396 = vmatpush1.bf16.msra.mxu0 0
  %4397 = vmatprep.subr.bf16.mxu0 0
  %4398 = vmatpush1.bf16.msra.mxu0 0
  %4399 = vmatprep.subr.bf16.mxu0 0
  %4400 = vmatpush1.bf16.msra.mxu0 0
  %4401 = vmatprep.subr.bf16.mxu0 0
  %4402 = vmatpush1.bf16.msra.mxu0 0
  %4403 = vmatprep.subr.bf16.mxu0 0
  %4404 = vmatpush1.bf16.msra.mxu0 0
  %4405 = vmatprep.subr.bf16.mxu0 0
  %4406 = vmatpush1.bf16.msra.mxu0 %v4390
  %4407 = vmatprep.subr.bf16.mxu0 0
  %4408 = vmatpush1.bf16.msra.mxu0 %v4389
  %4409 = vmatprep.subr.bf16.mxu0 0
  %4410 = vmatpush2.bf16.msra.mxu0 0
  %4411 = vmatprep.subr.bf16.mxu0 0
  %4412 = vmatpush2.bf16.msra.mxu0 0
  %4413 = vmatprep.subr.bf16.mxu0 0
  %4414 = vmatpush2.bf16.msra.mxu0 0
  %4415 = vmatprep.subr.bf16.mxu0 0
  %4416 = vmatpush2.bf16.msra.mxu0 0
  %4417 = vmatprep.subr.bf16.mxu0 0
  %4418 = vmatpush2.bf16.msra.mxu0 0
  %4419 = vmatprep.subr.bf16.mxu0 0
  %4420 = vmatpush2.bf16.msra.mxu0 0
  %4421 = vmatprep.subr.bf16.mxu0 0
  %4422 = vmatpush2.bf16.msra.mxu0 0
  %4423 = vmatprep.subr.bf16.mxu0 0
  %4424 = vmatpush2.bf16.msra.mxu0 0
  %4425 = vmatprep.mubr.bf16.mxu0 0
  %4426 = vmatmul.mubr.bf16.gmra.mxu0 %v2829
  %v4427 = vpop.f32.mrf.mxu0
  %v4428 = vadd.f32 %v4379, %v4427
  %v4429 = vpop.f32.mrf.mxu0
  %v4430 = vpop.f32.mrf.mxu0
  %v4431 = vadd.f32 %v4379, %v4430
  %v4432 = vpop.f32.mrf.mxu0
  %4433 = vdwg.mxu0
  %s4434 = scalar_lea.vmem %s57, 16
  %v4435 = vld [vmem:[%s4434] sm:$0xf]
  %v4436 = vld [vmem:[%s4434 + $0x4] sm:$0xf]
  %v4437 = vld [vmem:[%s4434 + $0x8] sm:$0xf]
  %v4438 = vld [vmem:[%s4434 + $0xc] sm:$0xf]
  %v4439 = vpack.c.bf16 %v4362, %v4362
  %v4440 = vpack.c.bf16 %v4365, %v4365
  %v4441 = vpack.c.bf16 %v4428, %v4428
  %v4442 = vpack.c.bf16 %v4431, %v4431
  %v4444 = vsel %vm410, %v4439, 0
  %v4447 = vsel %vm410, %v4441, 0
  %4449 = vmatprep.subr.bf16.mxu0 0
  %4450 = vmatpush1.bf16.xpose.msra.mxu0 0
  %4451 = vmatprep.subr.bf16.mxu0 0
  %4452 = vmatpush1.bf16.xpose.msra.mxu0 0
  %4453 = vmatprep.subr.bf16.mxu0 0
  %4454 = vmatpush1.bf16.xpose.msra.mxu0 0
  %4455 = vmatprep.subr.bf16.mxu0 0
  %4456 = vmatpush1.bf16.xpose.msra.mxu0 0
  %4457 = vmatprep.subr.bf16.mxu0 0
  %4458 = vmatpush1.bf16.xpose.msra.mxu0 0
  %4459 = vmatprep.subr.bf16.mxu0 0
  %4460 = vmatpush1.bf16.xpose.msra.mxu0 0
  %4461 = vmatprep.subr.bf16.mxu0 0
  %4462 = vmatpush1.bf16.xpose.msra.mxu0 0
  %4463 = vmatprep.subr.bf16.mxu0 0
  %4464 = vmatpush1.bf16.xpose.msra.mxu0 %v4447
  %4465 = vmatprep.subr.bf16.mxu0 0
  %4466 = vmatpush2.bf16.xpose.msra.mxu0 0
  %4467 = vmatprep.subr.bf16.mxu0 0
  %4468 = vmatpush2.bf16.xpose.msra.mxu0 0
  %4469 = vmatprep.subr.bf16.mxu0 0
  %4470 = vmatpush2.bf16.xpose.msra.mxu0 0
  %4471 = vmatprep.subr.bf16.mxu0 0
  %4472 = vmatpush2.bf16.xpose.msra.mxu0 0
  %4473 = vmatprep.subr.bf16.mxu0 0
  %4474 = vmatpush2.bf16.xpose.msra.mxu0 0
  %4475 = vmatprep.subr.bf16.mxu0 0
  %4476 = vmatpush2.bf16.xpose.msra.mxu0 0
  %4477 = vmatprep.subr.bf16.mxu0 0
  %4478 = vmatpush2.bf16.xpose.msra.mxu0 0
  %4479 = vmatprep.subr.bf16.mxu0 0
  %4480 = vmatpush2.bf16.xpose.msra.mxu0 0
  %4481 = vmatprep.mubr.bf16.mxu0 0
  %4482 = vmatmul.mubr.bf16.gmra.mxu0 %v4444
  %v4483 = vpop.f32.mrf.mxu0
  %v4484 = vadd.f32 0.0, %v4483
  %v4485 = vpop.f32.mrf.mxu0
  %v4486 = vpop.f32.mrf.mxu0
  %v4487 = vpop.f32.mrf.mxu0
  %4488 = vdwg.mxu0
  %v4490 = vsel %vm410, %v4440, 0
  %v4493 = vsel %vm410, %v4442, 0
  %4495 = vmatprep.subr.bf16.mxu0 0
  %4496 = vmatpush1.bf16.xpose.msra.mxu0 0
  %4497 = vmatprep.subr.bf16.mxu0 0
  %4498 = vmatpush1.bf16.xpose.msra.mxu0 0
  %4499 = vmatprep.subr.bf16.mxu0 0
  %4500 = vmatpush1.bf16.xpose.msra.mxu0 0
  %4501 = vmatprep.subr.bf16.mxu0 0
  %4502 = vmatpush1.bf16.xpose.msra.mxu0 0
  %4503 = vmatprep.subr.bf16.mxu0 0
  %4504 = vmatpush1.bf16.xpose.msra.mxu0 0
  %4505 = vmatprep.subr.bf16.mxu0 0
  %4506 = vmatpush1.bf16.xpose.msra.mxu0 0
  %4507 = vmatprep.subr.bf16.mxu0 0
  %4508 = vmatpush1.bf16.xpose.msra.mxu0 0
  %4509 = vmatprep.subr.bf16.mxu0 0
  %4510 = vmatpush1.bf16.xpose.msra.mxu0 %v4493
  %4511 = vmatprep.subr.bf16.mxu0 0
  %4512 = vmatpush2.bf16.xpose.msra.mxu0 0
  %4513 = vmatprep.subr.bf16.mxu0 0
  %4514 = vmatpush2.bf16.xpose.msra.mxu0 0
  %4515 = vmatprep.subr.bf16.mxu0 0
  %4516 = vmatpush2.bf16.xpose.msra.mxu0 0
  %4517 = vmatprep.subr.bf16.mxu0 0
  %4518 = vmatpush2.bf16.xpose.msra.mxu0 0
  %4519 = vmatprep.subr.bf16.mxu0 0
  %4520 = vmatpush2.bf16.xpose.msra.mxu0 0
  %4521 = vmatprep.subr.bf16.mxu0 0
  %4522 = vmatpush2.bf16.xpose.msra.mxu0 0
  %4523 = vmatprep.subr.bf16.mxu0 0
  %4524 = vmatpush2.bf16.xpose.msra.mxu0 0
  %4525 = vmatprep.subr.bf16.mxu0 0
  %4526 = vmatpush2.bf16.xpose.msra.mxu0 0
  %4527 = vmatprep.mubr.bf16.mxu0 0
  %4528 = vmatmul.mubr.bf16.gmra.mxu0 %v4490
  %v4529 = vpop.f32.mrf.mxu0
  %v4530 = vadd.f32 0.0, %v4529
  %v4531 = vpop.f32.mrf.mxu0
  %v4532 = vpop.f32.mrf.mxu0
  %v4533 = vpop.f32.mrf.mxu0
  %4534 = vdwg.mxu0
  %v4535 = vmul.f32 %v4484, 0.25
  %v4536 = vmul.f32 %v4530, 0.25
  %v4537 = vsel %vm508, %v4535, -inf
  %4538 = vmax.xlane.f32.xlu0 %v4537
  %v4539 = vpop.xlane.xlu0 %4538
  %v4540 = vsel %vm508, %v4536, -inf
  %4541 = vmax.xlane.f32.xlu0 %v4540
  %v4542 = vpop.xlane.xlu0 %4541
  %v4543 = vsub.f32 %v4535, %v4539
  %v4544 = vsub.f32 %v4536, %v4542
  %v4545 = vmul.f32 %v4543, 1.442695
  %v4546 = vpow.pop %v4545
  %v4547 = vmul.f32 %v4544, 1.442695
  %v4548 = vpow.pop %v4547
  %v4549 = vsel %vm508, %v4546, 0.0
  %4550 = vadd.xlane.f32.xlu0 %v4549
  %v4551 = vpop.xlane.xlu0 %4550
  %v4552 = vsel %vm508, %v4548, 0.0
  %4553 = vadd.xlane.f32.xlu0 %v4552
  %v4554 = vpop.xlane.xlu0 %4553
  %v4555 = vrcp.pop %v4551
  %v4556 = vrcp.pop %v4554
  %v4557 = vmul.f32 %v4546, %v4555
  %v4558 = vmul.f32 %v4548, %v4556
  %v4559 = vpack.c.bf16 %v4557, %v4557
  %v4560 = vpack.c.bf16 %v4558, %v4558
  %4562 = vrot.lane.b32.xlu0 %v4441, 96
  %v4563 = vpop.permute.xlu0 %4562
  %v4565 = vsel %vm508, %v4559, 0
  %v4568 = vsel %vm538, %v4563, 0
  %4570 = vmatprep.subr.bf16.mxu0 0
  %4571 = vmatpush1.bf16.msra.mxu0 0
  %4572 = vmatprep.subr.bf16.mxu0 0
  %4573 = vmatpush1.bf16.msra.mxu0 0
  %4574 = vmatprep.subr.bf16.mxu0 0
  %4575 = vmatpush1.bf16.msra.mxu0 0
  %4576 = vmatprep.subr.bf16.mxu0 0
  %4577 = vmatpush1.bf16.msra.mxu0 0
  %4578 = vmatprep.subr.bf16.mxu0 0
  %4579 = vmatpush1.bf16.msra.mxu0 0
  %4580 = vmatprep.subr.bf16.mxu0 0
  %4581 = vmatpush1.bf16.msra.mxu0 0
  %4582 = vmatprep.subr.bf16.mxu0 0
  %4583 = vmatpush1.bf16.msra.mxu0 0
  %4584 = vmatprep.subr.bf16.mxu0 0
  %4585 = vmatpush1.bf16.msra.mxu0 %v4568
  %4586 = vmatprep.subr.bf16.mxu0 0
  %4587 = vmatpush2.bf16.msra.mxu0 0
  %4588 = vmatprep.subr.bf16.mxu0 0
  %4589 = vmatpush2.bf16.msra.mxu0 0
  %4590 = vmatprep.subr.bf16.mxu0 0
  %4591 = vmatpush2.bf16.msra.mxu0 0
  %4592 = vmatprep.subr.bf16.mxu0 0
  %4593 = vmatpush2.bf16.msra.mxu0 0
  %4594 = vmatprep.subr.bf16.mxu0 0
  %4595 = vmatpush2.bf16.msra.mxu0 0
  %4596 = vmatprep.subr.bf16.mxu0 0
  %4597 = vmatpush2.bf16.msra.mxu0 0
  %4598 = vmatprep.subr.bf16.mxu0 0
  %4599 = vmatpush2.bf16.msra.mxu0 0
  %4600 = vmatprep.subr.bf16.mxu0 0
  %4601 = vmatpush2.bf16.msra.mxu0 0
  %4602 = vmatprep.mubr.bf16.mxu0 0
  %4603 = vmatmul.mubr.bf16.gmra.mxu0 %v4565
  %v4604 = vpop.f32.mrf.mxu0
  %v4605 = vadd.f32 0.0, %v4604
  %v4606 = vpop.f32.mrf.mxu0
  %v4607 = vpop.f32.mrf.mxu0
  %v4608 = vpop.f32.mrf.mxu0
  %4609 = vdwg.mxu0
  %4611 = vrot.lane.b32.xlu0 %v4442, 96
  %v4612 = vpop.permute.xlu0 %4611
  %v4614 = vsel %vm508, %v4560, 0
  %v4617 = vsel %vm538, %v4612, 0
  %4619 = vmatprep.subr.bf16.mxu0 0
  %4620 = vmatpush1.bf16.msra.mxu0 0
  %4621 = vmatprep.subr.bf16.mxu0 0
  %4622 = vmatpush1.bf16.msra.mxu0 0
  %4623 = vmatprep.subr.bf16.mxu0 0
  %4624 = vmatpush1.bf16.msra.mxu0 0
  %4625 = vmatprep.subr.bf16.mxu0 0
  %4626 = vmatpush1.bf16.msra.mxu0 0
  %4627 = vmatprep.subr.bf16.mxu0 0
  %4628 = vmatpush1.bf16.msra.mxu0 0
  %4629 = vmatprep.subr.bf16.mxu0 0
  %4630 = vmatpush1.bf16.msra.mxu0 0
  %4631 = vmatprep.subr.bf16.mxu0 0
  %4632 = vmatpush1.bf16.msra.mxu0 0
  %4633 = vmatprep.subr.bf16.mxu0 0
  %4634 = vmatpush1.bf16.msra.mxu0 %v4617
  %4635 = vmatprep.subr.bf16.mxu0 0
  %4636 = vmatpush2.bf16.msra.mxu0 0
  %4637 = vmatprep.subr.bf16.mxu0 0
  %4638 = vmatpush2.bf16.msra.mxu0 0
  %4639 = vmatprep.subr.bf16.mxu0 0
  %4640 = vmatpush2.bf16.msra.mxu0 0
  %4641 = vmatprep.subr.bf16.mxu0 0
  %4642 = vmatpush2.bf16.msra.mxu0 0
  %4643 = vmatprep.subr.bf16.mxu0 0
  %4644 = vmatpush2.bf16.msra.mxu0 0
  %4645 = vmatprep.subr.bf16.mxu0 0
  %4646 = vmatpush2.bf16.msra.mxu0 0
  %4647 = vmatprep.subr.bf16.mxu0 0
  %4648 = vmatpush2.bf16.msra.mxu0 0
  %4649 = vmatprep.subr.bf16.mxu0 0
  %4650 = vmatpush2.bf16.msra.mxu0 0
  %4651 = vmatprep.mubr.bf16.mxu0 0
  %4652 = vmatmul.mubr.bf16.gmra.mxu0 %v4614
  %v4653 = vpop.f32.mrf.mxu0
  %v4654 = vadd.f32 0.0, %v4653
  %v4655 = vpop.f32.mrf.mxu0
  %v4656 = vpop.f32.mrf.mxu0
  %v4657 = vpop.f32.mrf.mxu0
  %4658 = vdwg.mxu0
  %4660 = vrot.lane.b32.xlu0 %v4439, 112
  %v4661 = vpop.permute.xlu0 %4660
  %4662 = vrot.lane.b32.xlu0 %v4441, 112
  %v4663 = vpop.permute.xlu0 %4662
  %v4665 = vsel %vm410, %v4661, 0
  %v4668 = vsel %vm410, %v4663, 0
  %4670 = vmatprep.subr.bf16.mxu0 0
  %4671 = vmatpush1.bf16.xpose.msra.mxu0 0
  %4672 = vmatprep.subr.bf16.mxu0 0
  %4673 = vmatpush1.bf16.xpose.msra.mxu0 0
  %4674 = vmatprep.subr.bf16.mxu0 0
  %4675 = vmatpush1.bf16.xpose.msra.mxu0 0
  %4676 = vmatprep.subr.bf16.mxu0 0
  %4677 = vmatpush1.bf16.xpose.msra.mxu0 0
  %4678 = vmatprep.subr.bf16.mxu0 0
  %4679 = vmatpush1.bf16.xpose.msra.mxu0 0
  %4680 = vmatprep.subr.bf16.mxu0 0
  %4681 = vmatpush1.bf16.xpose.msra.mxu0 0
  %4682 = vmatprep.subr.bf16.mxu0 0
  %4683 = vmatpush1.bf16.xpose.msra.mxu0 0
  %4684 = vmatprep.subr.bf16.mxu0 0
  %4685 = vmatpush1.bf16.xpose.msra.mxu0 %v4668
  %4686 = vmatprep.subr.bf16.mxu0 0
  %4687 = vmatpush2.bf16.xpose.msra.mxu0 0
  %4688 = vmatprep.subr.bf16.mxu0 0
  %4689 = vmatpush2.bf16.xpose.msra.mxu0 0
  %4690 = vmatprep.subr.bf16.mxu0 0
  %4691 = vmatpush2.bf16.xpose.msra.mxu0 0
  %4692 = vmatprep.subr.bf16.mxu0 0
  %4693 = vmatpush2.bf16.xpose.msra.mxu0 0
  %4694 = vmatprep.subr.bf16.mxu0 0
  %4695 = vmatpush2.bf16.xpose.msra.mxu0 0
  %4696 = vmatprep.subr.bf16.mxu0 0
  %4697 = vmatpush2.bf16.xpose.msra.mxu0 0
  %4698 = vmatprep.subr.bf16.mxu0 0
  %4699 = vmatpush2.bf16.xpose.msra.mxu0 0
  %4700 = vmatprep.subr.bf16.mxu0 0
  %4701 = vmatpush2.bf16.xpose.msra.mxu0 0
  %4702 = vmatprep.mubr.bf16.mxu0 0
  %4703 = vmatmul.mubr.bf16.gmra.mxu0 %v4665
  %v4704 = vpop.f32.mrf.mxu0
  %v4705 = vadd.f32 0.0, %v4704
  %v4706 = vpop.f32.mrf.mxu0
  %v4707 = vpop.f32.mrf.mxu0
  %v4708 = vpop.f32.mrf.mxu0
  %4709 = vdwg.mxu0
  %4711 = vrot.lane.b32.xlu0 %v4440, 112
  %v4712 = vpop.permute.xlu0 %4711
  %4713 = vrot.lane.b32.xlu0 %v4442, 112
  %v4714 = vpop.permute.xlu0 %4713
  %v4716 = vsel %vm410, %v4712, 0
  %v4719 = vsel %vm410, %v4714, 0
  %4721 = vmatprep.subr.bf16.mxu0 0
  %4722 = vmatpush1.bf16.xpose.msra.mxu0 0
  %4723 = vmatprep.subr.bf16.mxu0 0
  %4724 = vmatpush1.bf16.xpose.msra.mxu0 0
  %4725 = vmatprep.subr.bf16.mxu0 0
  %4726 = vmatpush1.bf16.xpose.msra.mxu0 0
  %4727 = vmatprep.subr.bf16.mxu0 0
  %4728 = vmatpush1.bf16.xpose.msra.mxu0 0
  %4729 = vmatprep.subr.bf16.mxu0 0
  %4730 = vmatpush1.bf16.xpose.msra.mxu0 0
  %4731 = vmatprep.subr.bf16.mxu0 0
  %4732 = vmatpush1.bf16.xpose.msra.mxu0 0
  %4733 = vmatprep.subr.bf16.mxu0 0
  %4734 = vmatpush1.bf16.xpose.msra.mxu0 0
  %4735 = vmatprep.subr.bf16.mxu0 0
  %4736 = vmatpush1.bf16.xpose.msra.mxu0 %v4719
  %4737 = vmatprep.subr.bf16.mxu0 0
  %4738 = vmatpush2.bf16.xpose.msra.mxu0 0
  %4739 = vmatprep.subr.bf16.mxu0 0
  %4740 = vmatpush2.bf16.xpose.msra.mxu0 0
  %4741 = vmatprep.subr.bf16.mxu0 0
  %4742 = vmatpush2.bf16.xpose.msra.mxu0 0
  %4743 = vmatprep.subr.bf16.mxu0 0
  %4744 = vmatpush2.bf16.xpose.msra.mxu0 0
  %4745 = vmatprep.subr.bf16.mxu0 0
  %4746 = vmatpush2.bf16.xpose.msra.mxu0 0
  %4747 = vmatprep.subr.bf16.mxu0 0
  %4748 = vmatpush2.bf16.xpose.msra.mxu0 0
  %4749 = vmatprep.subr.bf16.mxu0 0
  %4750 = vmatpush2.bf16.xpose.msra.mxu0 0
  %4751 = vmatprep.subr.bf16.mxu0 0
  %4752 = vmatpush2.bf16.xpose.msra.mxu0 0
  %4753 = vmatprep.mubr.bf16.mxu0 0
  %4754 = vmatmul.mubr.bf16.gmra.mxu0 %v4716
  %v4755 = vpop.f32.mrf.mxu0
  %v4756 = vadd.f32 0.0, %v4755
  %v4757 = vpop.f32.mrf.mxu0
  %v4758 = vpop.f32.mrf.mxu0
  %v4759 = vpop.f32.mrf.mxu0
  %4760 = vdwg.mxu0
  %v4761 = vmul.f32 %v4705, 0.25
  %v4762 = vmul.f32 %v4756, 0.25
  %v4763 = vsel %vm508, %v4761, -inf
  %4764 = vmax.xlane.f32.xlu0 %v4763
  %v4765 = vpop.xlane.xlu0 %4764
  %v4766 = vsel %vm508, %v4762, -inf
  %4767 = vmax.xlane.f32.xlu0 %v4766
  %v4768 = vpop.xlane.xlu0 %4767
  %v4769 = vsub.f32 %v4761, %v4765
  %v4770 = vsub.f32 %v4762, %v4768
  %v4771 = vmul.f32 %v4769, 1.442695
  %v4772 = vpow.pop %v4771
  %v4773 = vmul.f32 %v4770, 1.442695
  %v4774 = vpow.pop %v4773
  %v4775 = vsel %vm508, %v4772, 0.0
  %4776 = vadd.xlane.f32.xlu0 %v4775
  %v4777 = vpop.xlane.xlu0 %4776
  %v4778 = vsel %vm508, %v4774, 0.0
  %4779 = vadd.xlane.f32.xlu0 %v4778
  %v4780 = vpop.xlane.xlu0 %4779
  %v4781 = vrcp.pop %v4777
  %v4782 = vrcp.pop %v4780
  %v4783 = vmul.f32 %v4772, %v4781
  %v4784 = vmul.f32 %v4774, %v4782
  %v4785 = vpack.c.bf16 %v4783, %v4783
  %v4786 = vpack.c.bf16 %v4784, %v4784
  %4787 = vrot.lane.b32.xlu0 %v4441, 80
  %v4788 = vpop.permute.xlu0 %4787
  %v4790 = vsel %vm508, %v4785, 0
  %v4793 = vsel %vm538, %v4788, 0
  %4795 = vmatprep.subr.bf16.mxu0 0
  %4796 = vmatpush1.bf16.msra.mxu0 0
  %4797 = vmatprep.subr.bf16.mxu0 0
  %4798 = vmatpush1.bf16.msra.mxu0 0
  %4799 = vmatprep.subr.bf16.mxu0 0
  %4800 = vmatpush1.bf16.msra.mxu0 0
  %4801 = vmatprep.subr.bf16.mxu0 0
  %4802 = vmatpush1.bf16.msra.mxu0 0
  %4803 = vmatprep.subr.bf16.mxu0 0
  %4804 = vmatpush1.bf16.msra.mxu0 0
  %4805 = vmatprep.subr.bf16.mxu0 0
  %4806 = vmatpush1.bf16.msra.mxu0 0
  %4807 = vmatprep.subr.bf16.mxu0 0
  %4808 = vmatpush1.bf16.msra.mxu0 0
  %4809 = vmatprep.subr.bf16.mxu0 0
  %4810 = vmatpush1.bf16.msra.mxu0 %v4793
  %4811 = vmatprep.subr.bf16.mxu0 0
  %4812 = vmatpush2.bf16.msra.mxu0 0
  %4813 = vmatprep.subr.bf16.mxu0 0
  %4814 = vmatpush2.bf16.msra.mxu0 0
  %4815 = vmatprep.subr.bf16.mxu0 0
  %4816 = vmatpush2.bf16.msra.mxu0 0
  %4817 = vmatprep.subr.bf16.mxu0 0
  %4818 = vmatpush2.bf16.msra.mxu0 0
  %4819 = vmatprep.subr.bf16.mxu0 0
  %4820 = vmatpush2.bf16.msra.mxu0 0
  %4821 = vmatprep.subr.bf16.mxu0 0
  %4822 = vmatpush2.bf16.msra.mxu0 0
  %4823 = vmatprep.subr.bf16.mxu0 0
  %4824 = vmatpush2.bf16.msra.mxu0 0
  %4825 = vmatprep.subr.bf16.mxu0 0
  %4826 = vmatpush2.bf16.msra.mxu0 0
  %4827 = vmatprep.mubr.bf16.mxu0 0
  %4828 = vmatmul.mubr.bf16.gmra.mxu0 %v4790
  %v4829 = vpop.f32.mrf.mxu0
  %v4830 = vadd.f32 0.0, %v4829
  %v4831 = vpop.f32.mrf.mxu0
  %v4832 = vpop.f32.mrf.mxu0
  %v4833 = vpop.f32.mrf.mxu0
  %4834 = vdwg.mxu0
  %4835 = vrot.lane.b32.xlu0 %v4442, 80
  %v4836 = vpop.permute.xlu0 %4835
  %v4838 = vsel %vm508, %v4786, 0
  %v4841 = vsel %vm538, %v4836, 0
  %4843 = vmatprep.subr.bf16.mxu0 0
  %4844 = vmatpush1.bf16.msra.mxu0 0
  %4845 = vmatprep.subr.bf16.mxu0 0
  %4846 = vmatpush1.bf16.msra.mxu0 0
  %4847 = vmatprep.subr.bf16.mxu0 0
  %4848 = vmatpush1.bf16.msra.mxu0 0
  %4849 = vmatprep.subr.bf16.mxu0 0
  %4850 = vmatpush1.bf16.msra.mxu0 0
  %4851 = vmatprep.subr.bf16.mxu0 0
  %4852 = vmatpush1.bf16.msra.mxu0 0
  %4853 = vmatprep.subr.bf16.mxu0 0
  %4854 = vmatpush1.bf16.msra.mxu0 0
  %4855 = vmatprep.subr.bf16.mxu0 0
  %4856 = vmatpush1.bf16.msra.mxu0 0
  %4857 = vmatprep.subr.bf16.mxu0 0
  %4858 = vmatpush1.bf16.msra.mxu0 %v4841
  %4859 = vmatprep.subr.bf16.mxu0 0
  %4860 = vmatpush2.bf16.msra.mxu0 0
  %4861 = vmatprep.subr.bf16.mxu0 0
  %4862 = vmatpush2.bf16.msra.mxu0 0
  %4863 = vmatprep.subr.bf16.mxu0 0
  %4864 = vmatpush2.bf16.msra.mxu0 0
  %4865 = vmatprep.subr.bf16.mxu0 0
  %4866 = vmatpush2.bf16.msra.mxu0 0
  %4867 = vmatprep.subr.bf16.mxu0 0
  %4868 = vmatpush2.bf16.msra.mxu0 0
  %4869 = vmatprep.subr.bf16.mxu0 0
  %4870 = vmatpush2.bf16.msra.mxu0 0
  %4871 = vmatprep.subr.bf16.mxu0 0
  %4872 = vmatpush2.bf16.msra.mxu0 0
  %4873 = vmatprep.subr.bf16.mxu0 0
  %4874 = vmatpush2.bf16.msra.mxu0 0
  %4875 = vmatprep.mubr.bf16.mxu0 0
  %4876 = vmatmul.mubr.bf16.gmra.mxu0 %v4838
  %v4877 = vpop.f32.mrf.mxu0
  %v4878 = vadd.f32 0.0, %v4877
  %v4879 = vpop.f32.mrf.mxu0
  %v4880 = vpop.f32.mrf.mxu0
  %v4881 = vpop.f32.mrf.mxu0
  %4882 = vdwg.mxu0
  %4885 = vrot.lane.b32.xlu0 %v4830, 16
  %v4886 = vpop.permute.xlu0 %4885
  %4887 = vrot.lane.b32.xlu0 %v4878, 16
  %v4888 = vpop.permute.xlu0 %4887
  %v4891 = vsel %vm410, %v4605, %v4886
  %v4892 = vsel %vm410, %v4654, %v4888
  %v4893 = vpack.c.bf16 %v4892, %v4891
  %s4894 = scalar_lea.vmem %s59, 1
  %v4895 = vld [vmem:[%s4894] sm:$0x1]
  %v4897 = vlaneseq
  %v4898 = vshrl.u32 %v4897, 7
  %v4899 = vsub.s32 0, %v4898
  %v4900 = vrot.slane %v4895, %v4899
  %v4906 = vunpack.c.l.b16 %v4435
  %v4907 = vunpack.c.l.b16 %v4436
  %v4908 = vunpack.c.l.b16 %v4437
  %v4909 = vunpack.c.l.b16 %v4438
  %v4910 = vpack.c.b16 %v4907, %v4906
  %v4911 = vpack.c.b16 %v4909, %v4908
  %v4915 = vsel %vm288, %v4893, 0
  %4917 = vmatprep.subr.bf16.mxu0 0
  %4918 = vmatpush1.bf16.msra.mxu0 0
  %4919 = vmatprep.subr.bf16.mxu0 0
  %4920 = vmatpush1.bf16.msra.mxu0 0
  %4921 = vmatprep.subr.bf16.mxu0 0
  %4922 = vmatpush1.bf16.msra.mxu0 0
  %4923 = vmatprep.subr.bf16.mxu0 0
  %4924 = vmatpush1.bf16.msra.mxu0 0
  %4925 = vmatprep.subr.bf16.mxu0 0
  %4926 = vmatpush1.bf16.msra.mxu0 0
  %4927 = vmatprep.subr.bf16.mxu0 0
  %4928 = vmatpush1.bf16.msra.mxu0 0
  %4929 = vmatprep.subr.bf16.mxu0 0
  %4930 = vmatpush1.bf16.msra.mxu0 %v4911
  %4931 = vmatprep.subr.bf16.mxu0 0
  %4932 = vmatpush1.bf16.msra.mxu0 %v4910
  %4933 = vmatprep.subr.bf16.mxu0 0
  %4934 = vmatpush2.bf16.msra.mxu0 0
  %4935 = vmatprep.subr.bf16.mxu0 0
  %4936 = vmatpush2.bf16.msra.mxu0 0
  %4937 = vmatprep.subr.bf16.mxu0 0
  %4938 = vmatpush2.bf16.msra.mxu0 0
  %4939 = vmatprep.subr.bf16.mxu0 0
  %4940 = vmatpush2.bf16.msra.mxu0 0
  %4941 = vmatprep.subr.bf16.mxu0 0
  %4942 = vmatpush2.bf16.msra.mxu0 0
  %4943 = vmatprep.subr.bf16.mxu0 0
  %4944 = vmatpush2.bf16.msra.mxu0 0
  %4945 = vmatprep.subr.bf16.mxu0 0
  %4946 = vmatpush2.bf16.msra.mxu0 0
  %4947 = vmatprep.subr.bf16.mxu0 0
  %4948 = vmatpush2.bf16.msra.mxu0 0
  %4949 = vmatprep.mubr.bf16.mxu0 0
  %4950 = vmatmul.mubr.bf16.gmra.mxu0 %v4915
  %v4951 = vpop.f32.mrf.mxu0
  %v4952 = vadd.f32 %v4900, %v4951
  %v4953 = vpop.f32.mrf.mxu0
  %v4954 = vpop.f32.mrf.mxu0
  %v4955 = vadd.f32 %v4900, %v4954
  %v4956 = vpop.f32.mrf.mxu0
  %4957 = vdwg.mxu0
  %v4958 = vadd.f32 %v4296, %v4952
  %v4959 = vadd.f32 %v4297, %v4955
  %s4960 = scalar_lea.vmem %s65, 1
  %v4961 = vld [vmem:[%s4960] sm:$0x1]
  %s4962 = scalar_lea.vmem %s67, 1
  %v4963 = vld [vmem:[%s4962] sm:$0x1]
  %v4964 = vsel %vm288, %v4958, 0.0
  %4965 = vadd.xlane.f32.xlu0 %v4964
  %v4966 = vpop.xlane.xlu0 %4965
  %v4967 = vsel %vm288, %v4959, 0.0
  %4968 = vadd.xlane.f32.xlu0 %v4967
  %v4969 = vpop.xlane.xlu0 %4968
  %v4970 = vmul.f32 %v4966, %v936
  %v4971 = vmul.f32 %v4969, %v936
  %v4972 = vsub.f32 %v4958, %v4970
  %v4973 = vsub.f32 %v4959, %v4971
  %v4974 = vmul.f32 %v4972, %v4972
  %v4975 = vmul.f32 %v4973, %v4973
  %v4976 = vsel %vm288, %v4974, 0.0
  %4977 = vadd.xlane.f32.xlu0 %v4976
  %v4978 = vpop.xlane.xlu0 %4977
  %v4979 = vsel %vm288, %v4975, 0.0
  %4980 = vadd.xlane.f32.xlu0 %v4979
  %v4981 = vpop.xlane.xlu0 %4980
  %v4982 = vmul.f32 %v4978, %v936
  %v4983 = vmul.f32 %v4981, %v936
  %v4984 = vadd.f32 %v4982, 1e-05
  %v4985 = vadd.f32 %v4983, 1e-05
  %v4986 = vrsqrt.pop %v4984
  %v4987 = vrsqrt.pop %v4985
  %v4988 = vmul.f32 %v4972, %v4986
  %v4989 = vmul.f32 %v4973, %v4987
  %v4991 = vlaneseq
  %v4992 = vshrl.u32 %v4991, 7
  %v4993 = vsub.s32 0, %v4992
  %v4994 = vrot.slane %v4961, %v4993
  %v4996 = vmul.f32 %v4988, %v4994
  %v4997 = vmul.f32 %v4989, %v4994
  %v4999 = vlaneseq
  %v5000 = vshrl.u32 %v4999, 7
  %v5001 = vsub.s32 0, %v5000
  %v5002 = vrot.slane %v4963, %v5001
  %v5004 = vadd.f32 %v4996, %v5002
  %v5005 = vadd.f32 %v4997, %v5002
  %s5006 = scalar_lea.vmem %s73, 16
  %v5007 = vld [vmem:[%s5006] sm:$0xf]
  %v5008 = vld [vmem:[%s5006 + $0x4] sm:$0xf]
  %v5009 = vld [vmem:[%s5006 + $0x8] sm:$0xf]
  %v5010 = vld [vmem:[%s5006 + $0xc] sm:$0xf]
  %v5011 = vpack.c.bf16 %v5005, %v5004
  %s5012 = scalar_lea.vmem %s75, 1
  %v5013 = vld [vmem:[%s5012] sm:$0x1]
  %v5015 = vlaneseq
  %v5016 = vshrl.u32 %v5015, 7
  %v5017 = vsub.s32 0, %v5016
  %v5018 = vrot.slane %v5013, %v5017
  %v5024 = vunpack.c.l.b16 %v5007
  %v5025 = vunpack.c.l.b16 %v5008
  %v5026 = vunpack.c.l.b16 %v5009
  %v5027 = vunpack.c.l.b16 %v5010
  %v5028 = vpack.c.b16 %v5025, %v5024
  %v5029 = vpack.c.b16 %v5027, %v5026
  %v5033 = vsel %vm288, %v5011, 0
  %5035 = vmatprep.subr.bf16.mxu0 0
  %5036 = vmatpush1.bf16.msra.mxu0 0
  %5037 = vmatprep.subr.bf16.mxu0 0
  %5038 = vmatpush1.bf16.msra.mxu0 0
  %5039 = vmatprep.subr.bf16.mxu0 0
  %5040 = vmatpush1.bf16.msra.mxu0 0
  %5041 = vmatprep.subr.bf16.mxu0 0
  %5042 = vmatpush1.bf16.msra.mxu0 0
  %5043 = vmatprep.subr.bf16.mxu0 0
  %5044 = vmatpush1.bf16.msra.mxu0 0
  %5045 = vmatprep.subr.bf16.mxu0 0
  %5046 = vmatpush1.bf16.msra.mxu0 0
  %5047 = vmatprep.subr.bf16.mxu0 0
  %5048 = vmatpush1.bf16.msra.mxu0 %v5029
  %5049 = vmatprep.subr.bf16.mxu0 0
  %5050 = vmatpush1.bf16.msra.mxu0 %v5028
  %5051 = vmatprep.subr.bf16.mxu0 0
  %5052 = vmatpush2.bf16.msra.mxu0 0
  %5053 = vmatprep.subr.bf16.mxu0 0
  %5054 = vmatpush2.bf16.msra.mxu0 0
  %5055 = vmatprep.subr.bf16.mxu0 0
  %5056 = vmatpush2.bf16.msra.mxu0 0
  %5057 = vmatprep.subr.bf16.mxu0 0
  %5058 = vmatpush2.bf16.msra.mxu0 0
  %5059 = vmatprep.subr.bf16.mxu0 0
  %5060 = vmatpush2.bf16.msra.mxu0 0
  %5061 = vmatprep.subr.bf16.mxu0 0
  %5062 = vmatpush2.bf16.msra.mxu0 0
  %5063 = vmatprep.subr.bf16.mxu0 0
  %5064 = vmatpush2.bf16.msra.mxu0 0
  %5065 = vmatprep.subr.bf16.mxu0 0
  %5066 = vmatpush2.bf16.msra.mxu0 0
  %5067 = vmatprep.mubr.bf16.mxu0 0
  %5068 = vmatmul.mubr.bf16.gmra.mxu0 %v5033
  %v5069 = vpop.f32.mrf.mxu0
  %v5070 = vadd.f32 %v5018, %v5069
  %v5071 = vpop.f32.mrf.mxu0
  %v5072 = vpop.f32.mrf.mxu0
  %v5073 = vadd.f32 %v5018, %v5072
  %v5074 = vpop.f32.mrf.mxu0
  %5075 = vdwg.mxu0
  %v5076 = vmax.f32 %v5070, 0.0
  %v5077 = vmax.f32 %v5073, 0.0
  %s5078 = scalar_lea.vmem %s77, 48
  %v5079 = vld [vmem:[%s5078] sm:$0xf]
  %v5080 = vld [vmem:[%s5078 + $0x4] sm:$0xf]
  %v5081 = vld [vmem:[%s5078 + $0x8] sm:$0xf]
  %v5082 = vld [vmem:[%s5078 + $0xc] sm:$0xf]
  %v5083 = vld [vmem:[%s5078 + $0x10] sm:$0xf]
  %v5084 = vld [vmem:[%s5078 + $0x14] sm:$0xf]
  %v5085 = vld [vmem:[%s5078 + $0x18] sm:$0xf]
  %v5086 = vld [vmem:[%s5078 + $0x1c] sm:$0xf]
  %v5087 = vld [vmem:[%s5078 + $0x20] sm:$0xf]
  %v5088 = vld [vmem:[%s5078 + $0x24] sm:$0xf]
  %v5089 = vld [vmem:[%s5078 + $0x28] sm:$0xf]
  %v5090 = vld [vmem:[%s5078 + $0x2c] sm:$0xf]
  %v5091 = vpack.c.bf16 %v5077, %v5076
  %s5092 = scalar_lea.vmem %s79, 1
  %v5093 = vld [vmem:[%s5092] sm:$0x1]
  %v5095 = vlaneseq
  %v5096 = vshrl.u32 %v5095, 7
  %v5097 = vsub.s32 0, %v5096
  %v5098 = vrot.slane %v5093, %v5097
  %v5112 = vunpack.c.l.b16 %v5079
  %v5113 = vunpack.c.l.b16 %v5080
  %v5114 = vunpack.c.l.b16 %v5081
  %v5115 = vunpack.c.l.b16 %v5082
  %v5116 = vunpack.c.l.b16 %v5083
  %v5117 = vunpack.c.l.b16 %v5084
  %v5118 = vunpack.c.l.b16 %v5085
  %v5119 = vunpack.c.l.b16 %v5086
  %v5120 = vunpack.c.l.b16 %v5087
  %v5121 = vunpack.c.l.b16 %v5088
  %v5122 = vunpack.c.l.b16 %v5089
  %v5123 = vunpack.c.l.b16 %v5090
  %v5124 = vpack.c.b16 %v5113, %v5112
  %v5125 = vpack.c.b16 %v5115, %v5114
  %v5126 = vpack.c.b16 %v5117, %v5116
  %v5127 = vpack.c.b16 %v5119, %v5118
  %v5128 = vpack.c.b16 %v5121, %v5120
  %v5129 = vpack.c.b16 %v5123, %v5122
  %v5137 = vsel %vm1099, %v5091, 0
  %5139 = vmatprep.subr.bf16.mxu0 0
  %5140 = vmatpush1.bf16.msra.mxu0 0
  %5141 = vmatprep.subr.bf16.mxu0 0
  %5142 = vmatpush1.bf16.msra.mxu0 0
  %5143 = vmatprep.subr.bf16.mxu0 0
  %5144 = vmatpush1.bf16.msra.mxu0 %v5129
  %5145 = vmatprep.subr.bf16.mxu0 0
  %5146 = vmatpush1.bf16.msra.mxu0 %v5128
  %5147 = vmatprep.subr.bf16.mxu0 0
  %5148 = vmatpush1.bf16.msra.mxu0 %v5127
  %5149 = vmatprep.subr.bf16.mxu0 0
  %5150 = vmatpush1.bf16.msra.mxu0 %v5126
  %5151 = vmatprep.subr.bf16.mxu0 0
  %5152 = vmatpush1.bf16.msra.mxu0 %v5125
  %5153 = vmatprep.subr.bf16.mxu0 0
  %5154 = vmatpush1.bf16.msra.mxu0 %v5124
  %5155 = vmatprep.subr.bf16.mxu0 0
  %5156 = vmatpush2.bf16.msra.mxu0 0
  %5157 = vmatprep.subr.bf16.mxu0 0
  %5158 = vmatpush2.bf16.msra.mxu0 0
  %5159 = vmatprep.subr.bf16.mxu0 0
  %5160 = vmatpush2.bf16.msra.mxu0 0
  %5161 = vmatprep.subr.bf16.mxu0 0
  %5162 = vmatpush2.bf16.msra.mxu0 0
  %5163 = vmatprep.subr.bf16.mxu0 0
  %5164 = vmatpush2.bf16.msra.mxu0 0
  %5165 = vmatprep.subr.bf16.mxu0 0
  %5166 = vmatpush2.bf16.msra.mxu0 0
  %5167 = vmatprep.subr.bf16.mxu0 0
  %5168 = vmatpush2.bf16.msra.mxu0 0
  %5169 = vmatprep.subr.bf16.mxu0 0
  %5170 = vmatpush2.bf16.msra.mxu0 0
  %5171 = vmatprep.mubr.bf16.mxu0 0
  %5172 = vmatmul.mubr.bf16.gmra.mxu0 %v5137
  %v5173 = vpop.f32.mrf.mxu0
  %v5174 = vadd.f32 %v5098, %v5173
  %v5175 = vpop.f32.mrf.mxu0
  %v5176 = vpop.f32.mrf.mxu0
  %v5177 = vadd.f32 %v5098, %v5176
  %v5178 = vpop.f32.mrf.mxu0
  %5179 = vdwg.mxu0
  %v5180 = vadd.f32 %v5004, %v5174
  %v5181 = vadd.f32 %v5005, %v5177
  %s5182 = scalar_lea.vmem %s69, 1
  %v5183 = vld [vmem:[%s5182] sm:$0x1]
  %s5184 = scalar_lea.vmem %s71, 1
  %v5185 = vld [vmem:[%s5184] sm:$0x1]
  %v5186 = vsel %vm288, %v5180, 0.0
  %5187 = vadd.xlane.f32.xlu0 %v5186
  %v5188 = vpop.xlane.xlu0 %5187
  %v5189 = vsel %vm288, %v5181, 0.0
  %5190 = vadd.xlane.f32.xlu0 %v5189
  %v5191 = vpop.xlane.xlu0 %5190
  %v5192 = vmul.f32 %v5188, %v936
  %v5193 = vmul.f32 %v5191, %v936
  %v5194 = vsub.f32 %v5180, %v5192
  %v5195 = vsub.f32 %v5181, %v5193
  %v5196 = vmul.f32 %v5194, %v5194
  %v5197 = vmul.f32 %v5195, %v5195
  %v5198 = vsel %vm288, %v5196, 0.0
  %5199 = vadd.xlane.f32.xlu0 %v5198
  %v5200 = vpop.xlane.xlu0 %5199
  %v5201 = vsel %vm288, %v5197, 0.0
  %5202 = vadd.xlane.f32.xlu0 %v5201
  %v5203 = vpop.xlane.xlu0 %5202
  %v5204 = vmul.f32 %v5200, %v936
  %v5205 = vmul.f32 %v5203, %v936
  %v5206 = vadd.f32 %v5204, 1e-05
  %v5207 = vadd.f32 %v5205, 1e-05
  %v5208 = vrsqrt.pop %v5206
  %v5209 = vrsqrt.pop %v5207
  %v5210 = vmul.f32 %v5194, %v5208
  %v5211 = vmul.f32 %v5195, %v5209
  %v5213 = vlaneseq
  %v5214 = vshrl.u32 %v5213, 7
  %v5215 = vsub.s32 0, %v5214
  %v5216 = vrot.slane %v5183, %v5215
  %v5218 = vmul.f32 %v5210, %v5216
  %v5219 = vmul.f32 %v5211, %v5216
  %v5221 = vlaneseq
  %v5222 = vshrl.u32 %v5221, 7
  %v5223 = vsub.s32 0, %v5222
  %v5224 = vrot.slane %v5185, %v5223
  %v5226 = vadd.f32 %v5218, %v5224
  %v5227 = vadd.f32 %v5219, %v5224
  %v5228 = vld [vmem:[%s81] sm:$0x1]
  %v5229 = vld [vmem:[%s83] sm:$0x1]
  %v5230 = vsel %vm288, %v5226, 0.0
  %5231 = vadd.xlane.f32.xlu0 %v5230
  %v5232 = vpop.xlane.xlu0 %5231
  %v5233 = vsel %vm288, %v5227, 0.0
  %5234 = vadd.xlane.f32.xlu0 %v5233
  %v5235 = vpop.xlane.xlu0 %5234
  %v5236 = vmul.f32 %v5232, %v936
  %v5237 = vmul.f32 %v5235, %v936
  %v5238 = vsub.f32 %v5226, %v5236
  %v5239 = vsub.f32 %v5227, %v5237
  %v5240 = vmul.f32 %v5238, %v5238
  %v5241 = vmul.f32 %v5239, %v5239
  %v5242 = vsel %vm288, %v5240, 0.0
  %5243 = vadd.xlane.f32.xlu0 %v5242
  %v5244 = vpop.xlane.xlu0 %5243
  %v5245 = vsel %vm288, %v5241, 0.0
  %5246 = vadd.xlane.f32.xlu0 %v5245
  %v5247 = vpop.xlane.xlu0 %5246
  %v5248 = vmul.f32 %v5244, %v936
  %v5249 = vmul.f32 %v5247, %v936
  %v5250 = vadd.f32 %v5248, 1e-05
  %v5251 = vadd.f32 %v5249, 1e-05
  %v5252 = vrsqrt.pop %v5250
  %v5253 = vrsqrt.pop %v5251
  %v5254 = vmul.f32 %v5238, %v5252
  %v5255 = vmul.f32 %v5239, %v5253
  %v5257 = vlaneseq
  %v5258 = vshrl.u32 %v5257, 7
  %v5259 = vsub.s32 0, %v5258
  %v5260 = vrot.slane %v5228, %v5259
  %v5262 = vmul.f32 %v5254, %v5260
  %v5263 = vmul.f32 %v5255, %v5260
  %v5265 = vlaneseq
  %v5266 = vshrl.u32 %v5265, 7
  %v5267 = vsub.s32 0, %v5266
  %v5268 = vrot.slane %v5229, %v5267
  %v5270 = vadd.f32 %v5262, %v5268
  %v5271 = vadd.f32 %v5263, %v5268
  %5272 = vst.msk [vmem:[%s85] sm:$0xff] %vm288, %v5270
  %5273 = vst.msk [vmem:[%s85 + $0x8] sm:$0xff] %vm288, %v5271
  // Predicated region
  $region170: #{gdlt_forward.1} parent=0 // pred_check
    _
  $region171: #{gdlt_forward.1} parent=0 // pred_check_branch
    %5275 = sbr.rel (0) target = $region173
  $region172: #{gdlt_forward.1} parent=0 // pred_region
    _
  $region173: #{gdlt_forward.1} parent=0 // pred_fallthru
    _
  // Predicated region
  $region174: #{gdlt_forward.1} parent=0 // pred_check
    _
  $region175: #{gdlt_forward.1} parent=0 // pred_check_branch
    %5277 = sbr.rel (0) target = $region177
  $region176: #{gdlt_forward.1} parent=0 // pred_region
    _
  $region177: #{gdlt_forward.1} parent=0 // pred_fallthru
    _

</llo_original>
